<compile_context>
chip_gen: v5e
topology: v5e:2x2
jax: 0.10.0
libtpu: 0.0.40
codegen_flags: <defaults>
</compile_context>

<pallas_src>
import jax
import jax.numpy as jnp
from jax.experimental import pallas as pl
from jax.experimental.pallas import tpu as pltpu

# --- config (mirrors train.py globals; vocab_size synthetic = 65 chars) ---
N_EMBED = 384
N_HEAD = 6
N_LAYER = 6
HEAD_SIZE = N_EMBED // N_HEAD
FFN_DIM = 4 * N_EMBED
BLOCK_SIZE = 256
VOCAB_SIZE = 65
V_PAD = 128            # lane-dense padded vocab for the lm_head output
LN_EPS = 1e-5          # torch.nn.LayerNorm default
NEG_INF = -1e30        # additive causal-mask value


def _layernorm(x, g, b):
    # f32 statistics regardless of matmul dtype
    mu = jnp.mean(x, axis=-1, keepdims=True)
    var = jnp.mean(jnp.square(x - mu), axis=-1, keepdims=True)
    return (x - mu) * jax.lax.rsqrt(var + LN_EPS) * g + b


# ---------------- fused GPT kernel: all layers + final LN + lm_head ----------
def _gpt_kernel(x_ref, mask_ref,
                ln1_g_ref, ln1_b_ref, wqkv_ref, wproj_ref, bproj_ref,
                ln2_g_ref, ln2_b_ref, w1_ref, b1_ref, w2_ref, b2_ref,
                lnf_g_ref, lnf_b_ref, wlm_ref, blm_ref,
                o_ref, x_acc, attn_sc):
    l = pl.program_id(1)
    n_l = pl.num_programs(1)

    @pl.when(l == 0)
    def _():
        x_acc[...] = x_ref[...].astype(jnp.float32)

    x = x_acc[...]                                  # (Bb, T, C) f32
    Bb, T, C = x.shape
    M = Bb * T
    D = HEAD_SIZE

    # ---------------- multi-head causal self-attention (pre-LN) --------------
    h = _layernorm(x, ln1_g_ref[l], ln1_b_ref[l]).astype(jnp.bfloat16)
    h2d = h.reshape(M, C)                           # leading-dim merge: free

    # one full-width fused QKV matmul (N = 3C = 1152); q columns are already
    # scaled by C ** -0.5 wrapper-side (matches PyTorch `C ** -0.5`, which is
    # intentionally NOT head_size ** -0.5)
    qkv = jnp.dot(h2d, wqkv_ref[l],
                  preferred_element_type=jnp.float32).astype(jnp.bfloat16)

    mask = mask_ref[...]                            # (T, T) additive 0 / -1e30

    for hd in range(N_HEAD):                        # static unrolled over heads
        qh = qkv[:, hd * D:(hd + 1) * D].reshape(Bb, T, D)
        kh = qkv[:, C + hd * D:C + (hd + 1) * D].reshape(Bb, T, D)
        vh = qkv[:, 2 * C + hd * D:2 * C + (hd + 1) * D].reshape(Bb, T, D)

        s = jnp.einsum('btd,bsd->bts', qh, kh,
                       preferred_element_type=jnp.float32) + mask
        s = s - jnp.max(s, axis=-1, keepdims=True)
        p = jnp.exp(s)
        p = p * pl.reciprocal(jnp.sum(p, axis=-1, keepdims=True), approx=True)

        ah = jnp.einsum('bts,bsd->btd', p.astype(jnp.bfloat16), vh,
                        preferred_element_type=jnp.float32)
        # head-concat written into the bf16 VMEM scratch at its lane offset
        attn_sc[:, :, hd * D:(hd + 1) * D] = ah.astype(jnp.bfloat16)

    # single K = 384 output projection over the concatenated heads
    sa = jnp.dot(attn_sc[...].reshape(M, C), wproj_ref[l],
                 preferred_element_type=jnp.float32) + bproj_ref[l]
    x = x + sa.reshape(Bb, T, C)                    # residual (dropout = id)

    # ---------------- feed-forward (pre-LN) -----------------------------------
    h2 = _layernorm(x, ln2_g_ref[l], ln2_b_ref[l]).astype(jnp.bfloat16)
    ff = jnp.dot(h2.reshape(M, C), w1_ref[l],
                 preferred_element_type=jnp.float32) + b1_ref[l]
    ff = jnp.maximum(ff, 0.0)
    ff = jnp.dot(ff.astype(jnp.bfloat16), w2_ref[l],
                 preferred_element_type=jnp.float32) + b2_ref[l]
    x = x + ff.reshape(Bb, T, C)

    x_acc[...] = x

    # ---------------- final LayerNorm + lm_head (padded vocab) ---------------
    @pl.when(l == n_l - 1)
    def _():
        hf = _layernorm(x, lnf_g_ref[...], lnf_b_ref[...]).astype(jnp.bfloat16)
        logits = jnp.dot(hf.reshape(M, C), wlm_ref[...],
                         preferred_element_type=jnp.float32) + blm_ref[...]
        o_ref[...] = logits.reshape(Bb, T, V_PAD)


# ---------------- tiling / VMEM budgeting -------------------------------------
def _tpu_vmem_capacity():
    try:
        return int(pltpu.get_tpu_info().vmem_capacity_bytes)
    except Exception:
        return 64 << 20            # conservative (v7x per-TC VMEM)


def _pick_batch_tile(B, T, target_rows):
    # target Bb*T rows to amortize the (resident) weight stream & fill the MXU
    bb = max(1, min(B, target_rows // max(T, 1)))
    while B % bb:
        bb -= 1
    # keep >= 2 batch tiles so the "parallel" axis can split across v7x's 2 TCs
    if B // bb < 2 and B > 1:
        bb = max(1, bb // 2)
        while B % bb:
            bb -= 1
    return bb


def gpt_forward_pallas(x, mask, p):
    """x: (B, T, C) f32 embeddings, mask: (T, T) additive -> (B, T, V_PAD) f32."""
    B, T, C = x.shape
    vmem_cap = _tpu_vmem_capacity()
    target_rows = 512 if vmem_cap <= (64 << 20) else 1024
    Bb = _pick_batch_tile(B, T, target_rows)

    weights = (p['ln1_g'], p['ln1_b'], p['wqkv'], p['wproj'], p['bproj'],
               p['ln2_g'], p['ln2_b'], p['w1'], p['b1'], p['w2'], p['b2'],
               p['ln_f_g'], p['ln_f_b'], p['w_lm'], p['b_lm'])

    def resident_spec(a):
        # full-array block, constant index map -> fetched once, resident in VMEM
        zeros = (0,) * a.ndim
        return pl.BlockSpec(a.shape, lambda b, l, z=zeros: z)

    in_specs = ([pl.BlockSpec((Bb, T, C), lambda b, l: (b, 0, 0)),
                 resident_spec(mask)]
                + [resident_spec(w) for w in weights])

    # per-shape VMEM budget (resident weights possibly double-buffered,
    # pipelined activation blocks, scratch, matmul temporaries) clamped to
    # the chip's VMEM capacity.
    weight_bytes = sum(int(w.size) * w.dtype.itemsize for w in weights)
    weight_bytes += int(mask.size) * mask.dtype.itemsize
    rows = Bb * T
    act_bytes = rows * (2 * C * 4 + 2 * V_PAD * 4     # pipelined x / logits blocks
                        + C * 4 + C * 2               # x_acc + attn scratch
                        + 3 * C * 6 + FFN_DIM * 6)    # qkv / ffn temporaries
    score_bytes = 4 * Bb * T * T * 4                  # live (Bb,T,T) f32 tiles
    vmem_need = 2 * weight_bytes + act_bytes + score_bytes + (16 << 20)
    vmem_limit = int(max(32 << 20, min(vmem_need, vmem_cap - (4 << 20))))

    return pl.pallas_call(
        _gpt_kernel,
        out_shape=jax.ShapeDtypeStruct((B, T, V_PAD), jnp.float32),
        grid=(B // Bb, N_LAYER),
        in_specs=in_specs,
        out_specs=pl.BlockSpec((Bb, T, V_PAD), lambda b, l: (b, 0, 0)),
        scratch_shapes=[pltpu.VMEM((Bb, T, C), jnp.float32),
                        pltpu.VMEM((Bb, T, C), jnp.bfloat16)],
        compiler_params=pltpu.CompilerParams(
            dimension_semantics=("parallel", "arbitrary"),
            vmem_limit_bytes=vmem_limit),
    )(x, mask, *weights)


# ---------------- parameter init (deterministic, synthetic) -------------------
def init_params(key):
    keys = jax.random.split(key, 12)
    L, C, H, D, F = N_LAYER, N_EMBED, N_HEAD, HEAD_SIZE, FFN_DIM

    def w(k, shape, scale=0.02):
        return scale * jax.random.normal(k, shape, jnp.float32)

    def heads_to_cols(wh):              # (L, H, C, D) -> (L, C, H*D)
        return jnp.transpose(wh, (0, 2, 1, 3)).reshape(L, C, H * D)

    # attention scale C ** -0.5 (full embedding dim, as in the reference)
    wq = w(keys[2], (L, H, C, D)) * (C ** -0.5)
    wk = w(keys[3], (L, H, C, D))
    wv = w(keys[4], (L, H, C, D))
    wqkv = jnp.concatenate(
        [heads_to_cols(wq), heads_to_cols(wk), heads_to_cols(wv)], axis=-1)

    wproj = w(keys[5], (L, H, D, C)).reshape(L, C, C)

    w_lm = jnp.pad(w(keys[8], (C, VOCAB_SIZE)),
                   ((0, 0), (0, V_PAD - VOCAB_SIZE)))

    return {
        'tok_emb': jax.random.normal(keys[0], (VOCAB_SIZE, C), jnp.float32),
        'pos_emb': jax.random.normal(keys[1], (BLOCK_SIZE, C), jnp.float32),
        'ln1_g': jnp.ones((L, 1, C), jnp.float32),
        'ln1_b': jnp.zeros((L, 1, C), jnp.float32),
        'wqkv': wqkv.astype(jnp.bfloat16),          # (L, C, 3C), q pre-scaled
        'wproj': wproj.astype(jnp.bfloat16),        # (L, C, C)
        'bproj': jnp.zeros((L, 1, C), jnp.float32),
        'ln2_g': jnp.ones((L, 1, C), jnp.float32),
        'ln2_b': jnp.zeros((L, 1, C), jnp.float32),
        'w1': w(keys[6], (L, C, F)).astype(jnp.bfloat16),
        'b1': jnp.zeros((L, 1, F), jnp.float32),
        'w2': w(keys[7], (L, F, C)).astype(jnp.bfloat16),
        'b2': jnp.zeros((L, 1, C), jnp.float32),
        'ln_f_g': jnp.ones((1, C), jnp.float32),
        'ln_f_b': jnp.zeros((1, C), jnp.float32),
        'w_lm': w_lm.astype(jnp.bfloat16),          # (C, V_PAD)
        'b_lm': jnp.zeros((1, V_PAD), jnp.float32),
    }


# ---------------- full forward (glue in plain JAX) ----------------------------
def bigram_lm_forward(params, idx, targets=None):
    B, T = idx.shape
    tok = jnp.take(params['tok_emb'], idx, axis=0)            # (B, T, C) gather
    pos = params['pos_emb'][:T]                                # (T, C)
    x = (tok + pos[None]).astype(jnp.float32)

    # additive causal mask built once (0 where allowed, -1e30 where masked)
    row = jax.lax.broadcasted_iota(jnp.int32, (T, T), 0)
    col = jax.lax.broadcasted_iota(jnp.int32, (T, T), 1)
    mask = jnp.where(col <= row, 0.0, NEG_INF).astype(jnp.float32)

    logits_pad = gpt_forward_pallas(x, mask, params)           # (B, T, V_PAD)
    logits = logits_pad[..., :VOCAB_SIZE]                      # drop vocab pad

    if targets is None:
        return logits, None
    flat = logits.reshape(B * T, VOCAB_SIZE)
    t = targets.reshape(B * T)
    logp = jax.nn.log_softmax(flat, axis=-1)
    loss = -jnp.mean(jnp.take_along_axis(logp, t[:, None], axis=1))
    return logits, loss
    # TODO(synk): dropout layers are identity at inference; training-mode
    # dropout and the autoregressive generate()/multinomial loop are not
    # implemented in-kernel.


if __name__ == "__main__":
    key = jax.random.PRNGKey(0)
    pkey, ikey, tkey = jax.random.split(key, 3)
    params = init_params(pkey)

    B, T = 2, 16                                               # T <= block_size
    idx = jax.random.randint(ikey, (B, T), 0, VOCAB_SIZE, dtype=jnp.int32)
    targets = jax.random.randint(tkey, (B, T), 0, VOCAB_SIZE, dtype=jnp.int32)

    logits, loss = bigram_lm_forward(params, idx, targets)
    jax.block_until_ready(logits)
    jax.block_until_ready(loss)
    assert logits.shape == (B, T, VOCAB_SIZE)
    assert loss.shape == ()
    assert bool(jnp.isfinite(loss))
    print("KERNEL_OK")
</pallas_src>

<mosaic_0001>
module attributes {stable_mosaic.version = 11 : i64} {
  func.func @_gpt_kernel(%arg0: i32, %arg1: i32, %arg2: memref<1x16x384xf32, #tpu.memory_space<vmem>>, %arg3: memref<16x16xf32, #tpu.memory_space<vmem>>, %arg4: memref<6x1x384xf32, #tpu.memory_space<vmem>>, %arg5: memref<6x1x384xf32, #tpu.memory_space<vmem>>, %arg6: memref<6x384x1152xbf16, #tpu.memory_space<vmem>>, %arg7: memref<6x384x384xbf16, #tpu.memory_space<vmem>>, %arg8: memref<6x1x384xf32, #tpu.memory_space<vmem>>, %arg9: memref<6x1x384xf32, #tpu.memory_space<vmem>>, %arg10: memref<6x1x384xf32, #tpu.memory_space<vmem>>, %arg11: memref<6x384x1536xbf16, #tpu.memory_space<vmem>>, %arg12: memref<6x1x1536xf32, #tpu.memory_space<vmem>>, %arg13: memref<6x1536x384xbf16, #tpu.memory_space<vmem>>, %arg14: memref<6x1x384xf32, #tpu.memory_space<vmem>>, %arg15: memref<1x384xf32, #tpu.memory_space<vmem>>, %arg16: memref<1x384xf32, #tpu.memory_space<vmem>>, %arg17: memref<384x128xbf16, #tpu.memory_space<vmem>>, %arg18: memref<1x128xf32, #tpu.memory_space<vmem>>, %arg19: memref<1x16x128xf32, #tpu.memory_space<vmem>>, %arg20: memref<1x16x384xf32, #tpu.memory_space<vmem>>, %arg21: memref<1x16x384xbf16, #tpu.memory_space<vmem>>) attributes {dimension_semantics = [#tpu.dimension_semantics<parallel>, #tpu.dimension_semantics<arbitrary>], iteration_bounds = array<i64: 2, 6>, scalar_prefetch = 0 : i64, scratch_operands = 2 : i64, tpu.core_type = #tpu.core_type<tc>, window_params = [{transform_indices = @transform_0, window_bounds = array<i64: 1, 16, 384>}, {pipeline_mode = #tpu.pipeline_mode<synchronous>, transform_indices = @transform_1, window_bounds = array<i64: 16, 16>}, {pipeline_mode = #tpu.pipeline_mode<synchronous>, transform_indices = @transform_2, window_bounds = array<i64: 6, 1, 384>}, {pipeline_mode = #tpu.pipeline_mode<synchronous>, transform_indices = @transform_3, window_bounds = array<i64: 6, 1, 384>}, {pipeline_mode = #tpu.pipeline_mode<synchronous>, transform_indices = @transform_4, window_bounds = array<i64: 6, 384, 1152>}, {pipeline_mode = #tpu.pipeline_mode<synchronous>, transform_indices = @transform_5, window_bounds = array<i64: 6, 384, 384>}, {pipeline_mode = #tpu.pipeline_mode<synchronous>, transform_indices = @transform_6, window_bounds = array<i64: 6, 1, 384>}, {pipeline_mode = #tpu.pipeline_mode<synchronous>, transform_indices = @transform_7, window_bounds = array<i64: 6, 1, 384>}, {pipeline_mode = #tpu.pipeline_mode<synchronous>, transform_indices = @transform_8, window_bounds = array<i64: 6, 1, 384>}, {pipeline_mode = #tpu.pipeline_mode<synchronous>, transform_indices = @transform_9, window_bounds = array<i64: 6, 384, 1536>}, {pipeline_mode = #tpu.pipeline_mode<synchronous>, transform_indices = @transform_10, window_bounds = array<i64: 6, 1, 1536>}, {pipeline_mode = #tpu.pipeline_mode<synchronous>, transform_indices = @transform_11, window_bounds = array<i64: 6, 1536, 384>}, {pipeline_mode = #tpu.pipeline_mode<synchronous>, transform_indices = @transform_12, window_bounds = array<i64: 6, 1, 384>}, {pipeline_mode = #tpu.pipeline_mode<synchronous>, transform_indices = @transform_13, window_bounds = array<i64: 1, 384>}, {pipeline_mode = #tpu.pipeline_mode<synchronous>, transform_indices = @transform_14, window_bounds = array<i64: 1, 384>}, {pipeline_mode = #tpu.pipeline_mode<synchronous>, transform_indices = @transform_15, window_bounds = array<i64: 384, 128>}, {pipeline_mode = #tpu.pipeline_mode<synchronous>, transform_indices = @transform_16, window_bounds = array<i64: 1, 128>}, {transform_indices = @transform_17, window_bounds = array<i64: 1, 16, 128>}]} {
    %c0_i32 = arith.constant 0 : i32
    %0 = arith.cmpi eq, %arg1, %c0_i32 : i32
    %1 = arith.extui %0 : i1 to i32
    %c0_i32_0 = arith.constant 0 : i32
    %2 = arith.cmpi ne, %1, %c0_i32_0 : i32
    scf.if %2 {
      %c0_85 = arith.constant 0 : index
      %c0_86 = arith.constant 0 : index
      %c0_87 = arith.constant 0 : index
      %252 = vector.load %arg2[%c0_85, %c0_86, %c0_87] : memref<1x16x384xf32, #tpu.memory_space<vmem>>, vector<1x16x384xf32>
      %c0_88 = arith.constant 0 : index
      %c0_89 = arith.constant 0 : index
      %c0_90 = arith.constant 0 : index
      %253 = vector.load %arg20[%c0_88, %c0_89, %c0_90] : memref<1x16x384xf32, #tpu.memory_space<vmem>>, vector<1x16x384xf32>
      tpu.vector_store %arg20[%c0_88, %c0_89, %c0_90], %252 {strides = array<i32>} : memref<1x16x384xf32, #tpu.memory_space<vmem>>, vector<1x16x384xf32>,
    } else {
    }
    %c0 = arith.constant 0 : index
    %c0_1 = arith.constant 0 : index
    %c0_2 = arith.constant 0 : index
    %3 = vector.load %arg20[%c0, %c0_1, %c0_2] : memref<1x16x384xf32, #tpu.memory_space<vmem>>, vector<1x16x384xf32>
    %4 = arith.index_cast %arg1 : i32 to index
    %c0_3 = arith.constant 0 : index
    %c0_4 = arith.constant 0 : index
    %5 = vector.load %arg4[%4, %c0_3, %c0_4] : memref<6x1x384xf32, #tpu.memory_space<vmem>>, vector<1x1x384xf32>
    %6 = vector.shape_cast %5 : vector<1x1x384xf32> to vector<1x384xf32>
    %7 = arith.index_cast %arg1 : i32 to index
    %c0_5 = arith.constant 0 : index
    %c0_6 = arith.constant 0 : index
    %8 = vector.load %arg5[%7, %c0_5, %c0_6] : memref<6x1x384xf32, #tpu.memory_space<vmem>>, vector<1x1x384xf32>
    %9 = vector.shape_cast %8 : vector<1x1x384xf32> to vector<1x384xf32>
    %cst = arith.constant dense<0.000000e+00> : vector<1x16xf32>
    %10 = vector.multi_reduction <add>, %3, %cst [2] : vector<1x16x384xf32> to vector<1x16xf32>
    %11 = vector.shape_cast %10 : vector<1x16xf32> to vector<1x16x1xf32>
    %cst_7 = arith.constant 3.840000e+02 : f32
    %12 = vector.broadcast %cst_7 : f32 to vector<1x16x1xf32>
    %13 = arith.divf %11, %12 : vector<1x16x1xf32>
    %14 = vector.broadcast %13 : vector<1x16x1xf32> to vector<1x16x384xf32>
    %15 = arith.subf %3, %14 : vector<1x16x384xf32>
    %16 = arith.mulf %15, %15 : vector<1x16x384xf32>
    %cst_8 = arith.constant dense<0.000000e+00> : vector<1x16xf32>
    %17 = vector.multi_reduction <add>, %16, %cst_8 [2] : vector<1x16x384xf32> to vector<1x16xf32>
    %18 = vector.shape_cast %17 : vector<1x16xf32> to vector<1x16x1xf32>
    %cst_9 = arith.constant 3.840000e+02 : f32
    %19 = vector.broadcast %cst_9 : f32 to vector<1x16x1xf32>
    %20 = arith.divf %18, %19 : vector<1x16x1xf32>
    %21 = vector.broadcast %13 : vector<1x16x1xf32> to vector<1x16x384xf32>
    %22 = arith.subf %3, %21 : vector<1x16x384xf32>
    %cst_10 = arith.constant 9.99999974E-6 : f32
    %23 = vector.broadcast %cst_10 : f32 to vector<1x16x1xf32>
    %24 = arith.addf %20, %23 : vector<1x16x1xf32>
    %25 = math.rsqrt %24 : vector<1x16x1xf32>
    %26 = vector.broadcast %25 : vector<1x16x1xf32> to vector<1x16x384xf32>
    %27 = arith.mulf %22, %26 : vector<1x16x384xf32>
    %28 = vector.shape_cast %6 : vector<1x384xf32> to vector<1x1x384xf32>
    %29 = vector.broadcast %28 : vector<1x1x384xf32> to vector<1x16x384xf32>
    %30 = arith.mulf %27, %29 : vector<1x16x384xf32>
    %31 = vector.shape_cast %9 : vector<1x384xf32> to vector<1x1x384xf32>
    %32 = vector.broadcast %31 : vector<1x1x384xf32> to vector<1x16x384xf32>
    %33 = arith.addf %30, %32 : vector<1x16x384xf32>
    %34 = arith.truncf %33 : vector<1x16x384xf32> to vector<1x16x384xbf16>
    %35 = vector.shape_cast %34 : vector<1x16x384xbf16> to vector<16x384xbf16>
    %36 = arith.index_cast %arg1 : i32 to index
    %c0_11 = arith.constant 0 : index
    %c0_12 = arith.constant 0 : index
    %37 = vector.load %arg6[%36, %c0_11, %c0_12] : memref<6x384x1152xbf16, #tpu.memory_space<vmem>>, vector<1x384x1152xbf16>
    %38 = vector.shape_cast %37 : vector<1x384x1152xbf16> to vector<384x1152xbf16>
    %cst_13 = arith.constant dense<0.000000e+00> : vector<16x1152xf32>
    %39 = tpu.matmul %35, %38, %cst_13 {dimension_numbers = #tpu.dot_dimension_numbers<[1], [0], [0], [1], [0, 0, 1, 1], [], []>} : vector<16x384xbf16>, vector<384x1152xbf16>, vector<16x1152xf32> -> vector<16x1152xf32>
    %40 = arith.truncf %39 : vector<16x1152xf32> to vector<16x1152xbf16>
    %c0_14 = arith.constant 0 : index
    %c0_15 = arith.constant 0 : index
    %41 = vector.load %arg3[%c0_14, %c0_15] : memref<16x16xf32, #tpu.memory_space<vmem>>, vector<16x16xf32>
    %42 = vector.extract_strided_slice %40 {offsets = [0, 0], sizes = [16, 64], strides = [1, 1]} : vector<16x1152xbf16> to vector<16x64xbf16>
    %43 = vector.shape_cast %42 : vector<16x64xbf16> to vector<1x16x64xbf16>
    %44 = vector.extract_strided_slice %40 {offsets = [0, 384], sizes = [16, 64], strides = [1, 1]} : vector<16x1152xbf16> to vector<16x64xbf16>
    %45 = vector.shape_cast %44 : vector<16x64xbf16> to vector<1x16x64xbf16>
    %46 = vector.extract_strided_slice %40 {offsets = [0, 768], sizes = [16, 64], strides = [1, 1]} : vector<16x1152xbf16> to vector<16x64xbf16>
    %47 = vector.shape_cast %46 : vector<16x64xbf16> to vector<1x16x64xbf16>
    "tpu.trace_start"() <{level = 10 : i32, message = "btd,bsd->bts"}> : () -> ()
    %cst_16 = arith.constant dense<0.000000e+00> : vector<1x16x16xf32>
    %48 = tpu.matmul %43, %45, %cst_16 {dimension_numbers = #tpu.dot_dimension_numbers<[2], [2], [1], [1], [0, 0, 0, 1, 1, 1], [0], [0]>} : vector<1x16x64xbf16>, vector<1x16x64xbf16>, vector<1x16x16xf32> -> vector<1x16x16xf32>
    "tpu.trace_stop"() : () -> ()
    %49 = vector.shape_cast %41 : vector<16x16xf32> to vector<1x16x16xf32>
    %50 = arith.addf %48, %49 : vector<1x16x16xf32>
    %cst_17 = arith.constant dense<0xFF800000> : vector<1x16xf32>
    %51 = vector.multi_reduction <maximumf>, %50, %cst_17 [2] : vector<1x16x16xf32> to vector<1x16xf32>
    %52 = vector.shape_cast %51 : vector<1x16xf32> to vector<1x16x1xf32>
    %53 = vector.broadcast %52 : vector<1x16x1xf32> to vector<1x16x16xf32>
    %54 = arith.subf %50, %53 : vector<1x16x16xf32>
    %55 = math.exp %54 : vector<1x16x16xf32>
    %cst_18 = arith.constant dense<0.000000e+00> : vector<1x16xf32>
    %56 = vector.multi_reduction <add>, %55, %cst_18 [2] : vector<1x16x16xf32> to vector<1x16xf32>
    %57 = vector.shape_cast %56 : vector<1x16xf32> to vector<1x16x1xf32>
    %58 = tpu.reciprocal %57 {approx = true} : vector<1x16x1xf32> -> vector<1x16x1xf32>
    %59 = vector.broadcast %58 : vector<1x16x1xf32> to vector<1x16x16xf32>
    %60 = arith.mulf %55, %59 : vector<1x16x16xf32>
    %61 = arith.truncf %60 : vector<1x16x16xf32> to vector<1x16x16xbf16>
    "tpu.trace_start"() <{level = 10 : i32, message = "bts,bsd->btd"}> : () -> ()
    %cst_19 = arith.constant dense<0.000000e+00> : vector<1x16x64xf32>
    %62 = tpu.matmul %61, %47, %cst_19 {dimension_numbers = #tpu.dot_dimension_numbers<[2], [1], [1], [2], [0, 0, 0, 1, 1, 2], [0], [0]>} : vector<1x16x16xbf16>, vector<1x16x64xbf16>, vector<1x16x64xf32> -> vector<1x16x64xf32>
    "tpu.trace_stop"() : () -> ()
    %63 = arith.truncf %62 : vector<1x16x64xf32> to vector<1x16x64xbf16>
    %c0_20 = arith.constant 0 : index
    %c0_21 = arith.constant 0 : index
    %c0_22 = arith.constant 0 : index
    %64 = vector.load %arg21[%c0_20, %c0_21, %c0_22] : memref<1x16x384xbf16, #tpu.memory_space<vmem>>, vector<1x16x64xbf16>
    tpu.vector_store %arg21[%c0_20, %c0_21, %c0_22], %63 {strides = array<i32>} : memref<1x16x384xbf16, #tpu.memory_space<vmem>>, vector<1x16x64xbf16>,
    %65 = vector.extract_strided_slice %40 {offsets = [0, 64], sizes = [16, 64], strides = [1, 1]} : vector<16x1152xbf16> to vector<16x64xbf16>
    %66 = vector.shape_cast %65 : vector<16x64xbf16> to vector<1x16x64xbf16>
    %67 = vector.extract_strided_slice %40 {offsets = [0, 448], sizes = [16, 64], strides = [1, 1]} : vector<16x1152xbf16> to vector<16x64xbf16>
    %68 = vector.shape_cast %67 : vector<16x64xbf16> to vector<1x16x64xbf16>
    %69 = vector.extract_strided_slice %40 {offsets = [0, 832], sizes = [16, 64], strides = [1, 1]} : vector<16x1152xbf16> to vector<16x64xbf16>
    %70 = vector.shape_cast %69 : vector<16x64xbf16> to vector<1x16x64xbf16>
    "tpu.trace_start"() <{level = 10 : i32, message = "btd,bsd->bts"}> : () -> ()
    %cst_23 = arith.constant dense<0.000000e+00> : vector<1x16x16xf32>
    %71 = tpu.matmul %66, %68, %cst_23 {dimension_numbers = #tpu.dot_dimension_numbers<[2], [2], [1], [1], [0, 0, 0, 1, 1, 1], [0], [0]>} : vector<1x16x64xbf16>, vector<1x16x64xbf16>, vector<1x16x16xf32> -> vector<1x16x16xf32>
    "tpu.trace_stop"() : () -> ()
    %72 = vector.shape_cast %41 : vector<16x16xf32> to vector<1x16x16xf32>
    %73 = arith.addf %71, %72 : vector<1x16x16xf32>
    %cst_24 = arith.constant dense<0xFF800000> : vector<1x16xf32>
    %74 = vector.multi_reduction <maximumf>, %73, %cst_24 [2] : vector<1x16x16xf32> to vector<1x16xf32>
    %75 = vector.shape_cast %74 : vector<1x16xf32> to vector<1x16x1xf32>
    %76 = vector.broadcast %75 : vector<1x16x1xf32> to vector<1x16x16xf32>
    %77 = arith.subf %73, %76 : vector<1x16x16xf32>
    %78 = math.exp %77 : vector<1x16x16xf32>
    %cst_25 = arith.constant dense<0.000000e+00> : vector<1x16xf32>
    %79 = vector.multi_reduction <add>, %78, %cst_25 [2] : vector<1x16x16xf32> to vector<1x16xf32>
    %80 = vector.shape_cast %79 : vector<1x16xf32> to vector<1x16x1xf32>
    %81 = tpu.reciprocal %80 {approx = true} : vector<1x16x1xf32> -> vector<1x16x1xf32>
    %82 = vector.broadcast %81 : vector<1x16x1xf32> to vector<1x16x16xf32>
    %83 = arith.mulf %78, %82 : vector<1x16x16xf32>
    %84 = arith.truncf %83 : vector<1x16x16xf32> to vector<1x16x16xbf16>
    "tpu.trace_start"() <{level = 10 : i32, message = "bts,bsd->btd"}> : () -> ()
    %cst_26 = arith.constant dense<0.000000e+00> : vector<1x16x64xf32>
    %85 = tpu.matmul %84, %70, %cst_26 {dimension_numbers = #tpu.dot_dimension_numbers<[2], [1], [1], [2], [0, 0, 0, 1, 1, 2], [0], [0]>} : vector<1x16x16xbf16>, vector<1x16x64xbf16>, vector<1x16x64xf32> -> vector<1x16x64xf32>
    "tpu.trace_stop"() : () -> ()
    %86 = arith.truncf %85 : vector<1x16x64xf32> to vector<1x16x64xbf16>
    %c0_27 = arith.constant 0 : index
    %c0_28 = arith.constant 0 : index
    %c64 = arith.constant 64 : index
    %87 = vector.load %arg21[%c0_27, %c0_28, %c64] : memref<1x16x384xbf16, #tpu.memory_space<vmem>>, vector<1x16x64xbf16>
    tpu.vector_store %arg21[%c0_27, %c0_28, %c64], %86 {strides = array<i32>} : memref<1x16x384xbf16, #tpu.memory_space<vmem>>, vector<1x16x64xbf16>,
    %88 = vector.extract_strided_slice %40 {offsets = [0, 128], sizes = [16, 64], strides = [1, 1]} : vector<16x1152xbf16> to vector<16x64xbf16>
    %89 = vector.shape_cast %88 : vector<16x64xbf16> to vector<1x16x64xbf16>
    %90 = vector.extract_strided_slice %40 {offsets = [0, 512], sizes = [16, 64], strides = [1, 1]} : vector<16x1152xbf16> to vector<16x64xbf16>
    %91 = vector.shape_cast %90 : vector<16x64xbf16> to vector<1x16x64xbf16>
    %92 = vector.extract_strided_slice %40 {offsets = [0, 896], sizes = [16, 64], strides = [1, 1]} : vector<16x1152xbf16> to vector<16x64xbf16>
    %93 = vector.shape_cast %92 : vector<16x64xbf16> to vector<1x16x64xbf16>
    "tpu.trace_start"() <{level = 10 : i32, message = "btd,bsd->bts"}> : () -> ()
    %cst_29 = arith.constant dense<0.000000e+00> : vector<1x16x16xf32>
    %94 = tpu.matmul %89, %91, %cst_29 {dimension_numbers = #tpu.dot_dimension_numbers<[2], [2], [1], [1], [0, 0, 0, 1, 1, 1], [0], [0]>} : vector<1x16x64xbf16>, vector<1x16x64xbf16>, vector<1x16x16xf32> -> vector<1x16x16xf32>
    "tpu.trace_stop"() : () -> ()
    %95 = vector.shape_cast %41 : vector<16x16xf32> to vector<1x16x16xf32>
    %96 = arith.addf %94, %95 : vector<1x16x16xf32>
    %cst_30 = arith.constant dense<0xFF800000> : vector<1x16xf32>
    %97 = vector.multi_reduction <maximumf>, %96, %cst_30 [2] : vector<1x16x16xf32> to vector<1x16xf32>
    %98 = vector.shape_cast %97 : vector<1x16xf32> to vector<1x16x1xf32>
    %99 = vector.broadcast %98 : vector<1x16x1xf32> to vector<1x16x16xf32>
    %100 = arith.subf %96, %99 : vector<1x16x16xf32>
    %101 = math.exp %100 : vector<1x16x16xf32>
    %cst_31 = arith.constant dense<0.000000e+00> : vector<1x16xf32>
    %102 = vector.multi_reduction <add>, %101, %cst_31 [2] : vector<1x16x16xf32> to vector<1x16xf32>
    %103 = vector.shape_cast %102 : vector<1x16xf32> to vector<1x16x1xf32>
    %104 = tpu.reciprocal %103 {approx = true} : vector<1x16x1xf32> -> vector<1x16x1xf32>
    %105 = vector.broadcast %104 : vector<1x16x1xf32> to vector<1x16x16xf32>
    %106 = arith.mulf %101, %105 : vector<1x16x16xf32>
    %107 = arith.truncf %106 : vector<1x16x16xf32> to vector<1x16x16xbf16>
    "tpu.trace_start"() <{level = 10 : i32, message = "bts,bsd->btd"}> : () -> ()
    %cst_32 = arith.constant dense<0.000000e+00> : vector<1x16x64xf32>
    %108 = tpu.matmul %107, %93, %cst_32 {dimension_numbers = #tpu.dot_dimension_numbers<[2], [1], [1], [2], [0, 0, 0, 1, 1, 2], [0], [0]>} : vector<1x16x16xbf16>, vector<1x16x64xbf16>, vector<1x16x64xf32> -> vector<1x16x64xf32>
    "tpu.trace_stop"() : () -> ()
    %109 = arith.truncf %108 : vector<1x16x64xf32> to vector<1x16x64xbf16>
    %c0_33 = arith.constant 0 : index
    %c0_34 = arith.constant 0 : index
    %c128 = arith.constant 128 : index
    %110 = vector.load %arg21[%c0_33, %c0_34, %c128] : memref<1x16x384xbf16, #tpu.memory_space<vmem>>, vector<1x16x64xbf16>
    tpu.vector_store %arg21[%c0_33, %c0_34, %c128], %109 {strides = array<i32>} : memref<1x16x384xbf16, #tpu.memory_space<vmem>>, vector<1x16x64xbf16>,
    %111 = vector.extract_strided_slice %40 {offsets = [0, 192], sizes = [16, 64], strides = [1, 1]} : vector<16x1152xbf16> to vector<16x64xbf16>
    %112 = vector.shape_cast %111 : vector<16x64xbf16> to vector<1x16x64xbf16>
    %113 = vector.extract_strided_slice %40 {offsets = [0, 576], sizes = [16, 64], strides = [1, 1]} : vector<16x1152xbf16> to vector<16x64xbf16>
    %114 = vector.shape_cast %113 : vector<16x64xbf16> to vector<1x16x64xbf16>
    %115 = vector.extract_strided_slice %40 {offsets = [0, 960], sizes = [16, 64], strides = [1, 1]} : vector<16x1152xbf16> to vector<16x64xbf16>
    %116 = vector.shape_cast %115 : vector<16x64xbf16> to vector<1x16x64xbf16>
    "tpu.trace_start"() <{level = 10 : i32, message = "btd,bsd->bts"}> : () -> ()
    %cst_35 = arith.constant dense<0.000000e+00> : vector<1x16x16xf32>
    %117 = tpu.matmul %112, %114, %cst_35 {dimension_numbers = #tpu.dot_dimension_numbers<[2], [2], [1], [1], [0, 0, 0, 1, 1, 1], [0], [0]>} : vector<1x16x64xbf16>, vector<1x16x64xbf16>, vector<1x16x16xf32> -> vector<1x16x16xf32>
    "tpu.trace_stop"() : () -> ()
    %118 = vector.shape_cast %41 : vector<16x16xf32> to vector<1x16x16xf32>
    %119 = arith.addf %117, %118 : vector<1x16x16xf32>
    %cst_36 = arith.constant dense<0xFF800000> : vector<1x16xf32>
    %120 = vector.multi_reduction <maximumf>, %119, %cst_36 [2] : vector<1x16x16xf32> to vector<1x16xf32>
    %121 = vector.shape_cast %120 : vector<1x16xf32> to vector<1x16x1xf32>
    %122 = vector.broadcast %121 : vector<1x16x1xf32> to vector<1x16x16xf32>
    %123 = arith.subf %119, %122 : vector<1x16x16xf32>
    %124 = math.exp %123 : vector<1x16x16xf32>
    %cst_37 = arith.constant dense<0.000000e+00> : vector<1x16xf32>
    %125 = vector.multi_reduction <add>, %124, %cst_37 [2] : vector<1x16x16xf32> to vector<1x16xf32>
    %126 = vector.shape_cast %125 : vector<1x16xf32> to vector<1x16x1xf32>
    %127 = tpu.reciprocal %126 {approx = true} : vector<1x16x1xf32> -> vector<1x16x1xf32>
    %128 = vector.broadcast %127 : vector<1x16x1xf32> to vector<1x16x16xf32>
    %129 = arith.mulf %124, %128 : vector<1x16x16xf32>
    %130 = arith.truncf %129 : vector<1x16x16xf32> to vector<1x16x16xbf16>
    "tpu.trace_start"() <{level = 10 : i32, message = "bts,bsd->btd"}> : () -> ()
    %cst_38 = arith.constant dense<0.000000e+00> : vector<1x16x64xf32>
    %131 = tpu.matmul %130, %116, %cst_38 {dimension_numbers = #tpu.dot_dimension_numbers<[2], [1], [1], [2], [0, 0, 0, 1, 1, 2], [0], [0]>} : vector<1x16x16xbf16>, vector<1x16x64xbf16>, vector<1x16x64xf32> -> vector<1x16x64xf32>
    "tpu.trace_stop"() : () -> ()
    %132 = arith.truncf %131 : vector<1x16x64xf32> to vector<1x16x64xbf16>
    %c0_39 = arith.constant 0 : index
    %c0_40 = arith.constant 0 : index
    %c192 = arith.constant 192 : index
    %133 = vector.load %arg21[%c0_39, %c0_40, %c192] : memref<1x16x384xbf16, #tpu.memory_space<vmem>>, vector<1x16x64xbf16>
    tpu.vector_store %arg21[%c0_39, %c0_40, %c192], %132 {strides = array<i32>} : memref<1x16x384xbf16, #tpu.memory_space<vmem>>, vector<1x16x64xbf16>,
    %134 = vector.extract_strided_slice %40 {offsets = [0, 256], sizes = [16, 64], strides = [1, 1]} : vector<16x1152xbf16> to vector<16x64xbf16>
    %135 = vector.shape_cast %134 : vector<16x64xbf16> to vector<1x16x64xbf16>
    %136 = vector.extract_strided_slice %40 {offsets = [0, 640], sizes = [16, 64], strides = [1, 1]} : vector<16x1152xbf16> to vector<16x64xbf16>
    %137 = vector.shape_cast %136 : vector<16x64xbf16> to vector<1x16x64xbf16>
    %138 = vector.extract_strided_slice %40 {offsets = [0, 1024], sizes = [16, 64], strides = [1, 1]} : vector<16x1152xbf16> to vector<16x64xbf16>
    %139 = vector.shape_cast %138 : vector<16x64xbf16> to vector<1x16x64xbf16>
    "tpu.trace_start"() <{level = 10 : i32, message = "btd,bsd->bts"}> : () -> ()
    %cst_41 = arith.constant dense<0.000000e+00> : vector<1x16x16xf32>
    %140 = tpu.matmul %135, %137, %cst_41 {dimension_numbers = #tpu.dot_dimension_numbers<[2], [2], [1], [1], [0, 0, 0, 1, 1, 1], [0], [0]>} : vector<1x16x64xbf16>, vector<1x16x64xbf16>, vector<1x16x16xf32> -> vector<1x16x16xf32>
    "tpu.trace_stop"() : () -> ()
    %141 = vector.shape_cast %41 : vector<16x16xf32> to vector<1x16x16xf32>
    %142 = arith.addf %140, %141 : vector<1x16x16xf32>
    %cst_42 = arith.constant dense<0xFF800000> : vector<1x16xf32>
    %143 = vector.multi_reduction <maximumf>, %142, %cst_42 [2] : vector<1x16x16xf32> to vector<1x16xf32>
    %144 = vector.shape_cast %143 : vector<1x16xf32> to vector<1x16x1xf32>
    %145 = vector.broadcast %144 : vector<1x16x1xf32> to vector<1x16x16xf32>
    %146 = arith.subf %142, %145 : vector<1x16x16xf32>
    %147 = math.exp %146 : vector<1x16x16xf32>
    %cst_43 = arith.constant dense<0.000000e+00> : vector<1x16xf32>
    %148 = vector.multi_reduction <add>, %147, %cst_43 [2] : vector<1x16x16xf32> to vector<1x16xf32>
    %149 = vector.shape_cast %148 : vector<1x16xf32> to vector<1x16x1xf32>
    %150 = tpu.reciprocal %149 {approx = true} : vector<1x16x1xf32> -> vector<1x16x1xf32>
    %151 = vector.broadcast %150 : vector<1x16x1xf32> to vector<1x16x16xf32>
    %152 = arith.mulf %147, %151 : vector<1x16x16xf32>
    %153 = arith.truncf %152 : vector<1x16x16xf32> to vector<1x16x16xbf16>
    "tpu.trace_start"() <{level = 10 : i32, message = "bts,bsd->btd"}> : () -> ()
    %cst_44 = arith.constant dense<0.000000e+00> : vector<1x16x64xf32>
    %154 = tpu.matmul %153, %139, %cst_44 {dimension_numbers = #tpu.dot_dimension_numbers<[2], [1], [1], [2], [0, 0, 0, 1, 1, 2], [0], [0]>} : vector<1x16x16xbf16>, vector<1x16x64xbf16>, vector<1x16x64xf32> -> vector<1x16x64xf32>
    "tpu.trace_stop"() : () -> ()
    %155 = arith.truncf %154 : vector<1x16x64xf32> to vector<1x16x64xbf16>
    %c0_45 = arith.constant 0 : index
    %c0_46 = arith.constant 0 : index
    %c256 = arith.constant 256 : index
    %156 = vector.load %arg21[%c0_45, %c0_46, %c256] : memref<1x16x384xbf16, #tpu.memory_space<vmem>>, vector<1x16x64xbf16>
    tpu.vector_store %arg21[%c0_45, %c0_46, %c256], %155 {strides = array<i32>} : memref<1x16x384xbf16, #tpu.memory_space<vmem>>, vector<1x16x64xbf16>,
    %157 = vector.extract_strided_slice %40 {offsets = [0, 320], sizes = [16, 64], strides = [1, 1]} : vector<16x1152xbf16> to vector<16x64xbf16>
    %158 = vector.shape_cast %157 : vector<16x64xbf16> to vector<1x16x64xbf16>
    %159 = vector.extract_strided_slice %40 {offsets = [0, 704], sizes = [16, 64], strides = [1, 1]} : vector<16x1152xbf16> to vector<16x64xbf16>
    %160 = vector.shape_cast %159 : vector<16x64xbf16> to vector<1x16x64xbf16>
    %161 = vector.extract_strided_slice %40 {offsets = [0, 1088], sizes = [16, 64], strides = [1, 1]} : vector<16x1152xbf16> to vector<16x64xbf16>
    %162 = vector.shape_cast %161 : vector<16x64xbf16> to vector<1x16x64xbf16>
    "tpu.trace_start"() <{level = 10 : i32, message = "btd,bsd->bts"}> : () -> ()
    %cst_47 = arith.constant dense<0.000000e+00> : vector<1x16x16xf32>
    %163 = tpu.matmul %158, %160, %cst_47 {dimension_numbers = #tpu.dot_dimension_numbers<[2], [2], [1], [1], [0, 0, 0, 1, 1, 1], [0], [0]>} : vector<1x16x64xbf16>, vector<1x16x64xbf16>, vector<1x16x16xf32> -> vector<1x16x16xf32>
    "tpu.trace_stop"() : () -> ()
    %164 = vector.shape_cast %41 : vector<16x16xf32> to vector<1x16x16xf32>
    %165 = arith.addf %163, %164 : vector<1x16x16xf32>
    %cst_48 = arith.constant dense<0xFF800000> : vector<1x16xf32>
    %166 = vector.multi_reduction <maximumf>, %165, %cst_48 [2] : vector<1x16x16xf32> to vector<1x16xf32>
    %167 = vector.shape_cast %166 : vector<1x16xf32> to vector<1x16x1xf32>
    %168 = vector.broadcast %167 : vector<1x16x1xf32> to vector<1x16x16xf32>
    %169 = arith.subf %165, %168 : vector<1x16x16xf32>
    %170 = math.exp %169 : vector<1x16x16xf32>
    %cst_49 = arith.constant dense<0.000000e+00> : vector<1x16xf32>
    %171 = vector.multi_reduction <add>, %170, %cst_49 [2] : vector<1x16x16xf32> to vector<1x16xf32>
    %172 = vector.shape_cast %171 : vector<1x16xf32> to vector<1x16x1xf32>
    %173 = tpu.reciprocal %172 {approx = true} : vector<1x16x1xf32> -> vector<1x16x1xf32>
    %174 = vector.broadcast %173 : vector<1x16x1xf32> to vector<1x16x16xf32>
    %175 = arith.mulf %170, %174 : vector<1x16x16xf32>
    %176 = arith.truncf %175 : vector<1x16x16xf32> to vector<1x16x16xbf16>
    "tpu.trace_start"() <{level = 10 : i32, message = "bts,bsd->btd"}> : () -> ()
    %cst_50 = arith.constant dense<0.000000e+00> : vector<1x16x64xf32>
    %177 = tpu.matmul %176, %162, %cst_50 {dimension_numbers = #tpu.dot_dimension_numbers<[2], [1], [1], [2], [0, 0, 0, 1, 1, 2], [0], [0]>} : vector<1x16x16xbf16>, vector<1x16x64xbf16>, vector<1x16x64xf32> -> vector<1x16x64xf32>
    "tpu.trace_stop"() : () -> ()
    %178 = arith.truncf %177 : vector<1x16x64xf32> to vector<1x16x64xbf16>
    %c0_51 = arith.constant 0 : index
    %c0_52 = arith.constant 0 : index
    %c320 = arith.constant 320 : index
    %179 = vector.load %arg21[%c0_51, %c0_52, %c320] : memref<1x16x384xbf16, #tpu.memory_space<vmem>>, vector<1x16x64xbf16>
    tpu.vector_store %arg21[%c0_51, %c0_52, %c320], %178 {strides = array<i32>} : memref<1x16x384xbf16, #tpu.memory_space<vmem>>, vector<1x16x64xbf16>,
    %c0_53 = arith.constant 0 : index
    %c0_54 = arith.constant 0 : index
    %c0_55 = arith.constant 0 : index
    %180 = vector.load %arg21[%c0_53, %c0_54, %c0_55] : memref<1x16x384xbf16, #tpu.memory_space<vmem>>, vector<1x16x384xbf16>
    %181 = vector.shape_cast %180 : vector<1x16x384xbf16> to vector<16x384xbf16>
    %182 = arith.index_cast %arg1 : i32 to index
    %c0_56 = arith.constant 0 : index
    %c0_57 = arith.constant 0 : index
    %183 = vector.load %arg7[%182, %c0_56, %c0_57] : memref<6x384x384xbf16, #tpu.memory_space<vmem>>, vector<1x384x384xbf16>
    %184 = vector.shape_cast %183 : vector<1x384x384xbf16> to vector<384x384xbf16>
    %cst_58 = arith.constant dense<0.000000e+00> : vector<16x384xf32>
    %185 = tpu.matmul %181, %184, %cst_58 {dimension_numbers = #tpu.dot_dimension_numbers<[1], [0], [0], [1], [0, 0, 1, 1], [], []>} : vector<16x384xbf16>, vector<384x384xbf16>, vector<16x384xf32> -> vector<16x384xf32>
    %186 = arith.index_cast %arg1 : i32 to index
    %c0_59 = arith.constant 0 : index
    %c0_60 = arith.constant 0 : index
    %187 = vector.load %arg8[%186, %c0_59, %c0_60] : memref<6x1x384xf32, #tpu.memory_space<vmem>>, vector<1x1x384xf32>
    %188 = vector.shape_cast %187 : vector<1x1x384xf32> to vector<1x384xf32>
    %189 = vector.broadcast %188 : vector<1x384xf32> to vector<16x384xf32>
    %190 = arith.addf %185, %189 : vector<16x384xf32>
    %191 = vector.shape_cast %190 : vector<16x384xf32> to vector<1x16x384xf32>
    %192 = arith.addf %3, %191 : vector<1x16x384xf32>
    %193 = arith.index_cast %arg1 : i32 to index
    %c0_61 = arith.constant 0 : index
    %c0_62 = arith.constant 0 : index
    %194 = vector.load %arg9[%193, %c0_61, %c0_62] : memref<6x1x384xf32, #tpu.memory_space<vmem>>, vector<1x1x384xf32>
    %195 = vector.shape_cast %194 : vector<1x1x384xf32> to vector<1x384xf32>
    %196 = arith.index_cast %arg1 : i32 to index
    %c0_63 = arith.constant 0 : index
    %c0_64 = arith.constant 0 : index
    %197 = vector.load %arg10[%196, %c0_63, %c0_64] : memref<6x1x384xf32, #tpu.memory_space<vmem>>, vector<1x1x384xf32>
    %198 = vector.shape_cast %197 : vector<1x1x384xf32> to vector<1x384xf32>
    %cst_65 = arith.constant dense<0.000000e+00> : vector<1x16xf32>
    %199 = vector.multi_reduction <add>, %192, %cst_65 [2] : vector<1x16x384xf32> to vector<1x16xf32>
    %200 = vector.shape_cast %199 : vector<1x16xf32> to vector<1x16x1xf32>
    %cst_66 = arith.constant 3.840000e+02 : f32
    %201 = vector.broadcast %cst_66 : f32 to vector<1x16x1xf32>
    %202 = arith.divf %200, %201 : vector<1x16x1xf32>
    %203 = vector.broadcast %202 : vector<1x16x1xf32> to vector<1x16x384xf32>
    %204 = arith.subf %192, %203 : vector<1x16x384xf32>
    %205 = arith.mulf %204, %204 : vector<1x16x384xf32>
    %cst_67 = arith.constant dense<0.000000e+00> : vector<1x16xf32>
    %206 = vector.multi_reduction <add>, %205, %cst_67 [2] : vector<1x16x384xf32> to vector<1x16xf32>
    %207 = vector.shape_cast %206 : vector<1x16xf32> to vector<1x16x1xf32>
    %cst_68 = arith.constant 3.840000e+02 : f32
    %208 = vector.broadcast %cst_68 : f32 to vector<1x16x1xf32>
    %209 = arith.divf %207, %208 : vector<1x16x1xf32>
    %210 = vector.broadcast %202 : vector<1x16x1xf32> to vector<1x16x384xf32>
    %211 = arith.subf %192, %210 : vector<1x16x384xf32>
    %cst_69 = arith.constant 9.99999974E-6 : f32
    %212 = vector.broadcast %cst_69 : f32 to vector<1x16x1xf32>
    %213 = arith.addf %209, %212 : vector<1x16x1xf32>
    %214 = math.rsqrt %213 : vector<1x16x1xf32>
    %215 = vector.broadcast %214 : vector<1x16x1xf32> to vector<1x16x384xf32>
    %216 = arith.mulf %211, %215 : vector<1x16x384xf32>
    %217 = vector.shape_cast %195 : vector<1x384xf32> to vector<1x1x384xf32>
    %218 = vector.broadcast %217 : vector<1x1x384xf32> to vector<1x16x384xf32>
    %219 = arith.mulf %216, %218 : vector<1x16x384xf32>
    %220 = vector.shape_cast %198 : vector<1x384xf32> to vector<1x1x384xf32>
    %221 = vector.broadcast %220 : vector<1x1x384xf32> to vector<1x16x384xf32>
    %222 = arith.addf %219, %221 : vector<1x16x384xf32>
    %223 = arith.truncf %222 : vector<1x16x384xf32> to vector<1x16x384xbf16>
    %224 = vector.shape_cast %223 : vector<1x16x384xbf16> to vector<16x384xbf16>
    %225 = arith.index_cast %arg1 : i32 to index
    %c0_70 = arith.constant 0 : index
    %c0_71 = arith.constant 0 : index
    %226 = vector.load %arg11[%225, %c0_70, %c0_71] : memref<6x384x1536xbf16, #tpu.memory_space<vmem>>, vector<1x384x1536xbf16>
    %227 = vector.shape_cast %226 : vector<1x384x1536xbf16> to vector<384x1536xbf16>
    %cst_72 = arith.constant dense<0.000000e+00> : vector<16x1536xf32>
    %228 = tpu.matmul %224, %227, %cst_72 {dimension_numbers = #tpu.dot_dimension_numbers<[1], [0], [0], [1], [0, 0, 1, 1], [], []>} : vector<16x384xbf16>, vector<384x1536xbf16>, vector<16x1536xf32> -> vector<16x1536xf32>
    %229 = arith.index_cast %arg1 : i32 to index
    %c0_73 = arith.constant 0 : index
    %c0_74 = arith.constant 0 : index
    %230 = vector.load %arg12[%229, %c0_73, %c0_74] : memref<6x1x1536xf32, #tpu.memory_space<vmem>>, vector<1x1x1536xf32>
    %231 = vector.shape_cast %230 : vector<1x1x1536xf32> to vector<1x1536xf32>
    %232 = vector.broadcast %231 : vector<1x1536xf32> to vector<16x1536xf32>
    %233 = arith.addf %228, %232 : vector<16x1536xf32>
    %cst_75 = arith.constant 0.000000e+00 : f32
    %234 = vector.broadcast %cst_75 : f32 to vector<16x1536xf32>
    %235 = arith.maximumf %233, %234 : vector<16x1536xf32>
    %236 = arith.truncf %235 : vector<16x1536xf32> to vector<16x1536xbf16>
    %237 = arith.index_cast %arg1 : i32 to index
    %c0_76 = arith.constant 0 : index
    %c0_77 = arith.constant 0 : index
    %238 = vector.load %arg13[%237, %c0_76, %c0_77] : memref<6x1536x384xbf16, #tpu.memory_space<vmem>>, vector<1x1536x384xbf16>
    %239 = vector.shape_cast %238 : vector<1x1536x384xbf16> to vector<1536x384xbf16>
    %cst_78 = arith.constant dense<0.000000e+00> : vector<16x384xf32>
    %240 = tpu.matmul %236, %239, %cst_78 {dimension_numbers = #tpu.dot_dimension_numbers<[1], [0], [0], [1], [0, 0, 1, 1], [], []>} : vector<16x1536xbf16>, vector<1536x384xbf16>, vector<16x384xf32> -> vector<16x384xf32>
    %241 = arith.index_cast %arg1 : i32 to index
    %c0_79 = arith.constant 0 : index
    %c0_80 = arith.constant 0 : index
    %242 = vector.load %arg14[%241, %c0_79, %c0_80] : memref<6x1x384xf32, #tpu.memory_space<vmem>>, vector<1x1x384xf32>
    %243 = vector.shape_cast %242 : vector<1x1x384xf32> to vector<1x384xf32>
    %244 = vector.broadcast %243 : vector<1x384xf32> to vector<16x384xf32>
    %245 = arith.addf %240, %244 : vector<16x384xf32>
    %246 = vector.shape_cast %245 : vector<16x384xf32> to vector<1x16x384xf32>
    %247 = arith.addf %192, %246 : vector<1x16x384xf32>
    %c0_81 = arith.constant 0 : index
    %c0_82 = arith.constant 0 : index
    %c0_83 = arith.constant 0 : index
    %248 = vector.load %arg20[%c0_81, %c0_82, %c0_83] : memref<1x16x384xf32, #tpu.memory_space<vmem>>, vector<1x16x384xf32>
    tpu.vector_store %arg20[%c0_81, %c0_82, %c0_83], %247 {strides = array<i32>} : memref<1x16x384xf32, #tpu.memory_space<vmem>>, vector<1x16x384xf32>,
    %c5_i32 = arith.constant 5 : i32
    %249 = arith.cmpi eq, %arg1, %c5_i32 : i32
    %250 = arith.extui %249 : i1 to i32
    %c0_i32_84 = arith.constant 0 : i32
    %251 = arith.cmpi ne, %250, %c0_i32_84 : i32
    scf.if %251 {
      %c0_85 = arith.constant 0 : index
      %c0_86 = arith.constant 0 : index
      %252 = vector.load %arg15[%c0_85, %c0_86] : memref<1x384xf32, #tpu.memory_space<vmem>>, vector<1x384xf32>
      %c0_87 = arith.constant 0 : index
      %c0_88 = arith.constant 0 : index
      %253 = vector.load %arg16[%c0_87, %c0_88] : memref<1x384xf32, #tpu.memory_space<vmem>>, vector<1x384xf32>
      %cst_89 = arith.constant dense<0.000000e+00> : vector<1x16xf32>
      %254 = vector.multi_reduction <add>, %247, %cst_89 [2] : vector<1x16x384xf32> to vector<1x16xf32>
      %255 = vector.shape_cast %254 : vector<1x16xf32> to vector<1x16x1xf32>
      %cst_90 = arith.constant 3.840000e+02 : f32
      %256 = vector.broadcast %cst_90 : f32 to vector<1x16x1xf32>
      %257 = arith.divf %255, %256 : vector<1x16x1xf32>
      %258 = vector.broadcast %257 : vector<1x16x1xf32> to vector<1x16x384xf32>
      %259 = arith.subf %247, %258 : vector<1x16x384xf32>
      %260 = arith.mulf %259, %259 : vector<1x16x384xf32>
      %cst_91 = arith.constant dense<0.000000e+00> : vector<1x16xf32>
      %261 = vector.multi_reduction <add>, %260, %cst_91 [2] : vector<1x16x384xf32> to vector<1x16xf32>
      %262 = vector.shape_cast %261 : vector<1x16xf32> to vector<1x16x1xf32>
      %cst_92 = arith.constant 3.840000e+02 : f32
      %263 = vector.broadcast %cst_92 : f32 to vector<1x16x1xf32>
      %264 = arith.divf %262, %263 : vector<1x16x1xf32>
      %265 = vector.broadcast %257 : vector<1x16x1xf32> to vector<1x16x384xf32>
      %266 = arith.subf %247, %265 : vector<1x16x384xf32>
      %cst_93 = arith.constant 9.99999974E-6 : f32
      %267 = vector.broadcast %cst_93 : f32 to vector<1x16x1xf32>
      %268 = arith.addf %264, %267 : vector<1x16x1xf32>
      %269 = math.rsqrt %268 : vector<1x16x1xf32>
      %270 = vector.broadcast %269 : vector<1x16x1xf32> to vector<1x16x384xf32>
      %271 = arith.mulf %266, %270 : vector<1x16x384xf32>
      %272 = vector.shape_cast %252 : vector<1x384xf32> to vector<1x1x384xf32>
      %273 = vector.broadcast %272 : vector<1x1x384xf32> to vector<1x16x384xf32>
      %274 = arith.mulf %271, %273 : vector<1x16x384xf32>
      %275 = vector.shape_cast %253 : vector<1x384xf32> to vector<1x1x384xf32>
      %276 = vector.broadcast %275 : vector<1x1x384xf32> to vector<1x16x384xf32>
      %277 = arith.addf %274, %276 : vector<1x16x384xf32>
      %278 = arith.truncf %277 : vector<1x16x384xf32> to vector<1x16x384xbf16>
      %279 = vector.shape_cast %278 : vector<1x16x384xbf16> to vector<16x384xbf16>
      %c0_94 = arith.constant 0 : index
      %c0_95 = arith.constant 0 : index
      %280 = vector.load %arg17[%c0_94, %c0_95] : memref<384x128xbf16, #tpu.memory_space<vmem>>, vector<384x128xbf16>
      %cst_96 = arith.constant dense<0.000000e+00> : vector<16x128xf32>
      %281 = tpu.matmul %279, %280, %cst_96 {dimension_numbers = #tpu.dot_dimension_numbers<[1], [0], [0], [1], [0, 0, 1, 1], [], []>} : vector<16x384xbf16>, vector<384x128xbf16>, vector<16x128xf32> -> vector<16x128xf32>
      %c0_97 = arith.constant 0 : index
      %c0_98 = arith.constant 0 : index
      %282 = vector.load %arg18[%c0_97, %c0_98] : memref<1x128xf32, #tpu.memory_space<vmem>>, vector<1x128xf32>
      %283 = vector.broadcast %282 : vector<1x128xf32> to vector<16x128xf32>
      %284 = arith.addf %281, %283 : vector<16x128xf32>
      %285 = vector.shape_cast %284 : vector<16x128xf32> to vector<1x16x128xf32>
      %c0_99 = arith.constant 0 : index
      %c0_100 = arith.constant 0 : index
      %c0_101 = arith.constant 0 : index
      %286 = vector.load %arg19[%c0_99, %c0_100, %c0_101] : memref<1x16x128xf32, #tpu.memory_space<vmem>>, vector<1x16x128xf32>
      tpu.vector_store %arg19[%c0_99, %c0_100, %c0_101], %285 {strides = array<i32>} : memref<1x16x128xf32, #tpu.memory_space<vmem>>, vector<1x16x128xf32>,
    } else {
    }
    return
  }
  func.func @transform_0(%arg0: i32, %arg1: i32) -> (i32, i32, i32) {
    %c0_i32 = arith.constant 0 : i32
    %c0_i32_0 = arith.constant 0 : i32
    %c0_i32_1 = arith.constant 0 : i32
    return %arg0, %c0_i32, %c0_i32_0 : i32, i32, i32
  }
  func.func @transform_1(%arg0: i32, %arg1: i32) -> (i32, i32) {
    %c0_i32 = arith.constant 0 : i32
    %c0_i32_0 = arith.constant 0 : i32
    %c0_i32_1 = arith.constant 0 : i32
    return %c0_i32, %c0_i32_0 : i32, i32
  }
  func.func @transform_2(%arg0: i32, %arg1: i32) -> (i32, i32, i32) {
    %c0_i32 = arith.constant 0 : i32
    %c0_i32_0 = arith.constant 0 : i32
    %c0_i32_1 = arith.constant 0 : i32
    %c0_i32_2 = arith.constant 0 : i32
    return %c0_i32, %c0_i32_0, %c0_i32_1 : i32, i32, i32
  }
  func.func @transform_3(%arg0: i32, %arg1: i32) -> (i32, i32, i32) {
    %c0_i32 = arith.constant 0 : i32
    %c0_i32_0 = arith.constant 0 : i32
    %c0_i32_1 = arith.constant 0 : i32
    %c0_i32_2 = arith.constant 0 : i32
    return %c0_i32, %c0_i32_0, %c0_i32_1 : i32, i32, i32
  }
  func.func @transform_4(%arg0: i32, %arg1: i32) -> (i32, i32, i32) {
    %c0_i32 = arith.constant 0 : i32
    %c0_i32_0 = arith.constant 0 : i32
    %c0_i32_1 = arith.constant 0 : i32
    %c0_i32_2 = arith.constant 0 : i32
    return %c0_i32, %c0_i32_0, %c0_i32_1 : i32, i32, i32
  }
  func.func @transform_5(%arg0: i32, %arg1: i32) -> (i32, i32, i32) {
    %c0_i32 = arith.constant 0 : i32
    %c0_i32_0 = arith.constant 0 : i32
    %c0_i32_1 = arith.constant 0 : i32
    %c0_i32_2 = arith.constant 0 : i32
    return %c0_i32, %c0_i32_0, %c0_i32_1 : i32, i32, i32
  }
  func.func @transform_6(%arg0: i32, %arg1: i32) -> (i32, i32, i32) {
    %c0_i32 = arith.constant 0 : i32
    %c0_i32_0 = arith.constant 0 : i32
    %c0_i32_1 = arith.constant 0 : i32
    %c0_i32_2 = arith.constant 0 : i32
    return %c0_i32, %c0_i32_0, %c0_i32_1 : i32, i32, i32
  }
  func.func @transform_7(%arg0: i32, %arg1: i32) -> (i32, i32, i32) {
    %c0_i32 = arith.constant 0 : i32
    %c0_i32_0 = arith.constant 0 : i32
    %c0_i32_1 = arith.constant 0 : i32
    %c0_i32_2 = arith.constant 0 : i32
    return %c0_i32, %c0_i32_0, %c0_i32_1 : i32, i32, i32
  }
  func.func @transform_8(%arg0: i32, %arg1: i32) -> (i32, i32, i32) {
    %c0_i32 = arith.constant 0 : i32
    %c0_i32_0 = arith.constant 0 : i32
    %c0_i32_1 = arith.constant 0 : i32
    %c0_i32_2 = arith.constant 0 : i32
    return %c0_i32, %c0_i32_0, %c0_i32_1 : i32, i32, i32
  }
  func.func @transform_9(%arg0: i32, %arg1: i32) -> (i32, i32, i32) {
    %c0_i32 = arith.constant 0 : i32
    %c0_i32_0 = arith.constant 0 : i32
    %c0_i32_1 = arith.constant 0 : i32
    %c0_i32_2 = arith.constant 0 : i32
    return %c0_i32, %c0_i32_0, %c0_i32_1 : i32, i32, i32
  }
  func.func @transform_10(%arg0: i32, %arg1: i32) -> (i32, i32, i32) {
    %c0_i32 = arith.constant 0 : i32
    %c0_i32_0 = arith.constant 0 : i32
    %c0_i32_1 = arith.constant 0 : i32
    %c0_i32_2 = arith.constant 0 : i32
    return %c0_i32, %c0_i32_0, %c0_i32_1 : i32, i32, i32
  }
  func.func @transform_11(%arg0: i32, %arg1: i32) -> (i32, i32, i32) {
    %c0_i32 = arith.constant 0 : i32
    %c0_i32_0 = arith.constant 0 : i32
    %c0_i32_1 = arith.constant 0 : i32
    %c0_i32_2 = arith.constant 0 : i32
    return %c0_i32, %c0_i32_0, %c0_i32_1 : i32, i32, i32
  }
  func.func @transform_12(%arg0: i32, %arg1: i32) -> (i32, i32, i32) {
    %c0_i32 = arith.constant 0 : i32
    %c0_i32_0 = arith.constant 0 : i32
    %c0_i32_1 = arith.constant 0 : i32
    %c0_i32_2 = arith.constant 0 : i32
    return %c0_i32, %c0_i32_0, %c0_i32_1 : i32, i32, i32
  }
  func.func @transform_13(%arg0: i32, %arg1: i32) -> (i32, i32) {
    %c0_i32 = arith.constant 0 : i32
    %c0_i32_0 = arith.constant 0 : i32
    %c0_i32_1 = arith.constant 0 : i32
    return %c0_i32, %c0_i32_0 : i32, i32
  }
  func.func @transform_14(%arg0: i32, %arg1: i32) -> (i32, i32) {
    %c0_i32 = arith.constant 0 : i32
    %c0_i32_0 = arith.constant 0 : i32
    %c0_i32_1 = arith.constant 0 : i32
    return %c0_i32, %c0_i32_0 : i32, i32
  }
  func.func @transform_15(%arg0: i32, %arg1: i32) -> (i32, i32) {
    %c0_i32 = arith.constant 0 : i32
    %c0_i32_0 = arith.constant 0 : i32
    %c0_i32_1 = arith.constant 0 : i32
    return %c0_i32, %c0_i32_0 : i32, i32
  }
  func.func @transform_16(%arg0: i32, %arg1: i32) -> (i32, i32) {
    %c0_i32 = arith.constant 0 : i32
    %c0_i32_0 = arith.constant 0 : i32
    %c0_i32_1 = arith.constant 0 : i32
    return %c0_i32, %c0_i32_0 : i32, i32
  }
  func.func @transform_17(%arg0: i32, %arg1: i32) -> (i32, i32, i32) {
    %c0_i32 = arith.constant 0 : i32
    %c0_i32_0 = arith.constant 0 : i32
    %c0_i32_1 = arith.constant 0 : i32
    return %arg0, %c0_i32, %c0_i32_0 : i32, i32, i32
  }
}

</mosaic_0001>

<llo_original>
// kernel: tpu_custom_call.1
$region0: #{tpu_custom_call.1}
  #allocation0 [shape = 'u32[]', space=smem, size = 0x4, offset = 0x4, fixed_abs, tag = 'smem constant byte address 0x4 - core index']
  #allocation1 [shape = 'u32[72,128]{1,0:T(1,128)}', space=vmem, size = 0x9000, scoped, tag = 'internal scratch']
  #allocation2 [shape = 'f32[1,16,384]{2,1,0:T(8,128)}', space=vmem, size = 0x6000, scoped, tag = 'scratch operand']
  #allocation3 [shape = 'bf16[1,16,384]{2,1,0:T(8,128)(2,1)}', space=vmem, size = 0x3000, scoped, tag = 'scratch operand']
  %s0 = inlined_call_operand.hbm [shape: f32[2,16,384], index: 0, kind: input, shape index: {}]
  %s1 = inlined_call_operand.hbm [shape: f32[16,16], index: 1, kind: input, shape index: {}]
  %s2 = inlined_call_operand.hbm [shape: f32[6,1,384], index: 2, kind: input, shape index: {}]
  %s3 = inlined_call_operand.hbm [shape: f32[6,1,384], index: 3, kind: input, shape index: {}]
  %s4 = inlined_call_operand.hbm [shape: bf16[6,384,1152], index: 4, kind: input, shape index: {}]
  %s5 = inlined_call_operand.hbm [shape: bf16[6,384,384], index: 5, kind: input, shape index: {}]
  %s6 = inlined_call_operand.hbm [shape: f32[6,1,384], index: 6, kind: input, shape index: {}]
  %s7 = inlined_call_operand.hbm [shape: f32[6,1,384], index: 7, kind: input, shape index: {}]
  %s8 = inlined_call_operand.hbm [shape: f32[6,1,384], index: 8, kind: input, shape index: {}]
  %s9 = inlined_call_operand.hbm [shape: bf16[6,384,1536], index: 9, kind: input, shape index: {}]
  %s10 = inlined_call_operand.hbm [shape: f32[6,1,1536], index: 10, kind: input, shape index: {}]
  %s11 = inlined_call_operand.hbm [shape: bf16[6,1536,384], index: 11, kind: input, shape index: {}]
  %s12 = inlined_call_operand.hbm [shape: f32[6,1,384], index: 12, kind: input, shape index: {}]
  %s13 = inlined_call_operand.hbm [shape: f32[1,384], index: 13, kind: input, shape index: {}]
  %s14 = inlined_call_operand.hbm [shape: f32[1,384], index: 14, kind: input, shape index: {}]
  %s15 = inlined_call_operand.hbm [shape: bf16[384,128], index: 15, kind: input, shape index: {}]
  %s16 = inlined_call_operand.hbm [shape: f32[1,128], index: 16, kind: input, shape index: {}]
  %s17 = inlined_call_operand.hbm [shape: f32[2,16,128], index: 17, kind: output, shape index: {}]
  %s18 = sld [smem:[#allocation0]]
  $region177: #{tpu_custom_call.1} parent=0
    _
  %s20 = ssub.s32 1, %s18
  %s21 = scalar_select 0, %s20, %s18
  $region1: #{tpu_custom_call.1} parent=0
    #allocation4 [shape = 'u8[49152]{0}', space=vmem, size = 0xc000, scoped, tag = 'input window, operand 0']
    #allocation5 [shape = 's32[2]{0}', space=sflag, size = 0x8, scoped, tag = 'scoped memory for tpu_custom_call.1']
    #allocation6 [shape = 's32[2]{0}', space=sflag, size = 0x8, scoped, tag = 'scoped memory for tpu_custom_call.1']
    #allocation7 [shape = 'u8[8192]{0}', space=vmem, size = 0x2000, scoped, tag = 'input window, operand 1, single buffered']
    #allocation8 [shape = 's32[1]{0}', space=sflag, size = 0x4, scoped, tag = 'scoped memory for tpu_custom_call.1']
    #allocation9 [shape = 'u8[9216]{0}', space=vmem, size = 0x2400, scoped, tag = 'input window, operand 2, single buffered']
    #allocation10 [shape = 'u8[9216]{0}', space=vmem, size = 0x2400, scoped, tag = 'input window, operand 3, single buffered']
    #allocation11 [shape = 's32[1]{0}', space=sflag, size = 0x4, scoped, tag = 'scoped memory for tpu_custom_call.1']
    #allocation12 [shape = 'u8[5308416]{0}', space=vmem, size = 0x510000, scoped, tag = 'input window, operand 4, single buffered']
    #allocation13 [shape = 'u8[1769472]{0}', space=vmem, size = 0x1b0000, scoped, tag = 'input window, operand 5, single buffered']
    #allocation14 [shape = 's32[1]{0}', space=sflag, size = 0x4, scoped, tag = 'scoped memory for tpu_custom_call.1']
    #allocation15 [shape = 'u8[9216]{0}', space=vmem, size = 0x2400, scoped, tag = 'input window, operand 6, single buffered']
    #allocation16 [shape = 'u8[9216]{0}', space=vmem, size = 0x2400, scoped, tag = 'input window, operand 7, single buffered']
    #allocation17 [shape = 's32[1]{0}', space=sflag, size = 0x4, scoped, tag = 'scoped memory for tpu_custom_call.1']
    #allocation18 [shape = 'u8[9216]{0}', space=vmem, size = 0x2400, scoped, tag = 'input window, operand 8, single buffered']
    #allocation19 [shape = 'u8[7077888]{0}', space=vmem, size = 0x6c0000, scoped, tag = 'input window, operand 9, single buffered']
    #allocation20 [shape = 's32[1]{0}', space=sflag, size = 0x4, scoped, tag = 'scoped memory for tpu_custom_call.1']
    #allocation21 [shape = 'u8[36864]{0}', space=vmem, size = 0x9000, scoped, tag = 'input window, operand 10, single buffered']
    #allocation22 [shape = 'u8[7077888]{0}', space=vmem, size = 0x6c0000, scoped, tag = 'input window, operand 11, single buffered']
    #allocation23 [shape = 's32[1]{0}', space=sflag, size = 0x4, scoped, tag = 'scoped memory for tpu_custom_call.1']
    #allocation24 [shape = 'u8[9216]{0}', space=vmem, size = 0x2400, scoped, tag = 'input window, operand 12, single buffered']
    #allocation25 [shape = 'u8[1536]{0}', space=vmem, size = 0x800, scoped, tag = 'input window, operand 13, single buffered']
    #allocation26 [shape = 's32[1]{0}', space=sflag, size = 0x4, scoped, tag = 'scoped memory for tpu_custom_call.1']
    #allocation27 [shape = 'u8[1536]{0}', space=vmem, size = 0x800, scoped, tag = 'input window, operand 14, single buffered']
    #allocation28 [shape = 'u8[98304]{0}', space=vmem, size = 0x18000, scoped, tag = 'input window, operand 15, single buffered']
    #allocation29 [shape = 's32[1]{0}', space=sflag, size = 0x4, scoped, tag = 'scoped memory for tpu_custom_call.1']
    #allocation30 [shape = 'u8[512]{0}', space=vmem, size = 0x400, scoped, tag = 'input window, operand 16, single buffered']
    #allocation31 [shape = 'u8[16384]{0}', space=vmem, size = 0x4000, scoped, tag = 'output window, operand 0']
    %22 = vsyncpa [#allocation5], 0
    %s23 = scalar_lea.sflag [#allocation5], 1
    %24 = vsyncpa %s23, 0
    %25 = vsyncpa [#allocation8], 0
    %26 = vsyncpa [#allocation11], 0
    %27 = vsyncpa [#allocation14], 0
    %28 = vsyncpa [#allocation17], 0
    %29 = vsyncpa [#allocation20], 0
    %30 = vsyncpa [#allocation23], 0
    %31 = vsyncpa [#allocation26], 0
    %32 = vsyncpa [#allocation29], 0
    %33 = vsyncpa [#allocation6], 0
    %s34 = scalar_lea.sflag [#allocation6], 1
    %35 = vsyncpa %s34, 0
    loop: start=0, step=1, limit=14
    $region2: #{tpu_custom_call.1} parent=1 // loop_pre_header
      _
    $region3: #{tpu_custom_call.1} parent=1 // loop_header
      %s37 = sphi 0, %s41
      %p38 = scmp.ge.s32.totalorder %s37, 14
      %s44 = sphi 0, %s56
      %s45 = sphi 0, %s52
      %s46 = sphi 0, %s44
      %s47 = sphi 0, %s45
      %s48 = sphi 0, %s46
      %s49 = sphi 0, %s47
      %s59 = sphi 0, %s61
      %s62 = sphi 0, %s59
      %s63 = sphi 0, %s62
      %s79 = sphi 0, %s63
      %s83 = sphi 0, %s83
      %s85 = sphi 0, %s83
      %s86 = sphi 0, %s85
      %s100 = sphi 0, %s86
      %s104 = sphi 0, %s104
      %s106 = sphi 0, %s104
      %s107 = sphi 0, %s106
      %s121 = sphi 0, %s107
      %s125 = sphi 0, %s125
      %s127 = sphi 0, %s125
      %s128 = sphi 0, %s127
      %s142 = sphi 0, %s128
      %s146 = sphi 0, %s146
      %s148 = sphi 0, %s146
      %s149 = sphi 0, %s148
      %s163 = sphi 0, %s149
      %s167 = sphi 0, %s167
      %s169 = sphi 0, %s167
      %s170 = sphi 0, %s169
      %s184 = sphi 0, %s170
      %s188 = sphi 0, %s188
      %s190 = sphi 0, %s188
      %s191 = sphi 0, %s190
      %s205 = sphi 0, %s191
      %s209 = sphi 0, %s209
      %s211 = sphi 0, %s209
      %s212 = sphi 0, %s211
      %s226 = sphi 0, %s212
      %s230 = sphi 0, %s230
      %s232 = sphi 0, %s230
      %s233 = sphi 0, %s232
      %s247 = sphi 0, %s233
      %s251 = sphi 0, %s251
      %s253 = sphi 0, %s251
      %s254 = sphi 0, %s253
      %s268 = sphi 0, %s254
      %s272 = sphi 0, %s272
      %s274 = sphi 0, %s272
      %s275 = sphi 0, %s274
      %s289 = sphi 0, %s275
      %s293 = sphi 0, %s293
      %s295 = sphi 0, %s293
      %s296 = sphi 0, %s295
      %s310 = sphi 0, %s296
      %s314 = sphi 0, %s314
      %s316 = sphi 0, %s314
      %s317 = sphi 0, %s316
      %s331 = sphi 0, %s317
      %s335 = sphi 0, %s335
      %s337 = sphi 0, %s335
      %s338 = sphi 0, %s337
      %s352 = sphi 0, %s338
      %s356 = sphi 0, %s356
      %s358 = sphi 0, %s356
      %s359 = sphi 0, %s358
      %s373 = sphi 0, %s359
      %s377 = sphi 0, %s377
      %s379 = sphi 0, %s377
      %s380 = sphi 0, %s379
      %s394 = sphi 0, %s380
      %s398 = sphi 0, %s398
      %s400 = sphi 0, %s398
      %s401 = sphi 0, %s400
      %s415 = sphi 0, %s401
      %s421 = sphi 0, %s423
      %s424 = sphi 0, %s421
      %s425 = sphi 0, %s424
      %s441 = sphi 0, %s425
    $region4: #{tpu_custom_call.1} parent=1 // loop_header_branch
      %40 = sbr.rel (%p38) target = $region8
    $region5: #{tpu_custom_call.1} parent=1 // loop_body
      %s42 = ssub.s32 %s37, 1
      %s43 = ssub.s32 %s37, 2
      %s50 = sadd.s32 1, %s45
      %p51 = scmp.ge.s32.totalorder %s50, 6
      %s52 = scalar_select %p51, 0, %s50
      %s53 = sadd.s32 1, %s44
      %s54 = scalar_select %p51, %s53, %s44
      %p55 = scmp.ge.s32.totalorder %s54, 2
      %s56 = scalar_select %p55, 0, %s54
      %s57 = ssub.s32 %s44, %s56
      %p58 = scmp.eq.s32.totalorder %s57, 0
      %s60 = sadd.s32 %s59, 1
      %s61 = scalar_select %p58, %s59, %s60
      %p64 = pneg %p58
      %p65 = scmp.eq.s32.totalorder %s37, 11
      %p66 = por %p64, %p65
      %p67 = scmp.ne.s32.totalorder %s59, %s62
      %p68 = scmp.eq.s32.totalorder %s37, 0
      %p69 = por %p67, %p68
      %p70 = scmp.ne.s32.totalorder %s59, %s62
      %p71 = scmp.eq.s32.totalorder %s42, 11
      %p72 = por %p70, %p71
      %p73 = scmp.ne.s32.totalorder %s62, %s63
      %p74 = scmp.eq.s32.totalorder %s42, 0
      %p75 = por %p73, %p74
      %p76 = scmp.ne.s32.totalorder %s62, %s63
      %p77 = scmp.eq.s32.totalorder %s43, 11
      %p78 = por %p76, %p77
      %p80 = scmp.ne.s32.totalorder %s63, %s79
      %p81 = scmp.eq.s32.totalorder %s43, 0
      %p82 = por %p80, %p81
      %s84 = sadd.s32 %s83, 1
      %p87 = scmp.eq.s32.totalorder %s37, 11
      %p88 = scmp.ne.s32.totalorder %s83, %s85
      %p89 = scmp.eq.s32.totalorder %s37, 0
      %p90 = por %p88, %p89
      %p91 = scmp.ne.s32.totalorder %s83, %s85
      %p92 = scmp.eq.s32.totalorder %s42, 11
      %p93 = por %p91, %p92
      %p94 = scmp.ne.s32.totalorder %s85, %s86
      %p95 = scmp.eq.s32.totalorder %s42, 0
      %p96 = por %p94, %p95
      %p97 = scmp.ne.s32.totalorder %s85, %s86
      %p98 = scmp.eq.s32.totalorder %s43, 11
      %p99 = por %p97, %p98
      %p101 = scmp.ne.s32.totalorder %s86, %s100
      %p102 = scmp.eq.s32.totalorder %s43, 0
      %p103 = por %p101, %p102
      %s105 = sadd.s32 %s104, 1
      %p108 = scmp.eq.s32.totalorder %s37, 11
      %p109 = scmp.ne.s32.totalorder %s104, %s106
      %p110 = scmp.eq.s32.totalorder %s37, 0
      %p111 = por %p109, %p110
      %p112 = scmp.ne.s32.totalorder %s104, %s106
      %p113 = scmp.eq.s32.totalorder %s42, 11
      %p114 = por %p112, %p113
      %p115 = scmp.ne.s32.totalorder %s106, %s107
      %p116 = scmp.eq.s32.totalorder %s42, 0
      %p117 = por %p115, %p116
      %p118 = scmp.ne.s32.totalorder %s106, %s107
      %p119 = scmp.eq.s32.totalorder %s43, 11
      %p120 = por %p118, %p119
      %p122 = scmp.ne.s32.totalorder %s107, %s121
      %p123 = scmp.eq.s32.totalorder %s43, 0
      %p124 = por %p122, %p123
      %s126 = sadd.s32 %s125, 1
      %p129 = scmp.eq.s32.totalorder %s37, 11
      %p130 = scmp.ne.s32.totalorder %s125, %s127
      %p131 = scmp.eq.s32.totalorder %s37, 0
      %p132 = por %p130, %p131
      %p133 = scmp.ne.s32.totalorder %s125, %s127
      %p134 = scmp.eq.s32.totalorder %s42, 11
      %p135 = por %p133, %p134
      %p136 = scmp.ne.s32.totalorder %s127, %s128
      %p137 = scmp.eq.s32.totalorder %s42, 0
      %p138 = por %p136, %p137
      %p139 = scmp.ne.s32.totalorder %s127, %s128
      %p140 = scmp.eq.s32.totalorder %s43, 11
      %p141 = por %p139, %p140
      %p143 = scmp.ne.s32.totalorder %s128, %s142
      %p144 = scmp.eq.s32.totalorder %s43, 0
      %p145 = por %p143, %p144
      %s147 = sadd.s32 %s146, 1
      %p150 = scmp.eq.s32.totalorder %s37, 11
      %p151 = scmp.ne.s32.totalorder %s146, %s148
      %p152 = scmp.eq.s32.totalorder %s37, 0
      %p153 = por %p151, %p152
      %p154 = scmp.ne.s32.totalorder %s146, %s148
      %p155 = scmp.eq.s32.totalorder %s42, 11
      %p156 = por %p154, %p155
      %p157 = scmp.ne.s32.totalorder %s148, %s149
      %p158 = scmp.eq.s32.totalorder %s42, 0
      %p159 = por %p157, %p158
      %p160 = scmp.ne.s32.totalorder %s148, %s149
      %p161 = scmp.eq.s32.totalorder %s43, 11
      %p162 = por %p160, %p161
      %p164 = scmp.ne.s32.totalorder %s149, %s163
      %p165 = scmp.eq.s32.totalorder %s43, 0
      %p166 = por %p164, %p165
      %s168 = sadd.s32 %s167, 1
      %p171 = scmp.eq.s32.totalorder %s37, 11
      %p172 = scmp.ne.s32.totalorder %s167, %s169
      %p173 = scmp.eq.s32.totalorder %s37, 0
      %p174 = por %p172, %p173
      %p175 = scmp.ne.s32.totalorder %s167, %s169
      %p176 = scmp.eq.s32.totalorder %s42, 11
      %p177 = por %p175, %p176
      %p178 = scmp.ne.s32.totalorder %s169, %s170
      %p179 = scmp.eq.s32.totalorder %s42, 0
      %p180 = por %p178, %p179
      %p181 = scmp.ne.s32.totalorder %s169, %s170
      %p182 = scmp.eq.s32.totalorder %s43, 11
      %p183 = por %p181, %p182
      %p185 = scmp.ne.s32.totalorder %s170, %s184
      %p186 = scmp.eq.s32.totalorder %s43, 0
      %p187 = por %p185, %p186
      %s189 = sadd.s32 %s188, 1
      %p192 = scmp.eq.s32.totalorder %s37, 11
      %p193 = scmp.ne.s32.totalorder %s188, %s190
      %p194 = scmp.eq.s32.totalorder %s37, 0
      %p195 = por %p193, %p194
      %p196 = scmp.ne.s32.totalorder %s188, %s190
      %p197 = scmp.eq.s32.totalorder %s42, 11
      %p198 = por %p196, %p197
      %p199 = scmp.ne.s32.totalorder %s190, %s191
      %p200 = scmp.eq.s32.totalorder %s42, 0
      %p201 = por %p199, %p200
      %p202 = scmp.ne.s32.totalorder %s190, %s191
      %p203 = scmp.eq.s32.totalorder %s43, 11
      %p204 = por %p202, %p203
      %p206 = scmp.ne.s32.totalorder %s191, %s205
      %p207 = scmp.eq.s32.totalorder %s43, 0
      %p208 = por %p206, %p207
      %s210 = sadd.s32 %s209, 1
      %p213 = scmp.eq.s32.totalorder %s37, 11
      %p214 = scmp.ne.s32.totalorder %s209, %s211
      %p215 = scmp.eq.s32.totalorder %s37, 0
      %p216 = por %p214, %p215
      %p217 = scmp.ne.s32.totalorder %s209, %s211
      %p218 = scmp.eq.s32.totalorder %s42, 11
      %p219 = por %p217, %p218
      %p220 = scmp.ne.s32.totalorder %s211, %s212
      %p221 = scmp.eq.s32.totalorder %s42, 0
      %p222 = por %p220, %p221
      %p223 = scmp.ne.s32.totalorder %s211, %s212
      %p224 = scmp.eq.s32.totalorder %s43, 11
      %p225 = por %p223, %p224
      %p227 = scmp.ne.s32.totalorder %s212, %s226
      %p228 = scmp.eq.s32.totalorder %s43, 0
      %p229 = por %p227, %p228
      %s231 = sadd.s32 %s230, 1
      %p234 = scmp.eq.s32.totalorder %s37, 11
      %p235 = scmp.ne.s32.totalorder %s230, %s232
      %p236 = scmp.eq.s32.totalorder %s37, 0
      %p237 = por %p235, %p236
      %p238 = scmp.ne.s32.totalorder %s230, %s232
      %p239 = scmp.eq.s32.totalorder %s42, 11
      %p240 = por %p238, %p239
      %p241 = scmp.ne.s32.totalorder %s232, %s233
      %p242 = scmp.eq.s32.totalorder %s42, 0
      %p243 = por %p241, %p242
      %p244 = scmp.ne.s32.totalorder %s232, %s233
      %p245 = scmp.eq.s32.totalorder %s43, 11
      %p246 = por %p244, %p245
      %p248 = scmp.ne.s32.totalorder %s233, %s247
      %p249 = scmp.eq.s32.totalorder %s43, 0
      %p250 = por %p248, %p249
      %s252 = sadd.s32 %s251, 1
      %p255 = scmp.eq.s32.totalorder %s37, 11
      %p256 = scmp.ne.s32.totalorder %s251, %s253
      %p257 = scmp.eq.s32.totalorder %s37, 0
      %p258 = por %p256, %p257
      %p259 = scmp.ne.s32.totalorder %s251, %s253
      %p260 = scmp.eq.s32.totalorder %s42, 11
      %p261 = por %p259, %p260
      %p262 = scmp.ne.s32.totalorder %s253, %s254
      %p263 = scmp.eq.s32.totalorder %s42, 0
      %p264 = por %p262, %p263
      %p265 = scmp.ne.s32.totalorder %s253, %s254
      %p266 = scmp.eq.s32.totalorder %s43, 11
      %p267 = por %p265, %p266
      %p269 = scmp.ne.s32.totalorder %s254, %s268
      %p270 = scmp.eq.s32.totalorder %s43, 0
      %p271 = por %p269, %p270
      %s273 = sadd.s32 %s272, 1
      %p276 = scmp.eq.s32.totalorder %s37, 11
      %p277 = scmp.ne.s32.totalorder %s272, %s274
      %p278 = scmp.eq.s32.totalorder %s37, 0
      %p279 = por %p277, %p278
      %p280 = scmp.ne.s32.totalorder %s272, %s274
      %p281 = scmp.eq.s32.totalorder %s42, 11
      %p282 = por %p280, %p281
      %p283 = scmp.ne.s32.totalorder %s274, %s275
      %p284 = scmp.eq.s32.totalorder %s42, 0
      %p285 = por %p283, %p284
      %p286 = scmp.ne.s32.totalorder %s274, %s275
      %p287 = scmp.eq.s32.totalorder %s43, 11
      %p288 = por %p286, %p287
      %p290 = scmp.ne.s32.totalorder %s275, %s289
      %p291 = scmp.eq.s32.totalorder %s43, 0
      %p292 = por %p290, %p291
      %s294 = sadd.s32 %s293, 1
      %p297 = scmp.eq.s32.totalorder %s37, 11
      %p298 = scmp.ne.s32.totalorder %s293, %s295
      %p299 = scmp.eq.s32.totalorder %s37, 0
      %p300 = por %p298, %p299
      %p301 = scmp.ne.s32.totalorder %s293, %s295
      %p302 = scmp.eq.s32.totalorder %s42, 11
      %p303 = por %p301, %p302
      %p304 = scmp.ne.s32.totalorder %s295, %s296
      %p305 = scmp.eq.s32.totalorder %s42, 0
      %p306 = por %p304, %p305
      %p307 = scmp.ne.s32.totalorder %s295, %s296
      %p308 = scmp.eq.s32.totalorder %s43, 11
      %p309 = por %p307, %p308
      %p311 = scmp.ne.s32.totalorder %s296, %s310
      %p312 = scmp.eq.s32.totalorder %s43, 0
      %p313 = por %p311, %p312
      %s315 = sadd.s32 %s314, 1
      %p318 = scmp.eq.s32.totalorder %s37, 11
      %p319 = scmp.ne.s32.totalorder %s314, %s316
      %p320 = scmp.eq.s32.totalorder %s37, 0
      %p321 = por %p319, %p320
      %p322 = scmp.ne.s32.totalorder %s314, %s316
      %p323 = scmp.eq.s32.totalorder %s42, 11
      %p324 = por %p322, %p323
      %p325 = scmp.ne.s32.totalorder %s316, %s317
      %p326 = scmp.eq.s32.totalorder %s42, 0
      %p327 = por %p325, %p326
      %p328 = scmp.ne.s32.totalorder %s316, %s317
      %p329 = scmp.eq.s32.totalorder %s43, 11
      %p330 = por %p328, %p329
      %p332 = scmp.ne.s32.totalorder %s317, %s331
      %p333 = scmp.eq.s32.totalorder %s43, 0
      %p334 = por %p332, %p333
      %s336 = sadd.s32 %s335, 1
      %p339 = scmp.eq.s32.totalorder %s37, 11
      %p340 = scmp.ne.s32.totalorder %s335, %s337
      %p341 = scmp.eq.s32.totalorder %s37, 0
      %p342 = por %p340, %p341
      %p343 = scmp.ne.s32.totalorder %s335, %s337
      %p344 = scmp.eq.s32.totalorder %s42, 11
      %p345 = por %p343, %p344
      %p346 = scmp.ne.s32.totalorder %s337, %s338
      %p347 = scmp.eq.s32.totalorder %s42, 0
      %p348 = por %p346, %p347
      %p349 = scmp.ne.s32.totalorder %s337, %s338
      %p350 = scmp.eq.s32.totalorder %s43, 11
      %p351 = por %p349, %p350
      %p353 = scmp.ne.s32.totalorder %s338, %s352
      %p354 = scmp.eq.s32.totalorder %s43, 0
      %p355 = por %p353, %p354
      %s357 = sadd.s32 %s356, 1
      %p360 = scmp.eq.s32.totalorder %s37, 11
      %p361 = scmp.ne.s32.totalorder %s356, %s358
      %p362 = scmp.eq.s32.totalorder %s37, 0
      %p363 = por %p361, %p362
      %p364 = scmp.ne.s32.totalorder %s356, %s358
      %p365 = scmp.eq.s32.totalorder %s42, 11
      %p366 = por %p364, %p365
      %p367 = scmp.ne.s32.totalorder %s358, %s359
      %p368 = scmp.eq.s32.totalorder %s42, 0
      %p369 = por %p367, %p368
      %p370 = scmp.ne.s32.totalorder %s358, %s359
      %p371 = scmp.eq.s32.totalorder %s43, 11
      %p372 = por %p370, %p371
      %p374 = scmp.ne.s32.totalorder %s359, %s373
      %p375 = scmp.eq.s32.totalorder %s43, 0
      %p376 = por %p374, %p375
      %s378 = sadd.s32 %s377, 1
      %p381 = scmp.eq.s32.totalorder %s37, 11
      %p382 = scmp.ne.s32.totalorder %s377, %s379
      %p383 = scmp.eq.s32.totalorder %s37, 0
      %p384 = por %p382, %p383
      %p385 = scmp.ne.s32.totalorder %s377, %s379
      %p386 = scmp.eq.s32.totalorder %s42, 11
      %p387 = por %p385, %p386
      %p388 = scmp.ne.s32.totalorder %s379, %s380
      %p389 = scmp.eq.s32.totalorder %s42, 0
      %p390 = por %p388, %p389
      %p391 = scmp.ne.s32.totalorder %s379, %s380
      %p392 = scmp.eq.s32.totalorder %s43, 11
      %p393 = por %p391, %p392
      %p395 = scmp.ne.s32.totalorder %s380, %s394
      %p396 = scmp.eq.s32.totalorder %s43, 0
      %p397 = por %p395, %p396
      %s399 = sadd.s32 %s398, 1
      %p402 = scmp.eq.s32.totalorder %s37, 11
      %p403 = scmp.ne.s32.totalorder %s398, %s400
      %p404 = scmp.eq.s32.totalorder %s37, 0
      %p405 = por %p403, %p404
      %p406 = scmp.ne.s32.totalorder %s398, %s400
      %p407 = scmp.eq.s32.totalorder %s42, 11
      %p408 = por %p406, %p407
      %p409 = scmp.ne.s32.totalorder %s400, %s401
      %p410 = scmp.eq.s32.totalorder %s42, 0
      %p411 = por %p409, %p410
      %p412 = scmp.ne.s32.totalorder %s400, %s401
      %p413 = scmp.eq.s32.totalorder %s43, 11
      %p414 = por %p412, %p413
      %p416 = scmp.ne.s32.totalorder %s401, %s415
      %p417 = scmp.eq.s32.totalorder %s43, 0
      %p418 = por %p416, %p417
      %s419 = ssub.s32 %s44, %s56
      %p420 = scmp.eq.s32.totalorder %s419, 0
      %s422 = sadd.s32 %s421, 1
      %s423 = scalar_select %p420, %s421, %s422
      %p426 = pneg %p420
      %p427 = scmp.eq.s32.totalorder %s37, 11
      %p428 = por %p426, %p427
      %p429 = scmp.ne.s32.totalorder %s421, %s424
      %p430 = scmp.eq.s32.totalorder %s37, 0
      %p431 = por %p429, %p430
      %p432 = scmp.ne.s32.totalorder %s421, %s424
      %p433 = scmp.eq.s32.totalorder %s42, 11
      %p434 = por %p432, %p433
      %p435 = scmp.ne.s32.totalorder %s424, %s425
      %p436 = scmp.eq.s32.totalorder %s42, 0
      %p437 = por %p435, %p436
      %p438 = scmp.ne.s32.totalorder %s424, %s425
      %p439 = scmp.eq.s32.totalorder %s43, 11
      %p440 = por %p438, %p439
      %p442 = scmp.ne.s32.totalorder %s425, %s441
      %p443 = scmp.eq.s32.totalorder %s43, 0
      %p444 = por %p442, %p443
      %p445 = scmp.le.s32.totalorder 1, %s37
      %p446 = scmp.lt.s32.totalorder %s37, 13
      %p447 = pnand %p445, %p446
      %p448 = pneg %p447
      // Predicated region
      $region9: #{tpu_custom_call.1} parent=5 // pred_check
        _
      $region10: #{tpu_custom_call.1} parent=5 // pred_check_branch
        %450 = sbr.rel (%p447) target = $region12
      $region11: #{tpu_custom_call.1} parent=5 // pred_region
        %s451 = ssub.s32 %s37, 1
        // Predicated region
        $region13: #{tpu_custom_call.1} parent=11 // pred_check
          %p452 = pneg %p96
        $region14: #{tpu_custom_call.1} parent=11 // pred_check_branch
          %454 = sbr.rel (%p452) target = $region16
        $region15: #{tpu_custom_call.1} parent=11 // pred_region
          %456 = vsyncadd [#allocation8], 0
          %s457 = sshll.u32 %s1, 4
          %s458 = int_to_ptr.hbm [resolvable:$true] %s457
          %s459 = sshll.u32 [#allocation7], 4
          %s460 = int_to_ptr.vmem [resolvable:$true] %s459
          %465 = dma.hbm_to_vmem [thread:$0]  %s458, 256, %s460, [#allocation8], 128, 128, 8
        $region16: #{tpu_custom_call.1} parent=11 // pred_fallthru
          _
        // Predicated region
        $region17: #{tpu_custom_call.1} parent=11 // pred_check
          %p466 = pneg %p117
        $region18: #{tpu_custom_call.1} parent=11 // pred_check_branch
          %468 = sbr.rel (%p466) target = $region20
        $region19: #{tpu_custom_call.1} parent=11 // pred_region
          %470 = vsyncadd [#allocation8], 0
          %s471 = sshll.u32 %s2, 4
          %s472 = int_to_ptr.hbm [resolvable:$true] %s471
          %s473 = sshll.u32 [#allocation9], 4
          %s474 = int_to_ptr.vmem [resolvable:$true] %s473
          %479 = dma.hbm_to_vmem [thread:$0]  %s472, 288, %s474, [#allocation8], 48, 48, 3
        $region20: #{tpu_custom_call.1} parent=11 // pred_fallthru
          _
        // Predicated region
        $region21: #{tpu_custom_call.1} parent=11 // pred_check
          %p480 = pneg %p138
        $region22: #{tpu_custom_call.1} parent=11 // pred_check_branch
          %482 = sbr.rel (%p480) target = $region24
        $region23: #{tpu_custom_call.1} parent=11 // pred_region
          %484 = vsyncadd [#allocation11], 0
          %s485 = sshll.u32 %s3, 4
          %s486 = int_to_ptr.hbm [resolvable:$true] %s485
          %s487 = sshll.u32 [#allocation10], 4
          %s488 = int_to_ptr.vmem [resolvable:$true] %s487
          %493 = dma.hbm_to_vmem [thread:$0]  %s486, 288, %s488, [#allocation11], 48, 48, 3
        $region24: #{tpu_custom_call.1} parent=11 // pred_fallthru
          _
        // Predicated region
        $region25: #{tpu_custom_call.1} parent=11 // pred_check
          %p494 = pneg %p159
        $region26: #{tpu_custom_call.1} parent=11 // pred_check_branch
          %496 = sbr.rel (%p494) target = $region28
        $region27: #{tpu_custom_call.1} parent=11 // pred_region
          %498 = vsyncadd [#allocation11], 0
          %s499 = sshll.u32 %s4, 4
          %s500 = int_to_ptr.hbm [resolvable:$true] %s499
          %s501 = sshll.u32 [#allocation12], 4
          %s502 = int_to_ptr.vmem [resolvable:$true] %s501
          %507 = dma.hbm_to_vmem [thread:$0]  %s500, 165888, %s502, [#allocation11], 576, 576, 36
        $region28: #{tpu_custom_call.1} parent=11 // pred_fallthru
          _
        // Predicated region
        $region29: #{tpu_custom_call.1} parent=11 // pred_check
          %p508 = pneg %p180
        $region30: #{tpu_custom_call.1} parent=11 // pred_check_branch
          %510 = sbr.rel (%p508) target = $region32
        $region31: #{tpu_custom_call.1} parent=11 // pred_region
          %512 = vsyncadd [#allocation14], 0
          %s513 = sshll.u32 %s5, 4
          %s514 = int_to_ptr.hbm [resolvable:$true] %s513
          %s515 = sshll.u32 [#allocation13], 4
          %s516 = int_to_ptr.vmem [resolvable:$true] %s515
          %521 = dma.hbm_to_vmem [thread:$0]  %s514, 55296, %s516, [#allocation14], 192, 192, 12
        $region32: #{tpu_custom_call.1} parent=11 // pred_fallthru
          _
        // Predicated region
        $region33: #{tpu_custom_call.1} parent=11 // pred_check
          %p522 = pneg %p201
        $region34: #{tpu_custom_call.1} parent=11 // pred_check_branch
          %524 = sbr.rel (%p522) target = $region36
        $region35: #{tpu_custom_call.1} parent=11 // pred_region
          %526 = vsyncadd [#allocation14], 0
          %s527 = sshll.u32 %s6, 4
          %s528 = int_to_ptr.hbm [resolvable:$true] %s527
          %s529 = sshll.u32 [#allocation15], 4
          %s530 = int_to_ptr.vmem [resolvable:$true] %s529
          %535 = dma.hbm_to_vmem [thread:$0]  %s528, 288, %s530, [#allocation14], 48, 48, 3
        $region36: #{tpu_custom_call.1} parent=11 // pred_fallthru
          _
        // Predicated region
        $region37: #{tpu_custom_call.1} parent=11 // pred_check
          %p536 = pneg %p222
        $region38: #{tpu_custom_call.1} parent=11 // pred_check_branch
          %538 = sbr.rel (%p536) target = $region40
        $region39: #{tpu_custom_call.1} parent=11 // pred_region
          %540 = vsyncadd [#allocation17], 0
          %s541 = sshll.u32 %s7, 4
          %s542 = int_to_ptr.hbm [resolvable:$true] %s541
          %s543 = sshll.u32 [#allocation16], 4
          %s544 = int_to_ptr.vmem [resolvable:$true] %s543
          %549 = dma.hbm_to_vmem [thread:$0]  %s542, 288, %s544, [#allocation17], 48, 48, 3
        $region40: #{tpu_custom_call.1} parent=11 // pred_fallthru
          _
        // Predicated region
        $region41: #{tpu_custom_call.1} parent=11 // pred_check
          %p550 = pneg %p243
        $region42: #{tpu_custom_call.1} parent=11 // pred_check_branch
          %552 = sbr.rel (%p550) target = $region44
        $region43: #{tpu_custom_call.1} parent=11 // pred_region
          %554 = vsyncadd [#allocation17], 0
          %s555 = sshll.u32 %s8, 4
          %s556 = int_to_ptr.hbm [resolvable:$true] %s555
          %s557 = sshll.u32 [#allocation18], 4
          %s558 = int_to_ptr.vmem [resolvable:$true] %s557
          %563 = dma.hbm_to_vmem [thread:$0]  %s556, 288, %s558, [#allocation17], 48, 48, 3
        $region44: #{tpu_custom_call.1} parent=11 // pred_fallthru
          _
        // Predicated region
        $region45: #{tpu_custom_call.1} parent=11 // pred_check
          %p564 = pneg %p264
        $region46: #{tpu_custom_call.1} parent=11 // pred_check_branch
          %566 = sbr.rel (%p564) target = $region48
        $region47: #{tpu_custom_call.1} parent=11 // pred_region
          %568 = vsyncadd [#allocation20], 0
          %s569 = sshll.u32 %s9, 4
          %s570 = int_to_ptr.hbm [resolvable:$true] %s569
          %s571 = sshll.u32 [#allocation19], 4
          %s572 = int_to_ptr.vmem [resolvable:$true] %s571
          %577 = dma.hbm_to_vmem [thread:$0]  %s570, 221184, %s572, [#allocation20], 768, 768, 48
        $region48: #{tpu_custom_call.1} parent=11 // pred_fallthru
          _
        // Predicated region
        $region49: #{tpu_custom_call.1} parent=11 // pred_check
          %p578 = pneg %p285
        $region50: #{tpu_custom_call.1} parent=11 // pred_check_branch
          %580 = sbr.rel (%p578) target = $region52
        $region51: #{tpu_custom_call.1} parent=11 // pred_region
          %582 = vsyncadd [#allocation20], 0
          %s583 = sshll.u32 %s10, 4
          %s584 = int_to_ptr.hbm [resolvable:$true] %s583
          %s585 = sshll.u32 [#allocation21], 4
          %s586 = int_to_ptr.vmem [resolvable:$true] %s585
          %591 = dma.hbm_to_vmem [thread:$0]  %s584, 1152, %s586, [#allocation20], 192, 192, 12
        $region52: #{tpu_custom_call.1} parent=11 // pred_fallthru
          _
        // Predicated region
        $region53: #{tpu_custom_call.1} parent=11 // pred_check
          %p592 = pneg %p306
        $region54: #{tpu_custom_call.1} parent=11 // pred_check_branch
          %594 = sbr.rel (%p592) target = $region56
        $region55: #{tpu_custom_call.1} parent=11 // pred_region
          %596 = vsyncadd [#allocation23], 0
          %s597 = sshll.u32 %s11, 4
          %s598 = int_to_ptr.hbm [resolvable:$true] %s597
          %s599 = sshll.u32 [#allocation22], 4
          %s600 = int_to_ptr.vmem [resolvable:$true] %s599
          %605 = dma.hbm_to_vmem [thread:$0]  %s598, 221184, %s600, [#allocation23], 192, 192, 12
        $region56: #{tpu_custom_call.1} parent=11 // pred_fallthru
          _
        // Predicated region
        $region57: #{tpu_custom_call.1} parent=11 // pred_check
          %p606 = pneg %p327
        $region58: #{tpu_custom_call.1} parent=11 // pred_check_branch
          %608 = sbr.rel (%p606) target = $region60
        $region59: #{tpu_custom_call.1} parent=11 // pred_region
          %610 = vsyncadd [#allocation23], 0
          %s611 = sshll.u32 %s12, 4
          %s612 = int_to_ptr.hbm [resolvable:$true] %s611
          %s613 = sshll.u32 [#allocation24], 4
          %s614 = int_to_ptr.vmem [resolvable:$true] %s613
          %619 = dma.hbm_to_vmem [thread:$0]  %s612, 288, %s614, [#allocation23], 48, 48, 3
        $region60: #{tpu_custom_call.1} parent=11 // pred_fallthru
          _
        // Predicated region
        $region61: #{tpu_custom_call.1} parent=11 // pred_check
          %p620 = pneg %p348
        $region62: #{tpu_custom_call.1} parent=11 // pred_check_branch
          %622 = sbr.rel (%p620) target = $region64
        $region63: #{tpu_custom_call.1} parent=11 // pred_region
          %624 = vsyncadd [#allocation26], 0
          %s626 = sshll.u32 %s13, 4
          %s627 = int_to_ptr.hbm [resolvable:$true] %s626
          %s628 = sshll.u32 [#allocation25], 4
          %s629 = int_to_ptr.vmem [resolvable:$true] %s628
          %631 = dma.hbm_to_vmem [thread:$0]  %s627, 48, %s629, [#allocation26]
        $region64: #{tpu_custom_call.1} parent=11 // pred_fallthru
          _
        // Predicated region
        $region65: #{tpu_custom_call.1} parent=11 // pred_check
          %p632 = pneg %p369
        $region66: #{tpu_custom_call.1} parent=11 // pred_check_branch
          %634 = sbr.rel (%p632) target = $region68
        $region67: #{tpu_custom_call.1} parent=11 // pred_region
          %636 = vsyncadd [#allocation26], 0
          %s638 = sshll.u32 %s14, 4
          %s639 = int_to_ptr.hbm [resolvable:$true] %s638
          %s640 = sshll.u32 [#allocation27], 4
          %s641 = int_to_ptr.vmem [resolvable:$true] %s640
          %643 = dma.hbm_to_vmem [thread:$0]  %s639, 48, %s641, [#allocation26]
        $region68: #{tpu_custom_call.1} parent=11 // pred_fallthru
          _
        // Predicated region
        $region69: #{tpu_custom_call.1} parent=11 // pred_check
          %p644 = pneg %p390
        $region70: #{tpu_custom_call.1} parent=11 // pred_check_branch
          %646 = sbr.rel (%p644) target = $region72
        $region71: #{tpu_custom_call.1} parent=11 // pred_region
          %648 = vsyncadd [#allocation29], 0
          %s649 = sshll.u32 %s15, 4
          %s650 = int_to_ptr.hbm [resolvable:$true] %s649
          %s651 = sshll.u32 [#allocation28], 4
          %s652 = int_to_ptr.vmem [resolvable:$true] %s651
          %657 = dma.hbm_to_vmem [thread:$0]  %s650, 3072, %s652, [#allocation29], 64, 64, 4
        $region72: #{tpu_custom_call.1} parent=11 // pred_fallthru
          _
        // Predicated region
        $region73: #{tpu_custom_call.1} parent=11 // pred_check
          %p658 = pneg %p411
        $region74: #{tpu_custom_call.1} parent=11 // pred_check_branch
          %660 = sbr.rel (%p658) target = $region76
        $region75: #{tpu_custom_call.1} parent=11 // pred_region
          %662 = vsyncadd [#allocation29], 0
          %s664 = sshll.u32 %s16, 4
          %s665 = int_to_ptr.hbm [resolvable:$true] %s664
          %s666 = sshll.u32 [#allocation30], 4
          %s667 = int_to_ptr.vmem [resolvable:$true] %s666
          %669 = dma.hbm_to_vmem [thread:$0]  %s665, 16, %s667, [#allocation29]
        $region76: #{tpu_custom_call.1} parent=11 // pred_fallthru
          _
      $region12: #{tpu_custom_call.1} parent=5 // pred_fallthru
        _
      %p670 = scmp.lt.s32.totalorder %s37, 12
      // Predicated region
      $region77: #{tpu_custom_call.1} parent=5 // pred_check
        %p671 = pneg %p670
      $region78: #{tpu_custom_call.1} parent=5 // pred_check_branch
        %673 = sbr.rel (%p671) target = $region80
      $region79: #{tpu_custom_call.1} parent=5 // pred_region
        // Predicated region
        $region81: #{tpu_custom_call.1} parent=79 // pred_check
          %p674 = pneg %p69
        $region82: #{tpu_custom_call.1} parent=79 // pred_check_branch
          %676 = sbr.rel (%p674) target = $region84
        $region83: #{tpu_custom_call.1} parent=79 // pred_region
          %s677 = sand.u32 %s59, 1
          %s678 = scalar_lea.sflag [#allocation5], %s677
          %s679 = sand.u32 %s59, 1
          %s680 = smul.addr %s679, 48
          %s681 = scalar_lea.vmem [#allocation4], %s680
          %683 = vsyncadd %s678, 0
          %s684 = smul.addr %s44, 6
          %s685 = smul.addr %s684, 8
          %s686 = scalar_lea.hbm %s0, %s685
          %s687 = sshll.u32 %s686, 4
          %s688 = int_to_ptr.hbm [resolvable:$true] %s687
          %s689 = sshll.u32 %s681, 4
          %s690 = int_to_ptr.vmem [resolvable:$true] %s689
          %695 = dma.hbm_to_vmem [thread:$0]  %s688, 768, %s690, %s678, 384, 384, 24
        $region84: #{tpu_custom_call.1} parent=79 // pred_fallthru
          _
      $region80: #{tpu_custom_call.1} parent=5 // pred_fallthru
        _
      %p696 = scmp.le.s32.totalorder 1, %s37
      %p697 = scmp.lt.s32.totalorder %s37, 13
      %p698 = pnand %p696, %p697
      %p699 = pneg %p698
      // Predicated region
      $region85: #{tpu_custom_call.1} parent=5 // pred_check
        _
      $region86: #{tpu_custom_call.1} parent=5 // pred_check_branch
        %701 = sbr.rel (%p698) target = $region88
      $region87: #{tpu_custom_call.1} parent=5 // pred_region
        %s702 = ssub.s32 %s37, 1
        %s703 = sand.u32 %s62, 1
        %s704 = scalar_lea.sflag [#allocation5], %s703
        %s705 = sand.u32 %s62, 1
        %s706 = smul.addr %s705, 48
        %s707 = scalar_lea.vmem [#allocation4], %s706
        // Predicated region
        $region89: #{tpu_custom_call.1} parent=87 // pred_check
          %p708 = pneg %p75
        $region90: #{tpu_custom_call.1} parent=87 // pred_check_branch
          %710 = sbr.rel (%p708) target = $region92
        $region91: #{tpu_custom_call.1} parent=87 // pred_region
          %712 = dma.done %s704, 768
        $region92: #{tpu_custom_call.1} parent=87 // pred_fallthru
          _
        // Predicated region
        $region93: #{tpu_custom_call.1} parent=87 // pred_check
          %p713 = pneg %p96
        $region94: #{tpu_custom_call.1} parent=87 // pred_check_branch
          %715 = sbr.rel (%p713) target = $region96
        $region95: #{tpu_custom_call.1} parent=87 // pred_region
          %717 = dma.done [#allocation8], 256
        $region96: #{tpu_custom_call.1} parent=87 // pred_fallthru
          _
        // Predicated region
        $region97: #{tpu_custom_call.1} parent=87 // pred_check
          %p718 = pneg %p117
        $region98: #{tpu_custom_call.1} parent=87 // pred_check_branch
          %720 = sbr.rel (%p718) target = $region100
        $region99: #{tpu_custom_call.1} parent=87 // pred_region
          %722 = dma.done [#allocation8], 288
        $region100: #{tpu_custom_call.1} parent=87 // pred_fallthru
          _
        // Predicated region
        $region101: #{tpu_custom_call.1} parent=87 // pred_check
          %p723 = pneg %p138
        $region102: #{tpu_custom_call.1} parent=87 // pred_check_branch
          %725 = sbr.rel (%p723) target = $region104
        $region103: #{tpu_custom_call.1} parent=87 // pred_region
          %727 = dma.done [#allocation11], 288
        $region104: #{tpu_custom_call.1} parent=87 // pred_fallthru
          _
        // Predicated region
        $region105: #{tpu_custom_call.1} parent=87 // pred_check
          %p728 = pneg %p159
        $region106: #{tpu_custom_call.1} parent=87 // pred_check_branch
          %730 = sbr.rel (%p728) target = $region108
        $region107: #{tpu_custom_call.1} parent=87 // pred_region
          %732 = dma.done [#allocation11], 165888
        $region108: #{tpu_custom_call.1} parent=87 // pred_fallthru
          _
        // Predicated region
        $region109: #{tpu_custom_call.1} parent=87 // pred_check
          %p733 = pneg %p180
        $region110: #{tpu_custom_call.1} parent=87 // pred_check_branch
          %735 = sbr.rel (%p733) target = $region112
        $region111: #{tpu_custom_call.1} parent=87 // pred_region
          %737 = dma.done [#allocation14], 55296
        $region112: #{tpu_custom_call.1} parent=87 // pred_fallthru
          _
        // Predicated region
        $region113: #{tpu_custom_call.1} parent=87 // pred_check
          %p738 = pneg %p201
        $region114: #{tpu_custom_call.1} parent=87 // pred_check_branch
          %740 = sbr.rel (%p738) target = $region116
        $region115: #{tpu_custom_call.1} parent=87 // pred_region
          %742 = dma.done [#allocation14], 288
        $region116: #{tpu_custom_call.1} parent=87 // pred_fallthru
          _
        // Predicated region
        $region117: #{tpu_custom_call.1} parent=87 // pred_check
          %p743 = pneg %p222
        $region118: #{tpu_custom_call.1} parent=87 // pred_check_branch
          %745 = sbr.rel (%p743) target = $region120
        $region119: #{tpu_custom_call.1} parent=87 // pred_region
          %747 = dma.done [#allocation17], 288
        $region120: #{tpu_custom_call.1} parent=87 // pred_fallthru
          _
        // Predicated region
        $region121: #{tpu_custom_call.1} parent=87 // pred_check
          %p748 = pneg %p243
        $region122: #{tpu_custom_call.1} parent=87 // pred_check_branch
          %750 = sbr.rel (%p748) target = $region124
        $region123: #{tpu_custom_call.1} parent=87 // pred_region
          %752 = dma.done [#allocation17], 288
        $region124: #{tpu_custom_call.1} parent=87 // pred_fallthru
          _
        // Predicated region
        $region125: #{tpu_custom_call.1} parent=87 // pred_check
          %p753 = pneg %p264
        $region126: #{tpu_custom_call.1} parent=87 // pred_check_branch
          %755 = sbr.rel (%p753) target = $region128
        $region127: #{tpu_custom_call.1} parent=87 // pred_region
          %757 = dma.done [#allocation20], 221184
        $region128: #{tpu_custom_call.1} parent=87 // pred_fallthru
          _
        // Predicated region
        $region129: #{tpu_custom_call.1} parent=87 // pred_check
          %p758 = pneg %p285
        $region130: #{tpu_custom_call.1} parent=87 // pred_check_branch
          %760 = sbr.rel (%p758) target = $region132
        $region131: #{tpu_custom_call.1} parent=87 // pred_region
          %762 = dma.done [#allocation20], 1152
        $region132: #{tpu_custom_call.1} parent=87 // pred_fallthru
          _
        // Predicated region
        $region133: #{tpu_custom_call.1} parent=87 // pred_check
          %p763 = pneg %p306
        $region134: #{tpu_custom_call.1} parent=87 // pred_check_branch
          %765 = sbr.rel (%p763) target = $region136
        $region135: #{tpu_custom_call.1} parent=87 // pred_region
          %767 = dma.done [#allocation23], 221184
        $region136: #{tpu_custom_call.1} parent=87 // pred_fallthru
          _
        // Predicated region
        $region137: #{tpu_custom_call.1} parent=87 // pred_check
          %p768 = pneg %p327
        $region138: #{tpu_custom_call.1} parent=87 // pred_check_branch
          %770 = sbr.rel (%p768) target = $region140
        $region139: #{tpu_custom_call.1} parent=87 // pred_region
          %772 = dma.done [#allocation23], 288
        $region140: #{tpu_custom_call.1} parent=87 // pred_fallthru
          _
        // Predicated region
        $region141: #{tpu_custom_call.1} parent=87 // pred_check
          %p773 = pneg %p348
        $region142: #{tpu_custom_call.1} parent=87 // pred_check_branch
          %775 = sbr.rel (%p773) target = $region144
        $region143: #{tpu_custom_call.1} parent=87 // pred_region
          %777 = dma.done [#allocation26], 48
        $region144: #{tpu_custom_call.1} parent=87 // pred_fallthru
          _
        // Predicated region
        $region145: #{tpu_custom_call.1} parent=87 // pred_check
          %p778 = pneg %p369
        $region146: #{tpu_custom_call.1} parent=87 // pred_check_branch
          %780 = sbr.rel (%p778) target = $region148
        $region147: #{tpu_custom_call.1} parent=87 // pred_region
          %782 = dma.done [#allocation26], 48
        $region148: #{tpu_custom_call.1} parent=87 // pred_fallthru
          _
        // Predicated region
        $region149: #{tpu_custom_call.1} parent=87 // pred_check
          %p783 = pneg %p390
        $region150: #{tpu_custom_call.1} parent=87 // pred_check_branch
          %785 = sbr.rel (%p783) target = $region152
        $region151: #{tpu_custom_call.1} parent=87 // pred_region
          %787 = dma.done [#allocation29], 3072
        $region152: #{tpu_custom_call.1} parent=87 // pred_fallthru
          _
        // Predicated region
        $region153: #{tpu_custom_call.1} parent=87 // pred_check
          %p788 = pneg %p411
        $region154: #{tpu_custom_call.1} parent=87 // pred_check_branch
          %790 = sbr.rel (%p788) target = $region156
        $region155: #{tpu_custom_call.1} parent=87 // pred_region
          %792 = dma.done [#allocation29], 16
        $region156: #{tpu_custom_call.1} parent=87 // pred_fallthru
          _
        %s793 = sand.u32 %s62, 1
        %s794 = scalar_lea.sflag [#allocation5], %s793
        %s795 = sand.u32 %s62, 1
        %s796 = smul.addr %s795, 48
        %s797 = scalar_lea.vmem [#allocation4], %s796
        %p798 = pneg %p75
        %p799 = pneg %p72
        %p800 = pneg %p96
        %p801 = pneg %p93
        %p802 = pneg %p117
        %p803 = pneg %p114
        %p804 = pneg %p138
        %p805 = pneg %p135
        %p806 = pneg %p159
        %p807 = pneg %p156
        %p808 = pneg %p180
        %p809 = pneg %p177
        %p810 = pneg %p201
        %p811 = pneg %p198
        %p812 = pneg %p222
        %p813 = pneg %p219
        %p814 = pneg %p243
        %p815 = pneg %p240
        %p816 = pneg %p264
        %p817 = pneg %p261
        %p818 = pneg %p285
        %p819 = pneg %p282
        %p820 = pneg %p306
        %p821 = pneg %p303
        %p822 = pneg %p327
        %p823 = pneg %p324
        %p824 = pneg %p348
        %p825 = pneg %p345
        %p826 = pneg %p369
        %p827 = pneg %p366
        %p828 = pneg %p390
        %p829 = pneg %p387
        %p830 = pneg %p411
        %p831 = pneg %p408
        %p832 = pneg %p437
        %p833 = pneg %p434
        %s834 = sand.u32 %s424, 1
        %s835 = scalar_lea.sflag [#allocation6], %s834
        %s836 = sand.u32 %s424, 1
        %s837 = smul.addr %s836, 16
        %s838 = scalar_lea.vmem [#allocation31], %s837
        %p840 = scmp.eq.s32.totalorder %s47, 0
        // Predicated region
        $region157: #{tpu_custom_call.1} parent=87 // pred_check
          %p841 = pneg %p840
        $region158: #{tpu_custom_call.1} parent=87 // pred_check_branch
          %843 = sbr.rel (%p841) target = $region160
        $region159: #{tpu_custom_call.1} parent=87 // pred_region
          %v844 = vld [vmem:[%s707] sm:$0xff]
          %v845 = vld [vmem:[%s707 + $0x8] sm:$0xff]
          %v846 = vld [vmem:[%s707 + $0x10] sm:$0xff]
          %v847 = vld [vmem:[%s707 + $0x18] sm:$0xff]
          %v848 = vld [vmem:[%s707 + $0x20] sm:$0xff]
          %v849 = vld [vmem:[%s707 + $0x28] sm:$0xff]
          %850 = vst [vmem:[#allocation2] sm:$0xff] %v844
          %851 = vst [vmem:[#allocation2 + $0x8] sm:$0xff] %v845
          %852 = vst [vmem:[#allocation2 + $0x10] sm:$0xff] %v846
          %853 = vst [vmem:[#allocation2 + $0x18] sm:$0xff] %v847
          %854 = vst [vmem:[#allocation2 + $0x20] sm:$0xff] %v848
          %855 = vst [vmem:[#allocation2 + $0x28] sm:$0xff] %v849
        $region160: #{tpu_custom_call.1} parent=87 // pred_fallthru
          _
        %v856 = vld [vmem:[#allocation2] sm:$0xff]
        %v857 = vld [vmem:[#allocation2 + $0x8] sm:$0xff]
        %v858 = vld [vmem:[#allocation2 + $0x10] sm:$0xff]
        %v859 = vld [vmem:[#allocation2 + $0x18] sm:$0xff]
        %v860 = vld [vmem:[#allocation2 + $0x20] sm:$0xff]
        %v861 = vld [vmem:[#allocation2 + $0x28] sm:$0xff]
        %s862 = smul.u32 %s47, 3
        %s863 = scalar_lea.vmem [#allocation9], %s862
        %v864 = vld [vmem:[%s863] sm:$0x7]
        %s865 = scalar_lea.vmem [#allocation10], %s862
        %v866 = vld [vmem:[%s865] sm:$0x7]
        %v867 = vadd.f32 %v856, %v857
        %v868 = vadd.f32 %v867, %v858
        %869 = vadd.xlane.f32.xlu0 %v868
        %v870 = vpop.xlane.xlu0 %869
        %v871 = vadd.f32 %v859, %v860
        %v872 = vadd.f32 %v871, %v861
        %873 = vadd.xlane.f32.xlu0 %v872
        %v874 = vpop.xlane.xlu0 %873
        %v875 = vrcp.pop 384.0
        %v876 = vmul.f32 384.0, %v875
        %v877 = vsub.f32 1.0, %v876
        %v878 = vmul.f32 %v875, %v877
        %v879 = vadd.f32 %v875, %v878
        %vm880 = vweird.f32 %v875
        %v881 = vsel %vm880, %v875, %v879
        %v882 = vmul.f32 %v870, %v881
        %v883 = vmul.f32 %v874, %v881
        %v884 = vsub.f32 %v856, %v882
        %v885 = vsub.f32 %v857, %v882
        %v886 = vsub.f32 %v858, %v882
        %v887 = vsub.f32 %v859, %v883
        %v888 = vsub.f32 %v860, %v883
        %v889 = vsub.f32 %v861, %v883
        %v890 = vmul.f32 %v884, %v884
        %v891 = vmul.f32 %v885, %v885
        %v892 = vmul.f32 %v886, %v886
        %v893 = vmul.f32 %v887, %v887
        %v894 = vmul.f32 %v888, %v888
        %v895 = vmul.f32 %v889, %v889
        %v896 = vadd.f32 %v890, %v891
        %v897 = vadd.f32 %v896, %v892
        %898 = vadd.xlane.f32.xlu0 %v897
        %v899 = vpop.xlane.xlu0 %898
        %v900 = vadd.f32 %v893, %v894
        %v901 = vadd.f32 %v900, %v895
        %902 = vadd.xlane.f32.xlu0 %v901
        %v903 = vpop.xlane.xlu0 %902
        %v904 = vmul.f32 %v899, %v881
        %v905 = vmul.f32 %v903, %v881
        %v906 = vadd.f32 %v904, 1e-05
        %v907 = vadd.f32 %v905, 1e-05
        %v908 = vrsqrt.pop %v906
        %v909 = vmul.f32 %v908, %v906
        %v910 = vmul.f32 %v909, %v908
        %v911 = vmul.f32 0.5, %v910
        %v912 = vsub.f32 1.5, %v911
        %v913 = vmul.f32 %v908, %v912
        %vm914 = vweird.f32 %v906
        %vm915 = vweird.f32 %v908
        %vm916 = vmor %vm914, %vm915
        %v917 = vsel %vm916, %v908, %v913
        %v918 = vrsqrt.pop %v907
        %v919 = vmul.f32 %v918, %v907
        %v920 = vmul.f32 %v919, %v918
        %v921 = vmul.f32 0.5, %v920
        %v922 = vsub.f32 1.5, %v921
        %v923 = vmul.f32 %v918, %v922
        %vm924 = vweird.f32 %v907
        %vm925 = vweird.f32 %v918
        %vm926 = vmor %vm924, %vm925
        %v927 = vsel %vm926, %v918, %v923
        %v928 = vmul.f32 %v884, %v917
        %v929 = vmul.f32 %v885, %v917
        %v930 = vmul.f32 %v886, %v917
        %v931 = vmul.f32 %v887, %v927
        %v932 = vmul.f32 %v888, %v927
        %v933 = vmul.f32 %v889, %v927
        %v935 = vperm.slane %v864, 0
        %v936 = vperm.slane %v864, 1
        %v937 = vperm.slane %v864, 2
        %v941 = vmul.f32 %v928, %v935
        %v942 = vmul.f32 %v929, %v936
        %v943 = vmul.f32 %v930, %v937
        %v944 = vmul.f32 %v931, %v935
        %v945 = vmul.f32 %v932, %v936
        %v946 = vmul.f32 %v933, %v937
        %v948 = vperm.slane %v866, 0
        %v949 = vperm.slane %v866, 1
        %v950 = vperm.slane %v866, 2
        %v954 = vadd.f32 %v941, %v948
        %v955 = vadd.f32 %v942, %v949
        %v956 = vadd.f32 %v943, %v950
        %v957 = vadd.f32 %v944, %v948
        %v958 = vadd.f32 %v945, %v949
        %v959 = vadd.f32 %v946, %v950
        %v960 = vpack.c.bf16 %v955, %v954
        %v961 = vpack.c.bf16 %v956, %v956
        %v962 = vpack.c.bf16 %v958, %v957
        %v963 = vpack.c.bf16 %v959, %v959
        %s964 = smul.u32 %s47, 432
        %s965 = smul.addr %s964, 4
        %s966 = scalar_lea.vmem [#allocation12], %s965
        %v967 = vld [vmem:[%s966] sm:$0xff]
        %v968 = vld [vmem:[%s966 + $0x8] sm:$0xff]
        %v969 = vld [vmem:[%s966 + $0x10] sm:$0xff]
        %v970 = vld [vmem:[%s966 + $0x18] sm:$0xff]
        %v971 = vld [vmem:[%s966 + $0x20] sm:$0xf]
        %v972 = vld [vmem:[%s966 + $0x24] sm:$0xff]
        %v973 = vld [vmem:[%s966 + $0x2c] sm:$0xff]
        %v974 = vld [vmem:[%s966 + $0x34] sm:$0xff]
        %v975 = vld [vmem:[%s966 + $0x3c] sm:$0xff]
        %v976 = vld [vmem:[%s966 + $0x44] sm:$0xf]
        %v977 = vld [vmem:[%s966 + $0x48] sm:$0xff]
        %v978 = vld [vmem:[%s966 + $0x50] sm:$0xff]
        %v979 = vld [vmem:[%s966 + $0x58] sm:$0xff]
        %v980 = vld [vmem:[%s966 + $0x60] sm:$0xff]
        %v981 = vld [vmem:[%s966 + $0x68] sm:$0xf]
        %v982 = vld [vmem:[%s966 + $0x6c] sm:$0xff]
        %v983 = vld [vmem:[%s966 + $0x74] sm:$0xff]
        %v984 = vld [vmem:[%s966 + $0x7c] sm:$0xff]
        %v985 = vld [vmem:[%s966 + $0x84] sm:$0xff]
        %v986 = vld [vmem:[%s966 + $0x8c] sm:$0xf]
        %v987 = vld [vmem:[%s966 + $0x90] sm:$0xff]
        %v988 = vld [vmem:[%s966 + $0x98] sm:$0xff]
        %v989 = vld [vmem:[%s966 + $0xa0] sm:$0xff]
        %v990 = vld [vmem:[%s966 + $0xa8] sm:$0xff]
        %v991 = vld [vmem:[%s966 + $0xb0] sm:$0xf]
        %v992 = vld [vmem:[%s966 + $0xb4] sm:$0xff]
        %v993 = vld [vmem:[%s966 + $0xbc] sm:$0xff]
        %v994 = vld [vmem:[%s966 + $0xc4] sm:$0xff]
        %v995 = vld [vmem:[%s966 + $0xcc] sm:$0xff]
        %v996 = vld [vmem:[%s966 + $0xd4] sm:$0xf]
        %v997 = vld [vmem:[%s966 + $0xd8] sm:$0xff]
        %v998 = vld [vmem:[%s966 + $0xe0] sm:$0xff]
        %v999 = vld [vmem:[%s966 + $0xe8] sm:$0xff]
        %v1000 = vld [vmem:[%s966 + $0xf0] sm:$0xff]
        %v1001 = vld [vmem:[%s966 + $0xf8] sm:$0xf]
        %v1002 = vld [vmem:[%s966 + $0xfc] sm:$0xff]
        %v1003 = vld [vmem:[%s966 + $0x104] sm:$0xff]
        %v1004 = vld [vmem:[%s966 + $0x10c] sm:$0xff]
        %v1005 = vld [vmem:[%s966 + $0x114] sm:$0xff]
        %v1006 = vld [vmem:[%s966 + $0x11c] sm:$0xf]
        %v1007 = vld [vmem:[%s966 + $0x120] sm:$0xff]
        %v1008 = vld [vmem:[%s966 + $0x128] sm:$0xff]
        %v1009 = vld [vmem:[%s966 + $0x130] sm:$0xff]
        %v1010 = vld [vmem:[%s966 + $0x138] sm:$0xff]
        %v1011 = vld [vmem:[%s966 + $0x140] sm:$0xf]
        %v1012 = vld [vmem:[%s966 + $0x144] sm:$0xff]
        %v1013 = vld [vmem:[%s966 + $0x14c] sm:$0xff]
        %v1014 = vld [vmem:[%s966 + $0x154] sm:$0xff]
        %v1015 = vld [vmem:[%s966 + $0x15c] sm:$0xff]
        %v1016 = vld [vmem:[%s966 + $0x164] sm:$0xf]
        %v1017 = vld [vmem:[%s966 + $0x168] sm:$0xff]
        %v1018 = vld [vmem:[%s966 + $0x170] sm:$0xff]
        %v1019 = vld [vmem:[%s966 + $0x178] sm:$0xff]
        %v1020 = vld [vmem:[%s966 + $0x180] sm:$0xff]
        %v1021 = vld [vmem:[%s966 + $0x188] sm:$0xf]
        %v1022 = vld [vmem:[%s966 + $0x18c] sm:$0xff]
        %v1023 = vld [vmem:[%s966 + $0x194] sm:$0xff]
        %v1024 = vld [vmem:[%s966 + $0x19c] sm:$0xff]
        %v1025 = vld [vmem:[%s966 + $0x1a4] sm:$0xff]
        %v1026 = vld [vmem:[%s966 + $0x1ac] sm:$0xf]
        %v1027 = vld [vmem:[%s966 + $0x1b0] sm:$0xff]
        %v1028 = vld [vmem:[%s966 + $0x1b8] sm:$0xff]
        %v1029 = vld [vmem:[%s966 + $0x1c0] sm:$0xff]
        %v1030 = vld [vmem:[%s966 + $0x1c8] sm:$0xff]
        %v1031 = vld [vmem:[%s966 + $0x1d0] sm:$0xf]
        %v1032 = vld [vmem:[%s966 + $0x1d4] sm:$0xff]
        %v1033 = vld [vmem:[%s966 + $0x1dc] sm:$0xff]
        %v1034 = vld [vmem:[%s966 + $0x1e4] sm:$0xff]
        %v1035 = vld [vmem:[%s966 + $0x1ec] sm:$0xff]
        %v1036 = vld [vmem:[%s966 + $0x1f4] sm:$0xf]
        %v1037 = vld [vmem:[%s966 + $0x1f8] sm:$0xff]
        %v1038 = vld [vmem:[%s966 + $0x200] sm:$0xff]
        %v1039 = vld [vmem:[%s966 + $0x208] sm:$0xff]
        %v1040 = vld [vmem:[%s966 + $0x210] sm:$0xff]
        %v1041 = vld [vmem:[%s966 + $0x218] sm:$0xf]
        %v1042 = vld [vmem:[%s966 + $0x21c] sm:$0xff]
        %v1043 = vld [vmem:[%s966 + $0x224] sm:$0xff]
        %v1044 = vld [vmem:[%s966 + $0x22c] sm:$0xff]
        %v1045 = vld [vmem:[%s966 + $0x234] sm:$0xff]
        %v1046 = vld [vmem:[%s966 + $0x23c] sm:$0xf]
        %v1047 = vld [vmem:[%s966 + $0x240] sm:$0xff]
        %v1048 = vld [vmem:[%s966 + $0x248] sm:$0xff]
        %v1049 = vld [vmem:[%s966 + $0x250] sm:$0xff]
        %v1050 = vld [vmem:[%s966 + $0x258] sm:$0xff]
        %v1051 = vld [vmem:[%s966 + $0x260] sm:$0xf]
        %v1052 = vld [vmem:[%s966 + $0x264] sm:$0xff]
        %v1053 = vld [vmem:[%s966 + $0x26c] sm:$0xff]
        %v1054 = vld [vmem:[%s966 + $0x274] sm:$0xff]
        %v1055 = vld [vmem:[%s966 + $0x27c] sm:$0xff]
        %v1056 = vld [vmem:[%s966 + $0x284] sm:$0xf]
        %v1057 = vld [vmem:[%s966 + $0x288] sm:$0xff]
        %v1058 = vld [vmem:[%s966 + $0x290] sm:$0xff]
        %v1059 = vld [vmem:[%s966 + $0x298] sm:$0xff]
        %v1060 = vld [vmem:[%s966 + $0x2a0] sm:$0xff]
        %v1061 = vld [vmem:[%s966 + $0x2a8] sm:$0xf]
        %v1062 = vld [vmem:[%s966 + $0x2ac] sm:$0xff]
        %v1063 = vld [vmem:[%s966 + $0x2b4] sm:$0xff]
        %v1064 = vld [vmem:[%s966 + $0x2bc] sm:$0xff]
        %v1065 = vld [vmem:[%s966 + $0x2c4] sm:$0xff]
        %v1066 = vld [vmem:[%s966 + $0x2cc] sm:$0xf]
        %v1067 = vld [vmem:[%s966 + $0x2d0] sm:$0xff]
        %v1068 = vld [vmem:[%s966 + $0x2d8] sm:$0xff]
        %v1069 = vld [vmem:[%s966 + $0x2e0] sm:$0xff]
        %v1070 = vld [vmem:[%s966 + $0x2e8] sm:$0xff]
        %v1071 = vld [vmem:[%s966 + $0x2f0] sm:$0xf]
        %v1072 = vld [vmem:[%s966 + $0x2f4] sm:$0xff]
        %v1073 = vld [vmem:[%s966 + $0x2fc] sm:$0xff]
        %v1074 = vld [vmem:[%s966 + $0x304] sm:$0xff]
        %v1075 = vld [vmem:[%s966 + $0x30c] sm:$0xff]
        %v1076 = vld [vmem:[%s966 + $0x314] sm:$0xf]
        %v1077 = vld [vmem:[%s966 + $0x318] sm:$0xff]
        %v1078 = vld [vmem:[%s966 + $0x320] sm:$0xff]
        %v1079 = vld [vmem:[%s966 + $0x328] sm:$0xff]
        %v1080 = vld [vmem:[%s966 + $0x330] sm:$0xff]
        %v1081 = vld [vmem:[%s966 + $0x338] sm:$0xf]
        %v1082 = vld [vmem:[%s966 + $0x33c] sm:$0xff]
        %v1083 = vld [vmem:[%s966 + $0x344] sm:$0xff]
        %v1084 = vld [vmem:[%s966 + $0x34c] sm:$0xff]
        %v1085 = vld [vmem:[%s966 + $0x354] sm:$0xff]
        %v1086 = vld [vmem:[%s966 + $0x35c] sm:$0xf]
        %v1087 = vld [vmem:[%s966 + $0x360] sm:$0xff]
        %v1088 = vld [vmem:[%s966 + $0x368] sm:$0xff]
        %v1089 = vld [vmem:[%s966 + $0x370] sm:$0xff]
        %v1090 = vld [vmem:[%s966 + $0x378] sm:$0xff]
        %v1091 = vld [vmem:[%s966 + $0x380] sm:$0xf]
        %v1092 = vld [vmem:[%s966 + $0x384] sm:$0xff]
        %v1093 = vld [vmem:[%s966 + $0x38c] sm:$0xff]
        %v1094 = vld [vmem:[%s966 + $0x394] sm:$0xff]
        %v1095 = vld [vmem:[%s966 + $0x39c] sm:$0xff]
        %v1096 = vld [vmem:[%s966 + $0x3a4] sm:$0xf]
        %v1097 = vld [vmem:[%s966 + $0x3a8] sm:$0xff]
        %v1098 = vld [vmem:[%s966 + $0x3b0] sm:$0xff]
        %v1099 = vld [vmem:[%s966 + $0x3b8] sm:$0xff]
        %v1100 = vld [vmem:[%s966 + $0x3c0] sm:$0xff]
        %v1101 = vld [vmem:[%s966 + $0x3c8] sm:$0xf]
        %v1102 = vld [vmem:[%s966 + $0x3cc] sm:$0xff]
        %v1103 = vld [vmem:[%s966 + $0x3d4] sm:$0xff]
        %v1104 = vld [vmem:[%s966 + $0x3dc] sm:$0xff]
        %v1105 = vld [vmem:[%s966 + $0x3e4] sm:$0xff]
        %v1106 = vld [vmem:[%s966 + $0x3ec] sm:$0xf]
        %v1107 = vld [vmem:[%s966 + $0x3f0] sm:$0xff]
        %v1108 = vld [vmem:[%s966 + $0x3f8] sm:$0xff]
        %v1109 = vld [vmem:[%s966 + $0x400] sm:$0xff]
        %v1110 = vld [vmem:[%s966 + $0x408] sm:$0xff]
        %v1111 = vld [vmem:[%s966 + $0x410] sm:$0xf]
        %v1112 = vld [vmem:[%s966 + $0x414] sm:$0xff]
        %v1113 = vld [vmem:[%s966 + $0x41c] sm:$0xff]
        %v1114 = vld [vmem:[%s966 + $0x424] sm:$0xff]
        %v1115 = vld [vmem:[%s966 + $0x42c] sm:$0xff]
        %v1116 = vld [vmem:[%s966 + $0x434] sm:$0xf]
        %v1117 = vld [vmem:[%s966 + $0x438] sm:$0xff]
        %v1118 = vld [vmem:[%s966 + $0x440] sm:$0xff]
        %v1119 = vld [vmem:[%s966 + $0x448] sm:$0xff]
        %v1120 = vld [vmem:[%s966 + $0x450] sm:$0xff]
        %v1121 = vld [vmem:[%s966 + $0x458] sm:$0xf]
        %v1122 = vld [vmem:[%s966 + $0x45c] sm:$0xff]
        %v1123 = vld [vmem:[%s966 + $0x464] sm:$0xff]
        %v1124 = vld [vmem:[%s966 + $0x46c] sm:$0xff]
        %v1125 = vld [vmem:[%s966 + $0x474] sm:$0xff]
        %v1126 = vld [vmem:[%s966 + $0x47c] sm:$0xf]
        %v1127 = vld [vmem:[%s966 + $0x480] sm:$0xff]
        %v1128 = vld [vmem:[%s966 + $0x488] sm:$0xff]
        %v1129 = vld [vmem:[%s966 + $0x490] sm:$0xff]
        %v1130 = vld [vmem:[%s966 + $0x498] sm:$0xff]
        %v1131 = vld [vmem:[%s966 + $0x4a0] sm:$0xf]
        %v1132 = vld [vmem:[%s966 + $0x4a4] sm:$0xff]
        %v1133 = vld [vmem:[%s966 + $0x4ac] sm:$0xff]
        %v1134 = vld [vmem:[%s966 + $0x4b4] sm:$0xff]
        %v1135 = vld [vmem:[%s966 + $0x4bc] sm:$0xff]
        %v1136 = vld [vmem:[%s966 + $0x4c4] sm:$0xf]
        %v1137 = vld [vmem:[%s966 + $0x4c8] sm:$0xff]
        %v1138 = vld [vmem:[%s966 + $0x4d0] sm:$0xff]
        %v1139 = vld [vmem:[%s966 + $0x4d8] sm:$0xff]
        %v1140 = vld [vmem:[%s966 + $0x4e0] sm:$0xff]
        %v1141 = vld [vmem:[%s966 + $0x4e8] sm:$0xf]
        %v1142 = vld [vmem:[%s966 + $0x4ec] sm:$0xff]
        %v1143 = vld [vmem:[%s966 + $0x4f4] sm:$0xff]
        %v1144 = vld [vmem:[%s966 + $0x4fc] sm:$0xff]
        %v1145 = vld [vmem:[%s966 + $0x504] sm:$0xff]
        %v1146 = vld [vmem:[%s966 + $0x50c] sm:$0xf]
        %v1147 = vld [vmem:[%s966 + $0x510] sm:$0xff]
        %v1148 = vld [vmem:[%s966 + $0x518] sm:$0xff]
        %v1149 = vld [vmem:[%s966 + $0x520] sm:$0xff]
        %v1150 = vld [vmem:[%s966 + $0x528] sm:$0xff]
        %v1151 = vld [vmem:[%s966 + $0x530] sm:$0xf]
        %v1152 = vld [vmem:[%s966 + $0x534] sm:$0xff]
        %v1153 = vld [vmem:[%s966 + $0x53c] sm:$0xff]
        %v1154 = vld [vmem:[%s966 + $0x544] sm:$0xff]
        %v1155 = vld [vmem:[%s966 + $0x54c] sm:$0xff]
        %v1156 = vld [vmem:[%s966 + $0x554] sm:$0xf]
        %v1157 = vld [vmem:[%s966 + $0x558] sm:$0xff]
        %v1158 = vld [vmem:[%s966 + $0x560] sm:$0xff]
        %v1159 = vld [vmem:[%s966 + $0x568] sm:$0xff]
        %v1160 = vld [vmem:[%s966 + $0x570] sm:$0xff]
        %v1161 = vld [vmem:[%s966 + $0x578] sm:$0xf]
        %v1162 = vld [vmem:[%s966 + $0x57c] sm:$0xff]
        %v1163 = vld [vmem:[%s966 + $0x584] sm:$0xff]
        %v1164 = vld [vmem:[%s966 + $0x58c] sm:$0xff]
        %v1165 = vld [vmem:[%s966 + $0x594] sm:$0xff]
        %v1166 = vld [vmem:[%s966 + $0x59c] sm:$0xf]
        %v1167 = vld [vmem:[%s966 + $0x5a0] sm:$0xff]
        %v1168 = vld [vmem:[%s966 + $0x5a8] sm:$0xff]
        %v1169 = vld [vmem:[%s966 + $0x5b0] sm:$0xff]
        %v1170 = vld [vmem:[%s966 + $0x5b8] sm:$0xff]
        %v1171 = vld [vmem:[%s966 + $0x5c0] sm:$0xf]
        %v1172 = vld [vmem:[%s966 + $0x5c4] sm:$0xff]
        %v1173 = vld [vmem:[%s966 + $0x5cc] sm:$0xff]
        %v1174 = vld [vmem:[%s966 + $0x5d4] sm:$0xff]
        %v1175 = vld [vmem:[%s966 + $0x5dc] sm:$0xff]
        %v1176 = vld [vmem:[%s966 + $0x5e4] sm:$0xf]
        %v1177 = vld [vmem:[%s966 + $0x5e8] sm:$0xff]
        %v1178 = vld [vmem:[%s966 + $0x5f0] sm:$0xff]
        %v1179 = vld [vmem:[%s966 + $0x5f8] sm:$0xff]
        %v1180 = vld [vmem:[%s966 + $0x600] sm:$0xff]
        %v1181 = vld [vmem:[%s966 + $0x608] sm:$0xf]
        %v1182 = vld [vmem:[%s966 + $0x60c] sm:$0xff]
        %v1183 = vld [vmem:[%s966 + $0x614] sm:$0xff]
        %v1184 = vld [vmem:[%s966 + $0x61c] sm:$0xff]
        %v1185 = vld [vmem:[%s966 + $0x624] sm:$0xff]
        %v1186 = vld [vmem:[%s966 + $0x62c] sm:$0xf]
        %v1187 = vld [vmem:[%s966 + $0x630] sm:$0xff]
        %v1188 = vld [vmem:[%s966 + $0x638] sm:$0xff]
        %v1189 = vld [vmem:[%s966 + $0x640] sm:$0xff]
        %v1190 = vld [vmem:[%s966 + $0x648] sm:$0xff]
        %v1191 = vld [vmem:[%s966 + $0x650] sm:$0xf]
        %v1192 = vld [vmem:[%s966 + $0x654] sm:$0xff]
        %v1193 = vld [vmem:[%s966 + $0x65c] sm:$0xff]
        %v1194 = vld [vmem:[%s966 + $0x664] sm:$0xff]
        %v1195 = vld [vmem:[%s966 + $0x66c] sm:$0xff]
        %v1196 = vld [vmem:[%s966 + $0x674] sm:$0xf]
        %v1197 = vld [vmem:[%s966 + $0x678] sm:$0xff]
        %v1198 = vld [vmem:[%s966 + $0x680] sm:$0xff]
        %v1199 = vld [vmem:[%s966 + $0x688] sm:$0xff]
        %v1200 = vld [vmem:[%s966 + $0x690] sm:$0xff]
        %v1201 = vld [vmem:[%s966 + $0x698] sm:$0xf]
        %v1202 = vld [vmem:[%s966 + $0x69c] sm:$0xff]
        %v1203 = vld [vmem:[%s966 + $0x6a4] sm:$0xff]
        %v1204 = vld [vmem:[%s966 + $0x6ac] sm:$0xff]
        %v1205 = vld [vmem:[%s966 + $0x6b4] sm:$0xff]
        %v1206 = vld [vmem:[%s966 + $0x6bc] sm:$0xf]
        %v1211 = vunpack.c.l.b16 %v960
        %v1212 = vunpack.c.h.b16 %v960
        %v1213 = vunpack.c.l.b16 %v961
        %v1214 = vunpack.c.l.b16 %v962
        %v1215 = vunpack.c.h.b16 %v962
        %v1216 = vunpack.c.l.b16 %v963
        %v1217 = vpack.c.b16 %v1214, %v1211
        %v1218 = vpack.c.b16 %v1215, %v1212
        %v1219 = vpack.c.b16 %v1216, %v1213
        %v1463 = vunpack.c.l.b16 %v967
        %v1464 = vunpack.c.h.b16 %v967
        %v1465 = vunpack.c.l.b16 %v968
        %v1466 = vunpack.c.h.b16 %v968
        %v1467 = vunpack.c.l.b16 %v969
        %v1468 = vunpack.c.h.b16 %v969
        %v1469 = vunpack.c.l.b16 %v970
        %v1470 = vunpack.c.h.b16 %v970
        %v1471 = vunpack.c.l.b16 %v971
        %v1472 = vunpack.c.l.b16 %v972
        %v1473 = vunpack.c.h.b16 %v972
        %v1474 = vunpack.c.l.b16 %v973
        %v1475 = vunpack.c.h.b16 %v973
        %v1476 = vunpack.c.l.b16 %v974
        %v1477 = vunpack.c.h.b16 %v974
        %v1478 = vunpack.c.l.b16 %v975
        %v1479 = vunpack.c.h.b16 %v975
        %v1480 = vunpack.c.l.b16 %v976
        %v1481 = vunpack.c.l.b16 %v977
        %v1482 = vunpack.c.h.b16 %v977
        %v1483 = vunpack.c.l.b16 %v978
        %v1484 = vunpack.c.h.b16 %v978
        %v1485 = vunpack.c.l.b16 %v979
        %v1486 = vunpack.c.h.b16 %v979
        %v1487 = vunpack.c.l.b16 %v980
        %v1488 = vunpack.c.h.b16 %v980
        %v1489 = vunpack.c.l.b16 %v981
        %v1490 = vunpack.c.l.b16 %v982
        %v1491 = vunpack.c.h.b16 %v982
        %v1492 = vunpack.c.l.b16 %v983
        %v1493 = vunpack.c.h.b16 %v983
        %v1494 = vunpack.c.l.b16 %v984
        %v1495 = vunpack.c.h.b16 %v984
        %v1496 = vunpack.c.l.b16 %v985
        %v1497 = vunpack.c.h.b16 %v985
        %v1498 = vunpack.c.l.b16 %v986
        %v1499 = vunpack.c.l.b16 %v987
        %v1500 = vunpack.c.h.b16 %v987
        %v1501 = vunpack.c.l.b16 %v988
        %v1502 = vunpack.c.h.b16 %v988
        %v1503 = vunpack.c.l.b16 %v989
        %v1504 = vunpack.c.h.b16 %v989
        %v1505 = vunpack.c.l.b16 %v990
        %v1506 = vunpack.c.h.b16 %v990
        %v1507 = vunpack.c.l.b16 %v991
        %v1508 = vunpack.c.l.b16 %v992
        %v1509 = vunpack.c.h.b16 %v992
        %v1510 = vunpack.c.l.b16 %v993
        %v1511 = vunpack.c.h.b16 %v993
        %v1512 = vunpack.c.l.b16 %v994
        %v1513 = vunpack.c.h.b16 %v994
        %v1514 = vunpack.c.l.b16 %v995
        %v1515 = vunpack.c.h.b16 %v995
        %v1516 = vunpack.c.l.b16 %v996
        %v1517 = vunpack.c.l.b16 %v997
        %v1518 = vunpack.c.h.b16 %v997
        %v1519 = vunpack.c.l.b16 %v998
        %v1520 = vunpack.c.h.b16 %v998
        %v1521 = vunpack.c.l.b16 %v999
        %v1522 = vunpack.c.h.b16 %v999
        %v1523 = vunpack.c.l.b16 %v1000
        %v1524 = vunpack.c.h.b16 %v1000
        %v1525 = vunpack.c.l.b16 %v1001
        %v1526 = vunpack.c.l.b16 %v1002
        %v1527 = vunpack.c.h.b16 %v1002
        %v1528 = vunpack.c.l.b16 %v1003
        %v1529 = vunpack.c.h.b16 %v1003
        %v1530 = vunpack.c.l.b16 %v1004
        %v1531 = vunpack.c.h.b16 %v1004
        %v1532 = vunpack.c.l.b16 %v1005
        %v1533 = vunpack.c.h.b16 %v1005
        %v1534 = vunpack.c.l.b16 %v1006
        %v1535 = vunpack.c.l.b16 %v1007
        %v1536 = vunpack.c.h.b16 %v1007
        %v1537 = vunpack.c.l.b16 %v1008
        %v1538 = vunpack.c.h.b16 %v1008
        %v1539 = vunpack.c.l.b16 %v1009
        %v1540 = vunpack.c.h.b16 %v1009
        %v1541 = vunpack.c.l.b16 %v1010
        %v1542 = vunpack.c.h.b16 %v1010
        %v1543 = vunpack.c.l.b16 %v1011
        %v1544 = vunpack.c.l.b16 %v1012
        %v1545 = vunpack.c.h.b16 %v1012
        %v1546 = vunpack.c.l.b16 %v1013
        %v1547 = vunpack.c.h.b16 %v1013
        %v1548 = vunpack.c.l.b16 %v1014
        %v1549 = vunpack.c.h.b16 %v1014
        %v1550 = vunpack.c.l.b16 %v1015
        %v1551 = vunpack.c.h.b16 %v1015
        %v1552 = vunpack.c.l.b16 %v1016
        %v1553 = vunpack.c.l.b16 %v1017
        %v1554 = vunpack.c.h.b16 %v1017
        %v1555 = vunpack.c.l.b16 %v1018
        %v1556 = vunpack.c.h.b16 %v1018
        %v1557 = vunpack.c.l.b16 %v1019
        %v1558 = vunpack.c.h.b16 %v1019
        %v1559 = vunpack.c.l.b16 %v1020
        %v1560 = vunpack.c.h.b16 %v1020
        %v1561 = vunpack.c.l.b16 %v1021
        %v1562 = vunpack.c.l.b16 %v1022
        %v1563 = vunpack.c.h.b16 %v1022
        %v1564 = vunpack.c.l.b16 %v1023
        %v1565 = vunpack.c.h.b16 %v1023
        %v1566 = vunpack.c.l.b16 %v1024
        %v1567 = vunpack.c.h.b16 %v1024
        %v1568 = vunpack.c.l.b16 %v1025
        %v1569 = vunpack.c.h.b16 %v1025
        %v1570 = vunpack.c.l.b16 %v1026
        %v1571 = vunpack.c.l.b16 %v1027
        %v1572 = vunpack.c.h.b16 %v1027
        %v1573 = vunpack.c.l.b16 %v1028
        %v1574 = vunpack.c.h.b16 %v1028
        %v1575 = vunpack.c.l.b16 %v1029
        %v1576 = vunpack.c.h.b16 %v1029
        %v1577 = vunpack.c.l.b16 %v1030
        %v1578 = vunpack.c.h.b16 %v1030
        %v1579 = vunpack.c.l.b16 %v1031
        %v1580 = vunpack.c.l.b16 %v1032
        %v1581 = vunpack.c.h.b16 %v1032
        %v1582 = vunpack.c.l.b16 %v1033
        %v1583 = vunpack.c.h.b16 %v1033
        %v1584 = vunpack.c.l.b16 %v1034
        %v1585 = vunpack.c.h.b16 %v1034
        %v1586 = vunpack.c.l.b16 %v1035
        %v1587 = vunpack.c.h.b16 %v1035
        %v1588 = vunpack.c.l.b16 %v1036
        %v1589 = vunpack.c.l.b16 %v1037
        %v1590 = vunpack.c.h.b16 %v1037
        %v1591 = vunpack.c.l.b16 %v1038
        %v1592 = vunpack.c.h.b16 %v1038
        %v1593 = vunpack.c.l.b16 %v1039
        %v1594 = vunpack.c.h.b16 %v1039
        %v1595 = vunpack.c.l.b16 %v1040
        %v1596 = vunpack.c.h.b16 %v1040
        %v1597 = vunpack.c.l.b16 %v1041
        %v1598 = vunpack.c.l.b16 %v1042
        %v1599 = vunpack.c.h.b16 %v1042
        %v1600 = vunpack.c.l.b16 %v1043
        %v1601 = vunpack.c.h.b16 %v1043
        %v1602 = vunpack.c.l.b16 %v1044
        %v1603 = vunpack.c.h.b16 %v1044
        %v1604 = vunpack.c.l.b16 %v1045
        %v1605 = vunpack.c.h.b16 %v1045
        %v1606 = vunpack.c.l.b16 %v1046
        %v1607 = vunpack.c.l.b16 %v1047
        %v1608 = vunpack.c.h.b16 %v1047
        %v1609 = vunpack.c.l.b16 %v1048
        %v1610 = vunpack.c.h.b16 %v1048
        %v1611 = vunpack.c.l.b16 %v1049
        %v1612 = vunpack.c.h.b16 %v1049
        %v1613 = vunpack.c.l.b16 %v1050
        %v1614 = vunpack.c.h.b16 %v1050
        %v1615 = vunpack.c.l.b16 %v1051
        %v1616 = vunpack.c.l.b16 %v1052
        %v1617 = vunpack.c.h.b16 %v1052
        %v1618 = vunpack.c.l.b16 %v1053
        %v1619 = vunpack.c.h.b16 %v1053
        %v1620 = vunpack.c.l.b16 %v1054
        %v1621 = vunpack.c.h.b16 %v1054
        %v1622 = vunpack.c.l.b16 %v1055
        %v1623 = vunpack.c.h.b16 %v1055
        %v1624 = vunpack.c.l.b16 %v1056
        %v1625 = vunpack.c.l.b16 %v1057
        %v1626 = vunpack.c.h.b16 %v1057
        %v1627 = vunpack.c.l.b16 %v1058
        %v1628 = vunpack.c.h.b16 %v1058
        %v1629 = vunpack.c.l.b16 %v1059
        %v1630 = vunpack.c.h.b16 %v1059
        %v1631 = vunpack.c.l.b16 %v1060
        %v1632 = vunpack.c.h.b16 %v1060
        %v1633 = vunpack.c.l.b16 %v1061
        %v1634 = vunpack.c.l.b16 %v1062
        %v1635 = vunpack.c.h.b16 %v1062
        %v1636 = vunpack.c.l.b16 %v1063
        %v1637 = vunpack.c.h.b16 %v1063
        %v1638 = vunpack.c.l.b16 %v1064
        %v1639 = vunpack.c.h.b16 %v1064
        %v1640 = vunpack.c.l.b16 %v1065
        %v1641 = vunpack.c.h.b16 %v1065
        %v1642 = vunpack.c.l.b16 %v1066
        %v1643 = vunpack.c.l.b16 %v1067
        %v1644 = vunpack.c.h.b16 %v1067
        %v1645 = vunpack.c.l.b16 %v1068
        %v1646 = vunpack.c.h.b16 %v1068
        %v1647 = vunpack.c.l.b16 %v1069
        %v1648 = vunpack.c.h.b16 %v1069
        %v1649 = vunpack.c.l.b16 %v1070
        %v1650 = vunpack.c.h.b16 %v1070
        %v1651 = vunpack.c.l.b16 %v1071
        %v1652 = vunpack.c.l.b16 %v1072
        %v1653 = vunpack.c.h.b16 %v1072
        %v1654 = vunpack.c.l.b16 %v1073
        %v1655 = vunpack.c.h.b16 %v1073
        %v1656 = vunpack.c.l.b16 %v1074
        %v1657 = vunpack.c.h.b16 %v1074
        %v1658 = vunpack.c.l.b16 %v1075
        %v1659 = vunpack.c.h.b16 %v1075
        %v1660 = vunpack.c.l.b16 %v1076
        %v1661 = vunpack.c.l.b16 %v1077
        %v1662 = vunpack.c.h.b16 %v1077
        %v1663 = vunpack.c.l.b16 %v1078
        %v1664 = vunpack.c.h.b16 %v1078
        %v1665 = vunpack.c.l.b16 %v1079
        %v1666 = vunpack.c.h.b16 %v1079
        %v1667 = vunpack.c.l.b16 %v1080
        %v1668 = vunpack.c.h.b16 %v1080
        %v1669 = vunpack.c.l.b16 %v1081
        %v1670 = vunpack.c.l.b16 %v1082
        %v1671 = vunpack.c.h.b16 %v1082
        %v1672 = vunpack.c.l.b16 %v1083
        %v1673 = vunpack.c.h.b16 %v1083
        %v1674 = vunpack.c.l.b16 %v1084
        %v1675 = vunpack.c.h.b16 %v1084
        %v1676 = vunpack.c.l.b16 %v1085
        %v1677 = vunpack.c.h.b16 %v1085
        %v1678 = vunpack.c.l.b16 %v1086
        %v1679 = vunpack.c.l.b16 %v1087
        %v1680 = vunpack.c.h.b16 %v1087
        %v1681 = vunpack.c.l.b16 %v1088
        %v1682 = vunpack.c.h.b16 %v1088
        %v1683 = vunpack.c.l.b16 %v1089
        %v1684 = vunpack.c.h.b16 %v1089
        %v1685 = vunpack.c.l.b16 %v1090
        %v1686 = vunpack.c.h.b16 %v1090
        %v1687 = vunpack.c.l.b16 %v1091
        %v1688 = vunpack.c.l.b16 %v1092
        %v1689 = vunpack.c.h.b16 %v1092
        %v1690 = vunpack.c.l.b16 %v1093
        %v1691 = vunpack.c.h.b16 %v1093
        %v1692 = vunpack.c.l.b16 %v1094
        %v1693 = vunpack.c.h.b16 %v1094
        %v1694 = vunpack.c.l.b16 %v1095
        %v1695 = vunpack.c.h.b16 %v1095
        %v1696 = vunpack.c.l.b16 %v1096
        %v1697 = vunpack.c.l.b16 %v1097
        %v1698 = vunpack.c.h.b16 %v1097
        %v1699 = vunpack.c.l.b16 %v1098
        %v1700 = vunpack.c.h.b16 %v1098
        %v1701 = vunpack.c.l.b16 %v1099
        %v1702 = vunpack.c.h.b16 %v1099
        %v1703 = vunpack.c.l.b16 %v1100
        %v1704 = vunpack.c.h.b16 %v1100
        %v1705 = vunpack.c.l.b16 %v1101
        %v1706 = vunpack.c.l.b16 %v1102
        %v1707 = vunpack.c.h.b16 %v1102
        %v1708 = vunpack.c.l.b16 %v1103
        %v1709 = vunpack.c.h.b16 %v1103
        %v1710 = vunpack.c.l.b16 %v1104
        %v1711 = vunpack.c.h.b16 %v1104
        %v1712 = vunpack.c.l.b16 %v1105
        %v1713 = vunpack.c.h.b16 %v1105
        %v1714 = vunpack.c.l.b16 %v1106
        %v1715 = vunpack.c.l.b16 %v1107
        %v1716 = vunpack.c.h.b16 %v1107
        %v1717 = vunpack.c.l.b16 %v1108
        %v1718 = vunpack.c.h.b16 %v1108
        %v1719 = vunpack.c.l.b16 %v1109
        %v1720 = vunpack.c.h.b16 %v1109
        %v1721 = vunpack.c.l.b16 %v1110
        %v1722 = vunpack.c.h.b16 %v1110
        %v1723 = vunpack.c.l.b16 %v1111
        %v1724 = vunpack.c.l.b16 %v1112
        %v1725 = vunpack.c.h.b16 %v1112
        %v1726 = vunpack.c.l.b16 %v1113
        %v1727 = vunpack.c.h.b16 %v1113
        %v1728 = vunpack.c.l.b16 %v1114
        %v1729 = vunpack.c.h.b16 %v1114
        %v1730 = vunpack.c.l.b16 %v1115
        %v1731 = vunpack.c.h.b16 %v1115
        %v1732 = vunpack.c.l.b16 %v1116
        %v1733 = vunpack.c.l.b16 %v1117
        %v1734 = vunpack.c.h.b16 %v1117
        %v1735 = vunpack.c.l.b16 %v1118
        %v1736 = vunpack.c.h.b16 %v1118
        %v1737 = vunpack.c.l.b16 %v1119
        %v1738 = vunpack.c.h.b16 %v1119
        %v1739 = vunpack.c.l.b16 %v1120
        %v1740 = vunpack.c.h.b16 %v1120
        %v1741 = vunpack.c.l.b16 %v1121
        %v1742 = vunpack.c.l.b16 %v1122
        %v1743 = vunpack.c.h.b16 %v1122
        %v1744 = vunpack.c.l.b16 %v1123
        %v1745 = vunpack.c.h.b16 %v1123
        %v1746 = vunpack.c.l.b16 %v1124
        %v1747 = vunpack.c.h.b16 %v1124
        %v1748 = vunpack.c.l.b16 %v1125
        %v1749 = vunpack.c.h.b16 %v1125
        %v1750 = vunpack.c.l.b16 %v1126
        %v1751 = vunpack.c.l.b16 %v1127
        %v1752 = vunpack.c.h.b16 %v1127
        %v1753 = vunpack.c.l.b16 %v1128
        %v1754 = vunpack.c.h.b16 %v1128
        %v1755 = vunpack.c.l.b16 %v1129
        %v1756 = vunpack.c.h.b16 %v1129
        %v1757 = vunpack.c.l.b16 %v1130
        %v1758 = vunpack.c.h.b16 %v1130
        %v1759 = vunpack.c.l.b16 %v1131
        %v1760 = vunpack.c.l.b16 %v1132
        %v1761 = vunpack.c.h.b16 %v1132
        %v1762 = vunpack.c.l.b16 %v1133
        %v1763 = vunpack.c.h.b16 %v1133
        %v1764 = vunpack.c.l.b16 %v1134
        %v1765 = vunpack.c.h.b16 %v1134
        %v1766 = vunpack.c.l.b16 %v1135
        %v1767 = vunpack.c.h.b16 %v1135
        %v1768 = vunpack.c.l.b16 %v1136
        %v1769 = vunpack.c.l.b16 %v1137
        %v1770 = vunpack.c.h.b16 %v1137
        %v1771 = vunpack.c.l.b16 %v1138
        %v1772 = vunpack.c.h.b16 %v1138
        %v1773 = vunpack.c.l.b16 %v1139
        %v1774 = vunpack.c.h.b16 %v1139
        %v1775 = vunpack.c.l.b16 %v1140
        %v1776 = vunpack.c.h.b16 %v1140
        %v1777 = vunpack.c.l.b16 %v1141
        %v1778 = vunpack.c.l.b16 %v1142
        %v1779 = vunpack.c.h.b16 %v1142
        %v1780 = vunpack.c.l.b16 %v1143
        %v1781 = vunpack.c.h.b16 %v1143
        %v1782 = vunpack.c.l.b16 %v1144
        %v1783 = vunpack.c.h.b16 %v1144
        %v1784 = vunpack.c.l.b16 %v1145
        %v1785 = vunpack.c.h.b16 %v1145
        %v1786 = vunpack.c.l.b16 %v1146
        %v1787 = vunpack.c.l.b16 %v1147
        %v1788 = vunpack.c.h.b16 %v1147
        %v1789 = vunpack.c.l.b16 %v1148
        %v1790 = vunpack.c.h.b16 %v1148
        %v1791 = vunpack.c.l.b16 %v1149
        %v1792 = vunpack.c.h.b16 %v1149
        %v1793 = vunpack.c.l.b16 %v1150
        %v1794 = vunpack.c.h.b16 %v1150
        %v1795 = vunpack.c.l.b16 %v1151
        %v1796 = vunpack.c.l.b16 %v1152
        %v1797 = vunpack.c.h.b16 %v1152
        %v1798 = vunpack.c.l.b16 %v1153
        %v1799 = vunpack.c.h.b16 %v1153
        %v1800 = vunpack.c.l.b16 %v1154
        %v1801 = vunpack.c.h.b16 %v1154
        %v1802 = vunpack.c.l.b16 %v1155
        %v1803 = vunpack.c.h.b16 %v1155
        %v1804 = vunpack.c.l.b16 %v1156
        %v1805 = vunpack.c.l.b16 %v1157
        %v1806 = vunpack.c.h.b16 %v1157
        %v1807 = vunpack.c.l.b16 %v1158
        %v1808 = vunpack.c.h.b16 %v1158
        %v1809 = vunpack.c.l.b16 %v1159
        %v1810 = vunpack.c.h.b16 %v1159
        %v1811 = vunpack.c.l.b16 %v1160
        %v1812 = vunpack.c.h.b16 %v1160
        %v1813 = vunpack.c.l.b16 %v1161
        %v1814 = vunpack.c.l.b16 %v1162
        %v1815 = vunpack.c.h.b16 %v1162
        %v1816 = vunpack.c.l.b16 %v1163
        %v1817 = vunpack.c.h.b16 %v1163
        %v1818 = vunpack.c.l.b16 %v1164
        %v1819 = vunpack.c.h.b16 %v1164
        %v1820 = vunpack.c.l.b16 %v1165
        %v1821 = vunpack.c.h.b16 %v1165
        %v1822 = vunpack.c.l.b16 %v1166
        %v1823 = vunpack.c.l.b16 %v1167
        %v1824 = vunpack.c.h.b16 %v1167
        %v1825 = vunpack.c.l.b16 %v1168
        %v1826 = vunpack.c.h.b16 %v1168
        %v1827 = vunpack.c.l.b16 %v1169
        %v1828 = vunpack.c.h.b16 %v1169
        %v1829 = vunpack.c.l.b16 %v1170
        %v1830 = vunpack.c.h.b16 %v1170
        %v1831 = vunpack.c.l.b16 %v1171
        %v1832 = vunpack.c.l.b16 %v1172
        %v1833 = vunpack.c.h.b16 %v1172
        %v1834 = vunpack.c.l.b16 %v1173
        %v1835 = vunpack.c.h.b16 %v1173
        %v1836 = vunpack.c.l.b16 %v1174
        %v1837 = vunpack.c.h.b16 %v1174
        %v1838 = vunpack.c.l.b16 %v1175
        %v1839 = vunpack.c.h.b16 %v1175
        %v1840 = vunpack.c.l.b16 %v1176
        %v1841 = vunpack.c.l.b16 %v1177
        %v1842 = vunpack.c.h.b16 %v1177
        %v1843 = vunpack.c.l.b16 %v1178
        %v1844 = vunpack.c.h.b16 %v1178
        %v1845 = vunpack.c.l.b16 %v1179
        %v1846 = vunpack.c.h.b16 %v1179
        %v1847 = vunpack.c.l.b16 %v1180
        %v1848 = vunpack.c.h.b16 %v1180
        %v1849 = vunpack.c.l.b16 %v1181
        %v1850 = vunpack.c.l.b16 %v1182
        %v1851 = vunpack.c.h.b16 %v1182
        %v1852 = vunpack.c.l.b16 %v1183
        %v1853 = vunpack.c.h.b16 %v1183
        %v1854 = vunpack.c.l.b16 %v1184
        %v1855 = vunpack.c.h.b16 %v1184
        %v1856 = vunpack.c.l.b16 %v1185
        %v1857 = vunpack.c.h.b16 %v1185
        %v1858 = vunpack.c.l.b16 %v1186
        %v1859 = vunpack.c.l.b16 %v1187
        %v1860 = vunpack.c.h.b16 %v1187
        %v1861 = vunpack.c.l.b16 %v1188
        %v1862 = vunpack.c.h.b16 %v1188
        %v1863 = vunpack.c.l.b16 %v1189
        %v1864 = vunpack.c.h.b16 %v1189
        %v1865 = vunpack.c.l.b16 %v1190
        %v1866 = vunpack.c.h.b16 %v1190
        %v1867 = vunpack.c.l.b16 %v1191
        %v1868 = vunpack.c.l.b16 %v1192
        %v1869 = vunpack.c.h.b16 %v1192
        %v1870 = vunpack.c.l.b16 %v1193
        %v1871 = vunpack.c.h.b16 %v1193
        %v1872 = vunpack.c.l.b16 %v1194
        %v1873 = vunpack.c.h.b16 %v1194
        %v1874 = vunpack.c.l.b16 %v1195
        %v1875 = vunpack.c.h.b16 %v1195
        %v1876 = vunpack.c.l.b16 %v1196
        %v1877 = vunpack.c.l.b16 %v1197
        %v1878 = vunpack.c.h.b16 %v1197
        %v1879 = vunpack.c.l.b16 %v1198
        %v1880 = vunpack.c.h.b16 %v1198
        %v1881 = vunpack.c.l.b16 %v1199
        %v1882 = vunpack.c.h.b16 %v1199
        %v1883 = vunpack.c.l.b16 %v1200
        %v1884 = vunpack.c.h.b16 %v1200
        %v1885 = vunpack.c.l.b16 %v1201
        %v1886 = vunpack.c.l.b16 %v1202
        %v1887 = vunpack.c.h.b16 %v1202
        %v1888 = vunpack.c.l.b16 %v1203
        %v1889 = vunpack.c.h.b16 %v1203
        %v1890 = vunpack.c.l.b16 %v1204
        %v1891 = vunpack.c.h.b16 %v1204
        %v1892 = vunpack.c.l.b16 %v1205
        %v1893 = vunpack.c.h.b16 %v1205
        %v1894 = vunpack.c.l.b16 %v1206
        %v1895 = vpack.c.b16 %v1472, %v1463
        %v1896 = vpack.c.b16 %v1473, %v1464
        %v1897 = vpack.c.b16 %v1474, %v1465
        %v1898 = vpack.c.b16 %v1475, %v1466
        %v1899 = vpack.c.b16 %v1476, %v1467
        %v1900 = vpack.c.b16 %v1477, %v1468
        %v1901 = vpack.c.b16 %v1478, %v1469
        %v1902 = vpack.c.b16 %v1479, %v1470
        %v1903 = vpack.c.b16 %v1480, %v1471
        %v1904 = vpack.c.b16 %v1490, %v1481
        %v1905 = vpack.c.b16 %v1491, %v1482
        %v1906 = vpack.c.b16 %v1492, %v1483
        %v1907 = vpack.c.b16 %v1493, %v1484
        %v1908 = vpack.c.b16 %v1494, %v1485
        %v1909 = vpack.c.b16 %v1495, %v1486
        %v1910 = vpack.c.b16 %v1496, %v1487
        %v1911 = vpack.c.b16 %v1497, %v1488
        %v1912 = vpack.c.b16 %v1498, %v1489
        %v1913 = vpack.c.b16 %v1508, %v1499
        %v1914 = vpack.c.b16 %v1509, %v1500
        %v1915 = vpack.c.b16 %v1510, %v1501
        %v1916 = vpack.c.b16 %v1511, %v1502
        %v1917 = vpack.c.b16 %v1512, %v1503
        %v1918 = vpack.c.b16 %v1513, %v1504
        %v1919 = vpack.c.b16 %v1514, %v1505
        %v1920 = vpack.c.b16 %v1515, %v1506
        %v1921 = vpack.c.b16 %v1516, %v1507
        %v1922 = vpack.c.b16 %v1526, %v1517
        %v1923 = vpack.c.b16 %v1527, %v1518
        %v1924 = vpack.c.b16 %v1528, %v1519
        %v1925 = vpack.c.b16 %v1529, %v1520
        %v1926 = vpack.c.b16 %v1530, %v1521
        %v1927 = vpack.c.b16 %v1531, %v1522
        %v1928 = vpack.c.b16 %v1532, %v1523
        %v1929 = vpack.c.b16 %v1533, %v1524
        %v1930 = vpack.c.b16 %v1534, %v1525
        %v1931 = vpack.c.b16 %v1544, %v1535
        %v1932 = vpack.c.b16 %v1545, %v1536
        %v1933 = vpack.c.b16 %v1546, %v1537
        %v1934 = vpack.c.b16 %v1547, %v1538
        %v1935 = vpack.c.b16 %v1548, %v1539
        %v1936 = vpack.c.b16 %v1549, %v1540
        %v1937 = vpack.c.b16 %v1550, %v1541
        %v1938 = vpack.c.b16 %v1551, %v1542
        %v1939 = vpack.c.b16 %v1552, %v1543
        %v1940 = vpack.c.b16 %v1562, %v1553
        %v1941 = vpack.c.b16 %v1563, %v1554
        %v1942 = vpack.c.b16 %v1564, %v1555
        %v1943 = vpack.c.b16 %v1565, %v1556
        %v1944 = vpack.c.b16 %v1566, %v1557
        %v1945 = vpack.c.b16 %v1567, %v1558
        %v1946 = vpack.c.b16 %v1568, %v1559
        %v1947 = vpack.c.b16 %v1569, %v1560
        %v1948 = vpack.c.b16 %v1570, %v1561
        %v1949 = vpack.c.b16 %v1580, %v1571
        %v1950 = vpack.c.b16 %v1581, %v1572
        %v1951 = vpack.c.b16 %v1582, %v1573
        %v1952 = vpack.c.b16 %v1583, %v1574
        %v1953 = vpack.c.b16 %v1584, %v1575
        %v1954 = vpack.c.b16 %v1585, %v1576
        %v1955 = vpack.c.b16 %v1586, %v1577
        %v1956 = vpack.c.b16 %v1587, %v1578
        %v1957 = vpack.c.b16 %v1588, %v1579
        %v1958 = vpack.c.b16 %v1598, %v1589
        %v1959 = vpack.c.b16 %v1599, %v1590
        %v1960 = vpack.c.b16 %v1600, %v1591
        %v1961 = vpack.c.b16 %v1601, %v1592
        %v1962 = vpack.c.b16 %v1602, %v1593
        %v1963 = vpack.c.b16 %v1603, %v1594
        %v1964 = vpack.c.b16 %v1604, %v1595
        %v1965 = vpack.c.b16 %v1605, %v1596
        %v1966 = vpack.c.b16 %v1606, %v1597
        %v1967 = vpack.c.b16 %v1616, %v1607
        %v1968 = vpack.c.b16 %v1617, %v1608
        %v1969 = vpack.c.b16 %v1618, %v1609
        %v1970 = vpack.c.b16 %v1619, %v1610
        %v1971 = vpack.c.b16 %v1620, %v1611
        %v1972 = vpack.c.b16 %v1621, %v1612
        %v1973 = vpack.c.b16 %v1622, %v1613
        %v1974 = vpack.c.b16 %v1623, %v1614
        %v1975 = vpack.c.b16 %v1624, %v1615
        %v1976 = vpack.c.b16 %v1634, %v1625
        %v1977 = vpack.c.b16 %v1635, %v1626
        %v1978 = vpack.c.b16 %v1636, %v1627
        %v1979 = vpack.c.b16 %v1637, %v1628
        %v1980 = vpack.c.b16 %v1638, %v1629
        %v1981 = vpack.c.b16 %v1639, %v1630
        %v1982 = vpack.c.b16 %v1640, %v1631
        %v1983 = vpack.c.b16 %v1641, %v1632
        %v1984 = vpack.c.b16 %v1642, %v1633
        %v1985 = vpack.c.b16 %v1652, %v1643
        %v1986 = vpack.c.b16 %v1653, %v1644
        %v1987 = vpack.c.b16 %v1654, %v1645
        %v1988 = vpack.c.b16 %v1655, %v1646
        %v1989 = vpack.c.b16 %v1656, %v1647
        %v1990 = vpack.c.b16 %v1657, %v1648
        %v1991 = vpack.c.b16 %v1658, %v1649
        %v1992 = vpack.c.b16 %v1659, %v1650
        %v1993 = vpack.c.b16 %v1660, %v1651
        %v1994 = vpack.c.b16 %v1670, %v1661
        %v1995 = vpack.c.b16 %v1671, %v1662
        %v1996 = vpack.c.b16 %v1672, %v1663
        %v1997 = vpack.c.b16 %v1673, %v1664
        %v1998 = vpack.c.b16 %v1674, %v1665
        %v1999 = vpack.c.b16 %v1675, %v1666
        %v2000 = vpack.c.b16 %v1676, %v1667
        %v2001 = vpack.c.b16 %v1677, %v1668
        %v2002 = vpack.c.b16 %v1678, %v1669
        %v2003 = vpack.c.b16 %v1688, %v1679
        %v2004 = vpack.c.b16 %v1689, %v1680
        %v2005 = vpack.c.b16 %v1690, %v1681
        %v2006 = vpack.c.b16 %v1691, %v1682
        %v2007 = vpack.c.b16 %v1692, %v1683
        %v2008 = vpack.c.b16 %v1693, %v1684
        %v2009 = vpack.c.b16 %v1694, %v1685
        %v2010 = vpack.c.b16 %v1695, %v1686
        %v2011 = vpack.c.b16 %v1696, %v1687
        %v2012 = vpack.c.b16 %v1706, %v1697
        %v2013 = vpack.c.b16 %v1707, %v1698
        %v2014 = vpack.c.b16 %v1708, %v1699
        %v2015 = vpack.c.b16 %v1709, %v1700
        %v2016 = vpack.c.b16 %v1710, %v1701
        %v2017 = vpack.c.b16 %v1711, %v1702
        %v2018 = vpack.c.b16 %v1712, %v1703
        %v2019 = vpack.c.b16 %v1713, %v1704
        %v2020 = vpack.c.b16 %v1714, %v1705
        %v2021 = vpack.c.b16 %v1724, %v1715
        %v2022 = vpack.c.b16 %v1725, %v1716
        %v2023 = vpack.c.b16 %v1726, %v1717
        %v2024 = vpack.c.b16 %v1727, %v1718
        %v2025 = vpack.c.b16 %v1728, %v1719
        %v2026 = vpack.c.b16 %v1729, %v1720
        %v2027 = vpack.c.b16 %v1730, %v1721
        %v2028 = vpack.c.b16 %v1731, %v1722
        %v2029 = vpack.c.b16 %v1732, %v1723
        %v2030 = vpack.c.b16 %v1742, %v1733
        %v2031 = vpack.c.b16 %v1743, %v1734
        %v2032 = vpack.c.b16 %v1744, %v1735
        %v2033 = vpack.c.b16 %v1745, %v1736
        %v2034 = vpack.c.b16 %v1746, %v1737
        %v2035 = vpack.c.b16 %v1747, %v1738
        %v2036 = vpack.c.b16 %v1748, %v1739
        %v2037 = vpack.c.b16 %v1749, %v1740
        %v2038 = vpack.c.b16 %v1750, %v1741
        %v2039 = vpack.c.b16 %v1760, %v1751
        %v2040 = vpack.c.b16 %v1761, %v1752
        %v2041 = vpack.c.b16 %v1762, %v1753
        %v2042 = vpack.c.b16 %v1763, %v1754
        %v2043 = vpack.c.b16 %v1764, %v1755
        %v2044 = vpack.c.b16 %v1765, %v1756
        %v2045 = vpack.c.b16 %v1766, %v1757
        %v2046 = vpack.c.b16 %v1767, %v1758
        %v2047 = vpack.c.b16 %v1768, %v1759
        %v2048 = vpack.c.b16 %v1778, %v1769
        %v2049 = vpack.c.b16 %v1779, %v1770
        %v2050 = vpack.c.b16 %v1780, %v1771
        %v2051 = vpack.c.b16 %v1781, %v1772
        %v2052 = vpack.c.b16 %v1782, %v1773
        %v2053 = vpack.c.b16 %v1783, %v1774
        %v2054 = vpack.c.b16 %v1784, %v1775
        %v2055 = vpack.c.b16 %v1785, %v1776
        %v2056 = vpack.c.b16 %v1786, %v1777
        %v2057 = vpack.c.b16 %v1796, %v1787
        %v2058 = vpack.c.b16 %v1797, %v1788
        %v2059 = vpack.c.b16 %v1798, %v1789
        %v2060 = vpack.c.b16 %v1799, %v1790
        %v2061 = vpack.c.b16 %v1800, %v1791
        %v2062 = vpack.c.b16 %v1801, %v1792
        %v2063 = vpack.c.b16 %v1802, %v1793
        %v2064 = vpack.c.b16 %v1803, %v1794
        %v2065 = vpack.c.b16 %v1804, %v1795
        %v2066 = vpack.c.b16 %v1814, %v1805
        %v2067 = vpack.c.b16 %v1815, %v1806
        %v2068 = vpack.c.b16 %v1816, %v1807
        %v2069 = vpack.c.b16 %v1817, %v1808
        %v2070 = vpack.c.b16 %v1818, %v1809
        %v2071 = vpack.c.b16 %v1819, %v1810
        %v2072 = vpack.c.b16 %v1820, %v1811
        %v2073 = vpack.c.b16 %v1821, %v1812
        %v2074 = vpack.c.b16 %v1822, %v1813
        %v2075 = vpack.c.b16 %v1832, %v1823
        %v2076 = vpack.c.b16 %v1833, %v1824
        %v2077 = vpack.c.b16 %v1834, %v1825
        %v2078 = vpack.c.b16 %v1835, %v1826
        %v2079 = vpack.c.b16 %v1836, %v1827
        %v2080 = vpack.c.b16 %v1837, %v1828
        %v2081 = vpack.c.b16 %v1838, %v1829
        %v2082 = vpack.c.b16 %v1839, %v1830
        %v2083 = vpack.c.b16 %v1840, %v1831
        %v2084 = vpack.c.b16 %v1850, %v1841
        %v2085 = vpack.c.b16 %v1851, %v1842
        %v2086 = vpack.c.b16 %v1852, %v1843
        %v2087 = vpack.c.b16 %v1853, %v1844
        %v2088 = vpack.c.b16 %v1854, %v1845
        %v2089 = vpack.c.b16 %v1855, %v1846
        %v2090 = vpack.c.b16 %v1856, %v1847
        %v2091 = vpack.c.b16 %v1857, %v1848
        %v2092 = vpack.c.b16 %v1858, %v1849
        %v2093 = vpack.c.b16 %v1868, %v1859
        %v2094 = vpack.c.b16 %v1869, %v1860
        %v2095 = vpack.c.b16 %v1870, %v1861
        %v2096 = vpack.c.b16 %v1871, %v1862
        %v2097 = vpack.c.b16 %v1872, %v1863
        %v2098 = vpack.c.b16 %v1873, %v1864
        %v2099 = vpack.c.b16 %v1874, %v1865
        %v2100 = vpack.c.b16 %v1875, %v1866
        %v2101 = vpack.c.b16 %v1876, %v1867
        %v2102 = vpack.c.b16 %v1886, %v1877
        %v2103 = vpack.c.b16 %v1887, %v1878
        %v2104 = vpack.c.b16 %v1888, %v1879
        %v2105 = vpack.c.b16 %v1889, %v1880
        %v2106 = vpack.c.b16 %v1890, %v1881
        %v2107 = vpack.c.b16 %v1891, %v1882
        %v2108 = vpack.c.b16 %v1892, %v1883
        %v2109 = vpack.c.b16 %v1893, %v1884
        %v2110 = vpack.c.b16 %v1894, %v1885
        %2327 = vmatpush.bf16.msra.mxu0 %v1958
        %2328 = vmatpush.bf16.msra.mxu0 %v1949
        %2329 = vmatpush.bf16.msra.mxu0 %v1940
        %2330 = vmatpush.bf16.msra.mxu0 %v1931
        %2331 = vmatpush.bf16.msra.mxu0 %v1922
        %2332 = vmatpush.bf16.msra.mxu0 %v1913
        %2333 = vmatpush.bf16.msra.mxu0 %v1904
        %2334 = vmatpush.bf16.msra.mxu0 %v1895
        %2335 = vmatmul.bf16.gmra.mxu0 %v1217
        %v2336 = vpop.f32.mrf.mxu0
        %v2337 = vadd.f32 0.0, %v2336
        %v2338 = vpop.f32.mrf.mxu0
        %v2339 = vadd.f32 0.0, %v2338
        %2340 = vdwg.mxu0
        %2341 = vmatpush.bf16.msra.mxu0 %v2030
        %2342 = vmatpush.bf16.msra.mxu0 %v2021
        %2343 = vmatpush.bf16.msra.mxu0 %v2012
        %2344 = vmatpush.bf16.msra.mxu0 %v2003
        %2345 = vmatpush.bf16.msra.mxu0 %v1994
        %2346 = vmatpush.bf16.msra.mxu0 %v1985
        %2347 = vmatpush.bf16.msra.mxu0 %v1976
        %2348 = vmatpush.bf16.msra.mxu0 %v1967
        %2349 = vmatmul.bf16.gmra.mxu0 %v1218
        %v2350 = vpop.f32.mrf.mxu0
        %v2351 = vadd.f32 %v2337, %v2350
        %v2352 = vpop.f32.mrf.mxu0
        %v2353 = vadd.f32 %v2339, %v2352
        %2354 = vdwg.mxu0
        %2355 = vmatpush.bf16.msra.mxu0 %v2102
        %2356 = vmatpush.bf16.msra.mxu0 %v2093
        %2357 = vmatpush.bf16.msra.mxu0 %v2084
        %2358 = vmatpush.bf16.msra.mxu0 %v2075
        %2359 = vmatpush.bf16.msra.mxu0 %v2066
        %2360 = vmatpush.bf16.msra.mxu0 %v2057
        %2361 = vmatpush.bf16.msra.mxu0 %v2048
        %2362 = vmatpush.bf16.msra.mxu0 %v2039
        %2363 = vmatmul.bf16.gmra.mxu0 %v1219
        %v2364 = vpop.f32.mrf.mxu0
        %v2365 = vadd.f32 %v2351, %v2364
        %v2366 = vpop.f32.mrf.mxu0
        %v2367 = vadd.f32 %v2353, %v2366
        %2368 = vdwg.mxu0
        %2369 = vmatpush.bf16.msra.mxu0 %v1959
        %2370 = vmatpush.bf16.msra.mxu0 %v1950
        %2371 = vmatpush.bf16.msra.mxu0 %v1941
        %2372 = vmatpush.bf16.msra.mxu0 %v1932
        %2373 = vmatpush.bf16.msra.mxu0 %v1923
        %2374 = vmatpush.bf16.msra.mxu0 %v1914
        %2375 = vmatpush.bf16.msra.mxu0 %v1905
        %2376 = vmatpush.bf16.msra.mxu0 %v1896
        %2377 = vmatmul.bf16.gmra.mxu0 %v1217
        %v2378 = vpop.f32.mrf.mxu0
        %v2379 = vadd.f32 0.0, %v2378
        %v2380 = vpop.f32.mrf.mxu0
        %v2381 = vadd.f32 0.0, %v2380
        %2382 = vdwg.mxu0
        %2383 = vmatpush.bf16.msra.mxu0 %v2031
        %2384 = vmatpush.bf16.msra.mxu0 %v2022
        %2385 = vmatpush.bf16.msra.mxu0 %v2013
        %2386 = vmatpush.bf16.msra.mxu0 %v2004
        %2387 = vmatpush.bf16.msra.mxu0 %v1995
        %2388 = vmatpush.bf16.msra.mxu0 %v1986
        %2389 = vmatpush.bf16.msra.mxu0 %v1977
        %2390 = vmatpush.bf16.msra.mxu0 %v1968
        %2391 = vmatmul.bf16.gmra.mxu0 %v1218
        %v2392 = vpop.f32.mrf.mxu0
        %v2393 = vadd.f32 %v2379, %v2392
        %v2394 = vpop.f32.mrf.mxu0
        %v2395 = vadd.f32 %v2381, %v2394
        %2396 = vdwg.mxu0
        %2397 = vmatpush.bf16.msra.mxu0 %v2103
        %2398 = vmatpush.bf16.msra.mxu0 %v2094
        %2399 = vmatpush.bf16.msra.mxu0 %v2085
        %2400 = vmatpush.bf16.msra.mxu0 %v2076
        %2401 = vmatpush.bf16.msra.mxu0 %v2067
        %2402 = vmatpush.bf16.msra.mxu0 %v2058
        %2403 = vmatpush.bf16.msra.mxu0 %v2049
        %2404 = vmatpush.bf16.msra.mxu0 %v2040
        %2405 = vmatmul.bf16.gmra.mxu0 %v1219
        %v2406 = vpop.f32.mrf.mxu0
        %v2407 = vadd.f32 %v2393, %v2406
        %v2408 = vpop.f32.mrf.mxu0
        %v2409 = vadd.f32 %v2395, %v2408
        %2410 = vdwg.mxu0
        %2411 = vmatpush.bf16.msra.mxu0 %v1960
        %2412 = vmatpush.bf16.msra.mxu0 %v1951
        %2413 = vmatpush.bf16.msra.mxu0 %v1942
        %2414 = vmatpush.bf16.msra.mxu0 %v1933
        %2415 = vmatpush.bf16.msra.mxu0 %v1924
        %2416 = vmatpush.bf16.msra.mxu0 %v1915
        %2417 = vmatpush.bf16.msra.mxu0 %v1906
        %2418 = vmatpush.bf16.msra.mxu0 %v1897
        %2419 = vmatmul.bf16.gmra.mxu0 %v1217
        %v2420 = vpop.f32.mrf.mxu0
        %v2421 = vadd.f32 0.0, %v2420
        %v2422 = vpop.f32.mrf.mxu0
        %v2423 = vadd.f32 0.0, %v2422
        %2424 = vdwg.mxu0
        %2425 = vmatpush.bf16.msra.mxu0 %v2032
        %2426 = vmatpush.bf16.msra.mxu0 %v2023
        %2427 = vmatpush.bf16.msra.mxu0 %v2014
        %2428 = vmatpush.bf16.msra.mxu0 %v2005
        %2429 = vmatpush.bf16.msra.mxu0 %v1996
        %2430 = vmatpush.bf16.msra.mxu0 %v1987
        %2431 = vmatpush.bf16.msra.mxu0 %v1978
        %2432 = vmatpush.bf16.msra.mxu0 %v1969
        %2433 = vmatmul.bf16.gmra.mxu0 %v1218
        %v2434 = vpop.f32.mrf.mxu0
        %v2435 = vadd.f32 %v2421, %v2434
        %v2436 = vpop.f32.mrf.mxu0
        %v2437 = vadd.f32 %v2423, %v2436
        %2438 = vdwg.mxu0
        %2439 = vmatpush.bf16.msra.mxu0 %v2104
        %2440 = vmatpush.bf16.msra.mxu0 %v2095
        %2441 = vmatpush.bf16.msra.mxu0 %v2086
        %2442 = vmatpush.bf16.msra.mxu0 %v2077
        %2443 = vmatpush.bf16.msra.mxu0 %v2068
        %2444 = vmatpush.bf16.msra.mxu0 %v2059
        %2445 = vmatpush.bf16.msra.mxu0 %v2050
        %2446 = vmatpush.bf16.msra.mxu0 %v2041
        %2447 = vmatmul.bf16.gmra.mxu0 %v1219
        %v2448 = vpop.f32.mrf.mxu0
        %v2449 = vadd.f32 %v2435, %v2448
        %v2450 = vpop.f32.mrf.mxu0
        %v2451 = vadd.f32 %v2437, %v2450
        %2452 = vdwg.mxu0
        %2453 = vmatpush.bf16.msra.mxu0 %v1961
        %2454 = vmatpush.bf16.msra.mxu0 %v1952
        %2455 = vmatpush.bf16.msra.mxu0 %v1943
        %2456 = vmatpush.bf16.msra.mxu0 %v1934
        %2457 = vmatpush.bf16.msra.mxu0 %v1925
        %2458 = vmatpush.bf16.msra.mxu0 %v1916
        %2459 = vmatpush.bf16.msra.mxu0 %v1907
        %2460 = vmatpush.bf16.msra.mxu0 %v1898
        %2461 = vmatmul.bf16.gmra.mxu0 %v1217
        %v2462 = vpop.f32.mrf.mxu0
        %v2463 = vadd.f32 0.0, %v2462
        %v2464 = vpop.f32.mrf.mxu0
        %v2465 = vadd.f32 0.0, %v2464
        %2466 = vdwg.mxu0
        %2467 = vmatpush.bf16.msra.mxu0 %v2033
        %2468 = vmatpush.bf16.msra.mxu0 %v2024
        %2469 = vmatpush.bf16.msra.mxu0 %v2015
        %2470 = vmatpush.bf16.msra.mxu0 %v2006
        %2471 = vmatpush.bf16.msra.mxu0 %v1997
        %2472 = vmatpush.bf16.msra.mxu0 %v1988
        %2473 = vmatpush.bf16.msra.mxu0 %v1979
        %2474 = vmatpush.bf16.msra.mxu0 %v1970
        %2475 = vmatmul.bf16.gmra.mxu0 %v1218
        %v2476 = vpop.f32.mrf.mxu0
        %v2477 = vadd.f32 %v2463, %v2476
        %v2478 = vpop.f32.mrf.mxu0
        %v2479 = vadd.f32 %v2465, %v2478
        %2480 = vdwg.mxu0
        %2481 = vmatpush.bf16.msra.mxu0 %v2105
        %2482 = vmatpush.bf16.msra.mxu0 %v2096
        %2483 = vmatpush.bf16.msra.mxu0 %v2087
        %2484 = vmatpush.bf16.msra.mxu0 %v2078
        %2485 = vmatpush.bf16.msra.mxu0 %v2069
        %2486 = vmatpush.bf16.msra.mxu0 %v2060
        %2487 = vmatpush.bf16.msra.mxu0 %v2051
        %2488 = vmatpush.bf16.msra.mxu0 %v2042
        %2489 = vmatmul.bf16.gmra.mxu0 %v1219
        %v2490 = vpop.f32.mrf.mxu0
        %v2491 = vadd.f32 %v2477, %v2490
        %v2492 = vpop.f32.mrf.mxu0
        %v2493 = vadd.f32 %v2479, %v2492
        %2494 = vdwg.mxu0
        %2495 = vmatpush.bf16.msra.mxu0 %v1962
        %2496 = vmatpush.bf16.msra.mxu0 %v1953
        %2497 = vmatpush.bf16.msra.mxu0 %v1944
        %2498 = vmatpush.bf16.msra.mxu0 %v1935
        %2499 = vmatpush.bf16.msra.mxu0 %v1926
        %2500 = vmatpush.bf16.msra.mxu0 %v1917
        %2501 = vmatpush.bf16.msra.mxu0 %v1908
        %2502 = vmatpush.bf16.msra.mxu0 %v1899
        %2503 = vmatmul.bf16.gmra.mxu0 %v1217
        %v2504 = vpop.f32.mrf.mxu0
        %v2505 = vadd.f32 0.0, %v2504
        %v2506 = vpop.f32.mrf.mxu0
        %v2507 = vadd.f32 0.0, %v2506
        %2508 = vdwg.mxu0
        %2509 = vmatpush.bf16.msra.mxu0 %v2034
        %2510 = vmatpush.bf16.msra.mxu0 %v2025
        %2511 = vmatpush.bf16.msra.mxu0 %v2016
        %2512 = vmatpush.bf16.msra.mxu0 %v2007
        %2513 = vmatpush.bf16.msra.mxu0 %v1998
        %2514 = vmatpush.bf16.msra.mxu0 %v1989
        %2515 = vmatpush.bf16.msra.mxu0 %v1980
        %2516 = vmatpush.bf16.msra.mxu0 %v1971
        %2517 = vmatmul.bf16.gmra.mxu0 %v1218
        %v2518 = vpop.f32.mrf.mxu0
        %v2519 = vadd.f32 %v2505, %v2518
        %v2520 = vpop.f32.mrf.mxu0
        %v2521 = vadd.f32 %v2507, %v2520
        %2522 = vdwg.mxu0
        %2523 = vmatpush.bf16.msra.mxu0 %v2106
        %2524 = vmatpush.bf16.msra.mxu0 %v2097
        %2525 = vmatpush.bf16.msra.mxu0 %v2088
        %2526 = vmatpush.bf16.msra.mxu0 %v2079
        %2527 = vmatpush.bf16.msra.mxu0 %v2070
        %2528 = vmatpush.bf16.msra.mxu0 %v2061
        %2529 = vmatpush.bf16.msra.mxu0 %v2052
        %2530 = vmatpush.bf16.msra.mxu0 %v2043
        %2531 = vmatmul.bf16.gmra.mxu0 %v1219
        %v2532 = vpop.f32.mrf.mxu0
        %v2533 = vadd.f32 %v2519, %v2532
        %v2534 = vpop.f32.mrf.mxu0
        %v2535 = vadd.f32 %v2521, %v2534
        %2536 = vdwg.mxu0
        %2537 = vmatpush.bf16.msra.mxu0 %v1963
        %2538 = vmatpush.bf16.msra.mxu0 %v1954
        %2539 = vmatpush.bf16.msra.mxu0 %v1945
        %2540 = vmatpush.bf16.msra.mxu0 %v1936
        %2541 = vmatpush.bf16.msra.mxu0 %v1927
        %2542 = vmatpush.bf16.msra.mxu0 %v1918
        %2543 = vmatpush.bf16.msra.mxu0 %v1909
        %2544 = vmatpush.bf16.msra.mxu0 %v1900
        %2545 = vmatmul.bf16.gmra.mxu0 %v1217
        %v2546 = vpop.f32.mrf.mxu0
        %v2547 = vadd.f32 0.0, %v2546
        %v2548 = vpop.f32.mrf.mxu0
        %v2549 = vadd.f32 0.0, %v2548
        %2550 = vdwg.mxu0
        %2551 = vmatpush.bf16.msra.mxu0 %v2035
        %2552 = vmatpush.bf16.msra.mxu0 %v2026
        %2553 = vmatpush.bf16.msra.mxu0 %v2017
        %2554 = vmatpush.bf16.msra.mxu0 %v2008
        %2555 = vmatpush.bf16.msra.mxu0 %v1999
        %2556 = vmatpush.bf16.msra.mxu0 %v1990
        %2557 = vmatpush.bf16.msra.mxu0 %v1981
        %2558 = vmatpush.bf16.msra.mxu0 %v1972
        %2559 = vmatmul.bf16.gmra.mxu0 %v1218
        %v2560 = vpop.f32.mrf.mxu0
        %v2561 = vadd.f32 %v2547, %v2560
        %v2562 = vpop.f32.mrf.mxu0
        %v2563 = vadd.f32 %v2549, %v2562
        %2564 = vdwg.mxu0
        %2565 = vmatpush.bf16.msra.mxu0 %v2107
        %2566 = vmatpush.bf16.msra.mxu0 %v2098
        %2567 = vmatpush.bf16.msra.mxu0 %v2089
        %2568 = vmatpush.bf16.msra.mxu0 %v2080
        %2569 = vmatpush.bf16.msra.mxu0 %v2071
        %2570 = vmatpush.bf16.msra.mxu0 %v2062
        %2571 = vmatpush.bf16.msra.mxu0 %v2053
        %2572 = vmatpush.bf16.msra.mxu0 %v2044
        %2573 = vmatmul.bf16.gmra.mxu0 %v1219
        %v2574 = vpop.f32.mrf.mxu0
        %v2575 = vadd.f32 %v2561, %v2574
        %v2576 = vpop.f32.mrf.mxu0
        %v2577 = vadd.f32 %v2563, %v2576
        %2578 = vdwg.mxu0
        %2579 = vmatpush.bf16.msra.mxu0 %v1964
        %2580 = vmatpush.bf16.msra.mxu0 %v1955
        %2581 = vmatpush.bf16.msra.mxu0 %v1946
        %2582 = vmatpush.bf16.msra.mxu0 %v1937
        %2583 = vmatpush.bf16.msra.mxu0 %v1928
        %2584 = vmatpush.bf16.msra.mxu0 %v1919
        %2585 = vmatpush.bf16.msra.mxu0 %v1910
        %2586 = vmatpush.bf16.msra.mxu0 %v1901
        %2587 = vmatmul.bf16.gmra.mxu0 %v1217
        %v2588 = vpop.f32.mrf.mxu0
        %v2589 = vadd.f32 0.0, %v2588
        %v2590 = vpop.f32.mrf.mxu0
        %v2591 = vadd.f32 0.0, %v2590
        %2592 = vdwg.mxu0
        %2593 = vmatpush.bf16.msra.mxu0 %v2036
        %2594 = vmatpush.bf16.msra.mxu0 %v2027
        %2595 = vmatpush.bf16.msra.mxu0 %v2018
        %2596 = vmatpush.bf16.msra.mxu0 %v2009
        %2597 = vmatpush.bf16.msra.mxu0 %v2000
        %2598 = vmatpush.bf16.msra.mxu0 %v1991
        %2599 = vmatpush.bf16.msra.mxu0 %v1982
        %2600 = vmatpush.bf16.msra.mxu0 %v1973
        %2601 = vmatmul.bf16.gmra.mxu0 %v1218
        %v2602 = vpop.f32.mrf.mxu0
        %v2603 = vadd.f32 %v2589, %v2602
        %v2604 = vpop.f32.mrf.mxu0
        %v2605 = vadd.f32 %v2591, %v2604
        %2606 = vdwg.mxu0
        %2607 = vmatpush.bf16.msra.mxu0 %v2108
        %2608 = vmatpush.bf16.msra.mxu0 %v2099
        %2609 = vmatpush.bf16.msra.mxu0 %v2090
        %2610 = vmatpush.bf16.msra.mxu0 %v2081
        %2611 = vmatpush.bf16.msra.mxu0 %v2072
        %2612 = vmatpush.bf16.msra.mxu0 %v2063
        %2613 = vmatpush.bf16.msra.mxu0 %v2054
        %2614 = vmatpush.bf16.msra.mxu0 %v2045
        %2615 = vmatmul.bf16.gmra.mxu0 %v1219
        %v2616 = vpop.f32.mrf.mxu0
        %v2617 = vadd.f32 %v2603, %v2616
        %v2618 = vpop.f32.mrf.mxu0
        %v2619 = vadd.f32 %v2605, %v2618
        %2620 = vdwg.mxu0
        %2621 = vmatpush.bf16.msra.mxu0 %v1965
        %2622 = vmatpush.bf16.msra.mxu0 %v1956
        %2623 = vmatpush.bf16.msra.mxu0 %v1947
        %2624 = vmatpush.bf16.msra.mxu0 %v1938
        %2625 = vmatpush.bf16.msra.mxu0 %v1929
        %2626 = vmatpush.bf16.msra.mxu0 %v1920
        %2627 = vmatpush.bf16.msra.mxu0 %v1911
        %2628 = vmatpush.bf16.msra.mxu0 %v1902
        %2629 = vmatmul.bf16.gmra.mxu0 %v1217
        %v2630 = vpop.f32.mrf.mxu0
        %v2631 = vadd.f32 0.0, %v2630
        %v2632 = vpop.f32.mrf.mxu0
        %v2633 = vadd.f32 0.0, %v2632
        %2634 = vdwg.mxu0
        %2635 = vmatpush.bf16.msra.mxu0 %v2037
        %2636 = vmatpush.bf16.msra.mxu0 %v2028
        %2637 = vmatpush.bf16.msra.mxu0 %v2019
        %2638 = vmatpush.bf16.msra.mxu0 %v2010
        %2639 = vmatpush.bf16.msra.mxu0 %v2001
        %2640 = vmatpush.bf16.msra.mxu0 %v1992
        %2641 = vmatpush.bf16.msra.mxu0 %v1983
        %2642 = vmatpush.bf16.msra.mxu0 %v1974
        %2643 = vmatmul.bf16.gmra.mxu0 %v1218
        %v2644 = vpop.f32.mrf.mxu0
        %v2645 = vadd.f32 %v2631, %v2644
        %v2646 = vpop.f32.mrf.mxu0
        %v2647 = vadd.f32 %v2633, %v2646
        %2648 = vdwg.mxu0
        %2649 = vmatpush.bf16.msra.mxu0 %v2109
        %2650 = vmatpush.bf16.msra.mxu0 %v2100
        %2651 = vmatpush.bf16.msra.mxu0 %v2091
        %2652 = vmatpush.bf16.msra.mxu0 %v2082
        %2653 = vmatpush.bf16.msra.mxu0 %v2073
        %2654 = vmatpush.bf16.msra.mxu0 %v2064
        %2655 = vmatpush.bf16.msra.mxu0 %v2055
        %2656 = vmatpush.bf16.msra.mxu0 %v2046
        %2657 = vmatmul.bf16.gmra.mxu0 %v1219
        %v2658 = vpop.f32.mrf.mxu0
        %v2659 = vadd.f32 %v2645, %v2658
        %v2660 = vpop.f32.mrf.mxu0
        %v2661 = vadd.f32 %v2647, %v2660
        %2662 = vdwg.mxu0
        %2663 = vmatpush.bf16.msra.mxu0 %v1966
        %2664 = vmatpush.bf16.msra.mxu0 %v1957
        %2665 = vmatpush.bf16.msra.mxu0 %v1948
        %2666 = vmatpush.bf16.msra.mxu0 %v1939
        %2667 = vmatpush.bf16.msra.mxu0 %v1930
        %2668 = vmatpush.bf16.msra.mxu0 %v1921
        %2669 = vmatpush.bf16.msra.mxu0 %v1912
        %2670 = vmatpush.bf16.msra.mxu0 %v1903
        %2671 = vmatmul.bf16.gmra.mxu0 %v1217
        %v2672 = vpop.f32.mrf.mxu0
        %v2673 = vadd.f32 0.0, %v2672
        %v2674 = vpop.f32.mrf.mxu0
        %v2675 = vadd.f32 0.0, %v2674
        %2676 = vdwg.mxu0
        %2677 = vmatpush.bf16.msra.mxu0 %v2038
        %2678 = vmatpush.bf16.msra.mxu0 %v2029
        %2679 = vmatpush.bf16.msra.mxu0 %v2020
        %2680 = vmatpush.bf16.msra.mxu0 %v2011
        %2681 = vmatpush.bf16.msra.mxu0 %v2002
        %2682 = vmatpush.bf16.msra.mxu0 %v1993
        %2683 = vmatpush.bf16.msra.mxu0 %v1984
        %2684 = vmatpush.bf16.msra.mxu0 %v1975
        %2685 = vmatmul.bf16.gmra.mxu0 %v1218
        %v2686 = vpop.f32.mrf.mxu0
        %v2687 = vadd.f32 %v2673, %v2686
        %v2688 = vpop.f32.mrf.mxu0
        %v2689 = vadd.f32 %v2675, %v2688
        %2690 = vdwg.mxu0
        %2691 = vmatpush.bf16.msra.mxu0 %v2110
        %2692 = vmatpush.bf16.msra.mxu0 %v2101
        %2693 = vmatpush.bf16.msra.mxu0 %v2092
        %2694 = vmatpush.bf16.msra.mxu0 %v2083
        %2695 = vmatpush.bf16.msra.mxu0 %v2074
        %2696 = vmatpush.bf16.msra.mxu0 %v2065
        %2697 = vmatpush.bf16.msra.mxu0 %v2056
        %2698 = vmatpush.bf16.msra.mxu0 %v2047
        %2699 = vmatmul.bf16.gmra.mxu0 %v1219
        %v2700 = vpop.f32.mrf.mxu0
        %v2701 = vadd.f32 %v2687, %v2700
        %v2702 = vpop.f32.mrf.mxu0
        %v2703 = vadd.f32 %v2689, %v2702
        %2704 = vdwg.mxu0
        %v2705 = vpack.c.bf16 %v2407, %v2365
        %v2706 = vpack.c.bf16 %v2491, %v2449
        %v2707 = vpack.c.bf16 %v2575, %v2533
        %v2708 = vpack.c.bf16 %v2659, %v2617
        %v2709 = vpack.c.bf16 %v2701, %v2701
        %v2710 = vpack.c.bf16 %v2409, %v2367
        %v2711 = vpack.c.bf16 %v2493, %v2451
        %v2712 = vpack.c.bf16 %v2577, %v2535
        %v2713 = vpack.c.bf16 %v2661, %v2619
        %v2714 = vpack.c.bf16 %v2703, %v2703
        %v2715 = vld [vmem:[#allocation7] sm:$0xff]
        %v2716 = vld [vmem:[#allocation7 + $0x8] sm:$0xff]
        %v2719 = vrot.slane %v2706, 4
        %v2720 = vrot.slane %v2711, 4
        %v2723 = vunpack.c.l.b16 %v2705
        %v2724 = vunpack.c.l.b16 %v2710
        %v2725 = vpack.c.b16 %v2724, %v2723
        %v2726 = vunpack.c.l.b16 %v2719
        %v2727 = vunpack.c.l.b16 %v2720
        %v2728 = vpack.c.b16 %v2727, %v2726
        %vm2729 = vcmask 523264
        %v2731 = vsel %vm2729, %v2725, 0
        %v2734 = vsel %vm2729, %v2728, 0
        %2736 = vmatpush.bf16.xpose.msra.mxu0 0
        %2737 = vmatpush.bf16.xpose.msra.mxu0 0
        %2738 = vmatpush.bf16.xpose.msra.mxu0 0
        %2739 = vmatpush.bf16.xpose.msra.mxu0 0
        %2740 = vmatpush.bf16.xpose.msra.mxu0 0
        %2741 = vmatpush.bf16.xpose.msra.mxu0 0
        %2742 = vmatpush.bf16.xpose.msra.mxu0 0
        %2743 = vmatpush.bf16.xpose.msra.mxu0 %v2734
        %2744 = vmatmul.bf16.gmra.mxu0 %v2731
        %v2745 = vpop.f32.mrf.mxu0
        %v2746 = vadd.f32 %v2715, %v2745
        %v2747 = vpop.f32.mrf.mxu0
        %v2748 = vadd.f32 %v2716, %v2747
        %2749 = vdwg.mxu0
        %vm2750 = vcmask 130048
        %v2751 = vsel %vm2750, %v2746, -inf
        %2752 = vmax.xlane.f32.xlu0 %v2751
        %v2753 = vpop.xlane.xlu0 %2752
        %v2754 = vsel %vm2750, %v2748, -inf
        %2755 = vmax.xlane.f32.xlu0 %v2754
        %v2756 = vpop.xlane.xlu0 %2755
        %v2757 = vsub.f32 %v2746, %v2753
        %v2758 = vsub.f32 %v2748, %v2756
        %v2759 = vmul.f32 %v2757, 1.442695
        %v2760 = vpow.pop %v2759
        %v2761 = vmul.f32 %v2758, 1.442695
        %v2762 = vpow.pop %v2761
        %v2763 = vsel %vm2750, %v2760, 0.0
        %2764 = vadd.xlane.f32.xlu0 %v2763
        %v2765 = vpop.xlane.xlu0 %2764
        %v2766 = vsel %vm2750, %v2762, 0.0
        %2767 = vadd.xlane.f32.xlu0 %v2766
        %v2768 = vpop.xlane.xlu0 %2767
        %v2769 = vrcp.pop %v2765
        %v2770 = vrcp.pop %v2768
        %v2771 = vmul.f32 %v2760, %v2769
        %v2772 = vmul.f32 %v2762, %v2770
        %v2773 = vpack.c.bf16 %v2771, %v2771
        %v2774 = vpack.c.bf16 %v2772, %v2772
        %v2777 = vunpack.c.l.b16 %v2773
        %v2778 = vunpack.c.l.b16 %v2774
        %v2779 = vpack.c.b16 %v2778, %v2777
        %v2782 = vunpack.c.l.b16 %v2708
        %v2783 = vunpack.c.l.b16 %v2713
        %v2784 = vpack.c.b16 %v2783, %v2782
        %v2787 = vsel %vm2750, %v2779, 0
        %2789 = vmatpush.bf16.msra.mxu0 0
        %2790 = vmatpush.bf16.msra.mxu0 0
        %2791 = vmatpush.bf16.msra.mxu0 0
        %2792 = vmatpush.bf16.msra.mxu0 0
        %2793 = vmatpush.bf16.msra.mxu0 0
        %2794 = vmatpush.bf16.msra.mxu0 0
        %2795 = vmatpush.bf16.msra.mxu0 0
        %2796 = vmatpush.bf16.msra.mxu0 %v2784
        %2797 = vmatmul.bf16.gmra.mxu0 %v2787
        %v2798 = vpop.f32.mrf.mxu0
        %v2799 = vadd.f32 0.0, %v2798
        %v2800 = vpop.f32.mrf.mxu0
        %v2801 = vadd.f32 0.0, %v2800
        %2802 = vdwg.mxu0
        %v2803 = vpack.c.bf16 %v2799, %v2799
        %v2804 = vpack.c.bf16 %v2801, %v2801
        %vm2805 = vcmask 519168
        %2806 = vst.msk [vmem:[#allocation3] sm:$0xf] %vm2805, %v2803
        %2807 = vst.msk [vmem:[#allocation3 + $0xc] sm:$0xf] %vm2805, %v2804
        %2808 = vrot.lane.b32.xlu0 %v2706, 64
        %v2809 = vpop.permute.xlu0 %2808
        %2810 = vrot.lane.b32.xlu0 %v2711, 64
        %v2811 = vpop.permute.xlu0 %2810
        %v2812 = vrot.slane %v2809, 4
        %v2813 = vrot.slane %v2811, 4
        %2814 = vrot.lane.b32.xlu0 %v2725, 64
        %v2815 = vpop.permute.xlu0 %2814
        %v2816 = vunpack.c.l.b16 %v2812
        %v2817 = vunpack.c.l.b16 %v2813
        %v2818 = vpack.c.b16 %v2817, %v2816
        %v2820 = vsel %vm2729, %v2815, 0
        %v2823 = vsel %vm2729, %v2818, 0
        %2825 = vmatpush.bf16.xpose.msra.mxu0 0
        %2826 = vmatpush.bf16.xpose.msra.mxu0 0
        %2827 = vmatpush.bf16.xpose.msra.mxu0 0
        %2828 = vmatpush.bf16.xpose.msra.mxu0 0
        %2829 = vmatpush.bf16.xpose.msra.mxu0 0
        %2830 = vmatpush.bf16.xpose.msra.mxu0 0
        %2831 = vmatpush.bf16.xpose.msra.mxu0 0
        %2832 = vmatpush.bf16.xpose.msra.mxu0 %v2823
        %2833 = vmatmul.bf16.gmra.mxu0 %v2820
        %v2834 = vpop.f32.mrf.mxu0
        %v2835 = vadd.f32 %v2715, %v2834
        %v2836 = vpop.f32.mrf.mxu0
        %v2837 = vadd.f32 %v2716, %v2836
        %2838 = vdwg.mxu0
        %v2839 = vsel %vm2750, %v2835, -inf
        %2840 = vmax.xlane.f32.xlu0 %v2839
        %v2841 = vpop.xlane.xlu0 %2840
        %v2842 = vsel %vm2750, %v2837, -inf
        %2843 = vmax.xlane.f32.xlu0 %v2842
        %v2844 = vpop.xlane.xlu0 %2843
        %v2845 = vsub.f32 %v2835, %v2841
        %v2846 = vsub.f32 %v2837, %v2844
        %v2847 = vmul.f32 %v2845, 1.442695
        %v2848 = vpow.pop %v2847
        %v2849 = vmul.f32 %v2846, 1.442695
        %v2850 = vpow.pop %v2849
        %v2851 = vsel %vm2750, %v2848, 0.0
        %2852 = vadd.xlane.f32.xlu0 %v2851
        %v2853 = vpop.xlane.xlu0 %2852
        %v2854 = vsel %vm2750, %v2850, 0.0
        %2855 = vadd.xlane.f32.xlu0 %v2854
        %v2856 = vpop.xlane.xlu0 %2855
        %v2857 = vrcp.pop %v2853
        %v2858 = vrcp.pop %v2856
        %v2859 = vmul.f32 %v2848, %v2857
        %v2860 = vmul.f32 %v2850, %v2858
        %v2861 = vpack.c.bf16 %v2859, %v2859
        %v2862 = vpack.c.bf16 %v2860, %v2860
        %v2865 = vunpack.c.l.b16 %v2861
        %v2866 = vunpack.c.l.b16 %v2862
        %v2867 = vpack.c.b16 %v2866, %v2865
        %2868 = vrot.lane.b32.xlu0 %v2784, 64
        %v2869 = vpop.permute.xlu0 %2868
        %v2872 = vsel %vm2750, %v2867, 0
        %2874 = vmatpush.bf16.msra.mxu0 0
        %2875 = vmatpush.bf16.msra.mxu0 0
        %2876 = vmatpush.bf16.msra.mxu0 0
        %2877 = vmatpush.bf16.msra.mxu0 0
        %2878 = vmatpush.bf16.msra.mxu0 0
        %2879 = vmatpush.bf16.msra.mxu0 0
        %2880 = vmatpush.bf16.msra.mxu0 0
        %2881 = vmatpush.bf16.msra.mxu0 %v2869
        %2882 = vmatmul.bf16.gmra.mxu0 %v2872
        %v2883 = vpop.f32.mrf.mxu0
        %v2884 = vadd.f32 0.0, %v2883
        %v2885 = vpop.f32.mrf.mxu0
        %v2886 = vadd.f32 0.0, %v2885
        %2887 = vdwg.mxu0
        %v2888 = vpack.c.bf16 %v2884, %v2884
        %v2889 = vpack.c.bf16 %v2886, %v2886
        %2892 = vrot.lane.b32.xlu0 %v2888, 64
        %v2893 = vpop.permute.xlu0 %2892
        %2894 = vrot.lane.b32.xlu0 %v2889, 64
        %v2895 = vpop.permute.xlu0 %2894
        %vm2898 = vcmask 1043968
        %2899 = vst.msk [vmem:[#allocation3] sm:$0xf] %vm2898, %v2893
        %2900 = vst.msk [vmem:[#allocation3 + $0xc] sm:$0xf] %vm2898, %v2895
        %v2901 = vrot.slane %v2705, 4
        %v2902 = vrot.slane %v2710, 4
        %v2903 = vrot.slane %v2708, 4
        %v2904 = vrot.slane %v2713, 4
        %v2905 = vunpack.c.l.b16 %v2901
        %v2906 = vunpack.c.l.b16 %v2902
        %v2907 = vpack.c.b16 %v2906, %v2905
        %v2910 = vunpack.c.l.b16 %v2707
        %v2911 = vunpack.c.l.b16 %v2712
        %v2912 = vpack.c.b16 %v2911, %v2910
        %v2914 = vsel %vm2729, %v2907, 0
        %v2917 = vsel %vm2729, %v2912, 0
        %2919 = vmatpush.bf16.xpose.msra.mxu0 0
        %2920 = vmatpush.bf16.xpose.msra.mxu0 0
        %2921 = vmatpush.bf16.xpose.msra.mxu0 0
        %2922 = vmatpush.bf16.xpose.msra.mxu0 0
        %2923 = vmatpush.bf16.xpose.msra.mxu0 0
        %2924 = vmatpush.bf16.xpose.msra.mxu0 0
        %2925 = vmatpush.bf16.xpose.msra.mxu0 0
        %2926 = vmatpush.bf16.xpose.msra.mxu0 %v2917
        %2927 = vmatmul.bf16.gmra.mxu0 %v2914
        %v2928 = vpop.f32.mrf.mxu0
        %v2929 = vadd.f32 %v2715, %v2928
        %v2930 = vpop.f32.mrf.mxu0
        %v2931 = vadd.f32 %v2716, %v2930
        %2932 = vdwg.mxu0
        %v2933 = vsel %vm2750, %v2929, -inf
        %2934 = vmax.xlane.f32.xlu0 %v2933
        %v2935 = vpop.xlane.xlu0 %2934
        %v2936 = vsel %vm2750, %v2931, -inf
        %2937 = vmax.xlane.f32.xlu0 %v2936
        %v2938 = vpop.xlane.xlu0 %2937
        %v2939 = vsub.f32 %v2929, %v2935
        %v2940 = vsub.f32 %v2931, %v2938
        %v2941 = vmul.f32 %v2939, 1.442695
        %v2942 = vpow.pop %v2941
        %v2943 = vmul.f32 %v2940, 1.442695
        %v2944 = vpow.pop %v2943
        %v2945 = vsel %vm2750, %v2942, 0.0
        %2946 = vadd.xlane.f32.xlu0 %v2945
        %v2947 = vpop.xlane.xlu0 %2946
        %v2948 = vsel %vm2750, %v2944, 0.0
        %2949 = vadd.xlane.f32.xlu0 %v2948
        %v2950 = vpop.xlane.xlu0 %2949
        %v2951 = vrcp.pop %v2947
        %v2952 = vrcp.pop %v2950
        %v2953 = vmul.f32 %v2942, %v2951
        %v2954 = vmul.f32 %v2944, %v2952
        %v2955 = vpack.c.bf16 %v2953, %v2953
        %v2956 = vpack.c.bf16 %v2954, %v2954
        %v2959 = vunpack.c.l.b16 %v2955
        %v2960 = vunpack.c.l.b16 %v2956
        %v2961 = vpack.c.b16 %v2960, %v2959
        %v2962 = vunpack.c.l.b16 %v2903
        %v2963 = vunpack.c.l.b16 %v2904
        %v2964 = vpack.c.b16 %v2963, %v2962
        %v2967 = vsel %vm2750, %v2961, 0
        %2969 = vmatpush.bf16.msra.mxu0 0
        %2970 = vmatpush.bf16.msra.mxu0 0
        %2971 = vmatpush.bf16.msra.mxu0 0
        %2972 = vmatpush.bf16.msra.mxu0 0
        %2973 = vmatpush.bf16.msra.mxu0 0
        %2974 = vmatpush.bf16.msra.mxu0 0
        %2975 = vmatpush.bf16.msra.mxu0 0
        %2976 = vmatpush.bf16.msra.mxu0 %v2964
        %2977 = vmatmul.bf16.gmra.mxu0 %v2967
        %v2978 = vpop.f32.mrf.mxu0
        %v2979 = vadd.f32 0.0, %v2978
        %v2980 = vpop.f32.mrf.mxu0
        %v2981 = vadd.f32 0.0, %v2980
        %2982 = vdwg.mxu0
        %v2983 = vpack.c.bf16 %v2979, %v2979
        %v2984 = vpack.c.bf16 %v2981, %v2981
        %2985 = vst.msk [vmem:[#allocation3 + $0x4] sm:$0xf] %vm2805, %v2983
        %2986 = vst.msk [vmem:[#allocation3 + $0x10] sm:$0xf] %vm2805, %v2984
        %2987 = vrot.lane.b32.xlu0 %v2705, 64
        %v2988 = vpop.permute.xlu0 %2987
        %2989 = vrot.lane.b32.xlu0 %v2710, 64
        %v2990 = vpop.permute.xlu0 %2989
        %v2991 = vrot.slane %v2988, 4
        %v2992 = vrot.slane %v2990, 4
        %2993 = vrot.lane.b32.xlu0 %v2708, 64
        %v2994 = vpop.permute.xlu0 %2993
        %2995 = vrot.lane.b32.xlu0 %v2713, 64
        %v2996 = vpop.permute.xlu0 %2995
        %v2997 = vrot.slane %v2994, 4
        %v2998 = vrot.slane %v2996, 4
        %v2999 = vunpack.c.l.b16 %v2991
        %v3000 = vunpack.c.l.b16 %v2992
        %v3001 = vpack.c.b16 %v3000, %v2999
        %3002 = vrot.lane.b32.xlu0 %v2912, 64
        %v3003 = vpop.permute.xlu0 %3002
        %v3005 = vsel %vm2729, %v3001, 0
        %v3008 = vsel %vm2729, %v3003, 0
        %3010 = vmatpush.bf16.xpose.msra.mxu0 0
        %3011 = vmatpush.bf16.xpose.msra.mxu0 0
        %3012 = vmatpush.bf16.xpose.msra.mxu0 0
        %3013 = vmatpush.bf16.xpose.msra.mxu0 0
        %3014 = vmatpush.bf16.xpose.msra.mxu0 0
        %3015 = vmatpush.bf16.xpose.msra.mxu0 0
        %3016 = vmatpush.bf16.xpose.msra.mxu0 0
        %3017 = vmatpush.bf16.xpose.msra.mxu0 %v3008
        %3018 = vmatmul.bf16.gmra.mxu0 %v3005
        %v3019 = vpop.f32.mrf.mxu0
        %v3020 = vadd.f32 %v2715, %v3019
        %v3021 = vpop.f32.mrf.mxu0
        %v3022 = vadd.f32 %v2716, %v3021
        %3023 = vdwg.mxu0
        %v3024 = vsel %vm2750, %v3020, -inf
        %3025 = vmax.xlane.f32.xlu0 %v3024
        %v3026 = vpop.xlane.xlu0 %3025
        %v3027 = vsel %vm2750, %v3022, -inf
        %3028 = vmax.xlane.f32.xlu0 %v3027
        %v3029 = vpop.xlane.xlu0 %3028
        %v3030 = vsub.f32 %v3020, %v3026
        %v3031 = vsub.f32 %v3022, %v3029
        %v3032 = vmul.f32 %v3030, 1.442695
        %v3033 = vpow.pop %v3032
        %v3034 = vmul.f32 %v3031, 1.442695
        %v3035 = vpow.pop %v3034
        %v3036 = vsel %vm2750, %v3033, 0.0
        %3037 = vadd.xlane.f32.xlu0 %v3036
        %v3038 = vpop.xlane.xlu0 %3037
        %v3039 = vsel %vm2750, %v3035, 0.0
        %3040 = vadd.xlane.f32.xlu0 %v3039
        %v3041 = vpop.xlane.xlu0 %3040
        %v3042 = vrcp.pop %v3038
        %v3043 = vrcp.pop %v3041
        %v3044 = vmul.f32 %v3033, %v3042
        %v3045 = vmul.f32 %v3035, %v3043
        %v3046 = vpack.c.bf16 %v3044, %v3044
        %v3047 = vpack.c.bf16 %v3045, %v3045
        %v3050 = vunpack.c.l.b16 %v3046
        %v3051 = vunpack.c.l.b16 %v3047
        %v3052 = vpack.c.b16 %v3051, %v3050
        %v3053 = vunpack.c.l.b16 %v2997
        %v3054 = vunpack.c.l.b16 %v2998
        %v3055 = vpack.c.b16 %v3054, %v3053
        %v3058 = vsel %vm2750, %v3052, 0
        %3060 = vmatpush.bf16.msra.mxu0 0
        %3061 = vmatpush.bf16.msra.mxu0 0
        %3062 = vmatpush.bf16.msra.mxu0 0
        %3063 = vmatpush.bf16.msra.mxu0 0
        %3064 = vmatpush.bf16.msra.mxu0 0
        %3065 = vmatpush.bf16.msra.mxu0 0
        %3066 = vmatpush.bf16.msra.mxu0 0
        %3067 = vmatpush.bf16.msra.mxu0 %v3055
        %3068 = vmatmul.bf16.gmra.mxu0 %v3058
        %v3069 = vpop.f32.mrf.mxu0
        %v3070 = vadd.f32 0.0, %v3069
        %v3071 = vpop.f32.mrf.mxu0
        %v3072 = vadd.f32 0.0, %v3071
        %3073 = vdwg.mxu0
        %v3074 = vpack.c.bf16 %v3070, %v3070
        %v3075 = vpack.c.bf16 %v3072, %v3072
        %3078 = vrot.lane.b32.xlu0 %v3074, 64
        %v3079 = vpop.permute.xlu0 %3078
        %3080 = vrot.lane.b32.xlu0 %v3075, 64
        %v3081 = vpop.permute.xlu0 %3080
        %3084 = vst.msk [vmem:[#allocation3 + $0x4] sm:$0xf] %vm2898, %v3079
        %3085 = vst.msk [vmem:[#allocation3 + $0x10] sm:$0xf] %vm2898, %v3081
        %v3086 = vrot.slane %v2707, 4
        %v3087 = vrot.slane %v2712, 4
        %v3088 = vunpack.c.l.b16 %v2706
        %v3089 = vunpack.c.l.b16 %v2711
        %v3090 = vpack.c.b16 %v3089, %v3088
        %v3091 = vunpack.c.l.b16 %v3086
        %v3092 = vunpack.c.l.b16 %v3087
        %v3093 = vpack.c.b16 %v3092, %v3091
        %v3095 = vsel %vm2729, %v3090, 0
        %v3098 = vsel %vm2729, %v3093, 0
        %3100 = vmatpush.bf16.xpose.msra.mxu0 0
        %3101 = vmatpush.bf16.xpose.msra.mxu0 0
        %3102 = vmatpush.bf16.xpose.msra.mxu0 0
        %3103 = vmatpush.bf16.xpose.msra.mxu0 0
        %3104 = vmatpush.bf16.xpose.msra.mxu0 0
        %3105 = vmatpush.bf16.xpose.msra.mxu0 0
        %3106 = vmatpush.bf16.xpose.msra.mxu0 0
        %3107 = vmatpush.bf16.xpose.msra.mxu0 %v3098
        %3108 = vmatmul.bf16.gmra.mxu0 %v3095
        %v3109 = vpop.f32.mrf.mxu0
        %v3110 = vadd.f32 %v2715, %v3109
        %v3111 = vpop.f32.mrf.mxu0
        %v3112 = vadd.f32 %v2716, %v3111
        %3113 = vdwg.mxu0
        %v3114 = vsel %vm2750, %v3110, -inf
        %3115 = vmax.xlane.f32.xlu0 %v3114
        %v3116 = vpop.xlane.xlu0 %3115
        %v3117 = vsel %vm2750, %v3112, -inf
        %3118 = vmax.xlane.f32.xlu0 %v3117
        %v3119 = vpop.xlane.xlu0 %3118
        %v3120 = vsub.f32 %v3110, %v3116
        %v3121 = vsub.f32 %v3112, %v3119
        %v3122 = vmul.f32 %v3120, 1.442695
        %v3123 = vpow.pop %v3122
        %v3124 = vmul.f32 %v3121, 1.442695
        %v3125 = vpow.pop %v3124
        %v3126 = vsel %vm2750, %v3123, 0.0
        %3127 = vadd.xlane.f32.xlu0 %v3126
        %v3128 = vpop.xlane.xlu0 %3127
        %v3129 = vsel %vm2750, %v3125, 0.0
        %3130 = vadd.xlane.f32.xlu0 %v3129
        %v3131 = vpop.xlane.xlu0 %3130
        %v3132 = vrcp.pop %v3128
        %v3133 = vrcp.pop %v3131
        %v3134 = vmul.f32 %v3123, %v3132
        %v3135 = vmul.f32 %v3125, %v3133
        %v3136 = vpack.c.bf16 %v3134, %v3134
        %v3137 = vpack.c.bf16 %v3135, %v3135
        %v3140 = vunpack.c.l.b16 %v3136
        %v3141 = vunpack.c.l.b16 %v3137
        %v3142 = vpack.c.b16 %v3141, %v3140
        %v3145 = vunpack.c.l.b16 %v2709
        %v3146 = vunpack.c.l.b16 %v2714
        %v3147 = vpack.c.b16 %v3146, %v3145
        %v3150 = vsel %vm2750, %v3142, 0
        %3152 = vmatpush.bf16.msra.mxu0 0
        %3153 = vmatpush.bf16.msra.mxu0 0
        %3154 = vmatpush.bf16.msra.mxu0 0
        %3155 = vmatpush.bf16.msra.mxu0 0
        %3156 = vmatpush.bf16.msra.mxu0 0
        %3157 = vmatpush.bf16.msra.mxu0 0
        %3158 = vmatpush.bf16.msra.mxu0 0
        %3159 = vmatpush.bf16.msra.mxu0 %v3147
        %3160 = vmatmul.bf16.gmra.mxu0 %v3150
        %v3161 = vpop.f32.mrf.mxu0
        %v3162 = vadd.f32 0.0, %v3161
        %v3163 = vpop.f32.mrf.mxu0
        %v3164 = vadd.f32 0.0, %v3163
        %3165 = vdwg.mxu0
        %v3166 = vpack.c.bf16 %v3162, %v3162
        %v3167 = vpack.c.bf16 %v3164, %v3164
        %3168 = vst.msk [vmem:[#allocation3 + $0x8] sm:$0xf] %vm2805, %v3166
        %3169 = vst.msk [vmem:[#allocation3 + $0x14] sm:$0xf] %vm2805, %v3167
        %3170 = vrot.lane.b32.xlu0 %v2707, 64
        %v3171 = vpop.permute.xlu0 %3170
        %3172 = vrot.lane.b32.xlu0 %v2712, 64
        %v3173 = vpop.permute.xlu0 %3172
        %v3174 = vrot.slane %v3171, 4
        %v3175 = vrot.slane %v3173, 4
        %3176 = vrot.lane.b32.xlu0 %v3090, 64
        %v3177 = vpop.permute.xlu0 %3176
        %v3178 = vunpack.c.l.b16 %v3174
        %v3179 = vunpack.c.l.b16 %v3175
        %v3180 = vpack.c.b16 %v3179, %v3178
        %v3182 = vsel %vm2729, %v3177, 0
        %v3185 = vsel %vm2729, %v3180, 0
        %3187 = vmatpush.bf16.xpose.msra.mxu0 0
        %3188 = vmatpush.bf16.xpose.msra.mxu0 0
        %3189 = vmatpush.bf16.xpose.msra.mxu0 0
        %3190 = vmatpush.bf16.xpose.msra.mxu0 0
        %3191 = vmatpush.bf16.xpose.msra.mxu0 0
        %3192 = vmatpush.bf16.xpose.msra.mxu0 0
        %3193 = vmatpush.bf16.xpose.msra.mxu0 0
        %3194 = vmatpush.bf16.xpose.msra.mxu0 %v3185
        %3195 = vmatmul.bf16.gmra.mxu0 %v3182
        %v3196 = vpop.f32.mrf.mxu0
        %v3197 = vadd.f32 %v2715, %v3196
        %v3198 = vpop.f32.mrf.mxu0
        %v3199 = vadd.f32 %v2716, %v3198
        %3200 = vdwg.mxu0
        %v3201 = vsel %vm2750, %v3197, -inf
        %3202 = vmax.xlane.f32.xlu0 %v3201
        %v3203 = vpop.xlane.xlu0 %3202
        %v3204 = vsel %vm2750, %v3199, -inf
        %3205 = vmax.xlane.f32.xlu0 %v3204
        %v3206 = vpop.xlane.xlu0 %3205
        %v3207 = vsub.f32 %v3197, %v3203
        %v3208 = vsub.f32 %v3199, %v3206
        %v3209 = vmul.f32 %v3207, 1.442695
        %v3210 = vpow.pop %v3209
        %v3211 = vmul.f32 %v3208, 1.442695
        %v3212 = vpow.pop %v3211
        %v3213 = vsel %vm2750, %v3210, 0.0
        %3214 = vadd.xlane.f32.xlu0 %v3213
        %v3215 = vpop.xlane.xlu0 %3214
        %v3216 = vsel %vm2750, %v3212, 0.0
        %3217 = vadd.xlane.f32.xlu0 %v3216
        %v3218 = vpop.xlane.xlu0 %3217
        %v3219 = vrcp.pop %v3215
        %v3220 = vrcp.pop %v3218
        %v3221 = vmul.f32 %v3210, %v3219
        %v3222 = vmul.f32 %v3212, %v3220
        %v3223 = vpack.c.bf16 %v3221, %v3221
        %v3224 = vpack.c.bf16 %v3222, %v3222
        %v3227 = vunpack.c.l.b16 %v3223
        %v3228 = vunpack.c.l.b16 %v3224
        %v3229 = vpack.c.b16 %v3228, %v3227
        %3230 = vrot.lane.b32.xlu0 %v3147, 64
        %v3231 = vpop.permute.xlu0 %3230
        %v3234 = vsel %vm2750, %v3229, 0
        %3236 = vmatpush.bf16.msra.mxu0 0
        %3237 = vmatpush.bf16.msra.mxu0 0
        %3238 = vmatpush.bf16.msra.mxu0 0
        %3239 = vmatpush.bf16.msra.mxu0 0
        %3240 = vmatpush.bf16.msra.mxu0 0
        %3241 = vmatpush.bf16.msra.mxu0 0
        %3242 = vmatpush.bf16.msra.mxu0 0
        %3243 = vmatpush.bf16.msra.mxu0 %v3231
        %3244 = vmatmul.bf16.gmra.mxu0 %v3234
        %v3245 = vpop.f32.mrf.mxu0
        %v3246 = vadd.f32 0.0, %v3245
        %v3247 = vpop.f32.mrf.mxu0
        %v3248 = vadd.f32 0.0, %v3247
        %3249 = vdwg.mxu0
        %v3250 = vpack.c.bf16 %v3246, %v3246
        %v3251 = vpack.c.bf16 %v3248, %v3248
        %3254 = vrot.lane.b32.xlu0 %v3250, 64
        %v3255 = vpop.permute.xlu0 %3254
        %3256 = vrot.lane.b32.xlu0 %v3251, 64
        %v3257 = vpop.permute.xlu0 %3256
        %3260 = vst.msk [vmem:[#allocation3 + $0x8] sm:$0xf] %vm2898, %v3255
        %3261 = vst.msk [vmem:[#allocation3 + $0x14] sm:$0xf] %vm2898, %v3257
        %v3262 = vld [vmem:[#allocation3] sm:$0xff]
        %v3263 = vld [vmem:[#allocation3 + $0x8] sm:$0xf]
        %v3264 = vld [vmem:[#allocation3 + $0xc] sm:$0xff]
        %v3265 = vld [vmem:[#allocation3 + $0x14] sm:$0xf]
        %s3266 = smul.u32 %s47, 144
        %s3267 = smul.addr %s3266, 4
        %s3268 = scalar_lea.vmem [#allocation13], %s3267
        %v3269 = vld [vmem:[%s3268] sm:$0xff]
        %v3270 = vld [vmem:[%s3268 + $0x8] sm:$0xf]
        %v3271 = vld [vmem:[%s3268 + $0xc] sm:$0xff]
        %v3272 = vld [vmem:[%s3268 + $0x14] sm:$0xf]
        %v3273 = vld [vmem:[%s3268 + $0x18] sm:$0xff]
        %v3274 = vld [vmem:[%s3268 + $0x20] sm:$0xf]
        %v3275 = vld [vmem:[%s3268 + $0x24] sm:$0xff]
        %v3276 = vld [vmem:[%s3268 + $0x2c] sm:$0xf]
        %v3277 = vld [vmem:[%s3268 + $0x30] sm:$0xff]
        %v3278 = vld [vmem:[%s3268 + $0x38] sm:$0xf]
        %v3279 = vld [vmem:[%s3268 + $0x3c] sm:$0xff]
        %v3280 = vld [vmem:[%s3268 + $0x44] sm:$0xf]
        %v3281 = vld [vmem:[%s3268 + $0x48] sm:$0xff]
        %v3282 = vld [vmem:[%s3268 + $0x50] sm:$0xf]
        %v3283 = vld [vmem:[%s3268 + $0x54] sm:$0xff]
        %v3284 = vld [vmem:[%s3268 + $0x5c] sm:$0xf]
        %v3285 = vld [vmem:[%s3268 + $0x60] sm:$0xff]
        %v3286 = vld [vmem:[%s3268 + $0x68] sm:$0xf]
        %v3287 = vld [vmem:[%s3268 + $0x6c] sm:$0xff]
        %v3288 = vld [vmem:[%s3268 + $0x74] sm:$0xf]
        %v3289 = vld [vmem:[%s3268 + $0x78] sm:$0xff]
        %v3290 = vld [vmem:[%s3268 + $0x80] sm:$0xf]
        %v3291 = vld [vmem:[%s3268 + $0x84] sm:$0xff]
        %v3292 = vld [vmem:[%s3268 + $0x8c] sm:$0xf]
        %v3293 = vld [vmem:[%s3268 + $0x90] sm:$0xff]
        %v3294 = vld [vmem:[%s3268 + $0x98] sm:$0xf]
        %v3295 = vld [vmem:[%s3268 + $0x9c] sm:$0xff]
        %v3296 = vld [vmem:[%s3268 + $0xa4] sm:$0xf]
        %v3297 = vld [vmem:[%s3268 + $0xa8] sm:$0xff]
        %v3298 = vld [vmem:[%s3268 + $0xb0] sm:$0xf]
        %v3299 = vld [vmem:[%s3268 + $0xb4] sm:$0xff]
        %v3300 = vld [vmem:[%s3268 + $0xbc] sm:$0xf]
        %v3301 = vld [vmem:[%s3268 + $0xc0] sm:$0xff]
        %v3302 = vld [vmem:[%s3268 + $0xc8] sm:$0xf]
        %v3303 = vld [vmem:[%s3268 + $0xcc] sm:$0xff]
        %v3304 = vld [vmem:[%s3268 + $0xd4] sm:$0xf]
        %v3305 = vld [vmem:[%s3268 + $0xd8] sm:$0xff]
        %v3306 = vld [vmem:[%s3268 + $0xe0] sm:$0xf]
        %v3307 = vld [vmem:[%s3268 + $0xe4] sm:$0xff]
        %v3308 = vld [vmem:[%s3268 + $0xec] sm:$0xf]
        %v3309 = vld [vmem:[%s3268 + $0xf0] sm:$0xff]
        %v3310 = vld [vmem:[%s3268 + $0xf8] sm:$0xf]
        %v3311 = vld [vmem:[%s3268 + $0xfc] sm:$0xff]
        %v3312 = vld [vmem:[%s3268 + $0x104] sm:$0xf]
        %v3313 = vld [vmem:[%s3268 + $0x108] sm:$0xff]
        %v3314 = vld [vmem:[%s3268 + $0x110] sm:$0xf]
        %v3315 = vld [vmem:[%s3268 + $0x114] sm:$0xff]
        %v3316 = vld [vmem:[%s3268 + $0x11c] sm:$0xf]
        %v3317 = vld [vmem:[%s3268 + $0x120] sm:$0xff]
        %v3318 = vld [vmem:[%s3268 + $0x128] sm:$0xf]
        %v3319 = vld [vmem:[%s3268 + $0x12c] sm:$0xff]
        %v3320 = vld [vmem:[%s3268 + $0x134] sm:$0xf]
        %v3321 = vld [vmem:[%s3268 + $0x138] sm:$0xff]
        %v3322 = vld [vmem:[%s3268 + $0x140] sm:$0xf]
        %v3323 = vld [vmem:[%s3268 + $0x144] sm:$0xff]
        %v3324 = vld [vmem:[%s3268 + $0x14c] sm:$0xf]
        %v3325 = vld [vmem:[%s3268 + $0x150] sm:$0xff]
        %v3326 = vld [vmem:[%s3268 + $0x158] sm:$0xf]
        %v3327 = vld [vmem:[%s3268 + $0x15c] sm:$0xff]
        %v3328 = vld [vmem:[%s3268 + $0x164] sm:$0xf]
        %v3329 = vld [vmem:[%s3268 + $0x168] sm:$0xff]
        %v3330 = vld [vmem:[%s3268 + $0x170] sm:$0xf]
        %v3331 = vld [vmem:[%s3268 + $0x174] sm:$0xff]
        %v3332 = vld [vmem:[%s3268 + $0x17c] sm:$0xf]
        %v3333 = vld [vmem:[%s3268 + $0x180] sm:$0xff]
        %v3334 = vld [vmem:[%s3268 + $0x188] sm:$0xf]
        %v3335 = vld [vmem:[%s3268 + $0x18c] sm:$0xff]
        %v3336 = vld [vmem:[%s3268 + $0x194] sm:$0xf]
        %v3337 = vld [vmem:[%s3268 + $0x198] sm:$0xff]
        %v3338 = vld [vmem:[%s3268 + $0x1a0] sm:$0xf]
        %v3339 = vld [vmem:[%s3268 + $0x1a4] sm:$0xff]
        %v3340 = vld [vmem:[%s3268 + $0x1ac] sm:$0xf]
        %v3341 = vld [vmem:[%s3268 + $0x1b0] sm:$0xff]
        %v3342 = vld [vmem:[%s3268 + $0x1b8] sm:$0xf]
        %v3343 = vld [vmem:[%s3268 + $0x1bc] sm:$0xff]
        %v3344 = vld [vmem:[%s3268 + $0x1c4] sm:$0xf]
        %v3345 = vld [vmem:[%s3268 + $0x1c8] sm:$0xff]
        %v3346 = vld [vmem:[%s3268 + $0x1d0] sm:$0xf]
        %v3347 = vld [vmem:[%s3268 + $0x1d4] sm:$0xff]
        %v3348 = vld [vmem:[%s3268 + $0x1dc] sm:$0xf]
        %v3349 = vld [vmem:[%s3268 + $0x1e0] sm:$0xff]
        %v3350 = vld [vmem:[%s3268 + $0x1e8] sm:$0xf]
        %v3351 = vld [vmem:[%s3268 + $0x1ec] sm:$0xff]
        %v3352 = vld [vmem:[%s3268 + $0x1f4] sm:$0xf]
        %v3353 = vld [vmem:[%s3268 + $0x1f8] sm:$0xff]
        %v3354 = vld [vmem:[%s3268 + $0x200] sm:$0xf]
        %v3355 = vld [vmem:[%s3268 + $0x204] sm:$0xff]
        %v3356 = vld [vmem:[%s3268 + $0x20c] sm:$0xf]
        %v3357 = vld [vmem:[%s3268 + $0x210] sm:$0xff]
        %v3358 = vld [vmem:[%s3268 + $0x218] sm:$0xf]
        %v3359 = vld [vmem:[%s3268 + $0x21c] sm:$0xff]
        %v3360 = vld [vmem:[%s3268 + $0x224] sm:$0xf]
        %v3361 = vld [vmem:[%s3268 + $0x228] sm:$0xff]
        %v3362 = vld [vmem:[%s3268 + $0x230] sm:$0xf]
        %v3363 = vld [vmem:[%s3268 + $0x234] sm:$0xff]
        %v3364 = vld [vmem:[%s3268 + $0x23c] sm:$0xf]
        %s3365 = scalar_lea.vmem [#allocation15], %s862
        %v3366 = vld [vmem:[%s3365] sm:$0x7]
        %v3368 = vperm.slane %v3366, 0
        %v3369 = vperm.slane %v3366, 1
        %v3370 = vperm.slane %v3366, 2
        %v3378 = vunpack.c.l.b16 %v3262
        %v3379 = vunpack.c.h.b16 %v3262
        %v3380 = vunpack.c.l.b16 %v3263
        %v3381 = vunpack.c.l.b16 %v3264
        %v3382 = vunpack.c.h.b16 %v3264
        %v3383 = vunpack.c.l.b16 %v3265
        %v3384 = vpack.c.b16 %v3381, %v3378
        %v3385 = vpack.c.b16 %v3382, %v3379
        %v3386 = vpack.c.b16 %v3383, %v3380
        %v3486 = vunpack.c.l.b16 %v3269
        %v3487 = vunpack.c.h.b16 %v3269
        %v3488 = vunpack.c.l.b16 %v3270
        %v3489 = vunpack.c.l.b16 %v3271
        %v3490 = vunpack.c.h.b16 %v3271
        %v3491 = vunpack.c.l.b16 %v3272
        %v3492 = vunpack.c.l.b16 %v3273
        %v3493 = vunpack.c.h.b16 %v3273
        %v3494 = vunpack.c.l.b16 %v3274
        %v3495 = vunpack.c.l.b16 %v3275
        %v3496 = vunpack.c.h.b16 %v3275
        %v3497 = vunpack.c.l.b16 %v3276
        %v3498 = vunpack.c.l.b16 %v3277
        %v3499 = vunpack.c.h.b16 %v3277
        %v3500 = vunpack.c.l.b16 %v3278
        %v3501 = vunpack.c.l.b16 %v3279
        %v3502 = vunpack.c.h.b16 %v3279
        %v3503 = vunpack.c.l.b16 %v3280
        %v3504 = vunpack.c.l.b16 %v3281
        %v3505 = vunpack.c.h.b16 %v3281
        %v3506 = vunpack.c.l.b16 %v3282
        %v3507 = vunpack.c.l.b16 %v3283
        %v3508 = vunpack.c.h.b16 %v3283
        %v3509 = vunpack.c.l.b16 %v3284
        %v3510 = vunpack.c.l.b16 %v3285
        %v3511 = vunpack.c.h.b16 %v3285
        %v3512 = vunpack.c.l.b16 %v3286
        %v3513 = vunpack.c.l.b16 %v3287
        %v3514 = vunpack.c.h.b16 %v3287
        %v3515 = vunpack.c.l.b16 %v3288
        %v3516 = vunpack.c.l.b16 %v3289
        %v3517 = vunpack.c.h.b16 %v3289
        %v3518 = vunpack.c.l.b16 %v3290
        %v3519 = vunpack.c.l.b16 %v3291
        %v3520 = vunpack.c.h.b16 %v3291
        %v3521 = vunpack.c.l.b16 %v3292
        %v3522 = vunpack.c.l.b16 %v3293
        %v3523 = vunpack.c.h.b16 %v3293
        %v3524 = vunpack.c.l.b16 %v3294
        %v3525 = vunpack.c.l.b16 %v3295
        %v3526 = vunpack.c.h.b16 %v3295
        %v3527 = vunpack.c.l.b16 %v3296
        %v3528 = vunpack.c.l.b16 %v3297
        %v3529 = vunpack.c.h.b16 %v3297
        %v3530 = vunpack.c.l.b16 %v3298
        %v3531 = vunpack.c.l.b16 %v3299
        %v3532 = vunpack.c.h.b16 %v3299
        %v3533 = vunpack.c.l.b16 %v3300
        %v3534 = vunpack.c.l.b16 %v3301
        %v3535 = vunpack.c.h.b16 %v3301
        %v3536 = vunpack.c.l.b16 %v3302
        %v3537 = vunpack.c.l.b16 %v3303
        %v3538 = vunpack.c.h.b16 %v3303
        %v3539 = vunpack.c.l.b16 %v3304
        %v3540 = vunpack.c.l.b16 %v3305
        %v3541 = vunpack.c.h.b16 %v3305
        %v3542 = vunpack.c.l.b16 %v3306
        %v3543 = vunpack.c.l.b16 %v3307
        %v3544 = vunpack.c.h.b16 %v3307
        %v3545 = vunpack.c.l.b16 %v3308
        %v3546 = vunpack.c.l.b16 %v3309
        %v3547 = vunpack.c.h.b16 %v3309
        %v3548 = vunpack.c.l.b16 %v3310
        %v3549 = vunpack.c.l.b16 %v3311
        %v3550 = vunpack.c.h.b16 %v3311
        %v3551 = vunpack.c.l.b16 %v3312
        %v3552 = vunpack.c.l.b16 %v3313
        %v3553 = vunpack.c.h.b16 %v3313
        %v3554 = vunpack.c.l.b16 %v3314
        %v3555 = vunpack.c.l.b16 %v3315
        %v3556 = vunpack.c.h.b16 %v3315
        %v3557 = vunpack.c.l.b16 %v3316
        %v3558 = vunpack.c.l.b16 %v3317
        %v3559 = vunpack.c.h.b16 %v3317
        %v3560 = vunpack.c.l.b16 %v3318
        %v3561 = vunpack.c.l.b16 %v3319
        %v3562 = vunpack.c.h.b16 %v3319
        %v3563 = vunpack.c.l.b16 %v3320
        %v3564 = vunpack.c.l.b16 %v3321
        %v3565 = vunpack.c.h.b16 %v3321
        %v3566 = vunpack.c.l.b16 %v3322
        %v3567 = vunpack.c.l.b16 %v3323
        %v3568 = vunpack.c.h.b16 %v3323
        %v3569 = vunpack.c.l.b16 %v3324
        %v3570 = vunpack.c.l.b16 %v3325
        %v3571 = vunpack.c.h.b16 %v3325
        %v3572 = vunpack.c.l.b16 %v3326
        %v3573 = vunpack.c.l.b16 %v3327
        %v3574 = vunpack.c.h.b16 %v3327
        %v3575 = vunpack.c.l.b16 %v3328
        %v3576 = vunpack.c.l.b16 %v3329
        %v3577 = vunpack.c.h.b16 %v3329
        %v3578 = vunpack.c.l.b16 %v3330
        %v3579 = vunpack.c.l.b16 %v3331
        %v3580 = vunpack.c.h.b16 %v3331
        %v3581 = vunpack.c.l.b16 %v3332
        %v3582 = vunpack.c.l.b16 %v3333
        %v3583 = vunpack.c.h.b16 %v3333
        %v3584 = vunpack.c.l.b16 %v3334
        %v3585 = vunpack.c.l.b16 %v3335
        %v3586 = vunpack.c.h.b16 %v3335
        %v3587 = vunpack.c.l.b16 %v3336
        %v3588 = vunpack.c.l.b16 %v3337
        %v3589 = vunpack.c.h.b16 %v3337
        %v3590 = vunpack.c.l.b16 %v3338
        %v3591 = vunpack.c.l.b16 %v3339
        %v3592 = vunpack.c.h.b16 %v3339
        %v3593 = vunpack.c.l.b16 %v3340
        %v3594 = vunpack.c.l.b16 %v3341
        %v3595 = vunpack.c.h.b16 %v3341
        %v3596 = vunpack.c.l.b16 %v3342
        %v3597 = vunpack.c.l.b16 %v3343
        %v3598 = vunpack.c.h.b16 %v3343
        %v3599 = vunpack.c.l.b16 %v3344
        %v3600 = vunpack.c.l.b16 %v3345
        %v3601 = vunpack.c.h.b16 %v3345
        %v3602 = vunpack.c.l.b16 %v3346
        %v3603 = vunpack.c.l.b16 %v3347
        %v3604 = vunpack.c.h.b16 %v3347
        %v3605 = vunpack.c.l.b16 %v3348
        %v3606 = vunpack.c.l.b16 %v3349
        %v3607 = vunpack.c.h.b16 %v3349
        %v3608 = vunpack.c.l.b16 %v3350
        %v3609 = vunpack.c.l.b16 %v3351
        %v3610 = vunpack.c.h.b16 %v3351
        %v3611 = vunpack.c.l.b16 %v3352
        %v3612 = vunpack.c.l.b16 %v3353
        %v3613 = vunpack.c.h.b16 %v3353
        %v3614 = vunpack.c.l.b16 %v3354
        %v3615 = vunpack.c.l.b16 %v3355
        %v3616 = vunpack.c.h.b16 %v3355
        %v3617 = vunpack.c.l.b16 %v3356
        %v3618 = vunpack.c.l.b16 %v3357
        %v3619 = vunpack.c.h.b16 %v3357
        %v3620 = vunpack.c.l.b16 %v3358
        %v3621 = vunpack.c.l.b16 %v3359
        %v3622 = vunpack.c.h.b16 %v3359
        %v3623 = vunpack.c.l.b16 %v3360
        %v3624 = vunpack.c.l.b16 %v3361
        %v3625 = vunpack.c.h.b16 %v3361
        %v3626 = vunpack.c.l.b16 %v3362
        %v3627 = vunpack.c.l.b16 %v3363
        %v3628 = vunpack.c.h.b16 %v3363
        %v3629 = vunpack.c.l.b16 %v3364
        %v3630 = vpack.c.b16 %v3489, %v3486
        %v3631 = vpack.c.b16 %v3490, %v3487
        %v3632 = vpack.c.b16 %v3491, %v3488
        %v3633 = vpack.c.b16 %v3495, %v3492
        %v3634 = vpack.c.b16 %v3496, %v3493
        %v3635 = vpack.c.b16 %v3497, %v3494
        %v3636 = vpack.c.b16 %v3501, %v3498
        %v3637 = vpack.c.b16 %v3502, %v3499
        %v3638 = vpack.c.b16 %v3503, %v3500
        %v3639 = vpack.c.b16 %v3507, %v3504
        %v3640 = vpack.c.b16 %v3508, %v3505
        %v3641 = vpack.c.b16 %v3509, %v3506
        %v3642 = vpack.c.b16 %v3513, %v3510
        %v3643 = vpack.c.b16 %v3514, %v3511
        %v3644 = vpack.c.b16 %v3515, %v3512
        %v3645 = vpack.c.b16 %v3519, %v3516
        %v3646 = vpack.c.b16 %v3520, %v3517
        %v3647 = vpack.c.b16 %v3521, %v3518
        %v3648 = vpack.c.b16 %v3525, %v3522
        %v3649 = vpack.c.b16 %v3526, %v3523
        %v3650 = vpack.c.b16 %v3527, %v3524
        %v3651 = vpack.c.b16 %v3531, %v3528
        %v3652 = vpack.c.b16 %v3532, %v3529
        %v3653 = vpack.c.b16 %v3533, %v3530
        %v3654 = vpack.c.b16 %v3537, %v3534
        %v3655 = vpack.c.b16 %v3538, %v3535
        %v3656 = vpack.c.b16 %v3539, %v3536
        %v3657 = vpack.c.b16 %v3543, %v3540
        %v3658 = vpack.c.b16 %v3544, %v3541
        %v3659 = vpack.c.b16 %v3545, %v3542
        %v3660 = vpack.c.b16 %v3549, %v3546
        %v3661 = vpack.c.b16 %v3550, %v3547
        %v3662 = vpack.c.b16 %v3551, %v3548
        %v3663 = vpack.c.b16 %v3555, %v3552
        %v3664 = vpack.c.b16 %v3556, %v3553
        %v3665 = vpack.c.b16 %v3557, %v3554
        %v3666 = vpack.c.b16 %v3561, %v3558
        %v3667 = vpack.c.b16 %v3562, %v3559
        %v3668 = vpack.c.b16 %v3563, %v3560
        %v3669 = vpack.c.b16 %v3567, %v3564
        %v3670 = vpack.c.b16 %v3568, %v3565
        %v3671 = vpack.c.b16 %v3569, %v3566
        %v3672 = vpack.c.b16 %v3573, %v3570
        %v3673 = vpack.c.b16 %v3574, %v3571
        %v3674 = vpack.c.b16 %v3575, %v3572
        %v3675 = vpack.c.b16 %v3579, %v3576
        %v3676 = vpack.c.b16 %v3580, %v3577
        %v3677 = vpack.c.b16 %v3581, %v3578
        %v3678 = vpack.c.b16 %v3585, %v3582
        %v3679 = vpack.c.b16 %v3586, %v3583
        %v3680 = vpack.c.b16 %v3587, %v3584
        %v3681 = vpack.c.b16 %v3591, %v3588
        %v3682 = vpack.c.b16 %v3592, %v3589
        %v3683 = vpack.c.b16 %v3593, %v3590
        %v3684 = vpack.c.b16 %v3597, %v3594
        %v3685 = vpack.c.b16 %v3598, %v3595
        %v3686 = vpack.c.b16 %v3599, %v3596
        %v3687 = vpack.c.b16 %v3603, %v3600
        %v3688 = vpack.c.b16 %v3604, %v3601
        %v3689 = vpack.c.b16 %v3605, %v3602
        %v3690 = vpack.c.b16 %v3609, %v3606
        %v3691 = vpack.c.b16 %v3610, %v3607
        %v3692 = vpack.c.b16 %v3611, %v3608
        %v3693 = vpack.c.b16 %v3615, %v3612
        %v3694 = vpack.c.b16 %v3616, %v3613
        %v3695 = vpack.c.b16 %v3617, %v3614
        %v3696 = vpack.c.b16 %v3621, %v3618
        %v3697 = vpack.c.b16 %v3622, %v3619
        %v3698 = vpack.c.b16 %v3623, %v3620
        %v3699 = vpack.c.b16 %v3627, %v3624
        %v3700 = vpack.c.b16 %v3628, %v3625
        %v3701 = vpack.c.b16 %v3629, %v3626
        %3774 = vmatpush.bf16.msra.mxu0 %v3651
        %3775 = vmatpush.bf16.msra.mxu0 %v3648
        %3776 = vmatpush.bf16.msra.mxu0 %v3645
        %3777 = vmatpush.bf16.msra.mxu0 %v3642
        %3778 = vmatpush.bf16.msra.mxu0 %v3639
        %3779 = vmatpush.bf16.msra.mxu0 %v3636
        %3780 = vmatpush.bf16.msra.mxu0 %v3633
        %3781 = vmatpush.bf16.msra.mxu0 %v3630
        %3782 = vmatmul.bf16.gmra.mxu0 %v3384
        %v3783 = vpop.f32.mrf.mxu0
        %v3784 = vadd.f32 %v3368, %v3783
        %v3785 = vpop.f32.mrf.mxu0
        %v3786 = vadd.f32 %v3368, %v3785
        %3787 = vdwg.mxu0
        %3788 = vmatpush.bf16.msra.mxu0 %v3675
        %3789 = vmatpush.bf16.msra.mxu0 %v3672
        %3790 = vmatpush.bf16.msra.mxu0 %v3669
        %3791 = vmatpush.bf16.msra.mxu0 %v3666
        %3792 = vmatpush.bf16.msra.mxu0 %v3663
        %3793 = vmatpush.bf16.msra.mxu0 %v3660
        %3794 = vmatpush.bf16.msra.mxu0 %v3657
        %3795 = vmatpush.bf16.msra.mxu0 %v3654
        %3796 = vmatmul.bf16.gmra.mxu0 %v3385
        %v3797 = vpop.f32.mrf.mxu0
        %v3798 = vadd.f32 %v3784, %v3797
        %v3799 = vpop.f32.mrf.mxu0
        %v3800 = vadd.f32 %v3786, %v3799
        %3801 = vdwg.mxu0
        %3802 = vmatpush.bf16.msra.mxu0 %v3699
        %3803 = vmatpush.bf16.msra.mxu0 %v3696
        %3804 = vmatpush.bf16.msra.mxu0 %v3693
        %3805 = vmatpush.bf16.msra.mxu0 %v3690
        %3806 = vmatpush.bf16.msra.mxu0 %v3687
        %3807 = vmatpush.bf16.msra.mxu0 %v3684
        %3808 = vmatpush.bf16.msra.mxu0 %v3681
        %3809 = vmatpush.bf16.msra.mxu0 %v3678
        %3810 = vmatmul.bf16.gmra.mxu0 %v3386
        %v3811 = vpop.f32.mrf.mxu0
        %v3812 = vadd.f32 %v3798, %v3811
        %v3813 = vpop.f32.mrf.mxu0
        %v3814 = vadd.f32 %v3800, %v3813
        %3815 = vdwg.mxu0
        %3816 = vmatpush.bf16.msra.mxu0 %v3652
        %3817 = vmatpush.bf16.msra.mxu0 %v3649
        %3818 = vmatpush.bf16.msra.mxu0 %v3646
        %3819 = vmatpush.bf16.msra.mxu0 %v3643
        %3820 = vmatpush.bf16.msra.mxu0 %v3640
        %3821 = vmatpush.bf16.msra.mxu0 %v3637
        %3822 = vmatpush.bf16.msra.mxu0 %v3634
        %3823 = vmatpush.bf16.msra.mxu0 %v3631
        %3824 = vmatmul.bf16.gmra.mxu0 %v3384
        %v3825 = vpop.f32.mrf.mxu0
        %v3826 = vadd.f32 %v3369, %v3825
        %v3827 = vpop.f32.mrf.mxu0
        %v3828 = vadd.f32 %v3369, %v3827
        %3829 = vdwg.mxu0
        %3830 = vmatpush.bf16.msra.mxu0 %v3676
        %3831 = vmatpush.bf16.msra.mxu0 %v3673
        %3832 = vmatpush.bf16.msra.mxu0 %v3670
        %3833 = vmatpush.bf16.msra.mxu0 %v3667
        %3834 = vmatpush.bf16.msra.mxu0 %v3664
        %3835 = vmatpush.bf16.msra.mxu0 %v3661
        %3836 = vmatpush.bf16.msra.mxu0 %v3658
        %3837 = vmatpush.bf16.msra.mxu0 %v3655
        %3838 = vmatmul.bf16.gmra.mxu0 %v3385
        %v3839 = vpop.f32.mrf.mxu0
        %v3840 = vadd.f32 %v3826, %v3839
        %v3841 = vpop.f32.mrf.mxu0
        %v3842 = vadd.f32 %v3828, %v3841
        %3843 = vdwg.mxu0
        %3844 = vmatpush.bf16.msra.mxu0 %v3700
        %3845 = vmatpush.bf16.msra.mxu0 %v3697
        %3846 = vmatpush.bf16.msra.mxu0 %v3694
        %3847 = vmatpush.bf16.msra.mxu0 %v3691
        %3848 = vmatpush.bf16.msra.mxu0 %v3688
        %3849 = vmatpush.bf16.msra.mxu0 %v3685
        %3850 = vmatpush.bf16.msra.mxu0 %v3682
        %3851 = vmatpush.bf16.msra.mxu0 %v3679
        %3852 = vmatmul.bf16.gmra.mxu0 %v3386
        %v3853 = vpop.f32.mrf.mxu0
        %v3854 = vadd.f32 %v3840, %v3853
        %v3855 = vpop.f32.mrf.mxu0
        %v3856 = vadd.f32 %v3842, %v3855
        %3857 = vdwg.mxu0
        %3858 = vmatpush.bf16.msra.mxu0 %v3653
        %3859 = vmatpush.bf16.msra.mxu0 %v3650
        %3860 = vmatpush.bf16.msra.mxu0 %v3647
        %3861 = vmatpush.bf16.msra.mxu0 %v3644
        %3862 = vmatpush.bf16.msra.mxu0 %v3641
        %3863 = vmatpush.bf16.msra.mxu0 %v3638
        %3864 = vmatpush.bf16.msra.mxu0 %v3635
        %3865 = vmatpush.bf16.msra.mxu0 %v3632
        %3866 = vmatmul.bf16.gmra.mxu0 %v3384
        %v3867 = vpop.f32.mrf.mxu0
        %v3868 = vadd.f32 %v3370, %v3867
        %v3869 = vpop.f32.mrf.mxu0
        %v3870 = vadd.f32 %v3370, %v3869
        %3871 = vdwg.mxu0
        %3872 = vmatpush.bf16.msra.mxu0 %v3677
        %3873 = vmatpush.bf16.msra.mxu0 %v3674
        %3874 = vmatpush.bf16.msra.mxu0 %v3671
        %3875 = vmatpush.bf16.msra.mxu0 %v3668
        %3876 = vmatpush.bf16.msra.mxu0 %v3665
        %3877 = vmatpush.bf16.msra.mxu0 %v3662
        %3878 = vmatpush.bf16.msra.mxu0 %v3659
        %3879 = vmatpush.bf16.msra.mxu0 %v3656
        %3880 = vmatmul.bf16.gmra.mxu0 %v3385
        %v3881 = vpop.f32.mrf.mxu0
        %v3882 = vadd.f32 %v3868, %v3881
        %v3883 = vpop.f32.mrf.mxu0
        %v3884 = vadd.f32 %v3870, %v3883
        %3885 = vdwg.mxu0
        %3886 = vmatpush.bf16.msra.mxu0 %v3701
        %3887 = vmatpush.bf16.msra.mxu0 %v3698
        %3888 = vmatpush.bf16.msra.mxu0 %v3695
        %3889 = vmatpush.bf16.msra.mxu0 %v3692
        %3890 = vmatpush.bf16.msra.mxu0 %v3689
        %3891 = vmatpush.bf16.msra.mxu0 %v3686
        %3892 = vmatpush.bf16.msra.mxu0 %v3683
        %3893 = vmatpush.bf16.msra.mxu0 %v3680
        %3894 = vmatmul.bf16.gmra.mxu0 %v3386
        %v3895 = vpop.f32.mrf.mxu0
        %v3896 = vadd.f32 %v3882, %v3895
        %v3897 = vpop.f32.mrf.mxu0
        %v3898 = vadd.f32 %v3884, %v3897
        %3899 = vdwg.mxu0
        %v3900 = vadd.f32 %v856, %v3812
        %v3901 = vadd.f32 %v857, %v3854
        %v3902 = vadd.f32 %v858, %v3896
        %v3903 = vadd.f32 %v859, %v3814
        %v3904 = vadd.f32 %v860, %v3856
        %v3905 = vadd.f32 %v861, %v3898
        %s3906 = scalar_lea.vmem [#allocation16], %s862
        %v3907 = vld [vmem:[%s3906] sm:$0x7]
        %s3908 = scalar_lea.vmem [#allocation18], %s862
        %v3909 = vld [vmem:[%s3908] sm:$0x7]
        %v3910 = vadd.f32 %v3900, %v3901
        %v3911 = vadd.f32 %v3910, %v3902
        %3912 = vadd.xlane.f32.xlu0 %v3911
        %v3913 = vpop.xlane.xlu0 %3912
        %v3914 = vadd.f32 %v3903, %v3904
        %v3915 = vadd.f32 %v3914, %v3905
        %3916 = vadd.xlane.f32.xlu0 %v3915
        %v3917 = vpop.xlane.xlu0 %3916
        %v3918 = vmul.f32 %v3913, %v881
        %v3919 = vmul.f32 %v3917, %v881
        %v3920 = vsub.f32 %v3900, %v3918
        %v3921 = vsub.f32 %v3901, %v3918
        %v3922 = vsub.f32 %v3902, %v3918
        %v3923 = vsub.f32 %v3903, %v3919
        %v3924 = vsub.f32 %v3904, %v3919
        %v3925 = vsub.f32 %v3905, %v3919
        %v3926 = vmul.f32 %v3920, %v3920
        %v3927 = vmul.f32 %v3921, %v3921
        %v3928 = vmul.f32 %v3922, %v3922
        %v3929 = vmul.f32 %v3923, %v3923
        %v3930 = vmul.f32 %v3924, %v3924
        %v3931 = vmul.f32 %v3925, %v3925
        %v3932 = vadd.f32 %v3926, %v3927
        %v3933 = vadd.f32 %v3932, %v3928
        %3934 = vadd.xlane.f32.xlu0 %v3933
        %v3935 = vpop.xlane.xlu0 %3934
        %v3936 = vadd.f32 %v3929, %v3930
        %v3937 = vadd.f32 %v3936, %v3931
        %3938 = vadd.xlane.f32.xlu0 %v3937
        %v3939 = vpop.xlane.xlu0 %3938
        %v3940 = vmul.f32 %v3935, %v881
        %v3941 = vmul.f32 %v3939, %v881
        %v3942 = vadd.f32 %v3940, 1e-05
        %v3943 = vadd.f32 %v3941, 1e-05
        %v3944 = vrsqrt.pop %v3942
        %v3945 = vmul.f32 %v3944, %v3942
        %v3946 = vmul.f32 %v3945, %v3944
        %v3947 = vmul.f32 0.5, %v3946
        %v3948 = vsub.f32 1.5, %v3947
        %v3949 = vmul.f32 %v3944, %v3948
        %vm3950 = vweird.f32 %v3942
        %vm3951 = vweird.f32 %v3944
        %vm3952 = vmor %vm3950, %vm3951
        %v3953 = vsel %vm3952, %v3944, %v3949
        %v3954 = vrsqrt.pop %v3943
        %v3955 = vmul.f32 %v3954, %v3943
        %v3956 = vmul.f32 %v3955, %v3954
        %v3957 = vmul.f32 0.5, %v3956
        %v3958 = vsub.f32 1.5, %v3957
        %v3959 = vmul.f32 %v3954, %v3958
        %vm3960 = vweird.f32 %v3943
        %vm3961 = vweird.f32 %v3954
        %vm3962 = vmor %vm3960, %vm3961
        %v3963 = vsel %vm3962, %v3954, %v3959
        %v3964 = vmul.f32 %v3920, %v3953
        %v3965 = vmul.f32 %v3921, %v3953
        %v3966 = vmul.f32 %v3922, %v3953
        %v3967 = vmul.f32 %v3923, %v3963
        %v3968 = vmul.f32 %v3924, %v3963
        %v3969 = vmul.f32 %v3925, %v3963
        %v3971 = vperm.slane %v3907, 0
        %v3972 = vperm.slane %v3907, 1
        %v3973 = vperm.slane %v3907, 2
        %v3977 = vmul.f32 %v3964, %v3971
        %v3978 = vmul.f32 %v3965, %v3972
        %v3979 = vmul.f32 %v3966, %v3973
        %v3980 = vmul.f32 %v3967, %v3971
        %v3981 = vmul.f32 %v3968, %v3972
        %v3982 = vmul.f32 %v3969, %v3973
        %v3984 = vperm.slane %v3909, 0
        %v3985 = vperm.slane %v3909, 1
        %v3986 = vperm.slane %v3909, 2
        %v3990 = vadd.f32 %v3977, %v3984
        %v3991 = vadd.f32 %v3978, %v3985
        %v3992 = vadd.f32 %v3979, %v3986
        %v3993 = vadd.f32 %v3980, %v3984
        %v3994 = vadd.f32 %v3981, %v3985
        %v3995 = vadd.f32 %v3982, %v3986
        %v3996 = vpack.c.bf16 %v3991, %v3990
        %v3997 = vpack.c.bf16 %v3992, %v3992
        %v3998 = vpack.c.bf16 %v3994, %v3993
        %v3999 = vpack.c.bf16 %v3995, %v3995
        %s4000 = smul.u32 %s47, 576
        %s4001 = smul.addr %s4000, 4
        %s4002 = scalar_lea.vmem [#allocation19], %s4001
        %v4003 = vld [vmem:[%s4002] sm:$0xff]
        %v4004 = vld [vmem:[%s4002 + $0x8] sm:$0xff]
        %v4005 = vld [vmem:[%s4002 + $0x10] sm:$0xff]
        %v4006 = vld [vmem:[%s4002 + $0x18] sm:$0xff]
        %v4007 = vld [vmem:[%s4002 + $0x20] sm:$0xff]
        %v4008 = vld [vmem:[%s4002 + $0x28] sm:$0xff]
        %v4009 = vld [vmem:[%s4002 + $0x30] sm:$0xff]
        %v4010 = vld [vmem:[%s4002 + $0x38] sm:$0xff]
        %v4011 = vld [vmem:[%s4002 + $0x40] sm:$0xff]
        %v4012 = vld [vmem:[%s4002 + $0x48] sm:$0xff]
        %v4013 = vld [vmem:[%s4002 + $0x50] sm:$0xff]
        %v4014 = vld [vmem:[%s4002 + $0x58] sm:$0xff]
        %v4015 = vld [vmem:[%s4002 + $0x60] sm:$0xff]
        %v4016 = vld [vmem:[%s4002 + $0x68] sm:$0xff]
        %v4017 = vld [vmem:[%s4002 + $0x70] sm:$0xff]
        %v4018 = vld [vmem:[%s4002 + $0x78] sm:$0xff]
        %v4019 = vld [vmem:[%s4002 + $0x80] sm:$0xff]
        %v4020 = vld [vmem:[%s4002 + $0x88] sm:$0xff]
        %v4021 = vld [vmem:[%s4002 + $0x90] sm:$0xff]
        %v4022 = vld [vmem:[%s4002 + $0x98] sm:$0xff]
        %v4023 = vld [vmem:[%s4002 + $0xa0] sm:$0xff]
        %v4024 = vld [vmem:[%s4002 + $0xa8] sm:$0xff]
        %v4025 = vld [vmem:[%s4002 + $0xb0] sm:$0xff]
        %v4026 = vld [vmem:[%s4002 + $0xb8] sm:$0xff]
        %v4027 = vld [vmem:[%s4002 + $0xc0] sm:$0xff]
        %v4028 = vld [vmem:[%s4002 + $0xc8] sm:$0xff]
        %v4029 = vld [vmem:[%s4002 + $0xd0] sm:$0xff]
        %v4030 = vld [vmem:[%s4002 + $0xd8] sm:$0xff]
        %v4031 = vld [vmem:[%s4002 + $0xe0] sm:$0xff]
        %v4032 = vld [vmem:[%s4002 + $0xe8] sm:$0xff]
        %v4033 = vld [vmem:[%s4002 + $0xf0] sm:$0xff]
        %v4034 = vld [vmem:[%s4002 + $0xf8] sm:$0xff]
        %v4035 = vld [vmem:[%s4002 + $0x100] sm:$0xff]
        %v4036 = vld [vmem:[%s4002 + $0x108] sm:$0xff]
        %v4037 = vld [vmem:[%s4002 + $0x110] sm:$0xff]
        %v4038 = vld [vmem:[%s4002 + $0x118] sm:$0xff]
        %v4039 = vld [vmem:[%s4002 + $0x120] sm:$0xff]
        %v4040 = vld [vmem:[%s4002 + $0x128] sm:$0xff]
        %v4041 = vld [vmem:[%s4002 + $0x130] sm:$0xff]
        %v4042 = vld [vmem:[%s4002 + $0x138] sm:$0xff]
        %v4043 = vld [vmem:[%s4002 + $0x140] sm:$0xff]
        %v4044 = vld [vmem:[%s4002 + $0x148] sm:$0xff]
        %v4045 = vld [vmem:[%s4002 + $0x150] sm:$0xff]
        %v4046 = vld [vmem:[%s4002 + $0x158] sm:$0xff]
        %v4047 = vld [vmem:[%s4002 + $0x160] sm:$0xff]
        %v4048 = vld [vmem:[%s4002 + $0x168] sm:$0xff]
        %v4049 = vld [vmem:[%s4002 + $0x170] sm:$0xff]
        %v4050 = vld [vmem:[%s4002 + $0x178] sm:$0xff]
        %v4051 = vld [vmem:[%s4002 + $0x180] sm:$0xff]
        %v4052 = vld [vmem:[%s4002 + $0x188] sm:$0xff]
        %v4053 = vld [vmem:[%s4002 + $0x190] sm:$0xff]
        %v4054 = vld [vmem:[%s4002 + $0x198] sm:$0xff]
        %v4055 = vld [vmem:[%s4002 + $0x1a0] sm:$0xff]
        %v4056 = vld [vmem:[%s4002 + $0x1a8] sm:$0xff]
        %v4057 = vld [vmem:[%s4002 + $0x1b0] sm:$0xff]
        %v4058 = vld [vmem:[%s4002 + $0x1b8] sm:$0xff]
        %v4059 = vld [vmem:[%s4002 + $0x1c0] sm:$0xff]
        %v4060 = vld [vmem:[%s4002 + $0x1c8] sm:$0xff]
        %v4061 = vld [vmem:[%s4002 + $0x1d0] sm:$0xff]
        %v4062 = vld [vmem:[%s4002 + $0x1d8] sm:$0xff]
        %v4063 = vld [vmem:[%s4002 + $0x1e0] sm:$0xff]
        %v4064 = vld [vmem:[%s4002 + $0x1e8] sm:$0xff]
        %v4065 = vld [vmem:[%s4002 + $0x1f0] sm:$0xff]
        %v4066 = vld [vmem:[%s4002 + $0x1f8] sm:$0xff]
        %v4067 = vld [vmem:[%s4002 + $0x200] sm:$0xff]
        %v4068 = vld [vmem:[%s4002 + $0x208] sm:$0xff]
        %v4069 = vld [vmem:[%s4002 + $0x210] sm:$0xff]
        %v4070 = vld [vmem:[%s4002 + $0x218] sm:$0xff]
        %v4071 = vld [vmem:[%s4002 + $0x220] sm:$0xff]
        %v4072 = vld [vmem:[%s4002 + $0x228] sm:$0xff]
        %v4073 = vld [vmem:[%s4002 + $0x230] sm:$0xff]
        %v4074 = vld [vmem:[%s4002 + $0x238] sm:$0xff]
        %v4075 = vld [vmem:[%s4002 + $0x240] sm:$0xff]
        %v4076 = vld [vmem:[%s4002 + $0x248] sm:$0xff]
        %v4077 = vld [vmem:[%s4002 + $0x250] sm:$0xff]
        %v4078 = vld [vmem:[%s4002 + $0x258] sm:$0xff]
        %v4079 = vld [vmem:[%s4002 + $0x260] sm:$0xff]
        %v4080 = vld [vmem:[%s4002 + $0x268] sm:$0xff]
        %v4081 = vld [vmem:[%s4002 + $0x270] sm:$0xff]
        %v4082 = vld [vmem:[%s4002 + $0x278] sm:$0xff]
        %v4083 = vld [vmem:[%s4002 + $0x280] sm:$0xff]
        %v4084 = vld [vmem:[%s4002 + $0x288] sm:$0xff]
        %v4085 = vld [vmem:[%s4002 + $0x290] sm:$0xff]
        %v4086 = vld [vmem:[%s4002 + $0x298] sm:$0xff]
        %v4087 = vld [vmem:[%s4002 + $0x2a0] sm:$0xff]
        %v4088 = vld [vmem:[%s4002 + $0x2a8] sm:$0xff]
        %v4089 = vld [vmem:[%s4002 + $0x2b0] sm:$0xff]
        %v4090 = vld [vmem:[%s4002 + $0x2b8] sm:$0xff]
        %v4091 = vld [vmem:[%s4002 + $0x2c0] sm:$0xff]
        %v4092 = vld [vmem:[%s4002 + $0x2c8] sm:$0xff]
        %v4093 = vld [vmem:[%s4002 + $0x2d0] sm:$0xff]
        %v4094 = vld [vmem:[%s4002 + $0x2d8] sm:$0xff]
        %v4095 = vld [vmem:[%s4002 + $0x2e0] sm:$0xff]
        %v4096 = vld [vmem:[%s4002 + $0x2e8] sm:$0xff]
        %v4097 = vld [vmem:[%s4002 + $0x2f0] sm:$0xff]
        %v4098 = vld [vmem:[%s4002 + $0x2f8] sm:$0xff]
        %v4099 = vld [vmem:[%s4002 + $0x300] sm:$0xff]
        %v4100 = vld [vmem:[%s4002 + $0x308] sm:$0xff]
        %v4101 = vld [vmem:[%s4002 + $0x310] sm:$0xff]
        %v4102 = vld [vmem:[%s4002 + $0x318] sm:$0xff]
        %v4103 = vld [vmem:[%s4002 + $0x320] sm:$0xff]
        %v4104 = vld [vmem:[%s4002 + $0x328] sm:$0xff]
        %v4105 = vld [vmem:[%s4002 + $0x330] sm:$0xff]
        %v4106 = vld [vmem:[%s4002 + $0x338] sm:$0xff]
        %v4107 = vld [vmem:[%s4002 + $0x340] sm:$0xff]
        %v4108 = vld [vmem:[%s4002 + $0x348] sm:$0xff]
        %v4109 = vld [vmem:[%s4002 + $0x350] sm:$0xff]
        %v4110 = vld [vmem:[%s4002 + $0x358] sm:$0xff]
        %v4111 = vld [vmem:[%s4002 + $0x360] sm:$0xff]
        %v4112 = vld [vmem:[%s4002 + $0x368] sm:$0xff]
        %v4113 = vld [vmem:[%s4002 + $0x370] sm:$0xff]
        %v4114 = vld [vmem:[%s4002 + $0x378] sm:$0xff]
        %v4115 = vld [vmem:[%s4002 + $0x380] sm:$0xff]
        %v4116 = vld [vmem:[%s4002 + $0x388] sm:$0xff]
        %v4117 = vld [vmem:[%s4002 + $0x390] sm:$0xff]
        %v4118 = vld [vmem:[%s4002 + $0x398] sm:$0xff]
        %v4119 = vld [vmem:[%s4002 + $0x3a0] sm:$0xff]
        %v4120 = vld [vmem:[%s4002 + $0x3a8] sm:$0xff]
        %v4121 = vld [vmem:[%s4002 + $0x3b0] sm:$0xff]
        %v4122 = vld [vmem:[%s4002 + $0x3b8] sm:$0xff]
        %v4123 = vld [vmem:[%s4002 + $0x3c0] sm:$0xff]
        %v4124 = vld [vmem:[%s4002 + $0x3c8] sm:$0xff]
        %v4125 = vld [vmem:[%s4002 + $0x3d0] sm:$0xff]
        %v4126 = vld [vmem:[%s4002 + $0x3d8] sm:$0xff]
        %v4127 = vld [vmem:[%s4002 + $0x3e0] sm:$0xff]
        %v4128 = vld [vmem:[%s4002 + $0x3e8] sm:$0xff]
        %v4129 = vld [vmem:[%s4002 + $0x3f0] sm:$0xff]
        %v4130 = vld [vmem:[%s4002 + $0x3f8] sm:$0xff]
        %v4131 = vld [vmem:[%s4002 + $0x400] sm:$0xff]
        %v4132 = vld [vmem:[%s4002 + $0x408] sm:$0xff]
        %v4133 = vld [vmem:[%s4002 + $0x410] sm:$0xff]
        %v4134 = vld [vmem:[%s4002 + $0x418] sm:$0xff]
        %v4135 = vld [vmem:[%s4002 + $0x420] sm:$0xff]
        %v4136 = vld [vmem:[%s4002 + $0x428] sm:$0xff]
        %v4137 = vld [vmem:[%s4002 + $0x430] sm:$0xff]
        %v4138 = vld [vmem:[%s4002 + $0x438] sm:$0xff]
        %v4139 = vld [vmem:[%s4002 + $0x440] sm:$0xff]
        %v4140 = vld [vmem:[%s4002 + $0x448] sm:$0xff]
        %v4141 = vld [vmem:[%s4002 + $0x450] sm:$0xff]
        %v4142 = vld [vmem:[%s4002 + $0x458] sm:$0xff]
        %v4143 = vld [vmem:[%s4002 + $0x460] sm:$0xff]
        %v4144 = vld [vmem:[%s4002 + $0x468] sm:$0xff]
        %v4145 = vld [vmem:[%s4002 + $0x470] sm:$0xff]
        %v4146 = vld [vmem:[%s4002 + $0x478] sm:$0xff]
        %v4147 = vld [vmem:[%s4002 + $0x480] sm:$0xff]
        %v4148 = vld [vmem:[%s4002 + $0x488] sm:$0xff]
        %v4149 = vld [vmem:[%s4002 + $0x490] sm:$0xff]
        %v4150 = vld [vmem:[%s4002 + $0x498] sm:$0xff]
        %v4151 = vld [vmem:[%s4002 + $0x4a0] sm:$0xff]
        %v4152 = vld [vmem:[%s4002 + $0x4a8] sm:$0xff]
        %v4153 = vld [vmem:[%s4002 + $0x4b0] sm:$0xff]
        %v4154 = vld [vmem:[%s4002 + $0x4b8] sm:$0xff]
        %v4155 = vld [vmem:[%s4002 + $0x4c0] sm:$0xff]
        %v4156 = vld [vmem:[%s4002 + $0x4c8] sm:$0xff]
        %v4157 = vld [vmem:[%s4002 + $0x4d0] sm:$0xff]
        %v4158 = vld [vmem:[%s4002 + $0x4d8] sm:$0xff]
        %v4159 = vld [vmem:[%s4002 + $0x4e0] sm:$0xff]
        %v4160 = vld [vmem:[%s4002 + $0x4e8] sm:$0xff]
        %v4161 = vld [vmem:[%s4002 + $0x4f0] sm:$0xff]
        %v4162 = vld [vmem:[%s4002 + $0x4f8] sm:$0xff]
        %v4163 = vld [vmem:[%s4002 + $0x500] sm:$0xff]
        %v4164 = vld [vmem:[%s4002 + $0x508] sm:$0xff]
        %v4165 = vld [vmem:[%s4002 + $0x510] sm:$0xff]
        %v4166 = vld [vmem:[%s4002 + $0x518] sm:$0xff]
        %v4167 = vld [vmem:[%s4002 + $0x520] sm:$0xff]
        %v4168 = vld [vmem:[%s4002 + $0x528] sm:$0xff]
        %v4169 = vld [vmem:[%s4002 + $0x530] sm:$0xff]
        %v4170 = vld [vmem:[%s4002 + $0x538] sm:$0xff]
        %v4171 = vld [vmem:[%s4002 + $0x540] sm:$0xff]
        %v4172 = vld [vmem:[%s4002 + $0x548] sm:$0xff]
        %v4173 = vld [vmem:[%s4002 + $0x550] sm:$0xff]
        %v4174 = vld [vmem:[%s4002 + $0x558] sm:$0xff]
        %v4175 = vld [vmem:[%s4002 + $0x560] sm:$0xff]
        %v4176 = vld [vmem:[%s4002 + $0x568] sm:$0xff]
        %v4177 = vld [vmem:[%s4002 + $0x570] sm:$0xff]
        %v4178 = vld [vmem:[%s4002 + $0x578] sm:$0xff]
        %v4179 = vld [vmem:[%s4002 + $0x580] sm:$0xff]
        %v4180 = vld [vmem:[%s4002 + $0x588] sm:$0xff]
        %v4181 = vld [vmem:[%s4002 + $0x590] sm:$0xff]
        %v4182 = vld [vmem:[%s4002 + $0x598] sm:$0xff]
        %v4183 = vld [vmem:[%s4002 + $0x5a0] sm:$0xff]
        %v4184 = vld [vmem:[%s4002 + $0x5a8] sm:$0xff]
        %v4185 = vld [vmem:[%s4002 + $0x5b0] sm:$0xff]
        %v4186 = vld [vmem:[%s4002 + $0x5b8] sm:$0xff]
        %v4187 = vld [vmem:[%s4002 + $0x5c0] sm:$0xff]
        %v4188 = vld [vmem:[%s4002 + $0x5c8] sm:$0xff]
        %v4189 = vld [vmem:[%s4002 + $0x5d0] sm:$0xff]
        %v4190 = vld [vmem:[%s4002 + $0x5d8] sm:$0xff]
        %v4191 = vld [vmem:[%s4002 + $0x5e0] sm:$0xff]
        %v4192 = vld [vmem:[%s4002 + $0x5e8] sm:$0xff]
        %v4193 = vld [vmem:[%s4002 + $0x5f0] sm:$0xff]
        %v4194 = vld [vmem:[%s4002 + $0x5f8] sm:$0xff]
        %v4195 = vld [vmem:[%s4002 + $0x600] sm:$0xff]
        %v4196 = vld [vmem:[%s4002 + $0x608] sm:$0xff]
        %v4197 = vld [vmem:[%s4002 + $0x610] sm:$0xff]
        %v4198 = vld [vmem:[%s4002 + $0x618] sm:$0xff]
        %v4199 = vld [vmem:[%s4002 + $0x620] sm:$0xff]
        %v4200 = vld [vmem:[%s4002 + $0x628] sm:$0xff]
        %v4201 = vld [vmem:[%s4002 + $0x630] sm:$0xff]
        %v4202 = vld [vmem:[%s4002 + $0x638] sm:$0xff]
        %v4203 = vld [vmem:[%s4002 + $0x640] sm:$0xff]
        %v4204 = vld [vmem:[%s4002 + $0x648] sm:$0xff]
        %v4205 = vld [vmem:[%s4002 + $0x650] sm:$0xff]
        %v4206 = vld [vmem:[%s4002 + $0x658] sm:$0xff]
        %v4207 = vld [vmem:[%s4002 + $0x660] sm:$0xff]
        %v4208 = vld [vmem:[%s4002 + $0x668] sm:$0xff]
        %v4209 = vld [vmem:[%s4002 + $0x670] sm:$0xff]
        %v4210 = vld [vmem:[%s4002 + $0x678] sm:$0xff]
        %v4211 = vld [vmem:[%s4002 + $0x680] sm:$0xff]
        %v4212 = vld [vmem:[%s4002 + $0x688] sm:$0xff]
        %v4213 = vld [vmem:[%s4002 + $0x690] sm:$0xff]
        %v4214 = vld [vmem:[%s4002 + $0x698] sm:$0xff]
        %v4215 = vld [vmem:[%s4002 + $0x6a0] sm:$0xff]
        %v4216 = vld [vmem:[%s4002 + $0x6a8] sm:$0xff]
        %v4217 = vld [vmem:[%s4002 + $0x6b0] sm:$0xff]
        %v4218 = vld [vmem:[%s4002 + $0x6b8] sm:$0xff]
        %v4219 = vld [vmem:[%s4002 + $0x6c0] sm:$0xff]
        %v4220 = vld [vmem:[%s4002 + $0x6c8] sm:$0xff]
        %v4221 = vld [vmem:[%s4002 + $0x6d0] sm:$0xff]
        %v4222 = vld [vmem:[%s4002 + $0x6d8] sm:$0xff]
        %v4223 = vld [vmem:[%s4002 + $0x6e0] sm:$0xff]
        %v4224 = vld [vmem:[%s4002 + $0x6e8] sm:$0xff]
        %v4225 = vld [vmem:[%s4002 + $0x6f0] sm:$0xff]
        %v4226 = vld [vmem:[%s4002 + $0x6f8] sm:$0xff]
        %v4227 = vld [vmem:[%s4002 + $0x700] sm:$0xff]
        %v4228 = vld [vmem:[%s4002 + $0x708] sm:$0xff]
        %v4229 = vld [vmem:[%s4002 + $0x710] sm:$0xff]
        %v4230 = vld [vmem:[%s4002 + $0x718] sm:$0xff]
        %v4231 = vld [vmem:[%s4002 + $0x720] sm:$0xff]
        %v4232 = vld [vmem:[%s4002 + $0x728] sm:$0xff]
        %v4233 = vld [vmem:[%s4002 + $0x730] sm:$0xff]
        %v4234 = vld [vmem:[%s4002 + $0x738] sm:$0xff]
        %v4235 = vld [vmem:[%s4002 + $0x740] sm:$0xff]
        %v4236 = vld [vmem:[%s4002 + $0x748] sm:$0xff]
        %v4237 = vld [vmem:[%s4002 + $0x750] sm:$0xff]
        %v4238 = vld [vmem:[%s4002 + $0x758] sm:$0xff]
        %v4239 = vld [vmem:[%s4002 + $0x760] sm:$0xff]
        %v4240 = vld [vmem:[%s4002 + $0x768] sm:$0xff]
        %v4241 = vld [vmem:[%s4002 + $0x770] sm:$0xff]
        %v4242 = vld [vmem:[%s4002 + $0x778] sm:$0xff]
        %v4243 = vld [vmem:[%s4002 + $0x780] sm:$0xff]
        %v4244 = vld [vmem:[%s4002 + $0x788] sm:$0xff]
        %v4245 = vld [vmem:[%s4002 + $0x790] sm:$0xff]
        %v4246 = vld [vmem:[%s4002 + $0x798] sm:$0xff]
        %v4247 = vld [vmem:[%s4002 + $0x7a0] sm:$0xff]
        %v4248 = vld [vmem:[%s4002 + $0x7a8] sm:$0xff]
        %v4249 = vld [vmem:[%s4002 + $0x7b0] sm:$0xff]
        %v4250 = vld [vmem:[%s4002 + $0x7b8] sm:$0xff]
        %v4251 = vld [vmem:[%s4002 + $0x7c0] sm:$0xff]
        %v4252 = vld [vmem:[%s4002 + $0x7c8] sm:$0xff]
        %v4253 = vld [vmem:[%s4002 + $0x7d0] sm:$0xff]
        %v4254 = vld [vmem:[%s4002 + $0x7d8] sm:$0xff]
        %v4255 = vld [vmem:[%s4002 + $0x7e0] sm:$0xff]
        %v4256 = vld [vmem:[%s4002 + $0x7e8] sm:$0xff]
        %v4257 = vld [vmem:[%s4002 + $0x7f0] sm:$0xff]
        %v4258 = vld [vmem:[%s4002 + $0x7f8] sm:$0xff]
        %v4259 = vld [vmem:[%s4002 + $0x800] sm:$0xff]
        %v4260 = vld [vmem:[%s4002 + $0x808] sm:$0xff]
        %v4261 = vld [vmem:[%s4002 + $0x810] sm:$0xff]
        %v4262 = vld [vmem:[%s4002 + $0x818] sm:$0xff]
        %v4263 = vld [vmem:[%s4002 + $0x820] sm:$0xff]
        %v4264 = vld [vmem:[%s4002 + $0x828] sm:$0xff]
        %v4265 = vld [vmem:[%s4002 + $0x830] sm:$0xff]
        %v4266 = vld [vmem:[%s4002 + $0x838] sm:$0xff]
        %v4267 = vld [vmem:[%s4002 + $0x840] sm:$0xff]
        %v4268 = vld [vmem:[%s4002 + $0x848] sm:$0xff]
        %v4269 = vld [vmem:[%s4002 + $0x850] sm:$0xff]
        %v4270 = vld [vmem:[%s4002 + $0x858] sm:$0xff]
        %v4271 = vld [vmem:[%s4002 + $0x860] sm:$0xff]
        %v4272 = vld [vmem:[%s4002 + $0x868] sm:$0xff]
        %v4273 = vld [vmem:[%s4002 + $0x870] sm:$0xff]
        %v4274 = vld [vmem:[%s4002 + $0x878] sm:$0xff]
        %v4275 = vld [vmem:[%s4002 + $0x880] sm:$0xff]
        %v4276 = vld [vmem:[%s4002 + $0x888] sm:$0xff]
        %v4277 = vld [vmem:[%s4002 + $0x890] sm:$0xff]
        %v4278 = vld [vmem:[%s4002 + $0x898] sm:$0xff]
        %v4279 = vld [vmem:[%s4002 + $0x8a0] sm:$0xff]
        %v4280 = vld [vmem:[%s4002 + $0x8a8] sm:$0xff]
        %v4281 = vld [vmem:[%s4002 + $0x8b0] sm:$0xff]
        %v4282 = vld [vmem:[%s4002 + $0x8b8] sm:$0xff]
        %v4283 = vld [vmem:[%s4002 + $0x8c0] sm:$0xff]
        %v4284 = vld [vmem:[%s4002 + $0x8c8] sm:$0xff]
        %v4285 = vld [vmem:[%s4002 + $0x8d0] sm:$0xff]
        %v4286 = vld [vmem:[%s4002 + $0x8d8] sm:$0xff]
        %v4287 = vld [vmem:[%s4002 + $0x8e0] sm:$0xff]
        %v4288 = vld [vmem:[%s4002 + $0x8e8] sm:$0xff]
        %v4289 = vld [vmem:[%s4002 + $0x8f0] sm:$0xff]
        %v4290 = vld [vmem:[%s4002 + $0x8f8] sm:$0xff]
        %s4291 = smul.u32 %s47, 12
        %s4292 = scalar_lea.vmem [#allocation21], %s4291
        %v4293 = vld [vmem:[%s4292] sm:$0xff]
        %v4294 = vld [vmem:[%s4292 + $0x8] sm:$0xf]
        %v4297 = vperm.slane %v4293, 0
        %v4298 = vperm.slane %v4293, 1
        %v4299 = vperm.slane %v4293, 2
        %v4300 = vperm.slane %v4293, 3
        %v4301 = vperm.slane %v4293, 4
        %v4302 = vperm.slane %v4293, 5
        %v4303 = vperm.slane %v4293, 6
        %v4304 = vperm.slane %v4293, 7
        %v4305 = vperm.slane %v4294, 0
        %v4306 = vperm.slane %v4294, 1
        %v4307 = vperm.slane %v4294, 2
        %v4308 = vperm.slane %v4294, 3
        %v4325 = vunpack.c.l.b16 %v3996
        %v4326 = vunpack.c.h.b16 %v3996
        %v4327 = vunpack.c.l.b16 %v3997
        %v4328 = vunpack.c.l.b16 %v3998
        %v4329 = vunpack.c.h.b16 %v3998
        %v4330 = vunpack.c.l.b16 %v3999
        %v4331 = vpack.c.b16 %v4328, %v4325
        %v4332 = vpack.c.b16 %v4329, %v4326
        %v4333 = vpack.c.b16 %v4330, %v4327
        %v4625 = vunpack.c.l.b16 %v4003
        %v4626 = vunpack.c.h.b16 %v4003
        %v4627 = vunpack.c.l.b16 %v4004
        %v4628 = vunpack.c.h.b16 %v4004
        %v4629 = vunpack.c.l.b16 %v4005
        %v4630 = vunpack.c.h.b16 %v4005
        %v4631 = vunpack.c.l.b16 %v4006
        %v4632 = vunpack.c.h.b16 %v4006
        %v4633 = vunpack.c.l.b16 %v4007
        %v4634 = vunpack.c.h.b16 %v4007
        %v4635 = vunpack.c.l.b16 %v4008
        %v4636 = vunpack.c.h.b16 %v4008
        %v4637 = vunpack.c.l.b16 %v4009
        %v4638 = vunpack.c.h.b16 %v4009
        %v4639 = vunpack.c.l.b16 %v4010
        %v4640 = vunpack.c.h.b16 %v4010
        %v4641 = vunpack.c.l.b16 %v4011
        %v4642 = vunpack.c.h.b16 %v4011
        %v4643 = vunpack.c.l.b16 %v4012
        %v4644 = vunpack.c.h.b16 %v4012
        %v4645 = vunpack.c.l.b16 %v4013
        %v4646 = vunpack.c.h.b16 %v4013
        %v4647 = vunpack.c.l.b16 %v4014
        %v4648 = vunpack.c.h.b16 %v4014
        %v4649 = vunpack.c.l.b16 %v4015
        %v4650 = vunpack.c.h.b16 %v4015
        %v4651 = vunpack.c.l.b16 %v4016
        %v4652 = vunpack.c.h.b16 %v4016
        %v4653 = vunpack.c.l.b16 %v4017
        %v4654 = vunpack.c.h.b16 %v4017
        %v4655 = vunpack.c.l.b16 %v4018
        %v4656 = vunpack.c.h.b16 %v4018
        %v4657 = vunpack.c.l.b16 %v4019
        %v4658 = vunpack.c.h.b16 %v4019
        %v4659 = vunpack.c.l.b16 %v4020
        %v4660 = vunpack.c.h.b16 %v4020
        %v4661 = vunpack.c.l.b16 %v4021
        %v4662 = vunpack.c.h.b16 %v4021
        %v4663 = vunpack.c.l.b16 %v4022
        %v4664 = vunpack.c.h.b16 %v4022
        %v4665 = vunpack.c.l.b16 %v4023
        %v4666 = vunpack.c.h.b16 %v4023
        %v4667 = vunpack.c.l.b16 %v4024
        %v4668 = vunpack.c.h.b16 %v4024
        %v4669 = vunpack.c.l.b16 %v4025
        %v4670 = vunpack.c.h.b16 %v4025
        %v4671 = vunpack.c.l.b16 %v4026
        %v4672 = vunpack.c.h.b16 %v4026
        %v4673 = vunpack.c.l.b16 %v4027
        %v4674 = vunpack.c.h.b16 %v4027
        %v4675 = vunpack.c.l.b16 %v4028
        %v4676 = vunpack.c.h.b16 %v4028
        %v4677 = vunpack.c.l.b16 %v4029
        %v4678 = vunpack.c.h.b16 %v4029
        %v4679 = vunpack.c.l.b16 %v4030
        %v4680 = vunpack.c.h.b16 %v4030
        %v4681 = vunpack.c.l.b16 %v4031
        %v4682 = vunpack.c.h.b16 %v4031
        %v4683 = vunpack.c.l.b16 %v4032
        %v4684 = vunpack.c.h.b16 %v4032
        %v4685 = vunpack.c.l.b16 %v4033
        %v4686 = vunpack.c.h.b16 %v4033
        %v4687 = vunpack.c.l.b16 %v4034
        %v4688 = vunpack.c.h.b16 %v4034
        %v4689 = vunpack.c.l.b16 %v4035
        %v4690 = vunpack.c.h.b16 %v4035
        %v4691 = vunpack.c.l.b16 %v4036
        %v4692 = vunpack.c.h.b16 %v4036
        %v4693 = vunpack.c.l.b16 %v4037
        %v4694 = vunpack.c.h.b16 %v4037
        %v4695 = vunpack.c.l.b16 %v4038
        %v4696 = vunpack.c.h.b16 %v4038
        %v4697 = vunpack.c.l.b16 %v4039
        %v4698 = vunpack.c.h.b16 %v4039
        %v4699 = vunpack.c.l.b16 %v4040
        %v4700 = vunpack.c.h.b16 %v4040
        %v4701 = vunpack.c.l.b16 %v4041
        %v4702 = vunpack.c.h.b16 %v4041
        %v4703 = vunpack.c.l.b16 %v4042
        %v4704 = vunpack.c.h.b16 %v4042
        %v4705 = vunpack.c.l.b16 %v4043
        %v4706 = vunpack.c.h.b16 %v4043
        %v4707 = vunpack.c.l.b16 %v4044
        %v4708 = vunpack.c.h.b16 %v4044
        %v4709 = vunpack.c.l.b16 %v4045
        %v4710 = vunpack.c.h.b16 %v4045
        %v4711 = vunpack.c.l.b16 %v4046
        %v4712 = vunpack.c.h.b16 %v4046
        %v4713 = vunpack.c.l.b16 %v4047
        %v4714 = vunpack.c.h.b16 %v4047
        %v4715 = vunpack.c.l.b16 %v4048
        %v4716 = vunpack.c.h.b16 %v4048
        %v4717 = vunpack.c.l.b16 %v4049
        %v4718 = vunpack.c.h.b16 %v4049
        %v4719 = vunpack.c.l.b16 %v4050
        %v4720 = vunpack.c.h.b16 %v4050
        %v4721 = vunpack.c.l.b16 %v4051
        %v4722 = vunpack.c.h.b16 %v4051
        %v4723 = vunpack.c.l.b16 %v4052
        %v4724 = vunpack.c.h.b16 %v4052
        %v4725 = vunpack.c.l.b16 %v4053
        %v4726 = vunpack.c.h.b16 %v4053
        %v4727 = vunpack.c.l.b16 %v4054
        %v4728 = vunpack.c.h.b16 %v4054
        %v4729 = vunpack.c.l.b16 %v4055
        %v4730 = vunpack.c.h.b16 %v4055
        %v4731 = vunpack.c.l.b16 %v4056
        %v4732 = vunpack.c.h.b16 %v4056
        %v4733 = vunpack.c.l.b16 %v4057
        %v4734 = vunpack.c.h.b16 %v4057
        %v4735 = vunpack.c.l.b16 %v4058
        %v4736 = vunpack.c.h.b16 %v4058
        %v4737 = vunpack.c.l.b16 %v4059
        %v4738 = vunpack.c.h.b16 %v4059
        %v4739 = vunpack.c.l.b16 %v4060
        %v4740 = vunpack.c.h.b16 %v4060
        %v4741 = vunpack.c.l.b16 %v4061
        %v4742 = vunpack.c.h.b16 %v4061
        %v4743 = vunpack.c.l.b16 %v4062
        %v4744 = vunpack.c.h.b16 %v4062
        %v4745 = vunpack.c.l.b16 %v4063
        %v4746 = vunpack.c.h.b16 %v4063
        %v4747 = vunpack.c.l.b16 %v4064
        %v4748 = vunpack.c.h.b16 %v4064
        %v4749 = vunpack.c.l.b16 %v4065
        %v4750 = vunpack.c.h.b16 %v4065
        %v4751 = vunpack.c.l.b16 %v4066
        %v4752 = vunpack.c.h.b16 %v4066
        %v4753 = vunpack.c.l.b16 %v4067
        %v4754 = vunpack.c.h.b16 %v4067
        %v4755 = vunpack.c.l.b16 %v4068
        %v4756 = vunpack.c.h.b16 %v4068
        %v4757 = vunpack.c.l.b16 %v4069
        %v4758 = vunpack.c.h.b16 %v4069
        %v4759 = vunpack.c.l.b16 %v4070
        %v4760 = vunpack.c.h.b16 %v4070
        %v4761 = vunpack.c.l.b16 %v4071
        %v4762 = vunpack.c.h.b16 %v4071
        %v4763 = vunpack.c.l.b16 %v4072
        %v4764 = vunpack.c.h.b16 %v4072
        %v4765 = vunpack.c.l.b16 %v4073
        %v4766 = vunpack.c.h.b16 %v4073
        %v4767 = vunpack.c.l.b16 %v4074
        %v4768 = vunpack.c.h.b16 %v4074
        %v4769 = vunpack.c.l.b16 %v4075
        %v4770 = vunpack.c.h.b16 %v4075
        %v4771 = vunpack.c.l.b16 %v4076
        %v4772 = vunpack.c.h.b16 %v4076
        %v4773 = vunpack.c.l.b16 %v4077
        %v4774 = vunpack.c.h.b16 %v4077
        %v4775 = vunpack.c.l.b16 %v4078
        %v4776 = vunpack.c.h.b16 %v4078
        %v4777 = vunpack.c.l.b16 %v4079
        %v4778 = vunpack.c.h.b16 %v4079
        %v4779 = vunpack.c.l.b16 %v4080
        %v4780 = vunpack.c.h.b16 %v4080
        %v4781 = vunpack.c.l.b16 %v4081
        %v4782 = vunpack.c.h.b16 %v4081
        %v4783 = vunpack.c.l.b16 %v4082
        %v4784 = vunpack.c.h.b16 %v4082
        %v4785 = vunpack.c.l.b16 %v4083
        %v4786 = vunpack.c.h.b16 %v4083
        %v4787 = vunpack.c.l.b16 %v4084
        %v4788 = vunpack.c.h.b16 %v4084
        %v4789 = vunpack.c.l.b16 %v4085
        %v4790 = vunpack.c.h.b16 %v4085
        %v4791 = vunpack.c.l.b16 %v4086
        %v4792 = vunpack.c.h.b16 %v4086
        %v4793 = vunpack.c.l.b16 %v4087
        %v4794 = vunpack.c.h.b16 %v4087
        %v4795 = vunpack.c.l.b16 %v4088
        %v4796 = vunpack.c.h.b16 %v4088
        %v4797 = vunpack.c.l.b16 %v4089
        %v4798 = vunpack.c.h.b16 %v4089
        %v4799 = vunpack.c.l.b16 %v4090
        %v4800 = vunpack.c.h.b16 %v4090
        %v4801 = vunpack.c.l.b16 %v4091
        %v4802 = vunpack.c.h.b16 %v4091
        %v4803 = vunpack.c.l.b16 %v4092
        %v4804 = vunpack.c.h.b16 %v4092
        %v4805 = vunpack.c.l.b16 %v4093
        %v4806 = vunpack.c.h.b16 %v4093
        %v4807 = vunpack.c.l.b16 %v4094
        %v4808 = vunpack.c.h.b16 %v4094
        %v4809 = vunpack.c.l.b16 %v4095
        %v4810 = vunpack.c.h.b16 %v4095
        %v4811 = vunpack.c.l.b16 %v4096
        %v4812 = vunpack.c.h.b16 %v4096
        %v4813 = vunpack.c.l.b16 %v4097
        %v4814 = vunpack.c.h.b16 %v4097
        %v4815 = vunpack.c.l.b16 %v4098
        %v4816 = vunpack.c.h.b16 %v4098
        %v4817 = vunpack.c.l.b16 %v4099
        %v4818 = vunpack.c.h.b16 %v4099
        %v4819 = vunpack.c.l.b16 %v4100
        %v4820 = vunpack.c.h.b16 %v4100
        %v4821 = vunpack.c.l.b16 %v4101
        %v4822 = vunpack.c.h.b16 %v4101
        %v4823 = vunpack.c.l.b16 %v4102
        %v4824 = vunpack.c.h.b16 %v4102
        %v4825 = vunpack.c.l.b16 %v4103
        %v4826 = vunpack.c.h.b16 %v4103
        %v4827 = vunpack.c.l.b16 %v4104
        %v4828 = vunpack.c.h.b16 %v4104
        %v4829 = vunpack.c.l.b16 %v4105
        %v4830 = vunpack.c.h.b16 %v4105
        %v4831 = vunpack.c.l.b16 %v4106
        %v4832 = vunpack.c.h.b16 %v4106
        %v4833 = vunpack.c.l.b16 %v4107
        %v4834 = vunpack.c.h.b16 %v4107
        %v4835 = vunpack.c.l.b16 %v4108
        %v4836 = vunpack.c.h.b16 %v4108
        %v4837 = vunpack.c.l.b16 %v4109
        %v4838 = vunpack.c.h.b16 %v4109
        %v4839 = vunpack.c.l.b16 %v4110
        %v4840 = vunpack.c.h.b16 %v4110
        %v4841 = vunpack.c.l.b16 %v4111
        %v4842 = vunpack.c.h.b16 %v4111
        %v4843 = vunpack.c.l.b16 %v4112
        %v4844 = vunpack.c.h.b16 %v4112
        %v4845 = vunpack.c.l.b16 %v4113
        %v4846 = vunpack.c.h.b16 %v4113
        %v4847 = vunpack.c.l.b16 %v4114
        %v4848 = vunpack.c.h.b16 %v4114
        %v4849 = vunpack.c.l.b16 %v4115
        %v4850 = vunpack.c.h.b16 %v4115
        %v4851 = vunpack.c.l.b16 %v4116
        %v4852 = vunpack.c.h.b16 %v4116
        %v4853 = vunpack.c.l.b16 %v4117
        %v4854 = vunpack.c.h.b16 %v4117
        %v4855 = vunpack.c.l.b16 %v4118
        %v4856 = vunpack.c.h.b16 %v4118
        %v4857 = vunpack.c.l.b16 %v4119
        %v4858 = vunpack.c.h.b16 %v4119
        %v4859 = vunpack.c.l.b16 %v4120
        %v4860 = vunpack.c.h.b16 %v4120
        %v4861 = vunpack.c.l.b16 %v4121
        %v4862 = vunpack.c.h.b16 %v4121
        %v4863 = vunpack.c.l.b16 %v4122
        %v4864 = vunpack.c.h.b16 %v4122
        %v4865 = vunpack.c.l.b16 %v4123
        %v4866 = vunpack.c.h.b16 %v4123
        %v4867 = vunpack.c.l.b16 %v4124
        %v4868 = vunpack.c.h.b16 %v4124
        %v4869 = vunpack.c.l.b16 %v4125
        %v4870 = vunpack.c.h.b16 %v4125
        %v4871 = vunpack.c.l.b16 %v4126
        %v4872 = vunpack.c.h.b16 %v4126
        %v4873 = vunpack.c.l.b16 %v4127
        %v4874 = vunpack.c.h.b16 %v4127
        %v4875 = vunpack.c.l.b16 %v4128
        %v4876 = vunpack.c.h.b16 %v4128
        %v4877 = vunpack.c.l.b16 %v4129
        %v4878 = vunpack.c.h.b16 %v4129
        %v4879 = vunpack.c.l.b16 %v4130
        %v4880 = vunpack.c.h.b16 %v4130
        %v4881 = vunpack.c.l.b16 %v4131
        %v4882 = vunpack.c.h.b16 %v4131
        %v4883 = vunpack.c.l.b16 %v4132
        %v4884 = vunpack.c.h.b16 %v4132
        %v4885 = vunpack.c.l.b16 %v4133
        %v4886 = vunpack.c.h.b16 %v4133
        %v4887 = vunpack.c.l.b16 %v4134
        %v4888 = vunpack.c.h.b16 %v4134
        %v4889 = vunpack.c.l.b16 %v4135
        %v4890 = vunpack.c.h.b16 %v4135
        %v4891 = vunpack.c.l.b16 %v4136
        %v4892 = vunpack.c.h.b16 %v4136
        %v4893 = vunpack.c.l.b16 %v4137
        %v4894 = vunpack.c.h.b16 %v4137
        %v4895 = vunpack.c.l.b16 %v4138
        %v4896 = vunpack.c.h.b16 %v4138
        %v4897 = vunpack.c.l.b16 %v4139
        %v4898 = vunpack.c.h.b16 %v4139
        %v4899 = vunpack.c.l.b16 %v4140
        %v4900 = vunpack.c.h.b16 %v4140
        %v4901 = vunpack.c.l.b16 %v4141
        %v4902 = vunpack.c.h.b16 %v4141
        %v4903 = vunpack.c.l.b16 %v4142
        %v4904 = vunpack.c.h.b16 %v4142
        %v4905 = vunpack.c.l.b16 %v4143
        %v4906 = vunpack.c.h.b16 %v4143
        %v4907 = vunpack.c.l.b16 %v4144
        %v4908 = vunpack.c.h.b16 %v4144
        %v4909 = vunpack.c.l.b16 %v4145
        %v4910 = vunpack.c.h.b16 %v4145
        %v4911 = vunpack.c.l.b16 %v4146
        %v4912 = vunpack.c.h.b16 %v4146
        %v4913 = vunpack.c.l.b16 %v4147
        %v4914 = vunpack.c.h.b16 %v4147
        %v4915 = vunpack.c.l.b16 %v4148
        %v4916 = vunpack.c.h.b16 %v4148
        %v4917 = vunpack.c.l.b16 %v4149
        %v4918 = vunpack.c.h.b16 %v4149
        %v4919 = vunpack.c.l.b16 %v4150
        %v4920 = vunpack.c.h.b16 %v4150
        %v4921 = vunpack.c.l.b16 %v4151
        %v4922 = vunpack.c.h.b16 %v4151
        %v4923 = vunpack.c.l.b16 %v4152
        %v4924 = vunpack.c.h.b16 %v4152
        %v4925 = vunpack.c.l.b16 %v4153
        %v4926 = vunpack.c.h.b16 %v4153
        %v4927 = vunpack.c.l.b16 %v4154
        %v4928 = vunpack.c.h.b16 %v4154
        %v4929 = vunpack.c.l.b16 %v4155
        %v4930 = vunpack.c.h.b16 %v4155
        %v4931 = vunpack.c.l.b16 %v4156
        %v4932 = vunpack.c.h.b16 %v4156
        %v4933 = vunpack.c.l.b16 %v4157
        %v4934 = vunpack.c.h.b16 %v4157
        %v4935 = vunpack.c.l.b16 %v4158
        %v4936 = vunpack.c.h.b16 %v4158
        %v4937 = vunpack.c.l.b16 %v4159
        %v4938 = vunpack.c.h.b16 %v4159
        %v4939 = vunpack.c.l.b16 %v4160
        %v4940 = vunpack.c.h.b16 %v4160
        %v4941 = vunpack.c.l.b16 %v4161
        %v4942 = vunpack.c.h.b16 %v4161
        %v4943 = vunpack.c.l.b16 %v4162
        %v4944 = vunpack.c.h.b16 %v4162
        %v4945 = vunpack.c.l.b16 %v4163
        %v4946 = vunpack.c.h.b16 %v4163
        %v4947 = vunpack.c.l.b16 %v4164
        %v4948 = vunpack.c.h.b16 %v4164
        %v4949 = vunpack.c.l.b16 %v4165
        %v4950 = vunpack.c.h.b16 %v4165
        %v4951 = vunpack.c.l.b16 %v4166
        %v4952 = vunpack.c.h.b16 %v4166
        %v4953 = vunpack.c.l.b16 %v4167
        %v4954 = vunpack.c.h.b16 %v4167
        %v4955 = vunpack.c.l.b16 %v4168
        %v4956 = vunpack.c.h.b16 %v4168
        %v4957 = vunpack.c.l.b16 %v4169
        %v4958 = vunpack.c.h.b16 %v4169
        %v4959 = vunpack.c.l.b16 %v4170
        %v4960 = vunpack.c.h.b16 %v4170
        %v4961 = vunpack.c.l.b16 %v4171
        %v4962 = vunpack.c.h.b16 %v4171
        %v4963 = vunpack.c.l.b16 %v4172
        %v4964 = vunpack.c.h.b16 %v4172
        %v4965 = vunpack.c.l.b16 %v4173
        %v4966 = vunpack.c.h.b16 %v4173
        %v4967 = vunpack.c.l.b16 %v4174
        %v4968 = vunpack.c.h.b16 %v4174
        %v4969 = vunpack.c.l.b16 %v4175
        %v4970 = vunpack.c.h.b16 %v4175
        %v4971 = vunpack.c.l.b16 %v4176
        %v4972 = vunpack.c.h.b16 %v4176
        %v4973 = vunpack.c.l.b16 %v4177
        %v4974 = vunpack.c.h.b16 %v4177
        %v4975 = vunpack.c.l.b16 %v4178
        %v4976 = vunpack.c.h.b16 %v4178
        %v4977 = vunpack.c.l.b16 %v4179
        %v4978 = vunpack.c.h.b16 %v4179
        %v4979 = vunpack.c.l.b16 %v4180
        %v4980 = vunpack.c.h.b16 %v4180
        %v4981 = vunpack.c.l.b16 %v4181
        %v4982 = vunpack.c.h.b16 %v4181
        %v4983 = vunpack.c.l.b16 %v4182
        %v4984 = vunpack.c.h.b16 %v4182
        %v4985 = vunpack.c.l.b16 %v4183
        %v4986 = vunpack.c.h.b16 %v4183
        %v4987 = vunpack.c.l.b16 %v4184
        %v4988 = vunpack.c.h.b16 %v4184
        %v4989 = vunpack.c.l.b16 %v4185
        %v4990 = vunpack.c.h.b16 %v4185
        %v4991 = vunpack.c.l.b16 %v4186
        %v4992 = vunpack.c.h.b16 %v4186
        %v4993 = vunpack.c.l.b16 %v4187
        %v4994 = vunpack.c.h.b16 %v4187
        %v4995 = vunpack.c.l.b16 %v4188
        %v4996 = vunpack.c.h.b16 %v4188
        %v4997 = vunpack.c.l.b16 %v4189
        %v4998 = vunpack.c.h.b16 %v4189
        %v4999 = vunpack.c.l.b16 %v4190
        %v5000 = vunpack.c.h.b16 %v4190
        %v5001 = vunpack.c.l.b16 %v4191
        %v5002 = vunpack.c.h.b16 %v4191
        %v5003 = vunpack.c.l.b16 %v4192
        %v5004 = vunpack.c.h.b16 %v4192
        %v5005 = vunpack.c.l.b16 %v4193
        %v5006 = vunpack.c.h.b16 %v4193
        %v5007 = vunpack.c.l.b16 %v4194
        %v5008 = vunpack.c.h.b16 %v4194
        %v5009 = vunpack.c.l.b16 %v4195
        %v5010 = vunpack.c.h.b16 %v4195
        %v5011 = vunpack.c.l.b16 %v4196
        %v5012 = vunpack.c.h.b16 %v4196
        %v5013 = vunpack.c.l.b16 %v4197
        %v5014 = vunpack.c.h.b16 %v4197
        %v5015 = vunpack.c.l.b16 %v4198
        %v5016 = vunpack.c.h.b16 %v4198
        %v5017 = vunpack.c.l.b16 %v4199
        %v5018 = vunpack.c.h.b16 %v4199
        %v5019 = vunpack.c.l.b16 %v4200
        %v5020 = vunpack.c.h.b16 %v4200
        %v5021 = vunpack.c.l.b16 %v4201
        %v5022 = vunpack.c.h.b16 %v4201
        %v5023 = vunpack.c.l.b16 %v4202
        %v5024 = vunpack.c.h.b16 %v4202
        %v5025 = vunpack.c.l.b16 %v4203
        %v5026 = vunpack.c.h.b16 %v4203
        %v5027 = vunpack.c.l.b16 %v4204
        %v5028 = vunpack.c.h.b16 %v4204
        %v5029 = vunpack.c.l.b16 %v4205
        %v5030 = vunpack.c.h.b16 %v4205
        %v5031 = vunpack.c.l.b16 %v4206
        %v5032 = vunpack.c.h.b16 %v4206
        %v5033 = vunpack.c.l.b16 %v4207
        %v5034 = vunpack.c.h.b16 %v4207
        %v5035 = vunpack.c.l.b16 %v4208
        %v5036 = vunpack.c.h.b16 %v4208
        %v5037 = vunpack.c.l.b16 %v4209
        %v5038 = vunpack.c.h.b16 %v4209
        %v5039 = vunpack.c.l.b16 %v4210
        %v5040 = vunpack.c.h.b16 %v4210
        %v5041 = vunpack.c.l.b16 %v4211
        %v5042 = vunpack.c.h.b16 %v4211
        %v5043 = vunpack.c.l.b16 %v4212
        %v5044 = vunpack.c.h.b16 %v4212
        %v5045 = vunpack.c.l.b16 %v4213
        %v5046 = vunpack.c.h.b16 %v4213
        %v5047 = vunpack.c.l.b16 %v4214
        %v5048 = vunpack.c.h.b16 %v4214
        %v5049 = vunpack.c.l.b16 %v4215
        %v5050 = vunpack.c.h.b16 %v4215
        %v5051 = vunpack.c.l.b16 %v4216
        %v5052 = vunpack.c.h.b16 %v4216
        %v5053 = vunpack.c.l.b16 %v4217
        %v5054 = vunpack.c.h.b16 %v4217
        %v5055 = vunpack.c.l.b16 %v4218
        %v5056 = vunpack.c.h.b16 %v4218
        %v5057 = vunpack.c.l.b16 %v4219
        %v5058 = vunpack.c.h.b16 %v4219
        %v5059 = vunpack.c.l.b16 %v4220
        %v5060 = vunpack.c.h.b16 %v4220
        %v5061 = vunpack.c.l.b16 %v4221
        %v5062 = vunpack.c.h.b16 %v4221
        %v5063 = vunpack.c.l.b16 %v4222
        %v5064 = vunpack.c.h.b16 %v4222
        %v5065 = vunpack.c.l.b16 %v4223
        %v5066 = vunpack.c.h.b16 %v4223
        %v5067 = vunpack.c.l.b16 %v4224
        %v5068 = vunpack.c.h.b16 %v4224
        %v5069 = vunpack.c.l.b16 %v4225
        %v5070 = vunpack.c.h.b16 %v4225
        %v5071 = vunpack.c.l.b16 %v4226
        %v5072 = vunpack.c.h.b16 %v4226
        %v5073 = vunpack.c.l.b16 %v4227
        %v5074 = vunpack.c.h.b16 %v4227
        %v5075 = vunpack.c.l.b16 %v4228
        %v5076 = vunpack.c.h.b16 %v4228
        %v5077 = vunpack.c.l.b16 %v4229
        %v5078 = vunpack.c.h.b16 %v4229
        %v5079 = vunpack.c.l.b16 %v4230
        %v5080 = vunpack.c.h.b16 %v4230
        %v5081 = vunpack.c.l.b16 %v4231
        %v5082 = vunpack.c.h.b16 %v4231
        %v5083 = vunpack.c.l.b16 %v4232
        %v5084 = vunpack.c.h.b16 %v4232
        %v5085 = vunpack.c.l.b16 %v4233
        %v5086 = vunpack.c.h.b16 %v4233
        %v5087 = vunpack.c.l.b16 %v4234
        %v5088 = vunpack.c.h.b16 %v4234
        %v5089 = vunpack.c.l.b16 %v4235
        %v5090 = vunpack.c.h.b16 %v4235
        %v5091 = vunpack.c.l.b16 %v4236
        %v5092 = vunpack.c.h.b16 %v4236
        %v5093 = vunpack.c.l.b16 %v4237
        %v5094 = vunpack.c.h.b16 %v4237
        %v5095 = vunpack.c.l.b16 %v4238
        %v5096 = vunpack.c.h.b16 %v4238
        %v5097 = vunpack.c.l.b16 %v4239
        %v5098 = vunpack.c.h.b16 %v4239
        %v5099 = vunpack.c.l.b16 %v4240
        %v5100 = vunpack.c.h.b16 %v4240
        %v5101 = vunpack.c.l.b16 %v4241
        %v5102 = vunpack.c.h.b16 %v4241
        %v5103 = vunpack.c.l.b16 %v4242
        %v5104 = vunpack.c.h.b16 %v4242
        %v5105 = vunpack.c.l.b16 %v4243
        %v5106 = vunpack.c.h.b16 %v4243
        %v5107 = vunpack.c.l.b16 %v4244
        %v5108 = vunpack.c.h.b16 %v4244
        %v5109 = vunpack.c.l.b16 %v4245
        %v5110 = vunpack.c.h.b16 %v4245
        %v5111 = vunpack.c.l.b16 %v4246
        %v5112 = vunpack.c.h.b16 %v4246
        %v5113 = vunpack.c.l.b16 %v4247
        %v5114 = vunpack.c.h.b16 %v4247
        %v5115 = vunpack.c.l.b16 %v4248
        %v5116 = vunpack.c.h.b16 %v4248
        %v5117 = vunpack.c.l.b16 %v4249
        %v5118 = vunpack.c.h.b16 %v4249
        %v5119 = vunpack.c.l.b16 %v4250
        %v5120 = vunpack.c.h.b16 %v4250
        %v5121 = vunpack.c.l.b16 %v4251
        %v5122 = vunpack.c.h.b16 %v4251
        %v5123 = vunpack.c.l.b16 %v4252
        %v5124 = vunpack.c.h.b16 %v4252
        %v5125 = vunpack.c.l.b16 %v4253
        %v5126 = vunpack.c.h.b16 %v4253
        %v5127 = vunpack.c.l.b16 %v4254
        %v5128 = vunpack.c.h.b16 %v4254
        %v5129 = vunpack.c.l.b16 %v4255
        %v5130 = vunpack.c.h.b16 %v4255
        %v5131 = vunpack.c.l.b16 %v4256
        %v5132 = vunpack.c.h.b16 %v4256
        %v5133 = vunpack.c.l.b16 %v4257
        %v5134 = vunpack.c.h.b16 %v4257
        %v5135 = vunpack.c.l.b16 %v4258
        %v5136 = vunpack.c.h.b16 %v4258
        %v5137 = vunpack.c.l.b16 %v4259
        %v5138 = vunpack.c.h.b16 %v4259
        %v5139 = vunpack.c.l.b16 %v4260
        %v5140 = vunpack.c.h.b16 %v4260
        %v5141 = vunpack.c.l.b16 %v4261
        %v5142 = vunpack.c.h.b16 %v4261
        %v5143 = vunpack.c.l.b16 %v4262
        %v5144 = vunpack.c.h.b16 %v4262
        %v5145 = vunpack.c.l.b16 %v4263
        %v5146 = vunpack.c.h.b16 %v4263
        %v5147 = vunpack.c.l.b16 %v4264
        %v5148 = vunpack.c.h.b16 %v4264
        %v5149 = vunpack.c.l.b16 %v4265
        %v5150 = vunpack.c.h.b16 %v4265
        %v5151 = vunpack.c.l.b16 %v4266
        %v5152 = vunpack.c.h.b16 %v4266
        %v5153 = vunpack.c.l.b16 %v4267
        %v5154 = vunpack.c.h.b16 %v4267
        %v5155 = vunpack.c.l.b16 %v4268
        %v5156 = vunpack.c.h.b16 %v4268
        %v5157 = vunpack.c.l.b16 %v4269
        %v5158 = vunpack.c.h.b16 %v4269
        %v5159 = vunpack.c.l.b16 %v4270
        %v5160 = vunpack.c.h.b16 %v4270
        %v5161 = vunpack.c.l.b16 %v4271
        %v5162 = vunpack.c.h.b16 %v4271
        %v5163 = vunpack.c.l.b16 %v4272
        %v5164 = vunpack.c.h.b16 %v4272
        %v5165 = vunpack.c.l.b16 %v4273
        %v5166 = vunpack.c.h.b16 %v4273
        %v5167 = vunpack.c.l.b16 %v4274
        %v5168 = vunpack.c.h.b16 %v4274
        %v5169 = vunpack.c.l.b16 %v4275
        %v5170 = vunpack.c.h.b16 %v4275
        %v5171 = vunpack.c.l.b16 %v4276
        %v5172 = vunpack.c.h.b16 %v4276
        %v5173 = vunpack.c.l.b16 %v4277
        %v5174 = vunpack.c.h.b16 %v4277
        %v5175 = vunpack.c.l.b16 %v4278
        %v5176 = vunpack.c.h.b16 %v4278
        %v5177 = vunpack.c.l.b16 %v4279
        %v5178 = vunpack.c.h.b16 %v4279
        %v5179 = vunpack.c.l.b16 %v4280
        %v5180 = vunpack.c.h.b16 %v4280
        %v5181 = vunpack.c.l.b16 %v4281
        %v5182 = vunpack.c.h.b16 %v4281
        %v5183 = vunpack.c.l.b16 %v4282
        %v5184 = vunpack.c.h.b16 %v4282
        %v5185 = vunpack.c.l.b16 %v4283
        %v5186 = vunpack.c.h.b16 %v4283
        %v5187 = vunpack.c.l.b16 %v4284
        %v5188 = vunpack.c.h.b16 %v4284
        %v5189 = vunpack.c.l.b16 %v4285
        %v5190 = vunpack.c.h.b16 %v4285
        %v5191 = vunpack.c.l.b16 %v4286
        %v5192 = vunpack.c.h.b16 %v4286
        %v5193 = vunpack.c.l.b16 %v4287
        %v5194 = vunpack.c.h.b16 %v4287
        %v5195 = vunpack.c.l.b16 %v4288
        %v5196 = vunpack.c.h.b16 %v4288
        %v5197 = vunpack.c.l.b16 %v4289
        %v5198 = vunpack.c.h.b16 %v4289
        %v5199 = vunpack.c.l.b16 %v4290
        %v5200 = vunpack.c.h.b16 %v4290
        %v5201 = vpack.c.b16 %v4637, %v4625
        %v5202 = vpack.c.b16 %v4638, %v4626
        %v5203 = vpack.c.b16 %v4639, %v4627
        %v5204 = vpack.c.b16 %v4640, %v4628
        %v5205 = vpack.c.b16 %v4641, %v4629
        %v5206 = vpack.c.b16 %v4642, %v4630
        %v5207 = vpack.c.b16 %v4643, %v4631
        %v5208 = vpack.c.b16 %v4644, %v4632
        %v5209 = vpack.c.b16 %v4645, %v4633
        %v5210 = vpack.c.b16 %v4646, %v4634
        %v5211 = vpack.c.b16 %v4647, %v4635
        %v5212 = vpack.c.b16 %v4648, %v4636
        %v5213 = vpack.c.b16 %v4661, %v4649
        %v5214 = vpack.c.b16 %v4662, %v4650
        %v5215 = vpack.c.b16 %v4663, %v4651
        %v5216 = vpack.c.b16 %v4664, %v4652
        %v5217 = vpack.c.b16 %v4665, %v4653
        %v5218 = vpack.c.b16 %v4666, %v4654
        %v5219 = vpack.c.b16 %v4667, %v4655
        %v5220 = vpack.c.b16 %v4668, %v4656
        %v5221 = vpack.c.b16 %v4669, %v4657
        %v5222 = vpack.c.b16 %v4670, %v4658
        %v5223 = vpack.c.b16 %v4671, %v4659
        %v5224 = vpack.c.b16 %v4672, %v4660
        %v5225 = vpack.c.b16 %v4685, %v4673
        %v5226 = vpack.c.b16 %v4686, %v4674
        %v5227 = vpack.c.b16 %v4687, %v4675
        %v5228 = vpack.c.b16 %v4688, %v4676
        %v5229 = vpack.c.b16 %v4689, %v4677
        %v5230 = vpack.c.b16 %v4690, %v4678
        %v5231 = vpack.c.b16 %v4691, %v4679
        %v5232 = vpack.c.b16 %v4692, %v4680
        %v5233 = vpack.c.b16 %v4693, %v4681
        %v5234 = vpack.c.b16 %v4694, %v4682
        %v5235 = vpack.c.b16 %v4695, %v4683
        %v5236 = vpack.c.b16 %v4696, %v4684
        %v5237 = vpack.c.b16 %v4709, %v4697
        %v5238 = vpack.c.b16 %v4710, %v4698
        %v5239 = vpack.c.b16 %v4711, %v4699
        %v5240 = vpack.c.b16 %v4712, %v4700
        %v5241 = vpack.c.b16 %v4713, %v4701
        %v5242 = vpack.c.b16 %v4714, %v4702
        %v5243 = vpack.c.b16 %v4715, %v4703
        %v5244 = vpack.c.b16 %v4716, %v4704
        %v5245 = vpack.c.b16 %v4717, %v4705
        %v5246 = vpack.c.b16 %v4718, %v4706
        %v5247 = vpack.c.b16 %v4719, %v4707
        %v5248 = vpack.c.b16 %v4720, %v4708
        %v5249 = vpack.c.b16 %v4733, %v4721
        %v5250 = vpack.c.b16 %v4734, %v4722
        %v5251 = vpack.c.b16 %v4735, %v4723
        %v5252 = vpack.c.b16 %v4736, %v4724
        %v5253 = vpack.c.b16 %v4737, %v4725
        %v5254 = vpack.c.b16 %v4738, %v4726
        %v5255 = vpack.c.b16 %v4739, %v4727
        %v5256 = vpack.c.b16 %v4740, %v4728
        %v5257 = vpack.c.b16 %v4741, %v4729
        %v5258 = vpack.c.b16 %v4742, %v4730
        %v5259 = vpack.c.b16 %v4743, %v4731
        %v5260 = vpack.c.b16 %v4744, %v4732
        %v5261 = vpack.c.b16 %v4757, %v4745
        %v5262 = vpack.c.b16 %v4758, %v4746
        %v5263 = vpack.c.b16 %v4759, %v4747
        %v5264 = vpack.c.b16 %v4760, %v4748
        %v5265 = vpack.c.b16 %v4761, %v4749
        %v5266 = vpack.c.b16 %v4762, %v4750
        %v5267 = vpack.c.b16 %v4763, %v4751
        %v5268 = vpack.c.b16 %v4764, %v4752
        %v5269 = vpack.c.b16 %v4765, %v4753
        %v5270 = vpack.c.b16 %v4766, %v4754
        %v5271 = vpack.c.b16 %v4767, %v4755
        %v5272 = vpack.c.b16 %v4768, %v4756
        %v5273 = vpack.c.b16 %v4781, %v4769
        %v5274 = vpack.c.b16 %v4782, %v4770
        %v5275 = vpack.c.b16 %v4783, %v4771
        %v5276 = vpack.c.b16 %v4784, %v4772
        %v5277 = vpack.c.b16 %v4785, %v4773
        %v5278 = vpack.c.b16 %v4786, %v4774
        %v5279 = vpack.c.b16 %v4787, %v4775
        %v5280 = vpack.c.b16 %v4788, %v4776
        %v5281 = vpack.c.b16 %v4789, %v4777
        %v5282 = vpack.c.b16 %v4790, %v4778
        %v5283 = vpack.c.b16 %v4791, %v4779
        %v5284 = vpack.c.b16 %v4792, %v4780
        %v5285 = vpack.c.b16 %v4805, %v4793
        %v5286 = vpack.c.b16 %v4806, %v4794
        %v5287 = vpack.c.b16 %v4807, %v4795
        %v5288 = vpack.c.b16 %v4808, %v4796
        %v5289 = vpack.c.b16 %v4809, %v4797
        %v5290 = vpack.c.b16 %v4810, %v4798
        %v5291 = vpack.c.b16 %v4811, %v4799
        %v5292 = vpack.c.b16 %v4812, %v4800
        %v5293 = vpack.c.b16 %v4813, %v4801
        %v5294 = vpack.c.b16 %v4814, %v4802
        %v5295 = vpack.c.b16 %v4815, %v4803
        %v5296 = vpack.c.b16 %v4816, %v4804
        %v5297 = vpack.c.b16 %v4829, %v4817
        %v5298 = vpack.c.b16 %v4830, %v4818
        %v5299 = vpack.c.b16 %v4831, %v4819
        %v5300 = vpack.c.b16 %v4832, %v4820
        %v5301 = vpack.c.b16 %v4833, %v4821
        %v5302 = vpack.c.b16 %v4834, %v4822
        %v5303 = vpack.c.b16 %v4835, %v4823
        %v5304 = vpack.c.b16 %v4836, %v4824
        %v5305 = vpack.c.b16 %v4837, %v4825
        %v5306 = vpack.c.b16 %v4838, %v4826
        %v5307 = vpack.c.b16 %v4839, %v4827
        %v5308 = vpack.c.b16 %v4840, %v4828
        %v5309 = vpack.c.b16 %v4853, %v4841
        %v5310 = vpack.c.b16 %v4854, %v4842
        %v5311 = vpack.c.b16 %v4855, %v4843
        %v5312 = vpack.c.b16 %v4856, %v4844
        %v5313 = vpack.c.b16 %v4857, %v4845
        %v5314 = vpack.c.b16 %v4858, %v4846
        %v5315 = vpack.c.b16 %v4859, %v4847
        %v5316 = vpack.c.b16 %v4860, %v4848
        %v5317 = vpack.c.b16 %v4861, %v4849
        %v5318 = vpack.c.b16 %v4862, %v4850
        %v5319 = vpack.c.b16 %v4863, %v4851
        %v5320 = vpack.c.b16 %v4864, %v4852
        %v5321 = vpack.c.b16 %v4877, %v4865
        %v5322 = vpack.c.b16 %v4878, %v4866
        %v5323 = vpack.c.b16 %v4879, %v4867
        %v5324 = vpack.c.b16 %v4880, %v4868
        %v5325 = vpack.c.b16 %v4881, %v4869
        %v5326 = vpack.c.b16 %v4882, %v4870
        %v5327 = vpack.c.b16 %v4883, %v4871
        %v5328 = vpack.c.b16 %v4884, %v4872
        %v5329 = vpack.c.b16 %v4885, %v4873
        %v5330 = vpack.c.b16 %v4886, %v4874
        %v5331 = vpack.c.b16 %v4887, %v4875
        %v5332 = vpack.c.b16 %v4888, %v4876
        %v5333 = vpack.c.b16 %v4901, %v4889
        %v5334 = vpack.c.b16 %v4902, %v4890
        %v5335 = vpack.c.b16 %v4903, %v4891
        %v5336 = vpack.c.b16 %v4904, %v4892
        %v5337 = vpack.c.b16 %v4905, %v4893
        %v5338 = vpack.c.b16 %v4906, %v4894
        %v5339 = vpack.c.b16 %v4907, %v4895
        %v5340 = vpack.c.b16 %v4908, %v4896
        %v5341 = vpack.c.b16 %v4909, %v4897
        %v5342 = vpack.c.b16 %v4910, %v4898
        %v5343 = vpack.c.b16 %v4911, %v4899
        %v5344 = vpack.c.b16 %v4912, %v4900
        %v5345 = vpack.c.b16 %v4925, %v4913
        %v5346 = vpack.c.b16 %v4926, %v4914
        %v5347 = vpack.c.b16 %v4927, %v4915
        %v5348 = vpack.c.b16 %v4928, %v4916
        %v5349 = vpack.c.b16 %v4929, %v4917
        %v5350 = vpack.c.b16 %v4930, %v4918
        %v5351 = vpack.c.b16 %v4931, %v4919
        %v5352 = vpack.c.b16 %v4932, %v4920
        %v5353 = vpack.c.b16 %v4933, %v4921
        %v5354 = vpack.c.b16 %v4934, %v4922
        %v5355 = vpack.c.b16 %v4935, %v4923
        %v5356 = vpack.c.b16 %v4936, %v4924
        %v5357 = vpack.c.b16 %v4949, %v4937
        %v5358 = vpack.c.b16 %v4950, %v4938
        %v5359 = vpack.c.b16 %v4951, %v4939
        %v5360 = vpack.c.b16 %v4952, %v4940
        %v5361 = vpack.c.b16 %v4953, %v4941
        %v5362 = vpack.c.b16 %v4954, %v4942
        %v5363 = vpack.c.b16 %v4955, %v4943
        %v5364 = vpack.c.b16 %v4956, %v4944
        %v5365 = vpack.c.b16 %v4957, %v4945
        %v5366 = vpack.c.b16 %v4958, %v4946
        %v5367 = vpack.c.b16 %v4959, %v4947
        %v5368 = vpack.c.b16 %v4960, %v4948
        %v5369 = vpack.c.b16 %v4973, %v4961
        %v5370 = vpack.c.b16 %v4974, %v4962
        %v5371 = vpack.c.b16 %v4975, %v4963
        %v5372 = vpack.c.b16 %v4976, %v4964
        %v5373 = vpack.c.b16 %v4977, %v4965
        %v5374 = vpack.c.b16 %v4978, %v4966
        %v5375 = vpack.c.b16 %v4979, %v4967
        %v5376 = vpack.c.b16 %v4980, %v4968
        %v5377 = vpack.c.b16 %v4981, %v4969
        %v5378 = vpack.c.b16 %v4982, %v4970
        %v5379 = vpack.c.b16 %v4983, %v4971
        %v5380 = vpack.c.b16 %v4984, %v4972
        %v5381 = vpack.c.b16 %v4997, %v4985
        %v5382 = vpack.c.b16 %v4998, %v4986
        %v5383 = vpack.c.b16 %v4999, %v4987
        %v5384 = vpack.c.b16 %v5000, %v4988
        %v5385 = vpack.c.b16 %v5001, %v4989
        %v5386 = vpack.c.b16 %v5002, %v4990
        %v5387 = vpack.c.b16 %v5003, %v4991
        %v5388 = vpack.c.b16 %v5004, %v4992
        %v5389 = vpack.c.b16 %v5005, %v4993
        %v5390 = vpack.c.b16 %v5006, %v4994
        %v5391 = vpack.c.b16 %v5007, %v4995
        %v5392 = vpack.c.b16 %v5008, %v4996
        %v5393 = vpack.c.b16 %v5021, %v5009
        %v5394 = vpack.c.b16 %v5022, %v5010
        %v5395 = vpack.c.b16 %v5023, %v5011
        %v5396 = vpack.c.b16 %v5024, %v5012
        %v5397 = vpack.c.b16 %v5025, %v5013
        %v5398 = vpack.c.b16 %v5026, %v5014
        %v5399 = vpack.c.b16 %v5027, %v5015
        %v5400 = vpack.c.b16 %v5028, %v5016
        %v5401 = vpack.c.b16 %v5029, %v5017
        %v5402 = vpack.c.b16 %v5030, %v5018
        %v5403 = vpack.c.b16 %v5031, %v5019
        %v5404 = vpack.c.b16 %v5032, %v5020
        %v5405 = vpack.c.b16 %v5045, %v5033
        %v5406 = vpack.c.b16 %v5046, %v5034
        %v5407 = vpack.c.b16 %v5047, %v5035
        %v5408 = vpack.c.b16 %v5048, %v5036
        %v5409 = vpack.c.b16 %v5049, %v5037
        %v5410 = vpack.c.b16 %v5050, %v5038
        %v5411 = vpack.c.b16 %v5051, %v5039
        %v5412 = vpack.c.b16 %v5052, %v5040
        %v5413 = vpack.c.b16 %v5053, %v5041
        %v5414 = vpack.c.b16 %v5054, %v5042
        %v5415 = vpack.c.b16 %v5055, %v5043
        %v5416 = vpack.c.b16 %v5056, %v5044
        %v5417 = vpack.c.b16 %v5069, %v5057
        %v5418 = vpack.c.b16 %v5070, %v5058
        %v5419 = vpack.c.b16 %v5071, %v5059
        %v5420 = vpack.c.b16 %v5072, %v5060
        %v5421 = vpack.c.b16 %v5073, %v5061
        %v5422 = vpack.c.b16 %v5074, %v5062
        %v5423 = vpack.c.b16 %v5075, %v5063
        %v5424 = vpack.c.b16 %v5076, %v5064
        %v5425 = vpack.c.b16 %v5077, %v5065
        %v5426 = vpack.c.b16 %v5078, %v5066
        %v5427 = vpack.c.b16 %v5079, %v5067
        %v5428 = vpack.c.b16 %v5080, %v5068
        %v5429 = vpack.c.b16 %v5093, %v5081
        %v5430 = vpack.c.b16 %v5094, %v5082
        %v5431 = vpack.c.b16 %v5095, %v5083
        %v5432 = vpack.c.b16 %v5096, %v5084
        %v5433 = vpack.c.b16 %v5097, %v5085
        %v5434 = vpack.c.b16 %v5098, %v5086
        %v5435 = vpack.c.b16 %v5099, %v5087
        %v5436 = vpack.c.b16 %v5100, %v5088
        %v5437 = vpack.c.b16 %v5101, %v5089
        %v5438 = vpack.c.b16 %v5102, %v5090
        %v5439 = vpack.c.b16 %v5103, %v5091
        %v5440 = vpack.c.b16 %v5104, %v5092
        %v5441 = vpack.c.b16 %v5117, %v5105
        %v5442 = vpack.c.b16 %v5118, %v5106
        %v5443 = vpack.c.b16 %v5119, %v5107
        %v5444 = vpack.c.b16 %v5120, %v5108
        %v5445 = vpack.c.b16 %v5121, %v5109
        %v5446 = vpack.c.b16 %v5122, %v5110
        %v5447 = vpack.c.b16 %v5123, %v5111
        %v5448 = vpack.c.b16 %v5124, %v5112
        %v5449 = vpack.c.b16 %v5125, %v5113
        %v5450 = vpack.c.b16 %v5126, %v5114
        %v5451 = vpack.c.b16 %v5127, %v5115
        %v5452 = vpack.c.b16 %v5128, %v5116
        %v5453 = vpack.c.b16 %v5141, %v5129
        %v5454 = vpack.c.b16 %v5142, %v5130
        %v5455 = vpack.c.b16 %v5143, %v5131
        %v5456 = vpack.c.b16 %v5144, %v5132
        %v5457 = vpack.c.b16 %v5145, %v5133
        %v5458 = vpack.c.b16 %v5146, %v5134
        %v5459 = vpack.c.b16 %v5147, %v5135
        %v5460 = vpack.c.b16 %v5148, %v5136
        %v5461 = vpack.c.b16 %v5149, %v5137
        %v5462 = vpack.c.b16 %v5150, %v5138
        %v5463 = vpack.c.b16 %v5151, %v5139
        %v5464 = vpack.c.b16 %v5152, %v5140
        %v5465 = vpack.c.b16 %v5165, %v5153
        %v5466 = vpack.c.b16 %v5166, %v5154
        %v5467 = vpack.c.b16 %v5167, %v5155
        %v5468 = vpack.c.b16 %v5168, %v5156
        %v5469 = vpack.c.b16 %v5169, %v5157
        %v5470 = vpack.c.b16 %v5170, %v5158
        %v5471 = vpack.c.b16 %v5171, %v5159
        %v5472 = vpack.c.b16 %v5172, %v5160
        %v5473 = vpack.c.b16 %v5173, %v5161
        %v5474 = vpack.c.b16 %v5174, %v5162
        %v5475 = vpack.c.b16 %v5175, %v5163
        %v5476 = vpack.c.b16 %v5176, %v5164
        %v5477 = vpack.c.b16 %v5189, %v5177
        %v5478 = vpack.c.b16 %v5190, %v5178
        %v5479 = vpack.c.b16 %v5191, %v5179
        %v5480 = vpack.c.b16 %v5192, %v5180
        %v5481 = vpack.c.b16 %v5193, %v5181
        %v5482 = vpack.c.b16 %v5194, %v5182
        %v5483 = vpack.c.b16 %v5195, %v5183
        %v5484 = vpack.c.b16 %v5196, %v5184
        %v5485 = vpack.c.b16 %v5197, %v5185
        %v5486 = vpack.c.b16 %v5198, %v5186
        %v5487 = vpack.c.b16 %v5199, %v5187
        %v5488 = vpack.c.b16 %v5200, %v5188
        %5777 = vmatpush.bf16.msra.mxu0 %v5285
        %5778 = vmatpush.bf16.msra.mxu0 %v5273
        %5779 = vmatpush.bf16.msra.mxu0 %v5261
        %5780 = vmatpush.bf16.msra.mxu0 %v5249
        %5781 = vmatpush.bf16.msra.mxu0 %v5237
        %5782 = vmatpush.bf16.msra.mxu0 %v5225
        %5783 = vmatpush.bf16.msra.mxu0 %v5213
        %5784 = vmatpush.bf16.msra.mxu0 %v5201
        %5785 = vmatmul.bf16.gmra.mxu0 %v4331
        %v5786 = vpop.f32.mrf.mxu0
        %v5787 = vadd.f32 %v4297, %v5786
        %v5788 = vpop.f32.mrf.mxu0
        %v5789 = vadd.f32 %v4297, %v5788
        %5790 = vdwg.mxu0
        %5791 = vmatpush.bf16.msra.mxu0 %v5381
        %5792 = vmatpush.bf16.msra.mxu0 %v5369
        %5793 = vmatpush.bf16.msra.mxu0 %v5357
        %5794 = vmatpush.bf16.msra.mxu0 %v5345
        %5795 = vmatpush.bf16.msra.mxu0 %v5333
        %5796 = vmatpush.bf16.msra.mxu0 %v5321
        %5797 = vmatpush.bf16.msra.mxu0 %v5309
        %5798 = vmatpush.bf16.msra.mxu0 %v5297
        %5799 = vmatmul.bf16.gmra.mxu0 %v4332
        %v5800 = vpop.f32.mrf.mxu0
        %v5801 = vadd.f32 %v5787, %v5800
        %v5802 = vpop.f32.mrf.mxu0
        %v5803 = vadd.f32 %v5789, %v5802
        %5804 = vdwg.mxu0
        %5805 = vmatpush.bf16.msra.mxu0 %v5477
        %5806 = vmatpush.bf16.msra.mxu0 %v5465
        %5807 = vmatpush.bf16.msra.mxu0 %v5453
        %5808 = vmatpush.bf16.msra.mxu0 %v5441
        %5809 = vmatpush.bf16.msra.mxu0 %v5429
        %5810 = vmatpush.bf16.msra.mxu0 %v5417
        %5811 = vmatpush.bf16.msra.mxu0 %v5405
        %5812 = vmatpush.bf16.msra.mxu0 %v5393
        %5813 = vmatmul.bf16.gmra.mxu0 %v4333
        %v5814 = vpop.f32.mrf.mxu0
        %v5815 = vadd.f32 %v5801, %v5814
        %v5816 = vpop.f32.mrf.mxu0
        %v5817 = vadd.f32 %v5803, %v5816
        %5818 = vdwg.mxu0
        %5819 = vmatpush.bf16.msra.mxu0 %v5286
        %5820 = vmatpush.bf16.msra.mxu0 %v5274
        %5821 = vmatpush.bf16.msra.mxu0 %v5262
        %5822 = vmatpush.bf16.msra.mxu0 %v5250
        %5823 = vmatpush.bf16.msra.mxu0 %v5238
        %5824 = vmatpush.bf16.msra.mxu0 %v5226
        %5825 = vmatpush.bf16.msra.mxu0 %v5214
        %5826 = vmatpush.bf16.msra.mxu0 %v5202
        %5827 = vmatmul.bf16.gmra.mxu0 %v4331
        %v5828 = vpop.f32.mrf.mxu0
        %v5829 = vadd.f32 %v4298, %v5828
        %v5830 = vpop.f32.mrf.mxu0
        %v5831 = vadd.f32 %v4298, %v5830
        %5832 = vdwg.mxu0
        %5833 = vmatpush.bf16.msra.mxu0 %v5382
        %5834 = vmatpush.bf16.msra.mxu0 %v5370
        %5835 = vmatpush.bf16.msra.mxu0 %v5358
        %5836 = vmatpush.bf16.msra.mxu0 %v5346
        %5837 = vmatpush.bf16.msra.mxu0 %v5334
        %5838 = vmatpush.bf16.msra.mxu0 %v5322
        %5839 = vmatpush.bf16.msra.mxu0 %v5310
        %5840 = vmatpush.bf16.msra.mxu0 %v5298
        %5841 = vmatmul.bf16.gmra.mxu0 %v4332
        %v5842 = vpop.f32.mrf.mxu0
        %v5843 = vadd.f32 %v5829, %v5842
        %v5844 = vpop.f32.mrf.mxu0
        %v5845 = vadd.f32 %v5831, %v5844
        %5846 = vdwg.mxu0
        %5847 = vmatpush.bf16.msra.mxu0 %v5478
        %5848 = vmatpush.bf16.msra.mxu0 %v5466
        %5849 = vmatpush.bf16.msra.mxu0 %v5454
        %5850 = vmatpush.bf16.msra.mxu0 %v5442
        %5851 = vmatpush.bf16.msra.mxu0 %v5430
        %5852 = vmatpush.bf16.msra.mxu0 %v5418
        %5853 = vmatpush.bf16.msra.mxu0 %v5406
        %5854 = vmatpush.bf16.msra.mxu0 %v5394
        %5855 = vmatmul.bf16.gmra.mxu0 %v4333
        %v5856 = vpop.f32.mrf.mxu0
        %v5857 = vadd.f32 %v5843, %v5856
        %v5858 = vpop.f32.mrf.mxu0
        %v5859 = vadd.f32 %v5845, %v5858
        %5860 = vdwg.mxu0
        %5861 = vmatpush.bf16.msra.mxu0 %v5287
        %5862 = vmatpush.bf16.msra.mxu0 %v5275
        %5863 = vmatpush.bf16.msra.mxu0 %v5263
        %5864 = vmatpush.bf16.msra.mxu0 %v5251
        %5865 = vmatpush.bf16.msra.mxu0 %v5239
        %5866 = vmatpush.bf16.msra.mxu0 %v5227
        %5867 = vmatpush.bf16.msra.mxu0 %v5215
        %5868 = vmatpush.bf16.msra.mxu0 %v5203
        %5869 = vmatmul.bf16.gmra.mxu0 %v4331
        %v5870 = vpop.f32.mrf.mxu0
        %v5871 = vadd.f32 %v4299, %v5870
        %v5872 = vpop.f32.mrf.mxu0
        %v5873 = vadd.f32 %v4299, %v5872
        %5874 = vdwg.mxu0
        %5875 = vmatpush.bf16.msra.mxu0 %v5383
        %5876 = vmatpush.bf16.msra.mxu0 %v5371
        %5877 = vmatpush.bf16.msra.mxu0 %v5359
        %5878 = vmatpush.bf16.msra.mxu0 %v5347
        %5879 = vmatpush.bf16.msra.mxu0 %v5335
        %5880 = vmatpush.bf16.msra.mxu0 %v5323
        %5881 = vmatpush.bf16.msra.mxu0 %v5311
        %5882 = vmatpush.bf16.msra.mxu0 %v5299
        %5883 = vmatmul.bf16.gmra.mxu0 %v4332
        %v5884 = vpop.f32.mrf.mxu0
        %v5885 = vadd.f32 %v5871, %v5884
        %v5886 = vpop.f32.mrf.mxu0
        %v5887 = vadd.f32 %v5873, %v5886
        %5888 = vdwg.mxu0
        %5889 = vmatpush.bf16.msra.mxu0 %v5479
        %5890 = vmatpush.bf16.msra.mxu0 %v5467
        %5891 = vmatpush.bf16.msra.mxu0 %v5455
        %5892 = vmatpush.bf16.msra.mxu0 %v5443
        %5893 = vmatpush.bf16.msra.mxu0 %v5431
        %5894 = vmatpush.bf16.msra.mxu0 %v5419
        %5895 = vmatpush.bf16.msra.mxu0 %v5407
        %5896 = vmatpush.bf16.msra.mxu0 %v5395
        %5897 = vmatmul.bf16.gmra.mxu0 %v4333
        %v5898 = vpop.f32.mrf.mxu0
        %v5899 = vadd.f32 %v5885, %v5898
        %v5900 = vpop.f32.mrf.mxu0
        %v5901 = vadd.f32 %v5887, %v5900
        %5902 = vdwg.mxu0
        %5903 = vmatpush.bf16.msra.mxu0 %v5288
        %5904 = vmatpush.bf16.msra.mxu0 %v5276
        %5905 = vmatpush.bf16.msra.mxu0 %v5264
        %5906 = vmatpush.bf16.msra.mxu0 %v5252
        %5907 = vmatpush.bf16.msra.mxu0 %v5240
        %5908 = vmatpush.bf16.msra.mxu0 %v5228
        %5909 = vmatpush.bf16.msra.mxu0 %v5216
        %5910 = vmatpush.bf16.msra.mxu0 %v5204
        %5911 = vmatmul.bf16.gmra.mxu0 %v4331
        %v5912 = vpop.f32.mrf.mxu0
        %v5913 = vadd.f32 %v4300, %v5912
        %v5914 = vpop.f32.mrf.mxu0
        %v5915 = vadd.f32 %v4300, %v5914
        %5916 = vdwg.mxu0
        %5917 = vmatpush.bf16.msra.mxu0 %v5384
        %5918 = vmatpush.bf16.msra.mxu0 %v5372
        %5919 = vmatpush.bf16.msra.mxu0 %v5360
        %5920 = vmatpush.bf16.msra.mxu0 %v5348
        %5921 = vmatpush.bf16.msra.mxu0 %v5336
        %5922 = vmatpush.bf16.msra.mxu0 %v5324
        %5923 = vmatpush.bf16.msra.mxu0 %v5312
        %5924 = vmatpush.bf16.msra.mxu0 %v5300
        %5925 = vmatmul.bf16.gmra.mxu0 %v4332
        %v5926 = vpop.f32.mrf.mxu0
        %v5927 = vadd.f32 %v5913, %v5926
        %v5928 = vpop.f32.mrf.mxu0
        %v5929 = vadd.f32 %v5915, %v5928
        %5930 = vdwg.mxu0
        %5931 = vmatpush.bf16.msra.mxu0 %v5480
        %5932 = vmatpush.bf16.msra.mxu0 %v5468
        %5933 = vmatpush.bf16.msra.mxu0 %v5456
        %5934 = vmatpush.bf16.msra.mxu0 %v5444
        %5935 = vmatpush.bf16.msra.mxu0 %v5432
        %5936 = vmatpush.bf16.msra.mxu0 %v5420
        %5937 = vmatpush.bf16.msra.mxu0 %v5408
        %5938 = vmatpush.bf16.msra.mxu0 %v5396
        %5939 = vmatmul.bf16.gmra.mxu0 %v4333
        %v5940 = vpop.f32.mrf.mxu0
        %v5941 = vadd.f32 %v5927, %v5940
        %v5942 = vpop.f32.mrf.mxu0
        %v5943 = vadd.f32 %v5929, %v5942
        %5944 = vdwg.mxu0
        %5945 = vmatpush.bf16.msra.mxu0 %v5289
        %5946 = vmatpush.bf16.msra.mxu0 %v5277
        %5947 = vmatpush.bf16.msra.mxu0 %v5265
        %5948 = vmatpush.bf16.msra.mxu0 %v5253
        %5949 = vmatpush.bf16.msra.mxu0 %v5241
        %5950 = vmatpush.bf16.msra.mxu0 %v5229
        %5951 = vmatpush.bf16.msra.mxu0 %v5217
        %5952 = vmatpush.bf16.msra.mxu0 %v5205
        %5953 = vmatmul.bf16.gmra.mxu0 %v4331
        %v5954 = vpop.f32.mrf.mxu0
        %v5955 = vadd.f32 %v4301, %v5954
        %v5956 = vpop.f32.mrf.mxu0
        %v5957 = vadd.f32 %v4301, %v5956
        %5958 = vdwg.mxu0
        %5959 = vmatpush.bf16.msra.mxu0 %v5385
        %5960 = vmatpush.bf16.msra.mxu0 %v5373
        %5961 = vmatpush.bf16.msra.mxu0 %v5361
        %5962 = vmatpush.bf16.msra.mxu0 %v5349
        %5963 = vmatpush.bf16.msra.mxu0 %v5337
        %5964 = vmatpush.bf16.msra.mxu0 %v5325
        %5965 = vmatpush.bf16.msra.mxu0 %v5313
        %5966 = vmatpush.bf16.msra.mxu0 %v5301
        %5967 = vmatmul.bf16.gmra.mxu0 %v4332
        %v5968 = vpop.f32.mrf.mxu0
        %v5969 = vadd.f32 %v5955, %v5968
        %v5970 = vpop.f32.mrf.mxu0
        %v5971 = vadd.f32 %v5957, %v5970
        %5972 = vdwg.mxu0
        %5973 = vmatpush.bf16.msra.mxu0 %v5481
        %5974 = vmatpush.bf16.msra.mxu0 %v5469
        %5975 = vmatpush.bf16.msra.mxu0 %v5457
        %5976 = vmatpush.bf16.msra.mxu0 %v5445
        %5977 = vmatpush.bf16.msra.mxu0 %v5433
        %5978 = vmatpush.bf16.msra.mxu0 %v5421
        %5979 = vmatpush.bf16.msra.mxu0 %v5409
        %5980 = vmatpush.bf16.msra.mxu0 %v5397
        %5981 = vmatmul.bf16.gmra.mxu0 %v4333
        %v5982 = vpop.f32.mrf.mxu0
        %v5983 = vadd.f32 %v5969, %v5982
        %v5984 = vpop.f32.mrf.mxu0
        %v5985 = vadd.f32 %v5971, %v5984
        %5986 = vdwg.mxu0
        %5987 = vmatpush.bf16.msra.mxu0 %v5290
        %5988 = vmatpush.bf16.msra.mxu0 %v5278
        %5989 = vmatpush.bf16.msra.mxu0 %v5266
        %5990 = vmatpush.bf16.msra.mxu0 %v5254
        %5991 = vmatpush.bf16.msra.mxu0 %v5242
        %5992 = vmatpush.bf16.msra.mxu0 %v5230
        %5993 = vmatpush.bf16.msra.mxu0 %v5218
        %5994 = vmatpush.bf16.msra.mxu0 %v5206
        %5995 = vmatmul.bf16.gmra.mxu0 %v4331
        %v5996 = vpop.f32.mrf.mxu0
        %v5997 = vadd.f32 %v4302, %v5996
        %v5998 = vpop.f32.mrf.mxu0
        %v5999 = vadd.f32 %v4302, %v5998
        %6000 = vdwg.mxu0
        %6001 = vmatpush.bf16.msra.mxu0 %v5386
        %6002 = vmatpush.bf16.msra.mxu0 %v5374
        %6003 = vmatpush.bf16.msra.mxu0 %v5362
        %6004 = vmatpush.bf16.msra.mxu0 %v5350
        %6005 = vmatpush.bf16.msra.mxu0 %v5338
        %6006 = vmatpush.bf16.msra.mxu0 %v5326
        %6007 = vmatpush.bf16.msra.mxu0 %v5314
        %6008 = vmatpush.bf16.msra.mxu0 %v5302
        %6009 = vmatmul.bf16.gmra.mxu0 %v4332
        %v6010 = vpop.f32.mrf.mxu0
        %v6011 = vadd.f32 %v5997, %v6010
        %v6012 = vpop.f32.mrf.mxu0
        %v6013 = vadd.f32 %v5999, %v6012
        %6014 = vdwg.mxu0
        %6015 = vmatpush.bf16.msra.mxu0 %v5482
        %6016 = vmatpush.bf16.msra.mxu0 %v5470
        %6017 = vmatpush.bf16.msra.mxu0 %v5458
        %6018 = vmatpush.bf16.msra.mxu0 %v5446
        %6019 = vmatpush.bf16.msra.mxu0 %v5434
        %6020 = vmatpush.bf16.msra.mxu0 %v5422
        %6021 = vmatpush.bf16.msra.mxu0 %v5410
        %6022 = vmatpush.bf16.msra.mxu0 %v5398
        %6023 = vmatmul.bf16.gmra.mxu0 %v4333
        %v6024 = vpop.f32.mrf.mxu0
        %v6025 = vadd.f32 %v6011, %v6024
        %v6026 = vpop.f32.mrf.mxu0
        %v6027 = vadd.f32 %v6013, %v6026
        %6028 = vdwg.mxu0
        %6029 = vmatpush.bf16.msra.mxu0 %v5291
        %6030 = vmatpush.bf16.msra.mxu0 %v5279
        %6031 = vmatpush.bf16.msra.mxu0 %v5267
        %6032 = vmatpush.bf16.msra.mxu0 %v5255
        %6033 = vmatpush.bf16.msra.mxu0 %v5243
        %6034 = vmatpush.bf16.msra.mxu0 %v5231
        %6035 = vmatpush.bf16.msra.mxu0 %v5219
        %6036 = vmatpush.bf16.msra.mxu0 %v5207
        %6037 = vmatmul.bf16.gmra.mxu0 %v4331
        %v6038 = vpop.f32.mrf.mxu0
        %v6039 = vadd.f32 %v4303, %v6038
        %v6040 = vpop.f32.mrf.mxu0
        %v6041 = vadd.f32 %v4303, %v6040
        %6042 = vdwg.mxu0
        %6043 = vmatpush.bf16.msra.mxu0 %v5387
        %6044 = vmatpush.bf16.msra.mxu0 %v5375
        %6045 = vmatpush.bf16.msra.mxu0 %v5363
        %6046 = vmatpush.bf16.msra.mxu0 %v5351
        %6047 = vmatpush.bf16.msra.mxu0 %v5339
        %6048 = vmatpush.bf16.msra.mxu0 %v5327
        %6049 = vmatpush.bf16.msra.mxu0 %v5315
        %6050 = vmatpush.bf16.msra.mxu0 %v5303
        %6051 = vmatmul.bf16.gmra.mxu0 %v4332
        %v6052 = vpop.f32.mrf.mxu0
        %v6053 = vadd.f32 %v6039, %v6052
        %v6054 = vpop.f32.mrf.mxu0
        %v6055 = vadd.f32 %v6041, %v6054
        %6056 = vdwg.mxu0
        %6057 = vmatpush.bf16.msra.mxu0 %v5483
        %6058 = vmatpush.bf16.msra.mxu0 %v5471
        %6059 = vmatpush.bf16.msra.mxu0 %v5459
        %6060 = vmatpush.bf16.msra.mxu0 %v5447
        %6061 = vmatpush.bf16.msra.mxu0 %v5435
        %6062 = vmatpush.bf16.msra.mxu0 %v5423
        %6063 = vmatpush.bf16.msra.mxu0 %v5411
        %6064 = vmatpush.bf16.msra.mxu0 %v5399
        %6065 = vmatmul.bf16.gmra.mxu0 %v4333
        %v6066 = vpop.f32.mrf.mxu0
        %v6067 = vadd.f32 %v6053, %v6066
        %v6068 = vpop.f32.mrf.mxu0
        %v6069 = vadd.f32 %v6055, %v6068
        %6070 = vdwg.mxu0
        %6071 = vmatpush.bf16.msra.mxu0 %v5292
        %6072 = vmatpush.bf16.msra.mxu0 %v5280
        %6073 = vmatpush.bf16.msra.mxu0 %v5268
        %6074 = vmatpush.bf16.msra.mxu0 %v5256
        %6075 = vmatpush.bf16.msra.mxu0 %v5244
        %6076 = vmatpush.bf16.msra.mxu0 %v5232
        %6077 = vmatpush.bf16.msra.mxu0 %v5220
        %6078 = vmatpush.bf16.msra.mxu0 %v5208
        %6079 = vmatmul.bf16.gmra.mxu0 %v4331
        %v6080 = vpop.f32.mrf.mxu0
        %v6081 = vadd.f32 %v4304, %v6080
        %v6082 = vpop.f32.mrf.mxu0
        %v6083 = vadd.f32 %v4304, %v6082
        %6084 = vdwg.mxu0
        %6085 = vmatpush.bf16.msra.mxu0 %v5388
        %6086 = vmatpush.bf16.msra.mxu0 %v5376
        %6087 = vmatpush.bf16.msra.mxu0 %v5364
        %6088 = vmatpush.bf16.msra.mxu0 %v5352
        %6089 = vmatpush.bf16.msra.mxu0 %v5340
        %6090 = vmatpush.bf16.msra.mxu0 %v5328
        %6091 = vmatpush.bf16.msra.mxu0 %v5316
        %6092 = vmatpush.bf16.msra.mxu0 %v5304
        %6093 = vmatmul.bf16.gmra.mxu0 %v4332
        %v6094 = vpop.f32.mrf.mxu0
        %v6095 = vadd.f32 %v6081, %v6094
        %v6096 = vpop.f32.mrf.mxu0
        %v6097 = vadd.f32 %v6083, %v6096
        %6098 = vdwg.mxu0
        %6099 = vmatpush.bf16.msra.mxu0 %v5484
        %6100 = vmatpush.bf16.msra.mxu0 %v5472
        %6101 = vmatpush.bf16.msra.mxu0 %v5460
        %6102 = vmatpush.bf16.msra.mxu0 %v5448
        %6103 = vmatpush.bf16.msra.mxu0 %v5436
        %6104 = vmatpush.bf16.msra.mxu0 %v5424
        %6105 = vmatpush.bf16.msra.mxu0 %v5412
        %6106 = vmatpush.bf16.msra.mxu0 %v5400
        %6107 = vmatmul.bf16.gmra.mxu0 %v4333
        %v6108 = vpop.f32.mrf.mxu0
        %v6109 = vadd.f32 %v6095, %v6108
        %v6110 = vpop.f32.mrf.mxu0
        %v6111 = vadd.f32 %v6097, %v6110
        %6112 = vdwg.mxu0
        %6113 = vmatpush.bf16.msra.mxu0 %v5293
        %6114 = vmatpush.bf16.msra.mxu0 %v5281
        %6115 = vmatpush.bf16.msra.mxu0 %v5269
        %6116 = vmatpush.bf16.msra.mxu0 %v5257
        %6117 = vmatpush.bf16.msra.mxu0 %v5245
        %6118 = vmatpush.bf16.msra.mxu0 %v5233
        %6119 = vmatpush.bf16.msra.mxu0 %v5221
        %6120 = vmatpush.bf16.msra.mxu0 %v5209
        %6121 = vmatmul.bf16.gmra.mxu0 %v4331
        %v6122 = vpop.f32.mrf.mxu0
        %v6123 = vadd.f32 %v4305, %v6122
        %v6124 = vpop.f32.mrf.mxu0
        %v6125 = vadd.f32 %v4305, %v6124
        %6126 = vdwg.mxu0
        %6127 = vmatpush.bf16.msra.mxu0 %v5389
        %6128 = vmatpush.bf16.msra.mxu0 %v5377
        %6129 = vmatpush.bf16.msra.mxu0 %v5365
        %6130 = vmatpush.bf16.msra.mxu0 %v5353
        %6131 = vmatpush.bf16.msra.mxu0 %v5341
        %6132 = vmatpush.bf16.msra.mxu0 %v5329
        %6133 = vmatpush.bf16.msra.mxu0 %v5317
        %6134 = vmatpush.bf16.msra.mxu0 %v5305
        %6135 = vmatmul.bf16.gmra.mxu0 %v4332
        %v6136 = vpop.f32.mrf.mxu0
        %v6137 = vadd.f32 %v6123, %v6136
        %v6138 = vpop.f32.mrf.mxu0
        %v6139 = vadd.f32 %v6125, %v6138
        %6140 = vdwg.mxu0
        %6141 = vmatpush.bf16.msra.mxu0 %v5485
        %6142 = vmatpush.bf16.msra.mxu0 %v5473
        %6143 = vmatpush.bf16.msra.mxu0 %v5461
        %6144 = vmatpush.bf16.msra.mxu0 %v5449
        %6145 = vmatpush.bf16.msra.mxu0 %v5437
        %6146 = vmatpush.bf16.msra.mxu0 %v5425
        %6147 = vmatpush.bf16.msra.mxu0 %v5413
        %6148 = vmatpush.bf16.msra.mxu0 %v5401
        %6149 = vmatmul.bf16.gmra.mxu0 %v4333
        %v6150 = vpop.f32.mrf.mxu0
        %v6151 = vadd.f32 %v6137, %v6150
        %v6152 = vpop.f32.mrf.mxu0
        %v6153 = vadd.f32 %v6139, %v6152
        %6154 = vdwg.mxu0
        %6155 = vmatpush.bf16.msra.mxu0 %v5294
        %6156 = vmatpush.bf16.msra.mxu0 %v5282
        %6157 = vmatpush.bf16.msra.mxu0 %v5270
        %6158 = vmatpush.bf16.msra.mxu0 %v5258
        %6159 = vmatpush.bf16.msra.mxu0 %v5246
        %6160 = vmatpush.bf16.msra.mxu0 %v5234
        %6161 = vmatpush.bf16.msra.mxu0 %v5222
        %6162 = vmatpush.bf16.msra.mxu0 %v5210
        %6163 = vmatmul.bf16.gmra.mxu0 %v4331
        %v6164 = vpop.f32.mrf.mxu0
        %v6165 = vadd.f32 %v4306, %v6164
        %v6166 = vpop.f32.mrf.mxu0
        %v6167 = vadd.f32 %v4306, %v6166
        %6168 = vdwg.mxu0
        %6169 = vmatpush.bf16.msra.mxu0 %v5390
        %6170 = vmatpush.bf16.msra.mxu0 %v5378
        %6171 = vmatpush.bf16.msra.mxu0 %v5366
        %6172 = vmatpush.bf16.msra.mxu0 %v5354
        %6173 = vmatpush.bf16.msra.mxu0 %v5342
        %6174 = vmatpush.bf16.msra.mxu0 %v5330
        %6175 = vmatpush.bf16.msra.mxu0 %v5318
        %6176 = vmatpush.bf16.msra.mxu0 %v5306
        %6177 = vmatmul.bf16.gmra.mxu0 %v4332
        %v6178 = vpop.f32.mrf.mxu0
        %v6179 = vadd.f32 %v6165, %v6178
        %v6180 = vpop.f32.mrf.mxu0
        %v6181 = vadd.f32 %v6167, %v6180
        %6182 = vdwg.mxu0
        %6183 = vmatpush.bf16.msra.mxu0 %v5486
        %6184 = vmatpush.bf16.msra.mxu0 %v5474
        %6185 = vmatpush.bf16.msra.mxu0 %v5462
        %6186 = vmatpush.bf16.msra.mxu0 %v5450
        %6187 = vmatpush.bf16.msra.mxu0 %v5438
        %6188 = vmatpush.bf16.msra.mxu0 %v5426
        %6189 = vmatpush.bf16.msra.mxu0 %v5414
        %6190 = vmatpush.bf16.msra.mxu0 %v5402
        %6191 = vmatmul.bf16.gmra.mxu0 %v4333
        %v6192 = vpop.f32.mrf.mxu0
        %v6193 = vadd.f32 %v6179, %v6192
        %v6194 = vpop.f32.mrf.mxu0
        %v6195 = vadd.f32 %v6181, %v6194
        %6196 = vdwg.mxu0
        %6197 = vmatpush.bf16.msra.mxu0 %v5295
        %6198 = vmatpush.bf16.msra.mxu0 %v5283
        %6199 = vmatpush.bf16.msra.mxu0 %v5271
        %6200 = vmatpush.bf16.msra.mxu0 %v5259
        %6201 = vmatpush.bf16.msra.mxu0 %v5247
        %6202 = vmatpush.bf16.msra.mxu0 %v5235
        %6203 = vmatpush.bf16.msra.mxu0 %v5223
        %6204 = vmatpush.bf16.msra.mxu0 %v5211
        %6205 = vmatmul.bf16.gmra.mxu0 %v4331
        %v6206 = vpop.f32.mrf.mxu0
        %v6207 = vadd.f32 %v4307, %v6206
        %v6208 = vpop.f32.mrf.mxu0
        %v6209 = vadd.f32 %v4307, %v6208
        %6210 = vdwg.mxu0
        %6211 = vmatpush.bf16.msra.mxu0 %v5391
        %6212 = vmatpush.bf16.msra.mxu0 %v5379
        %6213 = vmatpush.bf16.msra.mxu0 %v5367
        %6214 = vmatpush.bf16.msra.mxu0 %v5355
        %6215 = vmatpush.bf16.msra.mxu0 %v5343
        %6216 = vmatpush.bf16.msra.mxu0 %v5331
        %6217 = vmatpush.bf16.msra.mxu0 %v5319
        %6218 = vmatpush.bf16.msra.mxu0 %v5307
        %6219 = vmatmul.bf16.gmra.mxu0 %v4332
        %v6220 = vpop.f32.mrf.mxu0
        %v6221 = vadd.f32 %v6207, %v6220
        %v6222 = vpop.f32.mrf.mxu0
        %v6223 = vadd.f32 %v6209, %v6222
        %6224 = vdwg.mxu0
        %6225 = vmatpush.bf16.msra.mxu0 %v5487
        %6226 = vmatpush.bf16.msra.mxu0 %v5475
        %6227 = vmatpush.bf16.msra.mxu0 %v5463
        %6228 = vmatpush.bf16.msra.mxu0 %v5451
        %6229 = vmatpush.bf16.msra.mxu0 %v5439
        %6230 = vmatpush.bf16.msra.mxu0 %v5427
        %6231 = vmatpush.bf16.msra.mxu0 %v5415
        %6232 = vmatpush.bf16.msra.mxu0 %v5403
        %6233 = vmatmul.bf16.gmra.mxu0 %v4333
        %v6234 = vpop.f32.mrf.mxu0
        %v6235 = vadd.f32 %v6221, %v6234
        %v6236 = vpop.f32.mrf.mxu0
        %v6237 = vadd.f32 %v6223, %v6236
        %6238 = vdwg.mxu0
        %6239 = vmatpush.bf16.msra.mxu0 %v5296
        %6240 = vmatpush.bf16.msra.mxu0 %v5284
        %6241 = vmatpush.bf16.msra.mxu0 %v5272
        %6242 = vmatpush.bf16.msra.mxu0 %v5260
        %6243 = vmatpush.bf16.msra.mxu0 %v5248
        %6244 = vmatpush.bf16.msra.mxu0 %v5236
        %6245 = vmatpush.bf16.msra.mxu0 %v5224
        %6246 = vmatpush.bf16.msra.mxu0 %v5212
        %6247 = vmatmul.bf16.gmra.mxu0 %v4331
        %v6248 = vpop.f32.mrf.mxu0
        %v6249 = vadd.f32 %v4308, %v6248
        %v6250 = vpop.f32.mrf.mxu0
        %v6251 = vadd.f32 %v4308, %v6250
        %6252 = vdwg.mxu0
        %6253 = vmatpush.bf16.msra.mxu0 %v5392
        %6254 = vmatpush.bf16.msra.mxu0 %v5380
        %6255 = vmatpush.bf16.msra.mxu0 %v5368
        %6256 = vmatpush.bf16.msra.mxu0 %v5356
        %6257 = vmatpush.bf16.msra.mxu0 %v5344
        %6258 = vmatpush.bf16.msra.mxu0 %v5332
        %6259 = vmatpush.bf16.msra.mxu0 %v5320
        %6260 = vmatpush.bf16.msra.mxu0 %v5308
        %6261 = vmatmul.bf16.gmra.mxu0 %v4332
        %v6262 = vpop.f32.mrf.mxu0
        %v6263 = vadd.f32 %v6249, %v6262
        %v6264 = vpop.f32.mrf.mxu0
        %v6265 = vadd.f32 %v6251, %v6264
        %6266 = vdwg.mxu0
        %6267 = vmatpush.bf16.msra.mxu0 %v5488
        %6268 = vmatpush.bf16.msra.mxu0 %v5476
        %6269 = vmatpush.bf16.msra.mxu0 %v5464
        %6270 = vmatpush.bf16.msra.mxu0 %v5452
        %6271 = vmatpush.bf16.msra.mxu0 %v5440
        %6272 = vmatpush.bf16.msra.mxu0 %v5428
        %6273 = vmatpush.bf16.msra.mxu0 %v5416
        %6274 = vmatpush.bf16.msra.mxu0 %v5404
        %6275 = vmatmul.bf16.gmra.mxu0 %v4333
        %v6276 = vpop.f32.mrf.mxu0
        %v6277 = vadd.f32 %v6263, %v6276
        %v6278 = vpop.f32.mrf.mxu0
        %v6279 = vadd.f32 %v6265, %v6278
        %6280 = vdwg.mxu0
        %v6281 = vmax.f32 %v5815, 0.0
        %v6282 = vmax.f32 %v5857, 0.0
        %v6283 = vmax.f32 %v5899, 0.0
        %v6284 = vmax.f32 %v5941, 0.0
        %v6285 = vmax.f32 %v5983, 0.0
        %v6286 = vmax.f32 %v6025, 0.0
        %v6287 = vmax.f32 %v6067, 0.0
        %v6288 = vmax.f32 %v6109, 0.0
        %v6289 = vmax.f32 %v6151, 0.0
        %v6290 = vmax.f32 %v6193, 0.0
        %v6291 = vmax.f32 %v6235, 0.0
        %v6292 = vmax.f32 %v6277, 0.0
        %v6293 = vmax.f32 %v5817, 0.0
        %v6294 = vmax.f32 %v5859, 0.0
        %v6295 = vmax.f32 %v5901, 0.0
        %v6296 = vmax.f32 %v5943, 0.0
        %v6297 = vmax.f32 %v5985, 0.0
        %v6298 = vmax.f32 %v6027, 0.0
        %v6299 = vmax.f32 %v6069, 0.0
        %v6300 = vmax.f32 %v6111, 0.0
        %v6301 = vmax.f32 %v6153, 0.0
        %v6302 = vmax.f32 %v6195, 0.0
        %v6303 = vmax.f32 %v6237, 0.0
        %v6304 = vmax.f32 %v6279, 0.0
        %v6305 = vpack.c.bf16 %v6293, %v6281
        %v6306 = vpack.c.bf16 %v6294, %v6282
        %v6307 = vpack.c.bf16 %v6295, %v6283
        %v6308 = vpack.c.bf16 %v6296, %v6284
        %v6309 = vpack.c.bf16 %v6297, %v6285
        %v6310 = vpack.c.bf16 %v6298, %v6286
        %v6311 = vpack.c.bf16 %v6299, %v6287
        %v6312 = vpack.c.bf16 %v6300, %v6288
        %v6313 = vpack.c.bf16 %v6301, %v6289
        %v6314 = vpack.c.bf16 %v6302, %v6290
        %v6315 = vpack.c.bf16 %v6303, %v6291
        %v6316 = vpack.c.bf16 %v6304, %v6292
        %s6317 = smul.addr %s4000, 4
        %s6318 = scalar_lea.vmem [#allocation22], %s6317
        %v6319 = vld [vmem:[%s6318] sm:$0xff]
        %v6320 = vld [vmem:[%s6318 + $0x8] sm:$0xf]
        %v6321 = vld [vmem:[%s6318 + $0xc] sm:$0xff]
        %v6322 = vld [vmem:[%s6318 + $0x14] sm:$0xf]
        %v6323 = vld [vmem:[%s6318 + $0x18] sm:$0xff]
        %v6324 = vld [vmem:[%s6318 + $0x20] sm:$0xf]
        %v6325 = vld [vmem:[%s6318 + $0x24] sm:$0xff]
        %v6326 = vld [vmem:[%s6318 + $0x2c] sm:$0xf]
        %v6327 = vld [vmem:[%s6318 + $0x30] sm:$0xff]
        %v6328 = vld [vmem:[%s6318 + $0x38] sm:$0xf]
        %v6329 = vld [vmem:[%s6318 + $0x3c] sm:$0xff]
        %v6330 = vld [vmem:[%s6318 + $0x44] sm:$0xf]
        %v6331 = vld [vmem:[%s6318 + $0x48] sm:$0xff]
        %v6332 = vld [vmem:[%s6318 + $0x50] sm:$0xf]
        %v6333 = vld [vmem:[%s6318 + $0x54] sm:$0xff]
        %v6334 = vld [vmem:[%s6318 + $0x5c] sm:$0xf]
        %v6335 = vld [vmem:[%s6318 + $0x60] sm:$0xff]
        %v6336 = vld [vmem:[%s6318 + $0x68] sm:$0xf]
        %v6337 = vld [vmem:[%s6318 + $0x6c] sm:$0xff]
        %v6338 = vld [vmem:[%s6318 + $0x74] sm:$0xf]
        %v6339 = vld [vmem:[%s6318 + $0x78] sm:$0xff]
        %v6340 = vld [vmem:[%s6318 + $0x80] sm:$0xf]
        %v6341 = vld [vmem:[%s6318 + $0x84] sm:$0xff]
        %v6342 = vld [vmem:[%s6318 + $0x8c] sm:$0xf]
        %v6343 = vld [vmem:[%s6318 + $0x90] sm:$0xff]
        %v6344 = vld [vmem:[%s6318 + $0x98] sm:$0xf]
        %v6345 = vld [vmem:[%s6318 + $0x9c] sm:$0xff]
        %v6346 = vld [vmem:[%s6318 + $0xa4] sm:$0xf]
        %v6347 = vld [vmem:[%s6318 + $0xa8] sm:$0xff]
        %v6348 = vld [vmem:[%s6318 + $0xb0] sm:$0xf]
        %v6349 = vld [vmem:[%s6318 + $0xb4] sm:$0xff]
        %v6350 = vld [vmem:[%s6318 + $0xbc] sm:$0xf]
        %v6351 = vld [vmem:[%s6318 + $0xc0] sm:$0xff]
        %v6352 = vld [vmem:[%s6318 + $0xc8] sm:$0xf]
        %v6353 = vld [vmem:[%s6318 + $0xcc] sm:$0xff]
        %v6354 = vld [vmem:[%s6318 + $0xd4] sm:$0xf]
        %v6355 = vld [vmem:[%s6318 + $0xd8] sm:$0xff]
        %v6356 = vld [vmem:[%s6318 + $0xe0] sm:$0xf]
        %v6357 = vld [vmem:[%s6318 + $0xe4] sm:$0xff]
        %v6358 = vld [vmem:[%s6318 + $0xec] sm:$0xf]
        %v6359 = vld [vmem:[%s6318 + $0xf0] sm:$0xff]
        %v6360 = vld [vmem:[%s6318 + $0xf8] sm:$0xf]
        %v6361 = vld [vmem:[%s6318 + $0xfc] sm:$0xff]
        %v6362 = vld [vmem:[%s6318 + $0x104] sm:$0xf]
        %v6363 = vld [vmem:[%s6318 + $0x108] sm:$0xff]
        %v6364 = vld [vmem:[%s6318 + $0x110] sm:$0xf]
        %v6365 = vld [vmem:[%s6318 + $0x114] sm:$0xff]
        %v6366 = vld [vmem:[%s6318 + $0x11c] sm:$0xf]
        %v6367 = vld [vmem:[%s6318 + $0x120] sm:$0xff]
        %v6368 = vld [vmem:[%s6318 + $0x128] sm:$0xf]
        %v6369 = vld [vmem:[%s6318 + $0x12c] sm:$0xff]
        %v6370 = vld [vmem:[%s6318 + $0x134] sm:$0xf]
        %v6371 = vld [vmem:[%s6318 + $0x138] sm:$0xff]
        %v6372 = vld [vmem:[%s6318 + $0x140] sm:$0xf]
        %v6373 = vld [vmem:[%s6318 + $0x144] sm:$0xff]
        %v6374 = vld [vmem:[%s6318 + $0x14c] sm:$0xf]
        %v6375 = vld [vmem:[%s6318 + $0x150] sm:$0xff]
        %v6376 = vld [vmem:[%s6318 + $0x158] sm:$0xf]
        %v6377 = vld [vmem:[%s6318 + $0x15c] sm:$0xff]
        %v6378 = vld [vmem:[%s6318 + $0x164] sm:$0xf]
        %v6379 = vld [vmem:[%s6318 + $0x168] sm:$0xff]
        %v6380 = vld [vmem:[%s6318 + $0x170] sm:$0xf]
        %v6381 = vld [vmem:[%s6318 + $0x174] sm:$0xff]
        %v6382 = vld [vmem:[%s6318 + $0x17c] sm:$0xf]
        %v6383 = vld [vmem:[%s6318 + $0x180] sm:$0xff]
        %v6384 = vld [vmem:[%s6318 + $0x188] sm:$0xf]
        %v6385 = vld [vmem:[%s6318 + $0x18c] sm:$0xff]
        %v6386 = vld [vmem:[%s6318 + $0x194] sm:$0xf]
        %v6387 = vld [vmem:[%s6318 + $0x198] sm:$0xff]
        %v6388 = vld [vmem:[%s6318 + $0x1a0] sm:$0xf]
        %v6389 = vld [vmem:[%s6318 + $0x1a4] sm:$0xff]
        %v6390 = vld [vmem:[%s6318 + $0x1ac] sm:$0xf]
        %v6391 = vld [vmem:[%s6318 + $0x1b0] sm:$0xff]
        %v6392 = vld [vmem:[%s6318 + $0x1b8] sm:$0xf]
        %v6393 = vld [vmem:[%s6318 + $0x1bc] sm:$0xff]
        %v6394 = vld [vmem:[%s6318 + $0x1c4] sm:$0xf]
        %v6395 = vld [vmem:[%s6318 + $0x1c8] sm:$0xff]
        %v6396 = vld [vmem:[%s6318 + $0x1d0] sm:$0xf]
        %v6397 = vld [vmem:[%s6318 + $0x1d4] sm:$0xff]
        %v6398 = vld [vmem:[%s6318 + $0x1dc] sm:$0xf]
        %v6399 = vld [vmem:[%s6318 + $0x1e0] sm:$0xff]
        %v6400 = vld [vmem:[%s6318 + $0x1e8] sm:$0xf]
        %v6401 = vld [vmem:[%s6318 + $0x1ec] sm:$0xff]
        %v6402 = vld [vmem:[%s6318 + $0x1f4] sm:$0xf]
        %v6403 = vld [vmem:[%s6318 + $0x1f8] sm:$0xff]
        %v6404 = vld [vmem:[%s6318 + $0x200] sm:$0xf]
        %v6405 = vld [vmem:[%s6318 + $0x204] sm:$0xff]
        %v6406 = vld [vmem:[%s6318 + $0x20c] sm:$0xf]
        %v6407 = vld [vmem:[%s6318 + $0x210] sm:$0xff]
        %v6408 = vld [vmem:[%s6318 + $0x218] sm:$0xf]
        %v6409 = vld [vmem:[%s6318 + $0x21c] sm:$0xff]
        %v6410 = vld [vmem:[%s6318 + $0x224] sm:$0xf]
        %v6411 = vld [vmem:[%s6318 + $0x228] sm:$0xff]
        %v6412 = vld [vmem:[%s6318 + $0x230] sm:$0xf]
        %v6413 = vld [vmem:[%s6318 + $0x234] sm:$0xff]
        %v6414 = vld [vmem:[%s6318 + $0x23c] sm:$0xf]
        %v6415 = vld [vmem:[%s6318 + $0x240] sm:$0xff]
        %v6416 = vld [vmem:[%s6318 + $0x248] sm:$0xf]
        %v6417 = vld [vmem:[%s6318 + $0x24c] sm:$0xff]
        %v6418 = vld [vmem:[%s6318 + $0x254] sm:$0xf]
        %v6419 = vld [vmem:[%s6318 + $0x258] sm:$0xff]
        %v6420 = vld [vmem:[%s6318 + $0x260] sm:$0xf]
        %v6421 = vld [vmem:[%s6318 + $0x264] sm:$0xff]
        %v6422 = vld [vmem:[%s6318 + $0x26c] sm:$0xf]
        %v6423 = vld [vmem:[%s6318 + $0x270] sm:$0xff]
        %v6424 = vld [vmem:[%s6318 + $0x278] sm:$0xf]
        %v6425 = vld [vmem:[%s6318 + $0x27c] sm:$0xff]
        %v6426 = vld [vmem:[%s6318 + $0x284] sm:$0xf]
        %v6427 = vld [vmem:[%s6318 + $0x288] sm:$0xff]
        %v6428 = vld [vmem:[%s6318 + $0x290] sm:$0xf]
        %v6429 = vld [vmem:[%s6318 + $0x294] sm:$0xff]
        %v6430 = vld [vmem:[%s6318 + $0x29c] sm:$0xf]
        %v6431 = vld [vmem:[%s6318 + $0x2a0] sm:$0xff]
        %v6432 = vld [vmem:[%s6318 + $0x2a8] sm:$0xf]
        %v6433 = vld [vmem:[%s6318 + $0x2ac] sm:$0xff]
        %v6434 = vld [vmem:[%s6318 + $0x2b4] sm:$0xf]
        %v6435 = vld [vmem:[%s6318 + $0x2b8] sm:$0xff]
        %v6436 = vld [vmem:[%s6318 + $0x2c0] sm:$0xf]
        %v6437 = vld [vmem:[%s6318 + $0x2c4] sm:$0xff]
        %v6438 = vld [vmem:[%s6318 + $0x2cc] sm:$0xf]
        %v6439 = vld [vmem:[%s6318 + $0x2d0] sm:$0xff]
        %v6440 = vld [vmem:[%s6318 + $0x2d8] sm:$0xf]
        %v6441 = vld [vmem:[%s6318 + $0x2dc] sm:$0xff]
        %v6442 = vld [vmem:[%s6318 + $0x2e4] sm:$0xf]
        %v6443 = vld [vmem:[%s6318 + $0x2e8] sm:$0xff]
        %v6444 = vld [vmem:[%s6318 + $0x2f0] sm:$0xf]
        %v6445 = vld [vmem:[%s6318 + $0x2f4] sm:$0xff]
        %v6446 = vld [vmem:[%s6318 + $0x2fc] sm:$0xf]
        %v6447 = vld [vmem:[%s6318 + $0x300] sm:$0xff]
        %v6448 = vld [vmem:[%s6318 + $0x308] sm:$0xf]
        %v6449 = vld [vmem:[%s6318 + $0x30c] sm:$0xff]
        %v6450 = vld [vmem:[%s6318 + $0x314] sm:$0xf]
        %v6451 = vld [vmem:[%s6318 + $0x318] sm:$0xff]
        %v6452 = vld [vmem:[%s6318 + $0x320] sm:$0xf]
        %v6453 = vld [vmem:[%s6318 + $0x324] sm:$0xff]
        %v6454 = vld [vmem:[%s6318 + $0x32c] sm:$0xf]
        %v6455 = vld [vmem:[%s6318 + $0x330] sm:$0xff]
        %v6456 = vld [vmem:[%s6318 + $0x338] sm:$0xf]
        %v6457 = vld [vmem:[%s6318 + $0x33c] sm:$0xff]
        %v6458 = vld [vmem:[%s6318 + $0x344] sm:$0xf]
        %v6459 = vld [vmem:[%s6318 + $0x348] sm:$0xff]
        %v6460 = vld [vmem:[%s6318 + $0x350] sm:$0xf]
        %v6461 = vld [vmem:[%s6318 + $0x354] sm:$0xff]
        %v6462 = vld [vmem:[%s6318 + $0x35c] sm:$0xf]
        %v6463 = vld [vmem:[%s6318 + $0x360] sm:$0xff]
        %v6464 = vld [vmem:[%s6318 + $0x368] sm:$0xf]
        %v6465 = vld [vmem:[%s6318 + $0x36c] sm:$0xff]
        %v6466 = vld [vmem:[%s6318 + $0x374] sm:$0xf]
        %v6467 = vld [vmem:[%s6318 + $0x378] sm:$0xff]
        %v6468 = vld [vmem:[%s6318 + $0x380] sm:$0xf]
        %v6469 = vld [vmem:[%s6318 + $0x384] sm:$0xff]
        %v6470 = vld [vmem:[%s6318 + $0x38c] sm:$0xf]
        %v6471 = vld [vmem:[%s6318 + $0x390] sm:$0xff]
        %v6472 = vld [vmem:[%s6318 + $0x398] sm:$0xf]
        %v6473 = vld [vmem:[%s6318 + $0x39c] sm:$0xff]
        %v6474 = vld [vmem:[%s6318 + $0x3a4] sm:$0xf]
        %v6475 = vld [vmem:[%s6318 + $0x3a8] sm:$0xff]
        %v6476 = vld [vmem:[%s6318 + $0x3b0] sm:$0xf]
        %v6477 = vld [vmem:[%s6318 + $0x3b4] sm:$0xff]
        %v6478 = vld [vmem:[%s6318 + $0x3bc] sm:$0xf]
        %v6479 = vld [vmem:[%s6318 + $0x3c0] sm:$0xff]
        %v6480 = vld [vmem:[%s6318 + $0x3c8] sm:$0xf]
        %v6481 = vld [vmem:[%s6318 + $0x3cc] sm:$0xff]
        %v6482 = vld [vmem:[%s6318 + $0x3d4] sm:$0xf]
        %v6483 = vld [vmem:[%s6318 + $0x3d8] sm:$0xff]
        %v6484 = vld [vmem:[%s6318 + $0x3e0] sm:$0xf]
        %v6485 = vld [vmem:[%s6318 + $0x3e4] sm:$0xff]
        %v6486 = vld [vmem:[%s6318 + $0x3ec] sm:$0xf]
        %v6487 = vld [vmem:[%s6318 + $0x3f0] sm:$0xff]
        %v6488 = vld [vmem:[%s6318 + $0x3f8] sm:$0xf]
        %v6489 = vld [vmem:[%s6318 + $0x3fc] sm:$0xff]
        %v6490 = vld [vmem:[%s6318 + $0x404] sm:$0xf]
        %v6491 = vld [vmem:[%s6318 + $0x408] sm:$0xff]
        %v6492 = vld [vmem:[%s6318 + $0x410] sm:$0xf]
        %v6493 = vld [vmem:[%s6318 + $0x414] sm:$0xff]
        %v6494 = vld [vmem:[%s6318 + $0x41c] sm:$0xf]
        %v6495 = vld [vmem:[%s6318 + $0x420] sm:$0xff]
        %v6496 = vld [vmem:[%s6318 + $0x428] sm:$0xf]
        %v6497 = vld [vmem:[%s6318 + $0x42c] sm:$0xff]
        %v6498 = vld [vmem:[%s6318 + $0x434] sm:$0xf]
        %v6499 = vld [vmem:[%s6318 + $0x438] sm:$0xff]
        %v6500 = vld [vmem:[%s6318 + $0x440] sm:$0xf]
        %v6501 = vld [vmem:[%s6318 + $0x444] sm:$0xff]
        %v6502 = vld [vmem:[%s6318 + $0x44c] sm:$0xf]
        %v6503 = vld [vmem:[%s6318 + $0x450] sm:$0xff]
        %v6504 = vld [vmem:[%s6318 + $0x458] sm:$0xf]
        %v6505 = vld [vmem:[%s6318 + $0x45c] sm:$0xff]
        %v6506 = vld [vmem:[%s6318 + $0x464] sm:$0xf]
        %v6507 = vld [vmem:[%s6318 + $0x468] sm:$0xff]
        %v6508 = vld [vmem:[%s6318 + $0x470] sm:$0xf]
        %v6509 = vld [vmem:[%s6318 + $0x474] sm:$0xff]
        %v6510 = vld [vmem:[%s6318 + $0x47c] sm:$0xf]
        %v6511 = vld [vmem:[%s6318 + $0x480] sm:$0xff]
        %v6512 = vld [vmem:[%s6318 + $0x488] sm:$0xf]
        %v6513 = vld [vmem:[%s6318 + $0x48c] sm:$0xff]
        %v6514 = vld [vmem:[%s6318 + $0x494] sm:$0xf]
        %v6515 = vld [vmem:[%s6318 + $0x498] sm:$0xff]
        %v6516 = vld [vmem:[%s6318 + $0x4a0] sm:$0xf]
        %v6517 = vld [vmem:[%s6318 + $0x4a4] sm:$0xff]
        %v6518 = vld [vmem:[%s6318 + $0x4ac] sm:$0xf]
        %v6519 = vld [vmem:[%s6318 + $0x4b0] sm:$0xff]
        %v6520 = vld [vmem:[%s6318 + $0x4b8] sm:$0xf]
        %v6521 = vld [vmem:[%s6318 + $0x4bc] sm:$0xff]
        %v6522 = vld [vmem:[%s6318 + $0x4c4] sm:$0xf]
        %v6523 = vld [vmem:[%s6318 + $0x4c8] sm:$0xff]
        %v6524 = vld [vmem:[%s6318 + $0x4d0] sm:$0xf]
        %v6525 = vld [vmem:[%s6318 + $0x4d4] sm:$0xff]
        %v6526 = vld [vmem:[%s6318 + $0x4dc] sm:$0xf]
        %v6527 = vld [vmem:[%s6318 + $0x4e0] sm:$0xff]
        %v6528 = vld [vmem:[%s6318 + $0x4e8] sm:$0xf]
        %v6529 = vld [vmem:[%s6318 + $0x4ec] sm:$0xff]
        %v6530 = vld [vmem:[%s6318 + $0x4f4] sm:$0xf]
        %v6531 = vld [vmem:[%s6318 + $0x4f8] sm:$0xff]
        %v6532 = vld [vmem:[%s6318 + $0x500] sm:$0xf]
        %v6533 = vld [vmem:[%s6318 + $0x504] sm:$0xff]
        %v6534 = vld [vmem:[%s6318 + $0x50c] sm:$0xf]
        %v6535 = vld [vmem:[%s6318 + $0x510] sm:$0xff]
        %v6536 = vld [vmem:[%s6318 + $0x518] sm:$0xf]
        %v6537 = vld [vmem:[%s6318 + $0x51c] sm:$0xff]
        %v6538 = vld [vmem:[%s6318 + $0x524] sm:$0xf]
        %v6539 = vld [vmem:[%s6318 + $0x528] sm:$0xff]
        %v6540 = vld [vmem:[%s6318 + $0x530] sm:$0xf]
        %v6541 = vld [vmem:[%s6318 + $0x534] sm:$0xff]
        %v6542 = vld [vmem:[%s6318 + $0x53c] sm:$0xf]
        %v6543 = vld [vmem:[%s6318 + $0x540] sm:$0xff]
        %v6544 = vld [vmem:[%s6318 + $0x548] sm:$0xf]
        %v6545 = vld [vmem:[%s6318 + $0x54c] sm:$0xff]
        %v6546 = vld [vmem:[%s6318 + $0x554] sm:$0xf]
        %v6547 = vld [vmem:[%s6318 + $0x558] sm:$0xff]
        %v6548 = vld [vmem:[%s6318 + $0x560] sm:$0xf]
        %v6549 = vld [vmem:[%s6318 + $0x564] sm:$0xff]
        %v6550 = vld [vmem:[%s6318 + $0x56c] sm:$0xf]
        %v6551 = vld [vmem:[%s6318 + $0x570] sm:$0xff]
        %v6552 = vld [vmem:[%s6318 + $0x578] sm:$0xf]
        %v6553 = vld [vmem:[%s6318 + $0x57c] sm:$0xff]
        %v6554 = vld [vmem:[%s6318 + $0x584] sm:$0xf]
        %v6555 = vld [vmem:[%s6318 + $0x588] sm:$0xff]
        %v6556 = vld [vmem:[%s6318 + $0x590] sm:$0xf]
        %v6557 = vld [vmem:[%s6318 + $0x594] sm:$0xff]
        %v6558 = vld [vmem:[%s6318 + $0x59c] sm:$0xf]
        %v6559 = vld [vmem:[%s6318 + $0x5a0] sm:$0xff]
        %v6560 = vld [vmem:[%s6318 + $0x5a8] sm:$0xf]
        %v6561 = vld [vmem:[%s6318 + $0x5ac] sm:$0xff]
        %v6562 = vld [vmem:[%s6318 + $0x5b4] sm:$0xf]
        %v6563 = vld [vmem:[%s6318 + $0x5b8] sm:$0xff]
        %v6564 = vld [vmem:[%s6318 + $0x5c0] sm:$0xf]
        %v6565 = vld [vmem:[%s6318 + $0x5c4] sm:$0xff]
        %v6566 = vld [vmem:[%s6318 + $0x5cc] sm:$0xf]
        %v6567 = vld [vmem:[%s6318 + $0x5d0] sm:$0xff]
        %v6568 = vld [vmem:[%s6318 + $0x5d8] sm:$0xf]
        %v6569 = vld [vmem:[%s6318 + $0x5dc] sm:$0xff]
        %v6570 = vld [vmem:[%s6318 + $0x5e4] sm:$0xf]
        %v6571 = vld [vmem:[%s6318 + $0x5e8] sm:$0xff]
        %v6572 = vld [vmem:[%s6318 + $0x5f0] sm:$0xf]
        %v6573 = vld [vmem:[%s6318 + $0x5f4] sm:$0xff]
        %v6574 = vld [vmem:[%s6318 + $0x5fc] sm:$0xf]
        %v6575 = vld [vmem:[%s6318 + $0x600] sm:$0xff]
        %v6576 = vld [vmem:[%s6318 + $0x608] sm:$0xf]
        %v6577 = vld [vmem:[%s6318 + $0x60c] sm:$0xff]
        %v6578 = vld [vmem:[%s6318 + $0x614] sm:$0xf]
        %v6579 = vld [vmem:[%s6318 + $0x618] sm:$0xff]
        %v6580 = vld [vmem:[%s6318 + $0x620] sm:$0xf]
        %v6581 = vld [vmem:[%s6318 + $0x624] sm:$0xff]
        %v6582 = vld [vmem:[%s6318 + $0x62c] sm:$0xf]
        %v6583 = vld [vmem:[%s6318 + $0x630] sm:$0xff]
        %v6584 = vld [vmem:[%s6318 + $0x638] sm:$0xf]
        %v6585 = vld [vmem:[%s6318 + $0x63c] sm:$0xff]
        %v6586 = vld [vmem:[%s6318 + $0x644] sm:$0xf]
        %v6587 = vld [vmem:[%s6318 + $0x648] sm:$0xff]
        %v6588 = vld [vmem:[%s6318 + $0x650] sm:$0xf]
        %v6589 = vld [vmem:[%s6318 + $0x654] sm:$0xff]
        %v6590 = vld [vmem:[%s6318 + $0x65c] sm:$0xf]
        %v6591 = vld [vmem:[%s6318 + $0x660] sm:$0xff]
        %v6592 = vld [vmem:[%s6318 + $0x668] sm:$0xf]
        %v6593 = vld [vmem:[%s6318 + $0x66c] sm:$0xff]
        %v6594 = vld [vmem:[%s6318 + $0x674] sm:$0xf]
        %v6595 = vld [vmem:[%s6318 + $0x678] sm:$0xff]
        %v6596 = vld [vmem:[%s6318 + $0x680] sm:$0xf]
        %v6597 = vld [vmem:[%s6318 + $0x684] sm:$0xff]
        %v6598 = vld [vmem:[%s6318 + $0x68c] sm:$0xf]
        %v6599 = vld [vmem:[%s6318 + $0x690] sm:$0xff]
        %v6600 = vld [vmem:[%s6318 + $0x698] sm:$0xf]
        %v6601 = vld [vmem:[%s6318 + $0x69c] sm:$0xff]
        %v6602 = vld [vmem:[%s6318 + $0x6a4] sm:$0xf]
        %v6603 = vld [vmem:[%s6318 + $0x6a8] sm:$0xff]
        %v6604 = vld [vmem:[%s6318 + $0x6b0] sm:$0xf]
        %v6605 = vld [vmem:[%s6318 + $0x6b4] sm:$0xff]
        %v6606 = vld [vmem:[%s6318 + $0x6bc] sm:$0xf]
        %v6607 = vld [vmem:[%s6318 + $0x6c0] sm:$0xff]
        %v6608 = vld [vmem:[%s6318 + $0x6c8] sm:$0xf]
        %v6609 = vld [vmem:[%s6318 + $0x6cc] sm:$0xff]
        %v6610 = vld [vmem:[%s6318 + $0x6d4] sm:$0xf]
        %v6611 = vld [vmem:[%s6318 + $0x6d8] sm:$0xff]
        %v6612 = vld [vmem:[%s6318 + $0x6e0] sm:$0xf]
        %v6613 = vld [vmem:[%s6318 + $0x6e4] sm:$0xff]
        %v6614 = vld [vmem:[%s6318 + $0x6ec] sm:$0xf]
        %v6615 = vld [vmem:[%s6318 + $0x6f0] sm:$0xff]
        %v6616 = vld [vmem:[%s6318 + $0x6f8] sm:$0xf]
        %v6617 = vld [vmem:[%s6318 + $0x6fc] sm:$0xff]
        %v6618 = vld [vmem:[%s6318 + $0x704] sm:$0xf]
        %v6619 = vld [vmem:[%s6318 + $0x708] sm:$0xff]
        %v6620 = vld [vmem:[%s6318 + $0x710] sm:$0xf]
        %v6621 = vld [vmem:[%s6318 + $0x714] sm:$0xff]
        %v6622 = vld [vmem:[%s6318 + $0x71c] sm:$0xf]
        %v6623 = vld [vmem:[%s6318 + $0x720] sm:$0xff]
        %v6624 = vld [vmem:[%s6318 + $0x728] sm:$0xf]
        %v6625 = vld [vmem:[%s6318 + $0x72c] sm:$0xff]
        %v6626 = vld [vmem:[%s6318 + $0x734] sm:$0xf]
        %v6627 = vld [vmem:[%s6318 + $0x738] sm:$0xff]
        %v6628 = vld [vmem:[%s6318 + $0x740] sm:$0xf]
        %v6629 = vld [vmem:[%s6318 + $0x744] sm:$0xff]
        %v6630 = vld [vmem:[%s6318 + $0x74c] sm:$0xf]
        %v6631 = vld [vmem:[%s6318 + $0x750] sm:$0xff]
        %v6632 = vld [vmem:[%s6318 + $0x758] sm:$0xf]
        %v6633 = vld [vmem:[%s6318 + $0x75c] sm:$0xff]
        %v6634 = vld [vmem:[%s6318 + $0x764] sm:$0xf]
        %v6635 = vld [vmem:[%s6318 + $0x768] sm:$0xff]
        %v6636 = vld [vmem:[%s6318 + $0x770] sm:$0xf]
        %v6637 = vld [vmem:[%s6318 + $0x774] sm:$0xff]
        %v6638 = vld [vmem:[%s6318 + $0x77c] sm:$0xf]
        %v6639 = vld [vmem:[%s6318 + $0x780] sm:$0xff]
        %v6640 = vld [vmem:[%s6318 + $0x788] sm:$0xf]
        %v6641 = vld [vmem:[%s6318 + $0x78c] sm:$0xff]
        %v6642 = vld [vmem:[%s6318 + $0x794] sm:$0xf]
        %v6643 = vld [vmem:[%s6318 + $0x798] sm:$0xff]
        %v6644 = vld [vmem:[%s6318 + $0x7a0] sm:$0xf]
        %v6645 = vld [vmem:[%s6318 + $0x7a4] sm:$0xff]
        %v6646 = vld [vmem:[%s6318 + $0x7ac] sm:$0xf]
        %v6647 = vld [vmem:[%s6318 + $0x7b0] sm:$0xff]
        %v6648 = vld [vmem:[%s6318 + $0x7b8] sm:$0xf]
        %v6649 = vld [vmem:[%s6318 + $0x7bc] sm:$0xff]
        %v6650 = vld [vmem:[%s6318 + $0x7c4] sm:$0xf]
        %v6651 = vld [vmem:[%s6318 + $0x7c8] sm:$0xff]
        %v6652 = vld [vmem:[%s6318 + $0x7d0] sm:$0xf]
        %v6653 = vld [vmem:[%s6318 + $0x7d4] sm:$0xff]
        %v6654 = vld [vmem:[%s6318 + $0x7dc] sm:$0xf]
        %v6655 = vld [vmem:[%s6318 + $0x7e0] sm:$0xff]
        %v6656 = vld [vmem:[%s6318 + $0x7e8] sm:$0xf]
        %v6657 = vld [vmem:[%s6318 + $0x7ec] sm:$0xff]
        %v6658 = vld [vmem:[%s6318 + $0x7f4] sm:$0xf]
        %v6659 = vld [vmem:[%s6318 + $0x7f8] sm:$0xff]
        %v6660 = vld [vmem:[%s6318 + $0x800] sm:$0xf]
        %v6661 = vld [vmem:[%s6318 + $0x804] sm:$0xff]
        %v6662 = vld [vmem:[%s6318 + $0x80c] sm:$0xf]
        %v6663 = vld [vmem:[%s6318 + $0x810] sm:$0xff]
        %v6664 = vld [vmem:[%s6318 + $0x818] sm:$0xf]
        %v6665 = vld [vmem:[%s6318 + $0x81c] sm:$0xff]
        %v6666 = vld [vmem:[%s6318 + $0x824] sm:$0xf]
        %v6667 = vld [vmem:[%s6318 + $0x828] sm:$0xff]
        %v6668 = vld [vmem:[%s6318 + $0x830] sm:$0xf]
        %v6669 = vld [vmem:[%s6318 + $0x834] sm:$0xff]
        %v6670 = vld [vmem:[%s6318 + $0x83c] sm:$0xf]
        %v6671 = vld [vmem:[%s6318 + $0x840] sm:$0xff]
        %v6672 = vld [vmem:[%s6318 + $0x848] sm:$0xf]
        %v6673 = vld [vmem:[%s6318 + $0x84c] sm:$0xff]
        %v6674 = vld [vmem:[%s6318 + $0x854] sm:$0xf]
        %v6675 = vld [vmem:[%s6318 + $0x858] sm:$0xff]
        %v6676 = vld [vmem:[%s6318 + $0x860] sm:$0xf]
        %v6677 = vld [vmem:[%s6318 + $0x864] sm:$0xff]
        %v6678 = vld [vmem:[%s6318 + $0x86c] sm:$0xf]
        %v6679 = vld [vmem:[%s6318 + $0x870] sm:$0xff]
        %v6680 = vld [vmem:[%s6318 + $0x878] sm:$0xf]
        %v6681 = vld [vmem:[%s6318 + $0x87c] sm:$0xff]
        %v6682 = vld [vmem:[%s6318 + $0x884] sm:$0xf]
        %v6683 = vld [vmem:[%s6318 + $0x888] sm:$0xff]
        %v6684 = vld [vmem:[%s6318 + $0x890] sm:$0xf]
        %v6685 = vld [vmem:[%s6318 + $0x894] sm:$0xff]
        %v6686 = vld [vmem:[%s6318 + $0x89c] sm:$0xf]
        %v6687 = vld [vmem:[%s6318 + $0x8a0] sm:$0xff]
        %v6688 = vld [vmem:[%s6318 + $0x8a8] sm:$0xf]
        %v6689 = vld [vmem:[%s6318 + $0x8ac] sm:$0xff]
        %v6690 = vld [vmem:[%s6318 + $0x8b4] sm:$0xf]
        %v6691 = vld [vmem:[%s6318 + $0x8b8] sm:$0xff]
        %v6692 = vld [vmem:[%s6318 + $0x8c0] sm:$0xf]
        %v6693 = vld [vmem:[%s6318 + $0x8c4] sm:$0xff]
        %v6694 = vld [vmem:[%s6318 + $0x8cc] sm:$0xf]
        %v6695 = vld [vmem:[%s6318 + $0x8d0] sm:$0xff]
        %v6696 = vld [vmem:[%s6318 + $0x8d8] sm:$0xf]
        %v6697 = vld [vmem:[%s6318 + $0x8dc] sm:$0xff]
        %v6698 = vld [vmem:[%s6318 + $0x8e4] sm:$0xf]
        %v6699 = vld [vmem:[%s6318 + $0x8e8] sm:$0xff]
        %v6700 = vld [vmem:[%s6318 + $0x8f0] sm:$0xf]
        %v6701 = vld [vmem:[%s6318 + $0x8f4] sm:$0xff]
        %v6702 = vld [vmem:[%s6318 + $0x8fc] sm:$0xf]
        %s6703 = scalar_lea.vmem [#allocation24], %s862
        %v6704 = vld [vmem:[%s6703] sm:$0x7]
        %v6706 = vperm.slane %v6704, 0
        %v6707 = vperm.slane %v6704, 1
        %v6708 = vperm.slane %v6704, 2
        %v7096 = vunpack.c.l.b16 %v6319
        %v7097 = vunpack.c.h.b16 %v6319
        %v7098 = vunpack.c.l.b16 %v6320
        %v7099 = vunpack.c.l.b16 %v6321
        %v7100 = vunpack.c.h.b16 %v6321
        %v7101 = vunpack.c.l.b16 %v6322
        %v7102 = vunpack.c.l.b16 %v6323
        %v7103 = vunpack.c.h.b16 %v6323
        %v7104 = vunpack.c.l.b16 %v6324
        %v7105 = vunpack.c.l.b16 %v6325
        %v7106 = vunpack.c.h.b16 %v6325
        %v7107 = vunpack.c.l.b16 %v6326
        %v7108 = vunpack.c.l.b16 %v6327
        %v7109 = vunpack.c.h.b16 %v6327
        %v7110 = vunpack.c.l.b16 %v6328
        %v7111 = vunpack.c.l.b16 %v6329
        %v7112 = vunpack.c.h.b16 %v6329
        %v7113 = vunpack.c.l.b16 %v6330
        %v7114 = vunpack.c.l.b16 %v6331
        %v7115 = vunpack.c.h.b16 %v6331
        %v7116 = vunpack.c.l.b16 %v6332
        %v7117 = vunpack.c.l.b16 %v6333
        %v7118 = vunpack.c.h.b16 %v6333
        %v7119 = vunpack.c.l.b16 %v6334
        %v7120 = vunpack.c.l.b16 %v6335
        %v7121 = vunpack.c.h.b16 %v6335
        %v7122 = vunpack.c.l.b16 %v6336
        %v7123 = vunpack.c.l.b16 %v6337
        %v7124 = vunpack.c.h.b16 %v6337
        %v7125 = vunpack.c.l.b16 %v6338
        %v7126 = vunpack.c.l.b16 %v6339
        %v7127 = vunpack.c.h.b16 %v6339
        %v7128 = vunpack.c.l.b16 %v6340
        %v7129 = vunpack.c.l.b16 %v6341
        %v7130 = vunpack.c.h.b16 %v6341
        %v7131 = vunpack.c.l.b16 %v6342
        %v7132 = vunpack.c.l.b16 %v6343
        %v7133 = vunpack.c.h.b16 %v6343
        %v7134 = vunpack.c.l.b16 %v6344
        %v7135 = vunpack.c.l.b16 %v6345
        %v7136 = vunpack.c.h.b16 %v6345
        %v7137 = vunpack.c.l.b16 %v6346
        %v7138 = vunpack.c.l.b16 %v6347
        %v7139 = vunpack.c.h.b16 %v6347
        %v7140 = vunpack.c.l.b16 %v6348
        %v7141 = vunpack.c.l.b16 %v6349
        %v7142 = vunpack.c.h.b16 %v6349
        %v7143 = vunpack.c.l.b16 %v6350
        %v7144 = vunpack.c.l.b16 %v6351
        %v7145 = vunpack.c.h.b16 %v6351
        %v7146 = vunpack.c.l.b16 %v6352
        %v7147 = vunpack.c.l.b16 %v6353
        %v7148 = vunpack.c.h.b16 %v6353
        %v7149 = vunpack.c.l.b16 %v6354
        %v7150 = vunpack.c.l.b16 %v6355
        %v7151 = vunpack.c.h.b16 %v6355
        %v7152 = vunpack.c.l.b16 %v6356
        %v7153 = vunpack.c.l.b16 %v6357
        %v7154 = vunpack.c.h.b16 %v6357
        %v7155 = vunpack.c.l.b16 %v6358
        %v7156 = vunpack.c.l.b16 %v6359
        %v7157 = vunpack.c.h.b16 %v6359
        %v7158 = vunpack.c.l.b16 %v6360
        %v7159 = vunpack.c.l.b16 %v6361
        %v7160 = vunpack.c.h.b16 %v6361
        %v7161 = vunpack.c.l.b16 %v6362
        %v7162 = vunpack.c.l.b16 %v6363
        %v7163 = vunpack.c.h.b16 %v6363
        %v7164 = vunpack.c.l.b16 %v6364
        %v7165 = vunpack.c.l.b16 %v6365
        %v7166 = vunpack.c.h.b16 %v6365
        %v7167 = vunpack.c.l.b16 %v6366
        %v7168 = vunpack.c.l.b16 %v6367
        %v7169 = vunpack.c.h.b16 %v6367
        %v7170 = vunpack.c.l.b16 %v6368
        %v7171 = vunpack.c.l.b16 %v6369
        %v7172 = vunpack.c.h.b16 %v6369
        %v7173 = vunpack.c.l.b16 %v6370
        %v7174 = vunpack.c.l.b16 %v6371
        %v7175 = vunpack.c.h.b16 %v6371
        %v7176 = vunpack.c.l.b16 %v6372
        %v7177 = vunpack.c.l.b16 %v6373
        %v7178 = vunpack.c.h.b16 %v6373
        %v7179 = vunpack.c.l.b16 %v6374
        %v7180 = vunpack.c.l.b16 %v6375
        %v7181 = vunpack.c.h.b16 %v6375
        %v7182 = vunpack.c.l.b16 %v6376
        %v7183 = vunpack.c.l.b16 %v6377
        %v7184 = vunpack.c.h.b16 %v6377
        %v7185 = vunpack.c.l.b16 %v6378
        %v7186 = vunpack.c.l.b16 %v6379
        %v7187 = vunpack.c.h.b16 %v6379
        %v7188 = vunpack.c.l.b16 %v6380
        %v7189 = vunpack.c.l.b16 %v6381
        %v7190 = vunpack.c.h.b16 %v6381
        %v7191 = vunpack.c.l.b16 %v6382
        %v7192 = vunpack.c.l.b16 %v6383
        %v7193 = vunpack.c.h.b16 %v6383
        %v7194 = vunpack.c.l.b16 %v6384
        %v7195 = vunpack.c.l.b16 %v6385
        %v7196 = vunpack.c.h.b16 %v6385
        %v7197 = vunpack.c.l.b16 %v6386
        %v7198 = vunpack.c.l.b16 %v6387
        %v7199 = vunpack.c.h.b16 %v6387
        %v7200 = vunpack.c.l.b16 %v6388
        %v7201 = vunpack.c.l.b16 %v6389
        %v7202 = vunpack.c.h.b16 %v6389
        %v7203 = vunpack.c.l.b16 %v6390
        %v7204 = vunpack.c.l.b16 %v6391
        %v7205 = vunpack.c.h.b16 %v6391
        %v7206 = vunpack.c.l.b16 %v6392
        %v7207 = vunpack.c.l.b16 %v6393
        %v7208 = vunpack.c.h.b16 %v6393
        %v7209 = vunpack.c.l.b16 %v6394
        %v7210 = vunpack.c.l.b16 %v6395
        %v7211 = vunpack.c.h.b16 %v6395
        %v7212 = vunpack.c.l.b16 %v6396
        %v7213 = vunpack.c.l.b16 %v6397
        %v7214 = vunpack.c.h.b16 %v6397
        %v7215 = vunpack.c.l.b16 %v6398
        %v7216 = vunpack.c.l.b16 %v6399
        %v7217 = vunpack.c.h.b16 %v6399
        %v7218 = vunpack.c.l.b16 %v6400
        %v7219 = vunpack.c.l.b16 %v6401
        %v7220 = vunpack.c.h.b16 %v6401
        %v7221 = vunpack.c.l.b16 %v6402
        %v7222 = vunpack.c.l.b16 %v6403
        %v7223 = vunpack.c.h.b16 %v6403
        %v7224 = vunpack.c.l.b16 %v6404
        %v7225 = vunpack.c.l.b16 %v6405
        %v7226 = vunpack.c.h.b16 %v6405
        %v7227 = vunpack.c.l.b16 %v6406
        %v7228 = vunpack.c.l.b16 %v6407
        %v7229 = vunpack.c.h.b16 %v6407
        %v7230 = vunpack.c.l.b16 %v6408
        %v7231 = vunpack.c.l.b16 %v6409
        %v7232 = vunpack.c.h.b16 %v6409
        %v7233 = vunpack.c.l.b16 %v6410
        %v7234 = vunpack.c.l.b16 %v6411
        %v7235 = vunpack.c.h.b16 %v6411
        %v7236 = vunpack.c.l.b16 %v6412
        %v7237 = vunpack.c.l.b16 %v6413
        %v7238 = vunpack.c.h.b16 %v6413
        %v7239 = vunpack.c.l.b16 %v6414
        %v7240 = vunpack.c.l.b16 %v6415
        %v7241 = vunpack.c.h.b16 %v6415
        %v7242 = vunpack.c.l.b16 %v6416
        %v7243 = vunpack.c.l.b16 %v6417
        %v7244 = vunpack.c.h.b16 %v6417
        %v7245 = vunpack.c.l.b16 %v6418
        %v7246 = vunpack.c.l.b16 %v6419
        %v7247 = vunpack.c.h.b16 %v6419
        %v7248 = vunpack.c.l.b16 %v6420
        %v7249 = vunpack.c.l.b16 %v6421
        %v7250 = vunpack.c.h.b16 %v6421
        %v7251 = vunpack.c.l.b16 %v6422
        %v7252 = vunpack.c.l.b16 %v6423
        %v7253 = vunpack.c.h.b16 %v6423
        %v7254 = vunpack.c.l.b16 %v6424
        %v7255 = vunpack.c.l.b16 %v6425
        %v7256 = vunpack.c.h.b16 %v6425
        %v7257 = vunpack.c.l.b16 %v6426
        %v7258 = vunpack.c.l.b16 %v6427
        %v7259 = vunpack.c.h.b16 %v6427
        %v7260 = vunpack.c.l.b16 %v6428
        %v7261 = vunpack.c.l.b16 %v6429
        %v7262 = vunpack.c.h.b16 %v6429
        %v7263 = vunpack.c.l.b16 %v6430
        %v7264 = vunpack.c.l.b16 %v6431
        %v7265 = vunpack.c.h.b16 %v6431
        %v7266 = vunpack.c.l.b16 %v6432
        %v7267 = vunpack.c.l.b16 %v6433
        %v7268 = vunpack.c.h.b16 %v6433
        %v7269 = vunpack.c.l.b16 %v6434
        %v7270 = vunpack.c.l.b16 %v6435
        %v7271 = vunpack.c.h.b16 %v6435
        %v7272 = vunpack.c.l.b16 %v6436
        %v7273 = vunpack.c.l.b16 %v6437
        %v7274 = vunpack.c.h.b16 %v6437
        %v7275 = vunpack.c.l.b16 %v6438
        %v7276 = vunpack.c.l.b16 %v6439
        %v7277 = vunpack.c.h.b16 %v6439
        %v7278 = vunpack.c.l.b16 %v6440
        %v7279 = vunpack.c.l.b16 %v6441
        %v7280 = vunpack.c.h.b16 %v6441
        %v7281 = vunpack.c.l.b16 %v6442
        %v7282 = vunpack.c.l.b16 %v6443
        %v7283 = vunpack.c.h.b16 %v6443
        %v7284 = vunpack.c.l.b16 %v6444
        %v7285 = vunpack.c.l.b16 %v6445
        %v7286 = vunpack.c.h.b16 %v6445
        %v7287 = vunpack.c.l.b16 %v6446
        %v7288 = vunpack.c.l.b16 %v6447
        %v7289 = vunpack.c.h.b16 %v6447
        %v7290 = vunpack.c.l.b16 %v6448
        %v7291 = vunpack.c.l.b16 %v6449
        %v7292 = vunpack.c.h.b16 %v6449
        %v7293 = vunpack.c.l.b16 %v6450
        %v7294 = vunpack.c.l.b16 %v6451
        %v7295 = vunpack.c.h.b16 %v6451
        %v7296 = vunpack.c.l.b16 %v6452
        %v7297 = vunpack.c.l.b16 %v6453
        %v7298 = vunpack.c.h.b16 %v6453
        %v7299 = vunpack.c.l.b16 %v6454
        %v7300 = vunpack.c.l.b16 %v6455
        %v7301 = vunpack.c.h.b16 %v6455
        %v7302 = vunpack.c.l.b16 %v6456
        %v7303 = vunpack.c.l.b16 %v6457
        %v7304 = vunpack.c.h.b16 %v6457
        %v7305 = vunpack.c.l.b16 %v6458
        %v7306 = vunpack.c.l.b16 %v6459
        %v7307 = vunpack.c.h.b16 %v6459
        %v7308 = vunpack.c.l.b16 %v6460
        %v7309 = vunpack.c.l.b16 %v6461
        %v7310 = vunpack.c.h.b16 %v6461
        %v7311 = vunpack.c.l.b16 %v6462
        %v7312 = vunpack.c.l.b16 %v6463
        %v7313 = vunpack.c.h.b16 %v6463
        %v7314 = vunpack.c.l.b16 %v6464
        %v7315 = vunpack.c.l.b16 %v6465
        %v7316 = vunpack.c.h.b16 %v6465
        %v7317 = vunpack.c.l.b16 %v6466
        %v7318 = vunpack.c.l.b16 %v6467
        %v7319 = vunpack.c.h.b16 %v6467
        %v7320 = vunpack.c.l.b16 %v6468
        %v7321 = vunpack.c.l.b16 %v6469
        %v7322 = vunpack.c.h.b16 %v6469
        %v7323 = vunpack.c.l.b16 %v6470
        %v7324 = vunpack.c.l.b16 %v6471
        %v7325 = vunpack.c.h.b16 %v6471
        %v7326 = vunpack.c.l.b16 %v6472
        %v7327 = vunpack.c.l.b16 %v6473
        %v7328 = vunpack.c.h.b16 %v6473
        %v7329 = vunpack.c.l.b16 %v6474
        %v7330 = vunpack.c.l.b16 %v6475
        %v7331 = vunpack.c.h.b16 %v6475
        %v7332 = vunpack.c.l.b16 %v6476
        %v7333 = vunpack.c.l.b16 %v6477
        %v7334 = vunpack.c.h.b16 %v6477
        %v7335 = vunpack.c.l.b16 %v6478
        %v7336 = vunpack.c.l.b16 %v6479
        %v7337 = vunpack.c.h.b16 %v6479
        %v7338 = vunpack.c.l.b16 %v6480
        %v7339 = vunpack.c.l.b16 %v6481
        %v7340 = vunpack.c.h.b16 %v6481
        %v7341 = vunpack.c.l.b16 %v6482
        %v7342 = vunpack.c.l.b16 %v6483
        %v7343 = vunpack.c.h.b16 %v6483
        %v7344 = vunpack.c.l.b16 %v6484
        %v7345 = vunpack.c.l.b16 %v6485
        %v7346 = vunpack.c.h.b16 %v6485
        %v7347 = vunpack.c.l.b16 %v6486
        %v7348 = vunpack.c.l.b16 %v6487
        %v7349 = vunpack.c.h.b16 %v6487
        %v7350 = vunpack.c.l.b16 %v6488
        %v7351 = vunpack.c.l.b16 %v6489
        %v7352 = vunpack.c.h.b16 %v6489
        %v7353 = vunpack.c.l.b16 %v6490
        %v7354 = vunpack.c.l.b16 %v6491
        %v7355 = vunpack.c.h.b16 %v6491
        %v7356 = vunpack.c.l.b16 %v6492
        %v7357 = vunpack.c.l.b16 %v6493
        %v7358 = vunpack.c.h.b16 %v6493
        %v7359 = vunpack.c.l.b16 %v6494
        %v7360 = vunpack.c.l.b16 %v6495
        %v7361 = vunpack.c.h.b16 %v6495
        %v7362 = vunpack.c.l.b16 %v6496
        %v7363 = vunpack.c.l.b16 %v6497
        %v7364 = vunpack.c.h.b16 %v6497
        %v7365 = vunpack.c.l.b16 %v6498
        %v7366 = vunpack.c.l.b16 %v6499
        %v7367 = vunpack.c.h.b16 %v6499
        %v7368 = vunpack.c.l.b16 %v6500
        %v7369 = vunpack.c.l.b16 %v6501
        %v7370 = vunpack.c.h.b16 %v6501
        %v7371 = vunpack.c.l.b16 %v6502
        %v7372 = vunpack.c.l.b16 %v6503
        %v7373 = vunpack.c.h.b16 %v6503
        %v7374 = vunpack.c.l.b16 %v6504
        %v7375 = vunpack.c.l.b16 %v6505
        %v7376 = vunpack.c.h.b16 %v6505
        %v7377 = vunpack.c.l.b16 %v6506
        %v7378 = vunpack.c.l.b16 %v6507
        %v7379 = vunpack.c.h.b16 %v6507
        %v7380 = vunpack.c.l.b16 %v6508
        %v7381 = vunpack.c.l.b16 %v6509
        %v7382 = vunpack.c.h.b16 %v6509
        %v7383 = vunpack.c.l.b16 %v6510
        %v7384 = vunpack.c.l.b16 %v6511
        %v7385 = vunpack.c.h.b16 %v6511
        %v7386 = vunpack.c.l.b16 %v6512
        %v7387 = vunpack.c.l.b16 %v6513
        %v7388 = vunpack.c.h.b16 %v6513
        %v7389 = vunpack.c.l.b16 %v6514
        %v7390 = vunpack.c.l.b16 %v6515
        %v7391 = vunpack.c.h.b16 %v6515
        %v7392 = vunpack.c.l.b16 %v6516
        %v7393 = vunpack.c.l.b16 %v6517
        %v7394 = vunpack.c.h.b16 %v6517
        %v7395 = vunpack.c.l.b16 %v6518
        %v7396 = vunpack.c.l.b16 %v6519
        %v7397 = vunpack.c.h.b16 %v6519
        %v7398 = vunpack.c.l.b16 %v6520
        %v7399 = vunpack.c.l.b16 %v6521
        %v7400 = vunpack.c.h.b16 %v6521
        %v7401 = vunpack.c.l.b16 %v6522
        %v7402 = vunpack.c.l.b16 %v6523
        %v7403 = vunpack.c.h.b16 %v6523
        %v7404 = vunpack.c.l.b16 %v6524
        %v7405 = vunpack.c.l.b16 %v6525
        %v7406 = vunpack.c.h.b16 %v6525
        %v7407 = vunpack.c.l.b16 %v6526
        %v7408 = vunpack.c.l.b16 %v6527
        %v7409 = vunpack.c.h.b16 %v6527
        %v7410 = vunpack.c.l.b16 %v6528
        %v7411 = vunpack.c.l.b16 %v6529
        %v7412 = vunpack.c.h.b16 %v6529
        %v7413 = vunpack.c.l.b16 %v6530
        %v7414 = vunpack.c.l.b16 %v6531
        %v7415 = vunpack.c.h.b16 %v6531
        %v7416 = vunpack.c.l.b16 %v6532
        %v7417 = vunpack.c.l.b16 %v6533
        %v7418 = vunpack.c.h.b16 %v6533
        %v7419 = vunpack.c.l.b16 %v6534
        %v7420 = vunpack.c.l.b16 %v6535
        %v7421 = vunpack.c.h.b16 %v6535
        %v7422 = vunpack.c.l.b16 %v6536
        %v7423 = vunpack.c.l.b16 %v6537
        %v7424 = vunpack.c.h.b16 %v6537
        %v7425 = vunpack.c.l.b16 %v6538
        %v7426 = vunpack.c.l.b16 %v6539
        %v7427 = vunpack.c.h.b16 %v6539
        %v7428 = vunpack.c.l.b16 %v6540
        %v7429 = vunpack.c.l.b16 %v6541
        %v7430 = vunpack.c.h.b16 %v6541
        %v7431 = vunpack.c.l.b16 %v6542
        %v7432 = vunpack.c.l.b16 %v6543
        %v7433 = vunpack.c.h.b16 %v6543
        %v7434 = vunpack.c.l.b16 %v6544
        %v7435 = vunpack.c.l.b16 %v6545
        %v7436 = vunpack.c.h.b16 %v6545
        %v7437 = vunpack.c.l.b16 %v6546
        %v7438 = vunpack.c.l.b16 %v6547
        %v7439 = vunpack.c.h.b16 %v6547
        %v7440 = vunpack.c.l.b16 %v6548
        %v7441 = vunpack.c.l.b16 %v6549
        %v7442 = vunpack.c.h.b16 %v6549
        %v7443 = vunpack.c.l.b16 %v6550
        %v7444 = vunpack.c.l.b16 %v6551
        %v7445 = vunpack.c.h.b16 %v6551
        %v7446 = vunpack.c.l.b16 %v6552
        %v7447 = vunpack.c.l.b16 %v6553
        %v7448 = vunpack.c.h.b16 %v6553
        %v7449 = vunpack.c.l.b16 %v6554
        %v7450 = vunpack.c.l.b16 %v6555
        %v7451 = vunpack.c.h.b16 %v6555
        %v7452 = vunpack.c.l.b16 %v6556
        %v7453 = vunpack.c.l.b16 %v6557
        %v7454 = vunpack.c.h.b16 %v6557
        %v7455 = vunpack.c.l.b16 %v6558
        %v7456 = vunpack.c.l.b16 %v6559
        %v7457 = vunpack.c.h.b16 %v6559
        %v7458 = vunpack.c.l.b16 %v6560
        %v7459 = vunpack.c.l.b16 %v6561
        %v7460 = vunpack.c.h.b16 %v6561
        %v7461 = vunpack.c.l.b16 %v6562
        %v7462 = vunpack.c.l.b16 %v6563
        %v7463 = vunpack.c.h.b16 %v6563
        %v7464 = vunpack.c.l.b16 %v6564
        %v7465 = vunpack.c.l.b16 %v6565
        %v7466 = vunpack.c.h.b16 %v6565
        %v7467 = vunpack.c.l.b16 %v6566
        %v7468 = vunpack.c.l.b16 %v6567
        %v7469 = vunpack.c.h.b16 %v6567
        %v7470 = vunpack.c.l.b16 %v6568
        %v7471 = vunpack.c.l.b16 %v6569
        %v7472 = vunpack.c.h.b16 %v6569
        %v7473 = vunpack.c.l.b16 %v6570
        %v7474 = vunpack.c.l.b16 %v6571
        %v7475 = vunpack.c.h.b16 %v6571
        %v7476 = vunpack.c.l.b16 %v6572
        %v7477 = vunpack.c.l.b16 %v6573
        %v7478 = vunpack.c.h.b16 %v6573
        %v7479 = vunpack.c.l.b16 %v6574
        %v7480 = vunpack.c.l.b16 %v6575
        %v7481 = vunpack.c.h.b16 %v6575
        %v7482 = vunpack.c.l.b16 %v6576
        %v7483 = vunpack.c.l.b16 %v6577
        %v7484 = vunpack.c.h.b16 %v6577
        %v7485 = vunpack.c.l.b16 %v6578
        %v7486 = vunpack.c.l.b16 %v6579
        %v7487 = vunpack.c.h.b16 %v6579
        %v7488 = vunpack.c.l.b16 %v6580
        %v7489 = vunpack.c.l.b16 %v6581
        %v7490 = vunpack.c.h.b16 %v6581
        %v7491 = vunpack.c.l.b16 %v6582
        %v7492 = vunpack.c.l.b16 %v6583
        %v7493 = vunpack.c.h.b16 %v6583
        %v7494 = vunpack.c.l.b16 %v6584
        %v7495 = vunpack.c.l.b16 %v6585
        %v7496 = vunpack.c.h.b16 %v6585
        %v7497 = vunpack.c.l.b16 %v6586
        %v7498 = vunpack.c.l.b16 %v6587
        %v7499 = vunpack.c.h.b16 %v6587
        %v7500 = vunpack.c.l.b16 %v6588
        %v7501 = vunpack.c.l.b16 %v6589
        %v7502 = vunpack.c.h.b16 %v6589
        %v7503 = vunpack.c.l.b16 %v6590
        %v7504 = vunpack.c.l.b16 %v6591
        %v7505 = vunpack.c.h.b16 %v6591
        %v7506 = vunpack.c.l.b16 %v6592
        %v7507 = vunpack.c.l.b16 %v6593
        %v7508 = vunpack.c.h.b16 %v6593
        %v7509 = vunpack.c.l.b16 %v6594
        %v7510 = vunpack.c.l.b16 %v6595
        %v7511 = vunpack.c.h.b16 %v6595
        %v7512 = vunpack.c.l.b16 %v6596
        %v7513 = vunpack.c.l.b16 %v6597
        %v7514 = vunpack.c.h.b16 %v6597
        %v7515 = vunpack.c.l.b16 %v6598
        %v7516 = vunpack.c.l.b16 %v6599
        %v7517 = vunpack.c.h.b16 %v6599
        %v7518 = vunpack.c.l.b16 %v6600
        %v7519 = vunpack.c.l.b16 %v6601
        %v7520 = vunpack.c.h.b16 %v6601
        %v7521 = vunpack.c.l.b16 %v6602
        %v7522 = vunpack.c.l.b16 %v6603
        %v7523 = vunpack.c.h.b16 %v6603
        %v7524 = vunpack.c.l.b16 %v6604
        %v7525 = vunpack.c.l.b16 %v6605
        %v7526 = vunpack.c.h.b16 %v6605
        %v7527 = vunpack.c.l.b16 %v6606
        %v7528 = vunpack.c.l.b16 %v6607
        %v7529 = vunpack.c.h.b16 %v6607
        %v7530 = vunpack.c.l.b16 %v6608
        %v7531 = vunpack.c.l.b16 %v6609
        %v7532 = vunpack.c.h.b16 %v6609
        %v7533 = vunpack.c.l.b16 %v6610
        %v7534 = vunpack.c.l.b16 %v6611
        %v7535 = vunpack.c.h.b16 %v6611
        %v7536 = vunpack.c.l.b16 %v6612
        %v7537 = vunpack.c.l.b16 %v6613
        %v7538 = vunpack.c.h.b16 %v6613
        %v7539 = vunpack.c.l.b16 %v6614
        %v7540 = vunpack.c.l.b16 %v6615
        %v7541 = vunpack.c.h.b16 %v6615
        %v7542 = vunpack.c.l.b16 %v6616
        %v7543 = vunpack.c.l.b16 %v6617
        %v7544 = vunpack.c.h.b16 %v6617
        %v7545 = vunpack.c.l.b16 %v6618
        %v7546 = vunpack.c.l.b16 %v6619
        %v7547 = vunpack.c.h.b16 %v6619
        %v7548 = vunpack.c.l.b16 %v6620
        %v7549 = vunpack.c.l.b16 %v6621
        %v7550 = vunpack.c.h.b16 %v6621
        %v7551 = vunpack.c.l.b16 %v6622
        %v7552 = vunpack.c.l.b16 %v6623
        %v7553 = vunpack.c.h.b16 %v6623
        %v7554 = vunpack.c.l.b16 %v6624
        %v7555 = vunpack.c.l.b16 %v6625
        %v7556 = vunpack.c.h.b16 %v6625
        %v7557 = vunpack.c.l.b16 %v6626
        %v7558 = vunpack.c.l.b16 %v6627
        %v7559 = vunpack.c.h.b16 %v6627
        %v7560 = vunpack.c.l.b16 %v6628
        %v7561 = vunpack.c.l.b16 %v6629
        %v7562 = vunpack.c.h.b16 %v6629
        %v7563 = vunpack.c.l.b16 %v6630
        %v7564 = vunpack.c.l.b16 %v6631
        %v7565 = vunpack.c.h.b16 %v6631
        %v7566 = vunpack.c.l.b16 %v6632
        %v7567 = vunpack.c.l.b16 %v6633
        %v7568 = vunpack.c.h.b16 %v6633
        %v7569 = vunpack.c.l.b16 %v6634
        %v7570 = vunpack.c.l.b16 %v6635
        %v7571 = vunpack.c.h.b16 %v6635
        %v7572 = vunpack.c.l.b16 %v6636
        %v7573 = vunpack.c.l.b16 %v6637
        %v7574 = vunpack.c.h.b16 %v6637
        %v7575 = vunpack.c.l.b16 %v6638
        %v7576 = vunpack.c.l.b16 %v6639
        %v7577 = vunpack.c.h.b16 %v6639
        %v7578 = vunpack.c.l.b16 %v6640
        %v7579 = vunpack.c.l.b16 %v6641
        %v7580 = vunpack.c.h.b16 %v6641
        %v7581 = vunpack.c.l.b16 %v6642
        %v7582 = vunpack.c.l.b16 %v6643
        %v7583 = vunpack.c.h.b16 %v6643
        %v7584 = vunpack.c.l.b16 %v6644
        %v7585 = vunpack.c.l.b16 %v6645
        %v7586 = vunpack.c.h.b16 %v6645
        %v7587 = vunpack.c.l.b16 %v6646
        %v7588 = vunpack.c.l.b16 %v6647
        %v7589 = vunpack.c.h.b16 %v6647
        %v7590 = vunpack.c.l.b16 %v6648
        %v7591 = vunpack.c.l.b16 %v6649
        %v7592 = vunpack.c.h.b16 %v6649
        %v7593 = vunpack.c.l.b16 %v6650
        %v7594 = vunpack.c.l.b16 %v6651
        %v7595 = vunpack.c.h.b16 %v6651
        %v7596 = vunpack.c.l.b16 %v6652
        %v7597 = vunpack.c.l.b16 %v6653
        %v7598 = vunpack.c.h.b16 %v6653
        %v7599 = vunpack.c.l.b16 %v6654
        %v7600 = vunpack.c.l.b16 %v6655
        %v7601 = vunpack.c.h.b16 %v6655
        %v7602 = vunpack.c.l.b16 %v6656
        %v7603 = vunpack.c.l.b16 %v6657
        %v7604 = vunpack.c.h.b16 %v6657
        %v7605 = vunpack.c.l.b16 %v6658
        %v7606 = vunpack.c.l.b16 %v6659
        %v7607 = vunpack.c.h.b16 %v6659
        %v7608 = vunpack.c.l.b16 %v6660
        %v7609 = vunpack.c.l.b16 %v6661
        %v7610 = vunpack.c.h.b16 %v6661
        %v7611 = vunpack.c.l.b16 %v6662
        %v7612 = vunpack.c.l.b16 %v6663
        %v7613 = vunpack.c.h.b16 %v6663
        %v7614 = vunpack.c.l.b16 %v6664
        %v7615 = vunpack.c.l.b16 %v6665
        %v7616 = vunpack.c.h.b16 %v6665
        %v7617 = vunpack.c.l.b16 %v6666
        %v7618 = vunpack.c.l.b16 %v6667
        %v7619 = vunpack.c.h.b16 %v6667
        %v7620 = vunpack.c.l.b16 %v6668
        %v7621 = vunpack.c.l.b16 %v6669
        %v7622 = vunpack.c.h.b16 %v6669
        %v7623 = vunpack.c.l.b16 %v6670
        %v7624 = vunpack.c.l.b16 %v6671
        %v7625 = vunpack.c.h.b16 %v6671
        %v7626 = vunpack.c.l.b16 %v6672
        %v7627 = vunpack.c.l.b16 %v6673
        %v7628 = vunpack.c.h.b16 %v6673
        %v7629 = vunpack.c.l.b16 %v6674
        %v7630 = vunpack.c.l.b16 %v6675
        %v7631 = vunpack.c.h.b16 %v6675
        %v7632 = vunpack.c.l.b16 %v6676
        %v7633 = vunpack.c.l.b16 %v6677
        %v7634 = vunpack.c.h.b16 %v6677
        %v7635 = vunpack.c.l.b16 %v6678
        %v7636 = vunpack.c.l.b16 %v6679
        %v7637 = vunpack.c.h.b16 %v6679
        %v7638 = vunpack.c.l.b16 %v6680
        %v7639 = vunpack.c.l.b16 %v6681
        %v7640 = vunpack.c.h.b16 %v6681
        %v7641 = vunpack.c.l.b16 %v6682
        %v7642 = vunpack.c.l.b16 %v6683
        %v7643 = vunpack.c.h.b16 %v6683
        %v7644 = vunpack.c.l.b16 %v6684
        %v7645 = vunpack.c.l.b16 %v6685
        %v7646 = vunpack.c.h.b16 %v6685
        %v7647 = vunpack.c.l.b16 %v6686
        %v7648 = vunpack.c.l.b16 %v6687
        %v7649 = vunpack.c.h.b16 %v6687
        %v7650 = vunpack.c.l.b16 %v6688
        %v7651 = vunpack.c.l.b16 %v6689
        %v7652 = vunpack.c.h.b16 %v6689
        %v7653 = vunpack.c.l.b16 %v6690
        %v7654 = vunpack.c.l.b16 %v6691
        %v7655 = vunpack.c.h.b16 %v6691
        %v7656 = vunpack.c.l.b16 %v6692
        %v7657 = vunpack.c.l.b16 %v6693
        %v7658 = vunpack.c.h.b16 %v6693
        %v7659 = vunpack.c.l.b16 %v6694
        %v7660 = vunpack.c.l.b16 %v6695
        %v7661 = vunpack.c.h.b16 %v6695
        %v7662 = vunpack.c.l.b16 %v6696
        %v7663 = vunpack.c.l.b16 %v6697
        %v7664 = vunpack.c.h.b16 %v6697
        %v7665 = vunpack.c.l.b16 %v6698
        %v7666 = vunpack.c.l.b16 %v6699
        %v7667 = vunpack.c.h.b16 %v6699
        %v7668 = vunpack.c.l.b16 %v6700
        %v7669 = vunpack.c.l.b16 %v6701
        %v7670 = vunpack.c.h.b16 %v6701
        %v7671 = vunpack.c.l.b16 %v6702
        %v7672 = vpack.c.b16 %v7099, %v7096
        %v7673 = vpack.c.b16 %v7100, %v7097
        %v7674 = vpack.c.b16 %v7101, %v7098
        %v7675 = vpack.c.b16 %v7105, %v7102
        %v7676 = vpack.c.b16 %v7106, %v7103
        %v7677 = vpack.c.b16 %v7107, %v7104
        %v7678 = vpack.c.b16 %v7111, %v7108
        %v7679 = vpack.c.b16 %v7112, %v7109
        %v7680 = vpack.c.b16 %v7113, %v7110
        %v7681 = vpack.c.b16 %v7117, %v7114
        %v7682 = vpack.c.b16 %v7118, %v7115
        %v7683 = vpack.c.b16 %v7119, %v7116
        %v7684 = vpack.c.b16 %v7123, %v7120
        %v7685 = vpack.c.b16 %v7124, %v7121
        %v7686 = vpack.c.b16 %v7125, %v7122
        %v7687 = vpack.c.b16 %v7129, %v7126
        %v7688 = vpack.c.b16 %v7130, %v7127
        %v7689 = vpack.c.b16 %v7131, %v7128
        %v7690 = vpack.c.b16 %v7135, %v7132
        %v7691 = vpack.c.b16 %v7136, %v7133
        %v7692 = vpack.c.b16 %v7137, %v7134
        %v7693 = vpack.c.b16 %v7141, %v7138
        %v7694 = vpack.c.b16 %v7142, %v7139
        %v7695 = vpack.c.b16 %v7143, %v7140
        %v7696 = vpack.c.b16 %v7147, %v7144
        %v7697 = vpack.c.b16 %v7148, %v7145
        %v7698 = vpack.c.b16 %v7149, %v7146
        %v7699 = vpack.c.b16 %v7153, %v7150
        %v7700 = vpack.c.b16 %v7154, %v7151
        %v7701 = vpack.c.b16 %v7155, %v7152
        %v7702 = vpack.c.b16 %v7159, %v7156
        %v7703 = vpack.c.b16 %v7160, %v7157
        %v7704 = vpack.c.b16 %v7161, %v7158
        %v7705 = vpack.c.b16 %v7165, %v7162
        %v7706 = vpack.c.b16 %v7166, %v7163
        %v7707 = vpack.c.b16 %v7167, %v7164
        %v7708 = vpack.c.b16 %v7171, %v7168
        %v7709 = vpack.c.b16 %v7172, %v7169
        %v7710 = vpack.c.b16 %v7173, %v7170
        %v7711 = vpack.c.b16 %v7177, %v7174
        %v7712 = vpack.c.b16 %v7178, %v7175
        %v7713 = vpack.c.b16 %v7179, %v7176
        %v7714 = vpack.c.b16 %v7183, %v7180
        %v7715 = vpack.c.b16 %v7184, %v7181
        %v7716 = vpack.c.b16 %v7185, %v7182
        %v7717 = vpack.c.b16 %v7189, %v7186
        %v7718 = vpack.c.b16 %v7190, %v7187
        %v7719 = vpack.c.b16 %v7191, %v7188
        %v7720 = vpack.c.b16 %v7195, %v7192
        %v7721 = vpack.c.b16 %v7196, %v7193
        %v7722 = vpack.c.b16 %v7197, %v7194
        %v7723 = vpack.c.b16 %v7201, %v7198
        %v7724 = vpack.c.b16 %v7202, %v7199
        %v7725 = vpack.c.b16 %v7203, %v7200
        %v7726 = vpack.c.b16 %v7207, %v7204
        %v7727 = vpack.c.b16 %v7208, %v7205
        %v7728 = vpack.c.b16 %v7209, %v7206
        %v7729 = vpack.c.b16 %v7213, %v7210
        %v7730 = vpack.c.b16 %v7214, %v7211
        %v7731 = vpack.c.b16 %v7215, %v7212
        %v7732 = vpack.c.b16 %v7219, %v7216
        %v7733 = vpack.c.b16 %v7220, %v7217
        %v7734 = vpack.c.b16 %v7221, %v7218
        %v7735 = vpack.c.b16 %v7225, %v7222
        %v7736 = vpack.c.b16 %v7226, %v7223
        %v7737 = vpack.c.b16 %v7227, %v7224
        %v7738 = vpack.c.b16 %v7231, %v7228
        %v7739 = vpack.c.b16 %v7232, %v7229
        %v7740 = vpack.c.b16 %v7233, %v7230
        %v7741 = vpack.c.b16 %v7237, %v7234
        %v7742 = vpack.c.b16 %v7238, %v7235
        %v7743 = vpack.c.b16 %v7239, %v7236
        %v7744 = vpack.c.b16 %v7243, %v7240
        %v7745 = vpack.c.b16 %v7244, %v7241
        %v7746 = vpack.c.b16 %v7245, %v7242
        %v7747 = vpack.c.b16 %v7249, %v7246
        %v7748 = vpack.c.b16 %v7250, %v7247
        %v7749 = vpack.c.b16 %v7251, %v7248
        %v7750 = vpack.c.b16 %v7255, %v7252
        %v7751 = vpack.c.b16 %v7256, %v7253
        %v7752 = vpack.c.b16 %v7257, %v7254
        %v7753 = vpack.c.b16 %v7261, %v7258
        %v7754 = vpack.c.b16 %v7262, %v7259
        %v7755 = vpack.c.b16 %v7263, %v7260
        %v7756 = vpack.c.b16 %v7267, %v7264
        %v7757 = vpack.c.b16 %v7268, %v7265
        %v7758 = vpack.c.b16 %v7269, %v7266
        %v7759 = vpack.c.b16 %v7273, %v7270
        %v7760 = vpack.c.b16 %v7274, %v7271
        %v7761 = vpack.c.b16 %v7275, %v7272
        %v7762 = vpack.c.b16 %v7279, %v7276
        %v7763 = vpack.c.b16 %v7280, %v7277
        %v7764 = vpack.c.b16 %v7281, %v7278
        %v7765 = vpack.c.b16 %v7285, %v7282
        %v7766 = vpack.c.b16 %v7286, %v7283
        %v7767 = vpack.c.b16 %v7287, %v7284
        %v7768 = vpack.c.b16 %v7291, %v7288
        %v7769 = vpack.c.b16 %v7292, %v7289
        %v7770 = vpack.c.b16 %v7293, %v7290
        %v7771 = vpack.c.b16 %v7297, %v7294
        %v7772 = vpack.c.b16 %v7298, %v7295
        %v7773 = vpack.c.b16 %v7299, %v7296
        %v7774 = vpack.c.b16 %v7303, %v7300
        %v7775 = vpack.c.b16 %v7304, %v7301
        %v7776 = vpack.c.b16 %v7305, %v7302
        %v7777 = vpack.c.b16 %v7309, %v7306
        %v7778 = vpack.c.b16 %v7310, %v7307
        %v7779 = vpack.c.b16 %v7311, %v7308
        %v7780 = vpack.c.b16 %v7315, %v7312
        %v7781 = vpack.c.b16 %v7316, %v7313
        %v7782 = vpack.c.b16 %v7317, %v7314
        %v7783 = vpack.c.b16 %v7321, %v7318
        %v7784 = vpack.c.b16 %v7322, %v7319
        %v7785 = vpack.c.b16 %v7323, %v7320
        %v7786 = vpack.c.b16 %v7327, %v7324
        %v7787 = vpack.c.b16 %v7328, %v7325
        %v7788 = vpack.c.b16 %v7329, %v7326
        %v7789 = vpack.c.b16 %v7333, %v7330
        %v7790 = vpack.c.b16 %v7334, %v7331
        %v7791 = vpack.c.b16 %v7335, %v7332
        %v7792 = vpack.c.b16 %v7339, %v7336
        %v7793 = vpack.c.b16 %v7340, %v7337
        %v7794 = vpack.c.b16 %v7341, %v7338
        %v7795 = vpack.c.b16 %v7345, %v7342
        %v7796 = vpack.c.b16 %v7346, %v7343
        %v7797 = vpack.c.b16 %v7347, %v7344
        %v7798 = vpack.c.b16 %v7351, %v7348
        %v7799 = vpack.c.b16 %v7352, %v7349
        %v7800 = vpack.c.b16 %v7353, %v7350
        %v7801 = vpack.c.b16 %v7357, %v7354
        %v7802 = vpack.c.b16 %v7358, %v7355
        %v7803 = vpack.c.b16 %v7359, %v7356
        %v7804 = vpack.c.b16 %v7363, %v7360
        %v7805 = vpack.c.b16 %v7364, %v7361
        %v7806 = vpack.c.b16 %v7365, %v7362
        %v7807 = vpack.c.b16 %v7369, %v7366
        %v7808 = vpack.c.b16 %v7370, %v7367
        %v7809 = vpack.c.b16 %v7371, %v7368
        %v7810 = vpack.c.b16 %v7375, %v7372
        %v7811 = vpack.c.b16 %v7376, %v7373
        %v7812 = vpack.c.b16 %v7377, %v7374
        %v7813 = vpack.c.b16 %v7381, %v7378
        %v7814 = vpack.c.b16 %v7382, %v7379
        %v7815 = vpack.c.b16 %v7383, %v7380
        %v7816 = vpack.c.b16 %v7387, %v7384
        %v7817 = vpack.c.b16 %v7388, %v7385
        %v7818 = vpack.c.b16 %v7389, %v7386
        %v7819 = vpack.c.b16 %v7393, %v7390
        %v7820 = vpack.c.b16 %v7394, %v7391
        %v7821 = vpack.c.b16 %v7395, %v7392
        %v7822 = vpack.c.b16 %v7399, %v7396
        %v7823 = vpack.c.b16 %v7400, %v7397
        %v7824 = vpack.c.b16 %v7401, %v7398
        %v7825 = vpack.c.b16 %v7405, %v7402
        %v7826 = vpack.c.b16 %v7406, %v7403
        %v7827 = vpack.c.b16 %v7407, %v7404
        %v7828 = vpack.c.b16 %v7411, %v7408
        %v7829 = vpack.c.b16 %v7412, %v7409
        %v7830 = vpack.c.b16 %v7413, %v7410
        %v7831 = vpack.c.b16 %v7417, %v7414
        %v7832 = vpack.c.b16 %v7418, %v7415
        %v7833 = vpack.c.b16 %v7419, %v7416
        %v7834 = vpack.c.b16 %v7423, %v7420
        %v7835 = vpack.c.b16 %v7424, %v7421
        %v7836 = vpack.c.b16 %v7425, %v7422
        %v7837 = vpack.c.b16 %v7429, %v7426
        %v7838 = vpack.c.b16 %v7430, %v7427
        %v7839 = vpack.c.b16 %v7431, %v7428
        %v7840 = vpack.c.b16 %v7435, %v7432
        %v7841 = vpack.c.b16 %v7436, %v7433
        %v7842 = vpack.c.b16 %v7437, %v7434
        %v7843 = vpack.c.b16 %v7441, %v7438
        %v7844 = vpack.c.b16 %v7442, %v7439
        %v7845 = vpack.c.b16 %v7443, %v7440
        %v7846 = vpack.c.b16 %v7447, %v7444
        %v7847 = vpack.c.b16 %v7448, %v7445
        %v7848 = vpack.c.b16 %v7449, %v7446
        %v7849 = vpack.c.b16 %v7453, %v7450
        %v7850 = vpack.c.b16 %v7454, %v7451
        %v7851 = vpack.c.b16 %v7455, %v7452
        %v7852 = vpack.c.b16 %v7459, %v7456
        %v7853 = vpack.c.b16 %v7460, %v7457
        %v7854 = vpack.c.b16 %v7461, %v7458
        %v7855 = vpack.c.b16 %v7465, %v7462
        %v7856 = vpack.c.b16 %v7466, %v7463
        %v7857 = vpack.c.b16 %v7467, %v7464
        %v7858 = vpack.c.b16 %v7471, %v7468
        %v7859 = vpack.c.b16 %v7472, %v7469
        %v7860 = vpack.c.b16 %v7473, %v7470
        %v7861 = vpack.c.b16 %v7477, %v7474
        %v7862 = vpack.c.b16 %v7478, %v7475
        %v7863 = vpack.c.b16 %v7479, %v7476
        %v7864 = vpack.c.b16 %v7483, %v7480
        %v7865 = vpack.c.b16 %v7484, %v7481
        %v7866 = vpack.c.b16 %v7485, %v7482
        %v7867 = vpack.c.b16 %v7489, %v7486
        %v7868 = vpack.c.b16 %v7490, %v7487
        %v7869 = vpack.c.b16 %v7491, %v7488
        %v7870 = vpack.c.b16 %v7495, %v7492
        %v7871 = vpack.c.b16 %v7496, %v7493
        %v7872 = vpack.c.b16 %v7497, %v7494
        %v7873 = vpack.c.b16 %v7501, %v7498
        %v7874 = vpack.c.b16 %v7502, %v7499
        %v7875 = vpack.c.b16 %v7503, %v7500
        %v7876 = vpack.c.b16 %v7507, %v7504
        %v7877 = vpack.c.b16 %v7508, %v7505
        %v7878 = vpack.c.b16 %v7509, %v7506
        %v7879 = vpack.c.b16 %v7513, %v7510
        %v7880 = vpack.c.b16 %v7514, %v7511
        %v7881 = vpack.c.b16 %v7515, %v7512
        %v7882 = vpack.c.b16 %v7519, %v7516
        %v7883 = vpack.c.b16 %v7520, %v7517
        %v7884 = vpack.c.b16 %v7521, %v7518
        %v7885 = vpack.c.b16 %v7525, %v7522
        %v7886 = vpack.c.b16 %v7526, %v7523
        %v7887 = vpack.c.b16 %v7527, %v7524
        %v7888 = vpack.c.b16 %v7531, %v7528
        %v7889 = vpack.c.b16 %v7532, %v7529
        %v7890 = vpack.c.b16 %v7533, %v7530
        %v7891 = vpack.c.b16 %v7537, %v7534
        %v7892 = vpack.c.b16 %v7538, %v7535
        %v7893 = vpack.c.b16 %v7539, %v7536
        %v7894 = vpack.c.b16 %v7543, %v7540
        %v7895 = vpack.c.b16 %v7544, %v7541
        %v7896 = vpack.c.b16 %v7545, %v7542
        %v7897 = vpack.c.b16 %v7549, %v7546
        %v7898 = vpack.c.b16 %v7550, %v7547
        %v7899 = vpack.c.b16 %v7551, %v7548
        %v7900 = vpack.c.b16 %v7555, %v7552
        %v7901 = vpack.c.b16 %v7556, %v7553
        %v7902 = vpack.c.b16 %v7557, %v7554
        %v7903 = vpack.c.b16 %v7561, %v7558
        %v7904 = vpack.c.b16 %v7562, %v7559
        %v7905 = vpack.c.b16 %v7563, %v7560
        %v7906 = vpack.c.b16 %v7567, %v7564
        %v7907 = vpack.c.b16 %v7568, %v7565
        %v7908 = vpack.c.b16 %v7569, %v7566
        %v7909 = vpack.c.b16 %v7573, %v7570
        %v7910 = vpack.c.b16 %v7574, %v7571
        %v7911 = vpack.c.b16 %v7575, %v7572
        %v7912 = vpack.c.b16 %v7579, %v7576
        %v7913 = vpack.c.b16 %v7580, %v7577
        %v7914 = vpack.c.b16 %v7581, %v7578
        %v7915 = vpack.c.b16 %v7585, %v7582
        %v7916 = vpack.c.b16 %v7586, %v7583
        %v7917 = vpack.c.b16 %v7587, %v7584
        %v7918 = vpack.c.b16 %v7591, %v7588
        %v7919 = vpack.c.b16 %v7592, %v7589
        %v7920 = vpack.c.b16 %v7593, %v7590
        %v7921 = vpack.c.b16 %v7597, %v7594
        %v7922 = vpack.c.b16 %v7598, %v7595
        %v7923 = vpack.c.b16 %v7599, %v7596
        %v7924 = vpack.c.b16 %v7603, %v7600
        %v7925 = vpack.c.b16 %v7604, %v7601
        %v7926 = vpack.c.b16 %v7605, %v7602
        %v7927 = vpack.c.b16 %v7609, %v7606
        %v7928 = vpack.c.b16 %v7610, %v7607
        %v7929 = vpack.c.b16 %v7611, %v7608
        %v7930 = vpack.c.b16 %v7615, %v7612
        %v7931 = vpack.c.b16 %v7616, %v7613
        %v7932 = vpack.c.b16 %v7617, %v7614
        %v7933 = vpack.c.b16 %v7621, %v7618
        %v7934 = vpack.c.b16 %v7622, %v7619
        %v7935 = vpack.c.b16 %v7623, %v7620
        %v7936 = vpack.c.b16 %v7627, %v7624
        %v7937 = vpack.c.b16 %v7628, %v7625
        %v7938 = vpack.c.b16 %v7629, %v7626
        %v7939 = vpack.c.b16 %v7633, %v7630
        %v7940 = vpack.c.b16 %v7634, %v7631
        %v7941 = vpack.c.b16 %v7635, %v7632
        %v7942 = vpack.c.b16 %v7639, %v7636
        %v7943 = vpack.c.b16 %v7640, %v7637
        %v7944 = vpack.c.b16 %v7641, %v7638
        %v7945 = vpack.c.b16 %v7645, %v7642
        %v7946 = vpack.c.b16 %v7646, %v7643
        %v7947 = vpack.c.b16 %v7647, %v7644
        %v7948 = vpack.c.b16 %v7651, %v7648
        %v7949 = vpack.c.b16 %v7652, %v7649
        %v7950 = vpack.c.b16 %v7653, %v7650
        %v7951 = vpack.c.b16 %v7657, %v7654
        %v7952 = vpack.c.b16 %v7658, %v7655
        %v7953 = vpack.c.b16 %v7659, %v7656
        %v7954 = vpack.c.b16 %v7663, %v7660
        %v7955 = vpack.c.b16 %v7664, %v7661
        %v7956 = vpack.c.b16 %v7665, %v7662
        %v7957 = vpack.c.b16 %v7669, %v7666
        %v7958 = vpack.c.b16 %v7670, %v7667
        %v7959 = vpack.c.b16 %v7671, %v7668
        %8248 = vmatpush.bf16.msra.mxu0 %v7693
        %8249 = vmatpush.bf16.msra.mxu0 %v7690
        %8250 = vmatpush.bf16.msra.mxu0 %v7687
        %8251 = vmatpush.bf16.msra.mxu0 %v7684
        %8252 = vmatpush.bf16.msra.mxu0 %v7681
        %8253 = vmatpush.bf16.msra.mxu0 %v7678
        %8254 = vmatpush.bf16.msra.mxu0 %v7675
        %8255 = vmatpush.bf16.msra.mxu0 %v7672
        %8256 = vmatmul.bf16.gmra.mxu0 %v6305
        %v8257 = vpop.f32.mrf.mxu0
        %v8258 = vadd.f32 %v6706, %v8257
        %v8259 = vpop.f32.mrf.mxu0
        %v8260 = vadd.f32 %v6706, %v8259
        %8261 = vdwg.mxu0
        %8262 = vmatpush.bf16.msra.mxu0 %v7717
        %8263 = vmatpush.bf16.msra.mxu0 %v7714
        %8264 = vmatpush.bf16.msra.mxu0 %v7711
        %8265 = vmatpush.bf16.msra.mxu0 %v7708
        %8266 = vmatpush.bf16.msra.mxu0 %v7705
        %8267 = vmatpush.bf16.msra.mxu0 %v7702
        %8268 = vmatpush.bf16.msra.mxu0 %v7699
        %8269 = vmatpush.bf16.msra.mxu0 %v7696
        %8270 = vmatmul.bf16.gmra.mxu0 %v6306
        %v8271 = vpop.f32.mrf.mxu0
        %v8272 = vadd.f32 %v8258, %v8271
        %v8273 = vpop.f32.mrf.mxu0
        %v8274 = vadd.f32 %v8260, %v8273
        %8275 = vdwg.mxu0
        %8276 = vmatpush.bf16.msra.mxu0 %v7741
        %8277 = vmatpush.bf16.msra.mxu0 %v7738
        %8278 = vmatpush.bf16.msra.mxu0 %v7735
        %8279 = vmatpush.bf16.msra.mxu0 %v7732
        %8280 = vmatpush.bf16.msra.mxu0 %v7729
        %8281 = vmatpush.bf16.msra.mxu0 %v7726
        %8282 = vmatpush.bf16.msra.mxu0 %v7723
        %8283 = vmatpush.bf16.msra.mxu0 %v7720
        %8284 = vmatmul.bf16.gmra.mxu0 %v6307
        %v8285 = vpop.f32.mrf.mxu0
        %v8286 = vadd.f32 %v8272, %v8285
        %v8287 = vpop.f32.mrf.mxu0
        %v8288 = vadd.f32 %v8274, %v8287
        %8289 = vdwg.mxu0
        %8290 = vmatpush.bf16.msra.mxu0 %v7765
        %8291 = vmatpush.bf16.msra.mxu0 %v7762
        %8292 = vmatpush.bf16.msra.mxu0 %v7759
        %8293 = vmatpush.bf16.msra.mxu0 %v7756
        %8294 = vmatpush.bf16.msra.mxu0 %v7753
        %8295 = vmatpush.bf16.msra.mxu0 %v7750
        %8296 = vmatpush.bf16.msra.mxu0 %v7747
        %8297 = vmatpush.bf16.msra.mxu0 %v7744
        %8298 = vmatmul.bf16.gmra.mxu0 %v6308
        %v8299 = vpop.f32.mrf.mxu0
        %v8300 = vadd.f32 %v8286, %v8299
        %v8301 = vpop.f32.mrf.mxu0
        %v8302 = vadd.f32 %v8288, %v8301
        %8303 = vdwg.mxu0
        %8304 = vmatpush.bf16.msra.mxu0 %v7789
        %8305 = vmatpush.bf16.msra.mxu0 %v7786
        %8306 = vmatpush.bf16.msra.mxu0 %v7783
        %8307 = vmatpush.bf16.msra.mxu0 %v7780
        %8308 = vmatpush.bf16.msra.mxu0 %v7777
        %8309 = vmatpush.bf16.msra.mxu0 %v7774
        %8310 = vmatpush.bf16.msra.mxu0 %v7771
        %8311 = vmatpush.bf16.msra.mxu0 %v7768
        %8312 = vmatmul.bf16.gmra.mxu0 %v6309
        %v8313 = vpop.f32.mrf.mxu0
        %v8314 = vadd.f32 %v8300, %v8313
        %v8315 = vpop.f32.mrf.mxu0
        %v8316 = vadd.f32 %v8302, %v8315
        %8317 = vdwg.mxu0
        %8318 = vmatpush.bf16.msra.mxu0 %v7813
        %8319 = vmatpush.bf16.msra.mxu0 %v7810
        %8320 = vmatpush.bf16.msra.mxu0 %v7807
        %8321 = vmatpush.bf16.msra.mxu0 %v7804
        %8322 = vmatpush.bf16.msra.mxu0 %v7801
        %8323 = vmatpush.bf16.msra.mxu0 %v7798
        %8324 = vmatpush.bf16.msra.mxu0 %v7795
        %8325 = vmatpush.bf16.msra.mxu0 %v7792
        %8326 = vmatmul.bf16.gmra.mxu0 %v6310
        %v8327 = vpop.f32.mrf.mxu0
        %v8328 = vadd.f32 %v8314, %v8327
        %v8329 = vpop.f32.mrf.mxu0
        %v8330 = vadd.f32 %v8316, %v8329
        %8331 = vdwg.mxu0
        %8332 = vmatpush.bf16.msra.mxu0 %v7837
        %8333 = vmatpush.bf16.msra.mxu0 %v7834
        %8334 = vmatpush.bf16.msra.mxu0 %v7831
        %8335 = vmatpush.bf16.msra.mxu0 %v7828
        %8336 = vmatpush.bf16.msra.mxu0 %v7825
        %8337 = vmatpush.bf16.msra.mxu0 %v7822
        %8338 = vmatpush.bf16.msra.mxu0 %v7819
        %8339 = vmatpush.bf16.msra.mxu0 %v7816
        %8340 = vmatmul.bf16.gmra.mxu0 %v6311
        %v8341 = vpop.f32.mrf.mxu0
        %v8342 = vadd.f32 %v8328, %v8341
        %v8343 = vpop.f32.mrf.mxu0
        %v8344 = vadd.f32 %v8330, %v8343
        %8345 = vdwg.mxu0
        %8346 = vmatpush.bf16.msra.mxu0 %v7861
        %8347 = vmatpush.bf16.msra.mxu0 %v7858
        %8348 = vmatpush.bf16.msra.mxu0 %v7855
        %8349 = vmatpush.bf16.msra.mxu0 %v7852
        %8350 = vmatpush.bf16.msra.mxu0 %v7849
        %8351 = vmatpush.bf16.msra.mxu0 %v7846
        %8352 = vmatpush.bf16.msra.mxu0 %v7843
        %8353 = vmatpush.bf16.msra.mxu0 %v7840
        %8354 = vmatmul.bf16.gmra.mxu0 %v6312
        %v8355 = vpop.f32.mrf.mxu0
        %v8356 = vadd.f32 %v8342, %v8355
        %v8357 = vpop.f32.mrf.mxu0
        %v8358 = vadd.f32 %v8344, %v8357
        %8359 = vdwg.mxu0
        %8360 = vmatpush.bf16.msra.mxu0 %v7885
        %8361 = vmatpush.bf16.msra.mxu0 %v7882
        %8362 = vmatpush.bf16.msra.mxu0 %v7879
        %8363 = vmatpush.bf16.msra.mxu0 %v7876
        %8364 = vmatpush.bf16.msra.mxu0 %v7873
        %8365 = vmatpush.bf16.msra.mxu0 %v7870
        %8366 = vmatpush.bf16.msra.mxu0 %v7867
        %8367 = vmatpush.bf16.msra.mxu0 %v7864
        %8368 = vmatmul.bf16.gmra.mxu0 %v6313
        %v8369 = vpop.f32.mrf.mxu0
        %v8370 = vadd.f32 %v8356, %v8369
        %v8371 = vpop.f32.mrf.mxu0
        %v8372 = vadd.f32 %v8358, %v8371
        %8373 = vdwg.mxu0
        %8374 = vmatpush.bf16.msra.mxu0 %v7909
        %8375 = vmatpush.bf16.msra.mxu0 %v7906
        %8376 = vmatpush.bf16.msra.mxu0 %v7903
        %8377 = vmatpush.bf16.msra.mxu0 %v7900
        %8378 = vmatpush.bf16.msra.mxu0 %v7897
        %8379 = vmatpush.bf16.msra.mxu0 %v7894
        %8380 = vmatpush.bf16.msra.mxu0 %v7891
        %8381 = vmatpush.bf16.msra.mxu0 %v7888
        %8382 = vmatmul.bf16.gmra.mxu0 %v6314
        %v8383 = vpop.f32.mrf.mxu0
        %v8384 = vadd.f32 %v8370, %v8383
        %v8385 = vpop.f32.mrf.mxu0
        %v8386 = vadd.f32 %v8372, %v8385
        %8387 = vdwg.mxu0
        %8388 = vmatpush.bf16.msra.mxu0 %v7933
        %8389 = vmatpush.bf16.msra.mxu0 %v7930
        %8390 = vmatpush.bf16.msra.mxu0 %v7927
        %8391 = vmatpush.bf16.msra.mxu0 %v7924
        %8392 = vmatpush.bf16.msra.mxu0 %v7921
        %8393 = vmatpush.bf16.msra.mxu0 %v7918
        %8394 = vmatpush.bf16.msra.mxu0 %v7915
        %8395 = vmatpush.bf16.msra.mxu0 %v7912
        %8396 = vmatmul.bf16.gmra.mxu0 %v6315
        %v8397 = vpop.f32.mrf.mxu0
        %v8398 = vadd.f32 %v8384, %v8397
        %v8399 = vpop.f32.mrf.mxu0
        %v8400 = vadd.f32 %v8386, %v8399
        %8401 = vdwg.mxu0
        %8402 = vmatpush.bf16.msra.mxu0 %v7957
        %8403 = vmatpush.bf16.msra.mxu0 %v7954
        %8404 = vmatpush.bf16.msra.mxu0 %v7951
        %8405 = vmatpush.bf16.msra.mxu0 %v7948
        %8406 = vmatpush.bf16.msra.mxu0 %v7945
        %8407 = vmatpush.bf16.msra.mxu0 %v7942
        %8408 = vmatpush.bf16.msra.mxu0 %v7939
        %8409 = vmatpush.bf16.msra.mxu0 %v7936
        %8410 = vmatmul.bf16.gmra.mxu0 %v6316
        %v8411 = vpop.f32.mrf.mxu0
        %v8412 = vadd.f32 %v8398, %v8411
        %v8413 = vpop.f32.mrf.mxu0
        %v8414 = vadd.f32 %v8400, %v8413
        %8415 = vdwg.mxu0
        %8416 = vmatpush.bf16.msra.mxu0 %v7694
        %8417 = vmatpush.bf16.msra.mxu0 %v7691
        %8418 = vmatpush.bf16.msra.mxu0 %v7688
        %8419 = vmatpush.bf16.msra.mxu0 %v7685
        %8420 = vmatpush.bf16.msra.mxu0 %v7682
        %8421 = vmatpush.bf16.msra.mxu0 %v7679
        %8422 = vmatpush.bf16.msra.mxu0 %v7676
        %8423 = vmatpush.bf16.msra.mxu0 %v7673
        %8424 = vmatmul.bf16.gmra.mxu0 %v6305
        %v8425 = vpop.f32.mrf.mxu0
        %v8426 = vadd.f32 %v6707, %v8425
        %v8427 = vpop.f32.mrf.mxu0
        %v8428 = vadd.f32 %v6707, %v8427
        %8429 = vdwg.mxu0
        %8430 = vmatpush.bf16.msra.mxu0 %v7718
        %8431 = vmatpush.bf16.msra.mxu0 %v7715
        %8432 = vmatpush.bf16.msra.mxu0 %v7712
        %8433 = vmatpush.bf16.msra.mxu0 %v7709
        %8434 = vmatpush.bf16.msra.mxu0 %v7706
        %8435 = vmatpush.bf16.msra.mxu0 %v7703
        %8436 = vmatpush.bf16.msra.mxu0 %v7700
        %8437 = vmatpush.bf16.msra.mxu0 %v7697
        %8438 = vmatmul.bf16.gmra.mxu0 %v6306
        %v8439 = vpop.f32.mrf.mxu0
        %v8440 = vadd.f32 %v8426, %v8439
        %v8441 = vpop.f32.mrf.mxu0
        %v8442 = vadd.f32 %v8428, %v8441
        %8443 = vdwg.mxu0
        %8444 = vmatpush.bf16.msra.mxu0 %v7742
        %8445 = vmatpush.bf16.msra.mxu0 %v7739
        %8446 = vmatpush.bf16.msra.mxu0 %v7736
        %8447 = vmatpush.bf16.msra.mxu0 %v7733
        %8448 = vmatpush.bf16.msra.mxu0 %v7730
        %8449 = vmatpush.bf16.msra.mxu0 %v7727
        %8450 = vmatpush.bf16.msra.mxu0 %v7724
        %8451 = vmatpush.bf16.msra.mxu0 %v7721
        %8452 = vmatmul.bf16.gmra.mxu0 %v6307
        %v8453 = vpop.f32.mrf.mxu0
        %v8454 = vadd.f32 %v8440, %v8453
        %v8455 = vpop.f32.mrf.mxu0
        %v8456 = vadd.f32 %v8442, %v8455
        %8457 = vdwg.mxu0
        %8458 = vmatpush.bf16.msra.mxu0 %v7766
        %8459 = vmatpush.bf16.msra.mxu0 %v7763
        %8460 = vmatpush.bf16.msra.mxu0 %v7760
        %8461 = vmatpush.bf16.msra.mxu0 %v7757
        %8462 = vmatpush.bf16.msra.mxu0 %v7754
        %8463 = vmatpush.bf16.msra.mxu0 %v7751
        %8464 = vmatpush.bf16.msra.mxu0 %v7748
        %8465 = vmatpush.bf16.msra.mxu0 %v7745
        %8466 = vmatmul.bf16.gmra.mxu0 %v6308
        %v8467 = vpop.f32.mrf.mxu0
        %v8468 = vadd.f32 %v8454, %v8467
        %v8469 = vpop.f32.mrf.mxu0
        %v8470 = vadd.f32 %v8456, %v8469
        %8471 = vdwg.mxu0
        %8472 = vmatpush.bf16.msra.mxu0 %v7790
        %8473 = vmatpush.bf16.msra.mxu0 %v7787
        %8474 = vmatpush.bf16.msra.mxu0 %v7784
        %8475 = vmatpush.bf16.msra.mxu0 %v7781
        %8476 = vmatpush.bf16.msra.mxu0 %v7778
        %8477 = vmatpush.bf16.msra.mxu0 %v7775
        %8478 = vmatpush.bf16.msra.mxu0 %v7772
        %8479 = vmatpush.bf16.msra.mxu0 %v7769
        %8480 = vmatmul.bf16.gmra.mxu0 %v6309
        %v8481 = vpop.f32.mrf.mxu0
        %v8482 = vadd.f32 %v8468, %v8481
        %v8483 = vpop.f32.mrf.mxu0
        %v8484 = vadd.f32 %v8470, %v8483
        %8485 = vdwg.mxu0
        %8486 = vmatpush.bf16.msra.mxu0 %v7814
        %8487 = vmatpush.bf16.msra.mxu0 %v7811
        %8488 = vmatpush.bf16.msra.mxu0 %v7808
        %8489 = vmatpush.bf16.msra.mxu0 %v7805
        %8490 = vmatpush.bf16.msra.mxu0 %v7802
        %8491 = vmatpush.bf16.msra.mxu0 %v7799
        %8492 = vmatpush.bf16.msra.mxu0 %v7796
        %8493 = vmatpush.bf16.msra.mxu0 %v7793
        %8494 = vmatmul.bf16.gmra.mxu0 %v6310
        %v8495 = vpop.f32.mrf.mxu0
        %v8496 = vadd.f32 %v8482, %v8495
        %v8497 = vpop.f32.mrf.mxu0
        %v8498 = vadd.f32 %v8484, %v8497
        %8499 = vdwg.mxu0
        %8500 = vmatpush.bf16.msra.mxu0 %v7838
        %8501 = vmatpush.bf16.msra.mxu0 %v7835
        %8502 = vmatpush.bf16.msra.mxu0 %v7832
        %8503 = vmatpush.bf16.msra.mxu0 %v7829
        %8504 = vmatpush.bf16.msra.mxu0 %v7826
        %8505 = vmatpush.bf16.msra.mxu0 %v7823
        %8506 = vmatpush.bf16.msra.mxu0 %v7820
        %8507 = vmatpush.bf16.msra.mxu0 %v7817
        %8508 = vmatmul.bf16.gmra.mxu0 %v6311
        %v8509 = vpop.f32.mrf.mxu0
        %v8510 = vadd.f32 %v8496, %v8509
        %v8511 = vpop.f32.mrf.mxu0
        %v8512 = vadd.f32 %v8498, %v8511
        %8513 = vdwg.mxu0
        %8514 = vmatpush.bf16.msra.mxu0 %v7862
        %8515 = vmatpush.bf16.msra.mxu0 %v7859
        %8516 = vmatpush.bf16.msra.mxu0 %v7856
        %8517 = vmatpush.bf16.msra.mxu0 %v7853
        %8518 = vmatpush.bf16.msra.mxu0 %v7850
        %8519 = vmatpush.bf16.msra.mxu0 %v7847
        %8520 = vmatpush.bf16.msra.mxu0 %v7844
        %8521 = vmatpush.bf16.msra.mxu0 %v7841
        %8522 = vmatmul.bf16.gmra.mxu0 %v6312
        %v8523 = vpop.f32.mrf.mxu0
        %v8524 = vadd.f32 %v8510, %v8523
        %v8525 = vpop.f32.mrf.mxu0
        %v8526 = vadd.f32 %v8512, %v8525
        %8527 = vdwg.mxu0
        %8528 = vmatpush.bf16.msra.mxu0 %v7886
        %8529 = vmatpush.bf16.msra.mxu0 %v7883
        %8530 = vmatpush.bf16.msra.mxu0 %v7880
        %8531 = vmatpush.bf16.msra.mxu0 %v7877
        %8532 = vmatpush.bf16.msra.mxu0 %v7874
        %8533 = vmatpush.bf16.msra.mxu0 %v7871
        %8534 = vmatpush.bf16.msra.mxu0 %v7868
        %8535 = vmatpush.bf16.msra.mxu0 %v7865
        %8536 = vmatmul.bf16.gmra.mxu0 %v6313
        %v8537 = vpop.f32.mrf.mxu0
        %v8538 = vadd.f32 %v8524, %v8537
        %v8539 = vpop.f32.mrf.mxu0
        %v8540 = vadd.f32 %v8526, %v8539
        %8541 = vdwg.mxu0
        %8542 = vmatpush.bf16.msra.mxu0 %v7910
        %8543 = vmatpush.bf16.msra.mxu0 %v7907
        %8544 = vmatpush.bf16.msra.mxu0 %v7904
        %8545 = vmatpush.bf16.msra.mxu0 %v7901
        %8546 = vmatpush.bf16.msra.mxu0 %v7898
        %8547 = vmatpush.bf16.msra.mxu0 %v7895
        %8548 = vmatpush.bf16.msra.mxu0 %v7892
        %8549 = vmatpush.bf16.msra.mxu0 %v7889
        %8550 = vmatmul.bf16.gmra.mxu0 %v6314
        %v8551 = vpop.f32.mrf.mxu0
        %v8552 = vadd.f32 %v8538, %v8551
        %v8553 = vpop.f32.mrf.mxu0
        %v8554 = vadd.f32 %v8540, %v8553
        %8555 = vdwg.mxu0
        %8556 = vmatpush.bf16.msra.mxu0 %v7934
        %8557 = vmatpush.bf16.msra.mxu0 %v7931
        %8558 = vmatpush.bf16.msra.mxu0 %v7928
        %8559 = vmatpush.bf16.msra.mxu0 %v7925
        %8560 = vmatpush.bf16.msra.mxu0 %v7922
        %8561 = vmatpush.bf16.msra.mxu0 %v7919
        %8562 = vmatpush.bf16.msra.mxu0 %v7916
        %8563 = vmatpush.bf16.msra.mxu0 %v7913
        %8564 = vmatmul.bf16.gmra.mxu0 %v6315
        %v8565 = vpop.f32.mrf.mxu0
        %v8566 = vadd.f32 %v8552, %v8565
        %v8567 = vpop.f32.mrf.mxu0
        %v8568 = vadd.f32 %v8554, %v8567
        %8569 = vdwg.mxu0
        %8570 = vmatpush.bf16.msra.mxu0 %v7958
        %8571 = vmatpush.bf16.msra.mxu0 %v7955
        %8572 = vmatpush.bf16.msra.mxu0 %v7952
        %8573 = vmatpush.bf16.msra.mxu0 %v7949
        %8574 = vmatpush.bf16.msra.mxu0 %v7946
        %8575 = vmatpush.bf16.msra.mxu0 %v7943
        %8576 = vmatpush.bf16.msra.mxu0 %v7940
        %8577 = vmatpush.bf16.msra.mxu0 %v7937
        %8578 = vmatmul.bf16.gmra.mxu0 %v6316
        %v8579 = vpop.f32.mrf.mxu0
        %v8580 = vadd.f32 %v8566, %v8579
        %v8581 = vpop.f32.mrf.mxu0
        %v8582 = vadd.f32 %v8568, %v8581
        %8583 = vdwg.mxu0
        %8584 = vmatpush.bf16.msra.mxu0 %v7695
        %8585 = vmatpush.bf16.msra.mxu0 %v7692
        %8586 = vmatpush.bf16.msra.mxu0 %v7689
        %8587 = vmatpush.bf16.msra.mxu0 %v7686
        %8588 = vmatpush.bf16.msra.mxu0 %v7683
        %8589 = vmatpush.bf16.msra.mxu0 %v7680
        %8590 = vmatpush.bf16.msra.mxu0 %v7677
        %8591 = vmatpush.bf16.msra.mxu0 %v7674
        %8592 = vmatmul.bf16.gmra.mxu0 %v6305
        %v8593 = vpop.f32.mrf.mxu0
        %v8594 = vadd.f32 %v6708, %v8593
        %v8595 = vpop.f32.mrf.mxu0
        %v8596 = vadd.f32 %v6708, %v8595
        %8597 = vdwg.mxu0
        %8598 = vmatpush.bf16.msra.mxu0 %v7719
        %8599 = vmatpush.bf16.msra.mxu0 %v7716
        %8600 = vmatpush.bf16.msra.mxu0 %v7713
        %8601 = vmatpush.bf16.msra.mxu0 %v7710
        %8602 = vmatpush.bf16.msra.mxu0 %v7707
        %8603 = vmatpush.bf16.msra.mxu0 %v7704
        %8604 = vmatpush.bf16.msra.mxu0 %v7701
        %8605 = vmatpush.bf16.msra.mxu0 %v7698
        %8606 = vmatmul.bf16.gmra.mxu0 %v6306
        %v8607 = vpop.f32.mrf.mxu0
        %v8608 = vadd.f32 %v8594, %v8607
        %v8609 = vpop.f32.mrf.mxu0
        %v8610 = vadd.f32 %v8596, %v8609
        %8611 = vdwg.mxu0
        %8612 = vmatpush.bf16.msra.mxu0 %v7743
        %8613 = vmatpush.bf16.msra.mxu0 %v7740
        %8614 = vmatpush.bf16.msra.mxu0 %v7737
        %8615 = vmatpush.bf16.msra.mxu0 %v7734
        %8616 = vmatpush.bf16.msra.mxu0 %v7731
        %8617 = vmatpush.bf16.msra.mxu0 %v7728
        %8618 = vmatpush.bf16.msra.mxu0 %v7725
        %8619 = vmatpush.bf16.msra.mxu0 %v7722
        %8620 = vmatmul.bf16.gmra.mxu0 %v6307
        %v8621 = vpop.f32.mrf.mxu0
        %v8622 = vadd.f32 %v8608, %v8621
        %v8623 = vpop.f32.mrf.mxu0
        %v8624 = vadd.f32 %v8610, %v8623
        %8625 = vdwg.mxu0
        %8626 = vmatpush.bf16.msra.mxu0 %v7767
        %8627 = vmatpush.bf16.msra.mxu0 %v7764
        %8628 = vmatpush.bf16.msra.mxu0 %v7761
        %8629 = vmatpush.bf16.msra.mxu0 %v7758
        %8630 = vmatpush.bf16.msra.mxu0 %v7755
        %8631 = vmatpush.bf16.msra.mxu0 %v7752
        %8632 = vmatpush.bf16.msra.mxu0 %v7749
        %8633 = vmatpush.bf16.msra.mxu0 %v7746
        %8634 = vmatmul.bf16.gmra.mxu0 %v6308
        %v8635 = vpop.f32.mrf.mxu0
        %v8636 = vadd.f32 %v8622, %v8635
        %v8637 = vpop.f32.mrf.mxu0
        %v8638 = vadd.f32 %v8624, %v8637
        %8639 = vdwg.mxu0
        %8640 = vmatpush.bf16.msra.mxu0 %v7791
        %8641 = vmatpush.bf16.msra.mxu0 %v7788
        %8642 = vmatpush.bf16.msra.mxu0 %v7785
        %8643 = vmatpush.bf16.msra.mxu0 %v7782
        %8644 = vmatpush.bf16.msra.mxu0 %v7779
        %8645 = vmatpush.bf16.msra.mxu0 %v7776
        %8646 = vmatpush.bf16.msra.mxu0 %v7773
        %8647 = vmatpush.bf16.msra.mxu0 %v7770
        %8648 = vmatmul.bf16.gmra.mxu0 %v6309
        %v8649 = vpop.f32.mrf.mxu0
        %v8650 = vadd.f32 %v8636, %v8649
        %v8651 = vpop.f32.mrf.mxu0
        %v8652 = vadd.f32 %v8638, %v8651
        %8653 = vdwg.mxu0
        %8654 = vmatpush.bf16.msra.mxu0 %v7815
        %8655 = vmatpush.bf16.msra.mxu0 %v7812
        %8656 = vmatpush.bf16.msra.mxu0 %v7809
        %8657 = vmatpush.bf16.msra.mxu0 %v7806
        %8658 = vmatpush.bf16.msra.mxu0 %v7803
        %8659 = vmatpush.bf16.msra.mxu0 %v7800
        %8660 = vmatpush.bf16.msra.mxu0 %v7797
        %8661 = vmatpush.bf16.msra.mxu0 %v7794
        %8662 = vmatmul.bf16.gmra.mxu0 %v6310
        %v8663 = vpop.f32.mrf.mxu0
        %v8664 = vadd.f32 %v8650, %v8663
        %v8665 = vpop.f32.mrf.mxu0
        %v8666 = vadd.f32 %v8652, %v8665
        %8667 = vdwg.mxu0
        %8668 = vmatpush.bf16.msra.mxu0 %v7839
        %8669 = vmatpush.bf16.msra.mxu0 %v7836
        %8670 = vmatpush.bf16.msra.mxu0 %v7833
        %8671 = vmatpush.bf16.msra.mxu0 %v7830
        %8672 = vmatpush.bf16.msra.mxu0 %v7827
        %8673 = vmatpush.bf16.msra.mxu0 %v7824
        %8674 = vmatpush.bf16.msra.mxu0 %v7821
        %8675 = vmatpush.bf16.msra.mxu0 %v7818
        %8676 = vmatmul.bf16.gmra.mxu0 %v6311
        %v8677 = vpop.f32.mrf.mxu0
        %v8678 = vadd.f32 %v8664, %v8677
        %v8679 = vpop.f32.mrf.mxu0
        %v8680 = vadd.f32 %v8666, %v8679
        %8681 = vdwg.mxu0
        %8682 = vmatpush.bf16.msra.mxu0 %v7863
        %8683 = vmatpush.bf16.msra.mxu0 %v7860
        %8684 = vmatpush.bf16.msra.mxu0 %v7857
        %8685 = vmatpush.bf16.msra.mxu0 %v7854
        %8686 = vmatpush.bf16.msra.mxu0 %v7851
        %8687 = vmatpush.bf16.msra.mxu0 %v7848
        %8688 = vmatpush.bf16.msra.mxu0 %v7845
        %8689 = vmatpush.bf16.msra.mxu0 %v7842
        %8690 = vmatmul.bf16.gmra.mxu0 %v6312
        %v8691 = vpop.f32.mrf.mxu0
        %v8692 = vadd.f32 %v8678, %v8691
        %v8693 = vpop.f32.mrf.mxu0
        %v8694 = vadd.f32 %v8680, %v8693
        %8695 = vdwg.mxu0
        %8696 = vmatpush.bf16.msra.mxu0 %v7887
        %8697 = vmatpush.bf16.msra.mxu0 %v7884
        %8698 = vmatpush.bf16.msra.mxu0 %v7881
        %8699 = vmatpush.bf16.msra.mxu0 %v7878
        %8700 = vmatpush.bf16.msra.mxu0 %v7875
        %8701 = vmatpush.bf16.msra.mxu0 %v7872
        %8702 = vmatpush.bf16.msra.mxu0 %v7869
        %8703 = vmatpush.bf16.msra.mxu0 %v7866
        %8704 = vmatmul.bf16.gmra.mxu0 %v6313
        %v8705 = vpop.f32.mrf.mxu0
        %v8706 = vadd.f32 %v8692, %v8705
        %v8707 = vpop.f32.mrf.mxu0
        %v8708 = vadd.f32 %v8694, %v8707
        %8709 = vdwg.mxu0
        %8710 = vmatpush.bf16.msra.mxu0 %v7911
        %8711 = vmatpush.bf16.msra.mxu0 %v7908
        %8712 = vmatpush.bf16.msra.mxu0 %v7905
        %8713 = vmatpush.bf16.msra.mxu0 %v7902
        %8714 = vmatpush.bf16.msra.mxu0 %v7899
        %8715 = vmatpush.bf16.msra.mxu0 %v7896
        %8716 = vmatpush.bf16.msra.mxu0 %v7893
        %8717 = vmatpush.bf16.msra.mxu0 %v7890
        %8718 = vmatmul.bf16.gmra.mxu0 %v6314
        %v8719 = vpop.f32.mrf.mxu0
        %v8720 = vadd.f32 %v8706, %v8719
        %v8721 = vpop.f32.mrf.mxu0
        %v8722 = vadd.f32 %v8708, %v8721
        %8723 = vdwg.mxu0
        %8724 = vmatpush.bf16.msra.mxu0 %v7935
        %8725 = vmatpush.bf16.msra.mxu0 %v7932
        %8726 = vmatpush.bf16.msra.mxu0 %v7929
        %8727 = vmatpush.bf16.msra.mxu0 %v7926
        %8728 = vmatpush.bf16.msra.mxu0 %v7923
        %8729 = vmatpush.bf16.msra.mxu0 %v7920
        %8730 = vmatpush.bf16.msra.mxu0 %v7917
        %8731 = vmatpush.bf16.msra.mxu0 %v7914
        %8732 = vmatmul.bf16.gmra.mxu0 %v6315
        %v8733 = vpop.f32.mrf.mxu0
        %v8734 = vadd.f32 %v8720, %v8733
        %v8735 = vpop.f32.mrf.mxu0
        %v8736 = vadd.f32 %v8722, %v8735
        %8737 = vdwg.mxu0
        %8738 = vmatpush.bf16.msra.mxu0 %v7959
        %8739 = vmatpush.bf16.msra.mxu0 %v7956
        %8740 = vmatpush.bf16.msra.mxu0 %v7953
        %8741 = vmatpush.bf16.msra.mxu0 %v7950
        %8742 = vmatpush.bf16.msra.mxu0 %v7947
        %8743 = vmatpush.bf16.msra.mxu0 %v7944
        %8744 = vmatpush.bf16.msra.mxu0 %v7941
        %8745 = vmatpush.bf16.msra.mxu0 %v7938
        %8746 = vmatmul.bf16.gmra.mxu0 %v6316
        %v8747 = vpop.f32.mrf.mxu0
        %v8748 = vadd.f32 %v8734, %v8747
        %v8749 = vpop.f32.mrf.mxu0
        %v8750 = vadd.f32 %v8736, %v8749
        %8751 = vdwg.mxu0
        %v8752 = vadd.f32 %v3900, %v8412
        %v8753 = vadd.f32 %v3901, %v8580
        %v8754 = vadd.f32 %v3902, %v8748
        %v8755 = vadd.f32 %v3903, %v8414
        %v8756 = vadd.f32 %v3904, %v8582
        %v8757 = vadd.f32 %v3905, %v8750
        %8758 = vst [vmem:[#allocation2] sm:$0xff] %v8752
        %8759 = vst [vmem:[#allocation2 + $0x8] sm:$0xff] %v8753
        %8760 = vst [vmem:[#allocation2 + $0x10] sm:$0xff] %v8754
        %8761 = vst [vmem:[#allocation2 + $0x18] sm:$0xff] %v8755
        %8762 = vst [vmem:[#allocation2 + $0x20] sm:$0xff] %v8756
        %8763 = vst [vmem:[#allocation2 + $0x28] sm:$0xff] %v8757
        %p8764 = scmp.eq.s32.totalorder %s47, 5
        // Predicated region
        $region161: #{tpu_custom_call.1} parent=87 // pred_check
          %p8765 = pneg %p8764
        $region162: #{tpu_custom_call.1} parent=87 // pred_check_branch
          %8767 = sbr.rel (%p8765) target = $region164
        $region163: #{tpu_custom_call.1} parent=87 // pred_region
          %v8768 = vld [vmem:[#allocation25] sm:$0x7]
          %v8769 = vld [vmem:[#allocation27] sm:$0x7]
          %v8770 = vadd.f32 %v8752, %v8753
          %v8771 = vadd.f32 %v8770, %v8754
          %8772 = vadd.xlane.f32.xlu0 %v8771
          %v8773 = vpop.xlane.xlu0 %8772
          %v8774 = vadd.f32 %v8755, %v8756
          %v8775 = vadd.f32 %v8774, %v8757
          %8776 = vadd.xlane.f32.xlu0 %v8775
          %v8777 = vpop.xlane.xlu0 %8776
          %v8778 = vmul.f32 %v8773, %v881
          %v8779 = vmul.f32 %v8777, %v881
          %v8780 = vsub.f32 %v8752, %v8778
          %v8781 = vsub.f32 %v8753, %v8778
          %v8782 = vsub.f32 %v8754, %v8778
          %v8783 = vsub.f32 %v8755, %v8779
          %v8784 = vsub.f32 %v8756, %v8779
          %v8785 = vsub.f32 %v8757, %v8779
          %v8786 = vmul.f32 %v8780, %v8780
          %v8787 = vmul.f32 %v8781, %v8781
          %v8788 = vmul.f32 %v8782, %v8782
          %v8789 = vmul.f32 %v8783, %v8783
          %v8790 = vmul.f32 %v8784, %v8784
          %v8791 = vmul.f32 %v8785, %v8785
          %v8792 = vadd.f32 %v8786, %v8787
          %v8793 = vadd.f32 %v8792, %v8788
          %8794 = vadd.xlane.f32.xlu0 %v8793
          %v8795 = vpop.xlane.xlu0 %8794
          %v8796 = vadd.f32 %v8789, %v8790
          %v8797 = vadd.f32 %v8796, %v8791
          %8798 = vadd.xlane.f32.xlu0 %v8797
          %v8799 = vpop.xlane.xlu0 %8798
          %v8800 = vmul.f32 %v8795, %v881
          %v8801 = vmul.f32 %v8799, %v881
          %v8802 = vadd.f32 %v8800, 1e-05
          %v8803 = vadd.f32 %v8801, 1e-05
          %v8804 = vrsqrt.pop %v8802
          %v8805 = vmul.f32 %v8804, %v8802
          %v8806 = vmul.f32 %v8805, %v8804
          %v8807 = vmul.f32 0.5, %v8806
          %v8808 = vsub.f32 1.5, %v8807
          %v8809 = vmul.f32 %v8804, %v8808
          %vm8810 = vweird.f32 %v8802
          %vm8811 = vweird.f32 %v8804
          %vm8812 = vmor %vm8810, %vm8811
          %v8813 = vsel %vm8812, %v8804, %v8809
          %v8814 = vrsqrt.pop %v8803
          %v8815 = vmul.f32 %v8814, %v8803
          %v8816 = vmul.f32 %v8815, %v8814
          %v8817 = vmul.f32 0.5, %v8816
          %v8818 = vsub.f32 1.5, %v8817
          %v8819 = vmul.f32 %v8814, %v8818
          %vm8820 = vweird.f32 %v8803
          %vm8821 = vweird.f32 %v8814
          %vm8822 = vmor %vm8820, %vm8821
          %v8823 = vsel %vm8822, %v8814, %v8819
          %v8824 = vmul.f32 %v8780, %v8813
          %v8825 = vmul.f32 %v8781, %v8813
          %v8826 = vmul.f32 %v8782, %v8813
          %v8827 = vmul.f32 %v8783, %v8823
          %v8828 = vmul.f32 %v8784, %v8823
          %v8829 = vmul.f32 %v8785, %v8823
          %v8831 = vperm.slane %v8768, 0
          %v8832 = vperm.slane %v8768, 1
          %v8833 = vperm.slane %v8768, 2
          %v8837 = vmul.f32 %v8824, %v8831
          %v8838 = vmul.f32 %v8825, %v8832
          %v8839 = vmul.f32 %v8826, %v8833
          %v8840 = vmul.f32 %v8827, %v8831
          %v8841 = vmul.f32 %v8828, %v8832
          %v8842 = vmul.f32 %v8829, %v8833
          %v8844 = vperm.slane %v8769, 0
          %v8845 = vperm.slane %v8769, 1
          %v8846 = vperm.slane %v8769, 2
          %v8850 = vadd.f32 %v8837, %v8844
          %v8851 = vadd.f32 %v8838, %v8845
          %v8852 = vadd.f32 %v8839, %v8846
          %v8853 = vadd.f32 %v8840, %v8844
          %v8854 = vadd.f32 %v8841, %v8845
          %v8855 = vadd.f32 %v8842, %v8846
          %v8856 = vpack.c.bf16 %v8851, %v8850
          %v8857 = vpack.c.bf16 %v8852, %v8852
          %v8858 = vpack.c.bf16 %v8854, %v8853
          %v8859 = vpack.c.bf16 %v8855, %v8855
          %v8860 = vld [vmem:[#allocation28] sm:$0xf]
          %v8861 = vld [vmem:[#allocation28 + $0x4] sm:$0xf]
          %v8862 = vld [vmem:[#allocation28 + $0x8] sm:$0xf]
          %v8863 = vld [vmem:[#allocation28 + $0xc] sm:$0xf]
          %v8864 = vld [vmem:[#allocation28 + $0x10] sm:$0xf]
          %v8865 = vld [vmem:[#allocation28 + $0x14] sm:$0xf]
          %v8866 = vld [vmem:[#allocation28 + $0x18] sm:$0xf]
          %v8867 = vld [vmem:[#allocation28 + $0x1c] sm:$0xf]
          %v8868 = vld [vmem:[#allocation28 + $0x20] sm:$0xf]
          %v8869 = vld [vmem:[#allocation28 + $0x24] sm:$0xf]
          %v8870 = vld [vmem:[#allocation28 + $0x28] sm:$0xf]
          %v8871 = vld [vmem:[#allocation28 + $0x2c] sm:$0xf]
          %v8872 = vld [vmem:[#allocation28 + $0x30] sm:$0xf]
          %v8873 = vld [vmem:[#allocation28 + $0x34] sm:$0xf]
          %v8874 = vld [vmem:[#allocation28 + $0x38] sm:$0xf]
          %v8875 = vld [vmem:[#allocation28 + $0x3c] sm:$0xf]
          %v8876 = vld [vmem:[#allocation28 + $0x40] sm:$0xf]
          %v8877 = vld [vmem:[#allocation28 + $0x44] sm:$0xf]
          %v8878 = vld [vmem:[#allocation28 + $0x48] sm:$0xf]
          %v8879 = vld [vmem:[#allocation28 + $0x4c] sm:$0xf]
          %v8880 = vld [vmem:[#allocation28 + $0x50] sm:$0xf]
          %v8881 = vld [vmem:[#allocation28 + $0x54] sm:$0xf]
          %v8882 = vld [vmem:[#allocation28 + $0x58] sm:$0xf]
          %v8883 = vld [vmem:[#allocation28 + $0x5c] sm:$0xf]
          %v8884 = vld [vmem:[#allocation28 + $0x60] sm:$0xf]
          %v8885 = vld [vmem:[#allocation28 + $0x64] sm:$0xf]
          %v8886 = vld [vmem:[#allocation28 + $0x68] sm:$0xf]
          %v8887 = vld [vmem:[#allocation28 + $0x6c] sm:$0xf]
          %v8888 = vld [vmem:[#allocation28 + $0x70] sm:$0xf]
          %v8889 = vld [vmem:[#allocation28 + $0x74] sm:$0xf]
          %v8890 = vld [vmem:[#allocation28 + $0x78] sm:$0xf]
          %v8891 = vld [vmem:[#allocation28 + $0x7c] sm:$0xf]
          %v8892 = vld [vmem:[#allocation28 + $0x80] sm:$0xf]
          %v8893 = vld [vmem:[#allocation28 + $0x84] sm:$0xf]
          %v8894 = vld [vmem:[#allocation28 + $0x88] sm:$0xf]
          %v8895 = vld [vmem:[#allocation28 + $0x8c] sm:$0xf]
          %v8896 = vld [vmem:[#allocation28 + $0x90] sm:$0xf]
          %v8897 = vld [vmem:[#allocation28 + $0x94] sm:$0xf]
          %v8898 = vld [vmem:[#allocation28 + $0x98] sm:$0xf]
          %v8899 = vld [vmem:[#allocation28 + $0x9c] sm:$0xf]
          %v8900 = vld [vmem:[#allocation28 + $0xa0] sm:$0xf]
          %v8901 = vld [vmem:[#allocation28 + $0xa4] sm:$0xf]
          %v8902 = vld [vmem:[#allocation28 + $0xa8] sm:$0xf]
          %v8903 = vld [vmem:[#allocation28 + $0xac] sm:$0xf]
          %v8904 = vld [vmem:[#allocation28 + $0xb0] sm:$0xf]
          %v8905 = vld [vmem:[#allocation28 + $0xb4] sm:$0xf]
          %v8906 = vld [vmem:[#allocation28 + $0xb8] sm:$0xf]
          %v8907 = vld [vmem:[#allocation28 + $0xbc] sm:$0xf]
          %v8908 = vld [vmem:[#allocation30] sm:$0x1]
          %v8910 = vperm.slane %v8908, 0
          %v8916 = vunpack.c.l.b16 %v8856
          %v8917 = vunpack.c.h.b16 %v8856
          %v8918 = vunpack.c.l.b16 %v8857
          %v8919 = vunpack.c.l.b16 %v8858
          %v8920 = vunpack.c.h.b16 %v8858
          %v8921 = vunpack.c.l.b16 %v8859
          %v8922 = vpack.c.b16 %v8919, %v8916
          %v8923 = vpack.c.b16 %v8920, %v8917
          %v8924 = vpack.c.b16 %v8921, %v8918
          %v8976 = vunpack.c.l.b16 %v8860
          %v8977 = vunpack.c.l.b16 %v8861
          %v8978 = vunpack.c.l.b16 %v8862
          %v8979 = vunpack.c.l.b16 %v8863
          %v8980 = vunpack.c.l.b16 %v8864
          %v8981 = vunpack.c.l.b16 %v8865
          %v8982 = vunpack.c.l.b16 %v8866
          %v8983 = vunpack.c.l.b16 %v8867
          %v8984 = vunpack.c.l.b16 %v8868
          %v8985 = vunpack.c.l.b16 %v8869
          %v8986 = vunpack.c.l.b16 %v8870
          %v8987 = vunpack.c.l.b16 %v8871
          %v8988 = vunpack.c.l.b16 %v8872
          %v8989 = vunpack.c.l.b16 %v8873
          %v8990 = vunpack.c.l.b16 %v8874
          %v8991 = vunpack.c.l.b16 %v8875
          %v8992 = vunpack.c.l.b16 %v8876
          %v8993 = vunpack.c.l.b16 %v8877
          %v8994 = vunpack.c.l.b16 %v8878
          %v8995 = vunpack.c.l.b16 %v8879
          %v8996 = vunpack.c.l.b16 %v8880
          %v8997 = vunpack.c.l.b16 %v8881
          %v8998 = vunpack.c.l.b16 %v8882
          %v8999 = vunpack.c.l.b16 %v8883
          %v9000 = vunpack.c.l.b16 %v8884
          %v9001 = vunpack.c.l.b16 %v8885
          %v9002 = vunpack.c.l.b16 %v8886
          %v9003 = vunpack.c.l.b16 %v8887
          %v9004 = vunpack.c.l.b16 %v8888
          %v9005 = vunpack.c.l.b16 %v8889
          %v9006 = vunpack.c.l.b16 %v8890
          %v9007 = vunpack.c.l.b16 %v8891
          %v9008 = vunpack.c.l.b16 %v8892
          %v9009 = vunpack.c.l.b16 %v8893
          %v9010 = vunpack.c.l.b16 %v8894
          %v9011 = vunpack.c.l.b16 %v8895
          %v9012 = vunpack.c.l.b16 %v8896
          %v9013 = vunpack.c.l.b16 %v8897
          %v9014 = vunpack.c.l.b16 %v8898
          %v9015 = vunpack.c.l.b16 %v8899
          %v9016 = vunpack.c.l.b16 %v8900
          %v9017 = vunpack.c.l.b16 %v8901
          %v9018 = vunpack.c.l.b16 %v8902
          %v9019 = vunpack.c.l.b16 %v8903
          %v9020 = vunpack.c.l.b16 %v8904
          %v9021 = vunpack.c.l.b16 %v8905
          %v9022 = vunpack.c.l.b16 %v8906
          %v9023 = vunpack.c.l.b16 %v8907
          %v9024 = vpack.c.b16 %v8977, %v8976
          %v9025 = vpack.c.b16 %v8979, %v8978
          %v9026 = vpack.c.b16 %v8981, %v8980
          %v9027 = vpack.c.b16 %v8983, %v8982
          %v9028 = vpack.c.b16 %v8985, %v8984
          %v9029 = vpack.c.b16 %v8987, %v8986
          %v9030 = vpack.c.b16 %v8989, %v8988
          %v9031 = vpack.c.b16 %v8991, %v8990
          %v9032 = vpack.c.b16 %v8993, %v8992
          %v9033 = vpack.c.b16 %v8995, %v8994
          %v9034 = vpack.c.b16 %v8997, %v8996
          %v9035 = vpack.c.b16 %v8999, %v8998
          %v9036 = vpack.c.b16 %v9001, %v9000
          %v9037 = vpack.c.b16 %v9003, %v9002
          %v9038 = vpack.c.b16 %v9005, %v9004
          %v9039 = vpack.c.b16 %v9007, %v9006
          %v9040 = vpack.c.b16 %v9009, %v9008
          %v9041 = vpack.c.b16 %v9011, %v9010
          %v9042 = vpack.c.b16 %v9013, %v9012
          %v9043 = vpack.c.b16 %v9015, %v9014
          %v9044 = vpack.c.b16 %v9017, %v9016
          %v9045 = vpack.c.b16 %v9019, %v9018
          %v9046 = vpack.c.b16 %v9021, %v9020
          %v9047 = vpack.c.b16 %v9023, %v9022
          %9072 = vmatpush.bf16.msra.mxu0 %v9031
          %9073 = vmatpush.bf16.msra.mxu0 %v9030
          %9074 = vmatpush.bf16.msra.mxu0 %v9029
          %9075 = vmatpush.bf16.msra.mxu0 %v9028
          %9076 = vmatpush.bf16.msra.mxu0 %v9027
          %9077 = vmatpush.bf16.msra.mxu0 %v9026
          %9078 = vmatpush.bf16.msra.mxu0 %v9025
          %9079 = vmatpush.bf16.msra.mxu0 %v9024
          %9080 = vmatmul.bf16.gmra.mxu0 %v8922
          %v9081 = vpop.f32.mrf.mxu0
          %v9082 = vadd.f32 %v8910, %v9081
          %v9083 = vpop.f32.mrf.mxu0
          %v9084 = vadd.f32 %v8910, %v9083
          %9085 = vdwg.mxu0
          %9086 = vmatpush.bf16.msra.mxu0 %v9039
          %9087 = vmatpush.bf16.msra.mxu0 %v9038
          %9088 = vmatpush.bf16.msra.mxu0 %v9037
          %9089 = vmatpush.bf16.msra.mxu0 %v9036
          %9090 = vmatpush.bf16.msra.mxu0 %v9035
          %9091 = vmatpush.bf16.msra.mxu0 %v9034
          %9092 = vmatpush.bf16.msra.mxu0 %v9033
          %9093 = vmatpush.bf16.msra.mxu0 %v9032
          %9094 = vmatmul.bf16.gmra.mxu0 %v8923
          %v9095 = vpop.f32.mrf.mxu0
          %v9096 = vadd.f32 %v9082, %v9095
          %v9097 = vpop.f32.mrf.mxu0
          %v9098 = vadd.f32 %v9084, %v9097
          %9099 = vdwg.mxu0
          %9100 = vmatpush.bf16.msra.mxu0 %v9047
          %9101 = vmatpush.bf16.msra.mxu0 %v9046
          %9102 = vmatpush.bf16.msra.mxu0 %v9045
          %9103 = vmatpush.bf16.msra.mxu0 %v9044
          %9104 = vmatpush.bf16.msra.mxu0 %v9043
          %9105 = vmatpush.bf16.msra.mxu0 %v9042
          %9106 = vmatpush.bf16.msra.mxu0 %v9041
          %9107 = vmatpush.bf16.msra.mxu0 %v9040
          %9108 = vmatmul.bf16.gmra.mxu0 %v8924
          %v9109 = vpop.f32.mrf.mxu0
          %v9110 = vadd.f32 %v9096, %v9109
          %v9111 = vpop.f32.mrf.mxu0
          %v9112 = vadd.f32 %v9098, %v9111
          %9113 = vdwg.mxu0
          %9114 = vst [vmem:[%s838] sm:$0xff] %v9110
          %9115 = vst [vmem:[%s838 + $0x8] sm:$0xff] %v9112
        $region164: #{tpu_custom_call.1} parent=87 // pred_fallthru
          _
        %s9116 = sand.u32 %s424, 1
        %s9117 = scalar_lea.sflag [#allocation6], %s9116
        %s9118 = sand.u32 %s424, 1
        %s9119 = smul.addr %s9118, 16
        %s9120 = scalar_lea.vmem [#allocation31], %s9119
        // Predicated region
        $region165: #{tpu_custom_call.1} parent=87 // pred_check
          %p9121 = pneg %p434
        $region166: #{tpu_custom_call.1} parent=87 // pred_check_branch
          %9123 = sbr.rel (%p9121) target = $region168
        $region167: #{tpu_custom_call.1} parent=87 // pred_region
          %9125 = vsyncadd %s9117, 0
          %s9126 = smul.addr %s46, 2
          %s9127 = smul.addr %s9126, 8
          %s9128 = scalar_lea.hbm %s17, %s9127
          %s9129 = sshll.u32 %s9120, 4
          %s9130 = int_to_ptr.vmem [resolvable:$true] %s9129
          %s9131 = sshll.u32 %s9128, 4
          %s9132 = int_to_ptr.hbm [resolvable:$true] %s9131
          %9137 = dma.vmem_to_hbm [thread:$0]  %s9130, 256, %s9132, %s9117, 128, 128, 8
        $region168: #{tpu_custom_call.1} parent=87 // pred_fallthru
          _
      $region88: #{tpu_custom_call.1} parent=5 // pred_fallthru
        _
      %p9138 = scmp.le.s32.totalorder 2, %s37
      // Predicated region
      $region169: #{tpu_custom_call.1} parent=5 // pred_check
        %p9139 = pneg %p9138
      $region170: #{tpu_custom_call.1} parent=5 // pred_check_branch
        %9141 = sbr.rel (%p9139) target = $region172
      $region171: #{tpu_custom_call.1} parent=5 // pred_region
        %s9142 = ssub.s32 %s37, 2
        // Predicated region
        $region173: #{tpu_custom_call.1} parent=171 // pred_check
          %p9143 = pneg %p440
        $region174: #{tpu_custom_call.1} parent=171 // pred_check_branch
          %9145 = sbr.rel (%p9143) target = $region176
        $region175: #{tpu_custom_call.1} parent=171 // pred_region
          %s9146 = sand.u32 %s425, 1
          %s9147 = scalar_lea.sflag [#allocation6], %s9146
          %s9148 = sand.u32 %s425, 1
          %s9149 = smul.addr %s9148, 16
          %s9150 = scalar_lea.vmem [#allocation31], %s9149
          %9152 = dma.done %s9147, 256
        $region176: #{tpu_custom_call.1} parent=171 // pred_fallthru
          _
      $region172: #{tpu_custom_call.1} parent=5 // pred_fallthru
        _
    $region6: #{tpu_custom_call.1} parent=1 // loop_footer
      %s41 = sadd.s32 1, %s37
    $region7: #{tpu_custom_call.1} parent=1 // loop_footer_branch
      %36 = sbr.rel target = $region3
    $region8: #{tpu_custom_call.1} parent=1 // loop_exit
      _
    %9153 = vsyncpa [#allocation5], 1
    %s9154 = scalar_lea.sflag [#allocation5], 1
    %9155 = vsyncpa %s9154, 1
    %9156 = vsyncpa [#allocation8], 1
    %9157 = vsyncpa [#allocation11], 1
    %9158 = vsyncpa [#allocation14], 1
    %9159 = vsyncpa [#allocation17], 1
    %9160 = vsyncpa [#allocation20], 1
    %9161 = vsyncpa [#allocation23], 1
    %9162 = vsyncpa [#allocation26], 1
    %9163 = vsyncpa [#allocation29], 1
    %9164 = vsyncpa [#allocation6], 1
    %s9165 = scalar_lea.sflag [#allocation6], 1
    %9166 = vsyncpa %s9165, 1

</llo_original>
